<compile_context>
chip_gen: v7x
topology: tpu7x:2x2x1
jax: 0.10.0
libtpu: 0.0.40
codegen_flags: <defaults>
</compile_context>

<pallas_src>
import functools

import jax
import jax.numpy as jnp
from jax import lax
from jax.experimental import pallas as pl
from jax.experimental.pallas import tpu as pltpu

EPS = 1e-5  # PyTorch BatchNorm2d default eps


# ------------------------------ small helpers ------------------------------

def _round_up(x, m):
    return ((x + m - 1) // m) * m


def _vmem_budget():
    """Generation-aware VMEM budget: ~1/3 of physical for tiles, <=64MiB scoped."""
    try:
        cap = int(pltpu.get_tpu_info().vmem_capacity_bytes)
    except Exception:  # pragma: no cover - conservative (v7x-sized) fallback
        cap = 64 * 1024 * 1024
    budget = min(cap // 3, 40 * 1024 * 1024)
    limit = min(cap // 2, 64 * 1024 * 1024)
    return budget, limit


def _auto_tile_m(mp_real, e_blk, cfp, chp, clp, streams_cf, budget):
    """Pick the lane-tile width from a VMEM byte budget (multiple of the halo block)."""
    per_col = (2 * 2 * clp                 # label tile, bf16, double buffered
               + 2 * 4                     # valid mask, f32
               + 2 * 4 * cfp * streams_cf  # cur / out / (skip), f32
               + 6 * chp                   # in-kernel hidden window (f32 acc + bf16)
               + 8 * cfp                   # packed gamma|beta accumulator, f32
               + 4 * cfp)                  # slack
    t = int(budget // max(per_col, 1))
    t = max(e_blk, (t // e_blk) * e_blk)
    t = min(t, 16384)
    t = min(t, _round_up(mp_real, e_blk))
    return t


# ------------------------------ layout helpers ------------------------------

def _to_padded_flat(x_nchw, c_pad, pw, mp):
    """(N,C,H,W) -> (C_pad, MP): per-image pw-pixel zero border, channel pad, tail pad."""
    n, c, h, w = x_nchw.shape
    xp = jnp.pad(x_nchw, ((0, 0), (0, c_pad - c), (pw, pw), (pw, pw)))
    xp = jnp.transpose(xp, (1, 0, 2, 3)).reshape(c_pad, n * (h + 2 * pw) * (w + 2 * pw))
    return jnp.pad(xp, ((0, 0), (0, mp - xp.shape[1])))


def _from_padded_flat(x_cm, n, c, h, w, pw):
    x = x_cm[:c, : n * (h + 2 * pw) * (w + 2 * pw)]
    x = x.reshape(c, n, h + 2 * pw, w + 2 * pw)[:, :, pw:pw + h, pw:pw + w]
    return jnp.transpose(x, (1, 0, 2, 3))


def _valid_mask(n, h, w, pw, mp):
    """f32 (1, MP) mask: 1 at real (interior) pixels, 0 at pad / tail columns."""
    m_img = jnp.pad(jnp.ones((h, w), jnp.float32), ((pw, pw), (pw, pw))).reshape(-1)
    m = jnp.tile(m_img, n)
    return jnp.pad(m, (0, mp - m.shape[0])).reshape(1, mp)


# ------------------------------ Pallas kernels ------------------------------

def _stats_partial_kernel(x_ref, sum_ref, sq_ref):
    # Layer-0 BN partial sums.  Pad / tail columns of the input are exactly
    # zero, so they contribute nothing; division by the true pixel count
    # happens outside.  Per-tile partials keep the grid "parallel" (v7x).
    x = x_ref[...]                                            # (Cfp, T) f32
    s = jnp.sum(x, axis=1, keepdims=True)
    q = jnp.sum(x * x, axis=1, keepdims=True)
    lane = lax.broadcasted_iota(jnp.int32, (x.shape[0], 128), 1)
    sum_ref[...] = jnp.where(lane == 0, s, 0.0)
    sq_ref[...] = jnp.where(lane == 0, q, 0.0)


def _make_spade_layer_kernel(*, ks, t_m, e_blk, h1, wp_row, add_skip, emit_stats):
    """Fused per-layer kernel: shared conv + gamma/beta conv + BN + modulate + ReLU."""
    ks2 = ks * ks
    pw = ks // 2
    hid_w = t_m + 2 * h1                       # hidden window width needed per tile
    taps = [(ky - pw) * wp_row + (kx - pw) for ky in range(ks) for kx in range(ks)]

    def kernel(*refs):
        (ws_ref, bs_ref, wgb_ref, bgb_ref, mean_ref, istd_ref,
         mskl_ref, mskm_ref, mskr_ref, labl_ref, labm_ref, labr_ref,
         cur_ref) = refs[:13]
        pos = 13
        skip_ref = None
        if add_skip:
            skip_ref = refs[pos]
            pos += 1
        out_ref = refs[pos]
        pos += 1
        if emit_stats:
            sum_ref, sq_ref = refs[pos], refs[pos + 1]

        # Window column p corresponds to flat offset (p - e_blk) relative to the
        # first output column of this tile.  Halo blocks are clamped at the array
        # edges; the clamped region only ever feeds pad-position outputs.
        lab_win = jnp.concatenate([labl_ref[...], labm_ref[...], labr_ref[...]],
                                  axis=1)                     # (Clp, T+2E) bf16
        msk_win = jnp.concatenate([mskl_ref[...], mskm_ref[...], mskr_ref[...]],
                                  axis=1)                     # (1,   T+2E) f32

        # ---- shared conv: hidden over offsets [-h1, T+h1), 9 shifted bf16 GEMMs
        chp = bs_ref.shape[0]
        hid = jnp.zeros((chp, hid_w), jnp.float32)
        for t in range(ks2):
            a = e_blk - h1 + taps[t]
            hid = hid + jnp.dot(ws_ref[t], lab_win[:, a:a + hid_w],
                                preferred_element_type=jnp.float32)
        # bias, then force the per-image zero-padding ring of `hidden` to 0 (the
        # second conv relies on it), then cast to bf16 for the MXU.
        hid = (hid + bs_ref[...]) * msk_win[:, e_blk - h1:e_blk - h1 + hid_w]
        hid = hid.astype(jnp.bfloat16)

        # ---- gamma|beta conv (packed (2*Cfp, Chp) taps) over the output tile
        n2cf = bgb_ref.shape[0]
        gb = jnp.zeros((n2cf, t_m), jnp.float32)
        for t in range(ks2):
            a = h1 + taps[t]
            gb = gb + jnp.dot(wgb_ref[t], hid[:, a:a + t_m],
                              preferred_element_type=jnp.float32)
        gb = gb + bgb_ref[...]              # gamma bias already carries the "+1"
        cfp = n2cf // 2
        gamma1 = gb[:cfp, :]                # == (1 + gamma)
        beta = gb[cfp:, :]

        # ---- BatchNorm normalize + SPADE modulate + ReLU (+ skip), all f32
        norm = (cur_ref[...] - mean_ref[...]) * istd_ref[...]
        y = jnp.maximum(norm * gamma1 + beta, 0.0)
        if add_skip:
            y = y + skip_ref[...]
        out_ref[...] = y

        # ---- fused BN partial statistics for the *next* layer (masked to real pixels)
        if emit_stats:
            vmask = msk_win[:, e_blk:e_blk + t_m] > 0.0       # (1, T)
            ym = jnp.where(vmask, y, 0.0)
            s_col = jnp.sum(ym, axis=1, keepdims=True)
            q_col = jnp.sum(ym * ym, axis=1, keepdims=True)
            lane = lax.broadcasted_iota(jnp.int32, (cfp, 128), 1)
            sum_ref[...] = jnp.where(lane == 0, s_col, 0.0)
            sq_ref[...] = jnp.where(lane == 0, q_col, 0.0)

    return kernel


# --------------------------- pallas_call wrappers ---------------------------

def _input_stats(x_pf, t_m, vmem_limit):
    cfp, mp = x_pf.shape
    ntiles = mp // t_m
    return pl.pallas_call(
        _stats_partial_kernel,
        out_shape=(jax.ShapeDtypeStruct((cfp, ntiles * 128), jnp.float32),
                   jax.ShapeDtypeStruct((cfp, ntiles * 128), jnp.float32)),
        grid=(ntiles,),
        in_specs=[pl.BlockSpec((cfp, t_m), lambda i: (0, i))],
        out_specs=(pl.BlockSpec((cfp, 128), lambda i: (0, i)),
                   pl.BlockSpec((cfp, 128), lambda i: (0, i))),
        compiler_params=pltpu.CompilerParams(
            dimension_semantics=("parallel",), vmem_limit_bytes=vmem_limit),
    )(x_pf)


def _finalize_stats(sum_oh, sq_oh, m_true):
    s = jnp.sum(sum_oh, axis=1, keepdims=True)
    q = jnp.sum(sq_oh, axis=1, keepdims=True)
    mean = s / m_true
    var = jnp.maximum(q / m_true - mean * mean, 0.0)  # clamp: E[x^2]-E[x]^2 cancellation
    return mean, lax.rsqrt(var + EPS)


def _spade_layer(p, mean, istd, mask_pf, label_pf, cur, skip_arr, *,
                 ks, t_m, e_blk, h1, wp_row, emit_stats, vmem_limit):
    ks2 = ks * ks
    chp = p["bs"].shape[0]
    clp = label_pf.shape[0]
    n2cf = p["bgb"].shape[0]
    cfp, mp = cur.shape
    ntiles = mp // t_m
    r = t_m // e_blk
    n_e = mp // e_blk

    b2 = lambda i: (0, 0)
    b3 = lambda i: (0, 0, 0)
    mid = lambda i: (0, i)
    left = lambda i: (0, jnp.maximum(i * r - 1, 0))           # clamped halo blocks
    right = lambda i: (0, jnp.minimum((i + 1) * r, n_e - 1))

    in_specs = [
        pl.BlockSpec((ks2, chp, clp), b3),     # shared-conv taps (bf16)
        pl.BlockSpec((chp, 1), b2),            # shared-conv bias
        pl.BlockSpec((ks2, n2cf, chp), b3),    # packed gamma|beta taps (bf16)
        pl.BlockSpec((n2cf, 1), b2),           # packed biases (gamma bias has +1 folded)
        pl.BlockSpec((cfp, 1), b2),            # BN mean
        pl.BlockSpec((cfp, 1), b2),            # BN inv-std
        pl.BlockSpec((1, e_blk), left),        # valid mask: left halo
        pl.BlockSpec((1, t_m), mid),           # valid mask: tile
        pl.BlockSpec((1, e_blk), right),       # valid mask: right halo
        pl.BlockSpec((clp, e_blk), left),      # label: left halo
        pl.BlockSpec((clp, t_m), mid),         # label: tile
        pl.BlockSpec((clp, e_blk), right),     # label: right halo
        pl.BlockSpec((cfp, t_m), mid),         # cur
    ]
    args = [p["ws"], p["bs"], p["wgb"], p["bgb"], mean, istd,
            mask_pf, mask_pf, mask_pf, label_pf, label_pf, label_pf, cur]
    if skip_arr is not None:
        in_specs.append(pl.BlockSpec((cfp, t_m), mid))
        args.append(skip_arr)

    out_shape = [jax.ShapeDtypeStruct((cfp, mp), jnp.float32)]
    out_specs = [pl.BlockSpec((cfp, t_m), mid)]
    if emit_stats:
        out_shape += [jax.ShapeDtypeStruct((cfp, ntiles * 128), jnp.float32)] * 2
        out_specs += [pl.BlockSpec((cfp, 128), mid)] * 2

    kernel = _make_spade_layer_kernel(ks=ks, t_m=t_m, e_blk=e_blk, h1=h1,
                                      wp_row=wp_row,
                                      add_skip=skip_arr is not None,
                                      emit_stats=emit_stats)

    flops = 2 * mp * ks2 * (clp * chp + chp * n2cf) + 10 * mp * cfp
    n_cm = 3 if skip_arr is not None else 2
    bytes_acc = (2 * clp * (mp + 2 * ntiles * e_blk)      # bf16 label (+halos)
                 + 4 * (mp + 2 * ntiles * e_blk)          # f32 mask (+halos)
                 + 4 * cfp * mp * n_cm                    # cur / out / (skip)
                 + (8 * cfp * ntiles * 128 if emit_stats else 0))
    cost = pl.CostEstimate(flops=int(flops), transcendentals=0,
                           bytes_accessed=int(bytes_acc))

    return pl.pallas_call(
        kernel,
        out_shape=tuple(out_shape),
        grid=(ntiles,),
        in_specs=in_specs,
        out_specs=tuple(out_specs),
        compiler_params=pltpu.CompilerParams(
            dimension_semantics=("parallel",), vmem_limit_bytes=vmem_limit),
        cost_estimate=cost,
    )(*args)


# --------------------------------- JAX glue ---------------------------------

def spade_block_forward(feat_nchw, label_nchw, params, *, ks=3, skip=True,
                        tile_m=None):
    """Matches SpadeBlock.forward (blocks_count = len(params)), bf16 GEMM operands."""
    N, Cf, H, W = feat_nchw.shape
    _, Cl, _, _ = label_nchw.shape
    pw = ks // 2
    wp_row, hp = W + 2 * pw, H + 2 * pw
    mp_real = N * hp * wp_row
    m_true = float(N * H * W)

    cfp = _round_up(Cf, 8)
    clp = _round_up(Cl, 8)
    chp = params[0]["bs"].shape[0]
    h1 = pw * (wp_row + 1)                        # max single-conv flat offset
    e_blk = _round_up(max(2 * h1, 1), 128)        # halo block covers both stacked convs

    budget, vmem_limit = _vmem_budget()
    if tile_m is None:
        t_m = _auto_tile_m(mp_real, e_blk, cfp, chp, clp, 3 if skip else 2, budget)
    else:
        t_m = _round_up(max(tile_m, e_blk), e_blk)
    mp = _round_up(mp_real, t_m)                  # pad (and mask) the tail, keep tiling

    feat_pf = _to_padded_flat(feat_nchw.astype(jnp.float32), cfp, pw, mp)
    label_pf = _to_padded_flat(label_nchw.astype(jnp.float32), clp, pw, mp
                               ).astype(jnp.bfloat16)
    mask_pf = _valid_mask(N, H, W, pw, mp)

    # Layer-0 BN stats (later layers get stats fused out of the previous epilogue).
    mean, istd = _finalize_stats(*_input_stats(feat_pf, t_m, vmem_limit), m_true)

    cur = feat_pf
    n_layers = len(params)
    for li, p in enumerate(params):
        last = li == n_layers - 1
        res = _spade_layer(p, mean, istd, mask_pf, label_pf, cur,
                           feat_pf if (skip and last) else None,
                           ks=ks, t_m=t_m, e_blk=e_blk, h1=h1, wp_row=wp_row,
                           emit_stats=not last, vmem_limit=vmem_limit)
        if not last:
            cur, sum_oh, sq_oh = res
            mean, istd = _finalize_stats(sum_oh, sq_oh, m_true)
        else:
            cur = res[0]

    return _from_padded_flat(cur, N, Cf, H, W, pw)


# -------------------- deterministic parameter init ----------------------

def init_params(key, feat_nc, label_nc, hidden_nc, ks, blocks_count):
    cfp = _round_up(feat_nc, 8)
    clp = _round_up(label_nc, 8)
    chp = _round_up(hidden_nc, 8)
    ks2 = ks * ks
    packed, hwio = [], []
    for _ in range(blocks_count):
        key, k1, k2, k3, k4, k5, k6 = jax.random.split(key, 7)
        ws = 0.30 * jax.random.normal(k1, (ks, ks, label_nc, hidden_nc), jnp.float32)
        bs = 0.10 * jax.random.normal(k2, (hidden_nc,), jnp.float32)
        wg = 0.20 * jax.random.normal(k3, (ks, ks, hidden_nc, feat_nc), jnp.float32)
        bg = 0.10 * jax.random.normal(k4, (feat_nc,), jnp.float32)
        wb = 0.20 * jax.random.normal(k5, (ks, ks, hidden_nc, feat_nc), jnp.float32)
        bb = 0.10 * jax.random.normal(k6, (feat_nc,), jnp.float32)
        hwio.append(dict(ws=ws, bs=bs, wg=wg, bg=bg, wb=wb, bb=bb))

        # per-tap (Co_pad, Ci_pad) GEMM weights, channel-padded to sublane granularity
        ws_t = jnp.zeros((ks2, chp, clp), jnp.float32)
        ws_t = ws_t.at[:, :hidden_nc, :label_nc].set(
            jnp.transpose(ws.reshape(ks2, label_nc, hidden_nc), (0, 2, 1)))
        wgb_t = jnp.zeros((ks2, 2 * cfp, chp), jnp.float32)
        wgb_t = wgb_t.at[:, :feat_nc, :hidden_nc].set(
            jnp.transpose(wg.reshape(ks2, hidden_nc, feat_nc), (0, 2, 1)))
        wgb_t = wgb_t.at[:, cfp:cfp + feat_nc, :hidden_nc].set(
            jnp.transpose(wb.reshape(ks2, hidden_nc, feat_nc), (0, 2, 1)))

        bs_c = jnp.zeros((chp, 1), jnp.float32).at[:hidden_nc, 0].set(bs)
        bgb_c = jnp.zeros((2 * cfp, 1), jnp.float32)
        bgb_c = bgb_c.at[:feat_nc, 0].set(bg + 1.0)     # fold "1 + gamma" into the bias
        bgb_c = bgb_c.at[cfp:cfp + feat_nc, 0].set(bb)

        packed.append(dict(ws=ws_t.astype(jnp.bfloat16), bs=bs_c,
                           wgb=wgb_t.astype(jnp.bfloat16), bgb=bgb_c))
    return packed, hwio


# --------------------------- reference (bf16-matched) --------------------------

def _conv_ref(x_nhwc, w_hwio, b):
    wq = w_hwio.astype(jnp.bfloat16).astype(jnp.float32)
    y = lax.conv_general_dilated(
        x_nhwc, wq, window_strides=(1, 1), padding="SAME",
        dimension_numbers=("NHWC", "HWIO", "NHWC"),
        precision=lax.Precision.HIGHEST)
    return y + b.reshape(1, 1, 1, -1)


def spade_block_ref(feat_nchw, label_nchw, params_hwio, skip=True):
    """f32 reference mirroring the kernel's bf16 quantization points.

    bf16 x bf16 products are exact in f32, so this matches the MXU math up to
    summation order plus rare one-ulp differences when re-quantizing `hidden`.
    """
    feat = jnp.transpose(feat_nchw, (0, 2, 3, 1)).astype(jnp.float32)
    label = jnp.transpose(label_nchw, (0, 2, 3, 1)).astype(jnp.float32)
    label_q = label.astype(jnp.bfloat16).astype(jnp.float32)
    cur = feat
    for p in params_hwio:
        hidden = _conv_ref(label_q, p["ws"], p["bs"])
        hidden_q = hidden.astype(jnp.bfloat16).astype(jnp.float32)
        gamma = _conv_ref(hidden_q, p["wg"], p["bg"])
        beta = _conv_ref(hidden_q, p["wb"], p["bb"])
        mean = jnp.mean(cur, axis=(0, 1, 2), keepdims=True)
        var = jnp.mean((cur - mean) ** 2, axis=(0, 1, 2), keepdims=True)
        norm = (cur - mean) / jnp.sqrt(var + EPS)
        cur = jax.nn.relu(norm * (1.0 + gamma) + beta)
    if skip:
        cur = cur + feat
    return jnp.transpose(cur, (0, 3, 1, 2))


# --------------------------------- main ----------------------------------

if __name__ == "__main__":
    feat_nc, label_nc, hidden_nc, ks, blocks = 4, 3, 8, 3, 2
    N, H, W = 2, 16, 16

    key = jax.random.PRNGKey(0)
    kf, kl, kp = jax.random.split(key, 3)
    feat = jax.random.normal(kf, (N, feat_nc, H, W), jnp.float32)
    label = jax.random.normal(kl, (N, label_nc, H, W), jnp.float32)
    params, params_hwio = init_params(kp, feat_nc, label_nc, hidden_nc, ks, blocks)

    # tile_m=256 at this toy size gives a 3-tile grid, exercising clamped halos
    # on both edges and the masked tile-padding tail.
    fwd = jax.jit(functools.partial(spade_block_forward, ks=ks, skip=True, tile_m=256))
    out = jax.block_until_ready(fwd(feat, label, params))
    assert out.shape == (N, feat_nc, H, W)

    ref = spade_block_ref(feat, label, params_hwio, skip=True)
    max_err = float(jnp.max(jnp.abs(out - ref)))
    mean_err = float(jnp.mean(jnp.abs(out - ref)))
    # max tolerance covers rare 1-ulp bf16 re-quantization flips of `hidden`
    # propagating through the second conv; mean must stay tight.
    if max_err > 5e-2 or mean_err > 2e-3:
        raise SystemExit(f"numerical mismatch: max_err={max_err} mean_err={mean_err}")
    print("KERNEL_OK")
</pallas_src>

<mosaic_0001>
module attributes {stable_mosaic.version = 11 : i64} {
  func.func @_stats_partial_kernel(%arg0: i32, %arg1: memref<8x256xf32, #tpu.memory_space<vmem>>, %arg2: memref<8x128xf32, #tpu.memory_space<vmem>>, %arg3: memref<8x128xf32, #tpu.memory_space<vmem>>) attributes {dimension_semantics = [#tpu.dimension_semantics<parallel>], iteration_bounds = array<i64: 3>, scalar_prefetch = 0 : i64, scratch_operands = 0 : i64, tpu.core_type = #tpu.core_type<tc>, window_params = [{transform_indices = @transform_0, window_bounds = array<i64: 8, 256>}, {transform_indices = @transform_1, window_bounds = array<i64: 8, 128>}, {transform_indices = @transform_2, window_bounds = array<i64: 8, 128>}]} {
    %c0 = arith.constant 0 : index
    %c0_0 = arith.constant 0 : index
    %0 = vector.load %arg1[%c0, %c0_0] : memref<8x256xf32, #tpu.memory_space<vmem>>, vector<8x256xf32>
    %cst = arith.constant dense<0.000000e+00> : vector<8xf32>
    %1 = vector.multi_reduction <add>, %0, %cst [1] : vector<8x256xf32> to vector<8xf32>
    %2 = vector.shape_cast %1 : vector<8xf32> to vector<8x1xf32>
    %3 = arith.mulf %0, %0 : vector<8x256xf32>
    %cst_1 = arith.constant dense<0.000000e+00> : vector<8xf32>
    %4 = vector.multi_reduction <add>, %3, %cst_1 [1] : vector<8x256xf32> to vector<8xf32>
    %5 = vector.shape_cast %4 : vector<8xf32> to vector<8x1xf32>
    %6 = tpu.iota {dimensions = array<i32: 1>} : vector<8x128xi32>
    %c0_i32 = arith.constant 0 : i32
    %7 = vector.broadcast %c0_i32 : i32 to vector<8x128xi32>
    %8 = arith.cmpi eq, %6, %7 : vector<8x128xi32>
    %cst_2 = arith.constant 0.000000e+00 : f32
    %9 = vector.shape_cast %2 : vector<8x1xf32> to vector<8x1xf32>
    %10 = vector.broadcast %9 : vector<8x1xf32> to vector<8x128xf32>
    %11 = vector.broadcast %cst_2 : f32 to vector<8x128xf32>
    %12 = arith.select %8, %10, %11 : vector<8x128xi1>, vector<8x128xf32>
    %c0_3 = arith.constant 0 : index
    %c0_4 = arith.constant 0 : index
    %13 = vector.load %arg2[%c0_3, %c0_4] : memref<8x128xf32, #tpu.memory_space<vmem>>, vector<8x128xf32>
    tpu.vector_store %arg2[%c0_3, %c0_4], %12 {strides = array<i32>} : memref<8x128xf32, #tpu.memory_space<vmem>>, vector<8x128xf32>,
    %c0_i32_5 = arith.constant 0 : i32
    %14 = vector.broadcast %c0_i32_5 : i32 to vector<8x128xi32>
    %15 = arith.cmpi eq, %6, %14 : vector<8x128xi32>
    %cst_6 = arith.constant 0.000000e+00 : f32
    %16 = vector.shape_cast %5 : vector<8x1xf32> to vector<8x1xf32>
    %17 = vector.broadcast %16 : vector<8x1xf32> to vector<8x128xf32>
    %18 = vector.broadcast %cst_6 : f32 to vector<8x128xf32>
    %19 = arith.select %15, %17, %18 : vector<8x128xi1>, vector<8x128xf32>
    %c0_7 = arith.constant 0 : index
    %c0_8 = arith.constant 0 : index
    %20 = vector.load %arg3[%c0_7, %c0_8] : memref<8x128xf32, #tpu.memory_space<vmem>>, vector<8x128xf32>
    tpu.vector_store %arg3[%c0_7, %c0_8], %19 {strides = array<i32>} : memref<8x128xf32, #tpu.memory_space<vmem>>, vector<8x128xf32>,
    return
  }
  func.func @transform_0(%arg0: i32) -> (i32, i32) {
    %c0_i32 = arith.constant 0 : i32
    %c0_i32_0 = arith.constant 0 : i32
    return %c0_i32, %arg0 : i32, i32
  }
  func.func @transform_1(%arg0: i32) -> (i32, i32) {
    %c0_i32 = arith.constant 0 : i32
    %c0_i32_0 = arith.constant 0 : i32
    return %c0_i32, %arg0 : i32, i32
  }
  func.func @transform_2(%arg0: i32) -> (i32, i32) {
    %c0_i32 = arith.constant 0 : i32
    %c0_i32_0 = arith.constant 0 : i32
    return %c0_i32, %arg0 : i32, i32
  }
}

module attributes {stable_mosaic.version = 11 : i64} {
  func.func @kernel(%arg0: i32, %arg1: memref<9x8x8xbf16, #tpu.memory_space<vmem>>, %arg2: memref<8x1xf32, #tpu.memory_space<vmem>>, %arg3: memref<9x16x8xbf16, #tpu.memory_space<vmem>>, %arg4: memref<16x1xf32, #tpu.memory_space<vmem>>, %arg5: memref<8x1xf32, #tpu.memory_space<vmem>>, %arg6: memref<8x1xf32, #tpu.memory_space<vmem>>, %arg7: memref<1x128xf32, #tpu.memory_space<vmem>>, %arg8: memref<1x256xf32, #tpu.memory_space<vmem>>, %arg9: memref<1x128xf32, #tpu.memory_space<vmem>>, %arg10: memref<8x128xbf16, #tpu.memory_space<vmem>>, %arg11: memref<8x256xbf16, #tpu.memory_space<vmem>>, %arg12: memref<8x128xbf16, #tpu.memory_space<vmem>>, %arg13: memref<8x256xf32, #tpu.memory_space<vmem>>, %arg14: memref<8x256xf32, #tpu.memory_space<vmem>>, %arg15: memref<8x256xf32, #tpu.memory_space<vmem>>) attributes {dimension_semantics = [#tpu.dimension_semantics<parallel>], iteration_bounds = array<i64: 3>, scalar_prefetch = 0 : i64, scratch_operands = 0 : i64, tpu.core_type = #tpu.core_type<tc>, window_params = [{pipeline_mode = #tpu.pipeline_mode<synchronous>, transform_indices = @transform_0, window_bounds = array<i64: 9, 8, 8>}, {pipeline_mode = #tpu.pipeline_mode<synchronous>, transform_indices = @transform_1, window_bounds = array<i64: 8, 1>}, {pipeline_mode = #tpu.pipeline_mode<synchronous>, transform_indices = @transform_2, window_bounds = array<i64: 9, 16, 8>}, {pipeline_mode = #tpu.pipeline_mode<synchronous>, transform_indices = @transform_3, window_bounds = array<i64: 16, 1>}, {pipeline_mode = #tpu.pipeline_mode<synchronous>, transform_indices = @transform_4, window_bounds = array<i64: 8, 1>}, {pipeline_mode = #tpu.pipeline_mode<synchronous>, transform_indices = @transform_5, window_bounds = array<i64: 8, 1>}, {transform_indices = @transform_6, window_bounds = array<i64: 1, 128>}, {transform_indices = @transform_7, window_bounds = array<i64: 1, 256>}, {transform_indices = @transform_8, window_bounds = array<i64: 1, 128>}, {transform_indices = @transform_9, window_bounds = array<i64: 8, 128>}, {transform_indices = @transform_10, window_bounds = array<i64: 8, 256>}, {transform_indices = @transform_11, window_bounds = array<i64: 8, 128>}, {transform_indices = @transform_12, window_bounds = array<i64: 8, 256>}, {transform_indices = @transform_13, window_bounds = array<i64: 8, 256>}, {transform_indices = @transform_14, window_bounds = array<i64: 8, 256>}]} {
    %c0 = arith.constant 0 : index
    %c0_0 = arith.constant 0 : index
    %0 = vector.load %arg10[%c0, %c0_0] : memref<8x128xbf16, #tpu.memory_space<vmem>>, vector<8x128xbf16>
    %c0_1 = arith.constant 0 : index
    %c0_2 = arith.constant 0 : index
    %1 = vector.load %arg11[%c0_1, %c0_2] : memref<8x256xbf16, #tpu.memory_space<vmem>>, vector<8x256xbf16>
    %c0_3 = arith.constant 0 : index
    %c0_4 = arith.constant 0 : index
    %2 = vector.load %arg12[%c0_3, %c0_4] : memref<8x128xbf16, #tpu.memory_space<vmem>>, vector<8x128xbf16>
    %3 = tpu.concatenate %0, %1, %2 in 1 : vector<8x128xbf16>, vector<8x256xbf16>, vector<8x128xbf16> -> vector<8x512xbf16>
    %c0_5 = arith.constant 0 : index
    %c0_6 = arith.constant 0 : index
    %4 = vector.load %arg7[%c0_5, %c0_6] : memref<1x128xf32, #tpu.memory_space<vmem>>, vector<1x128xf32>
    %c0_7 = arith.constant 0 : index
    %c0_8 = arith.constant 0 : index
    %5 = vector.load %arg8[%c0_7, %c0_8] : memref<1x256xf32, #tpu.memory_space<vmem>>, vector<1x256xf32>
    %c0_9 = arith.constant 0 : index
    %c0_10 = arith.constant 0 : index
    %6 = vector.load %arg9[%c0_9, %c0_10] : memref<1x128xf32, #tpu.memory_space<vmem>>, vector<1x128xf32>
    %7 = tpu.concatenate %4, %5, %6 in 1 : vector<1x128xf32>, vector<1x256xf32>, vector<1x128xf32> -> vector<1x512xf32>
    %cst = arith.constant 0.000000e+00 : f32
    %8 = vector.broadcast %cst : f32 to vector<8x294xf32>
    %c0_11 = arith.constant 0 : index
    %c0_12 = arith.constant 0 : index
    %c0_13 = arith.constant 0 : index
    %9 = vector.load %arg1[%c0_11, %c0_12, %c0_13] : memref<9x8x8xbf16, #tpu.memory_space<vmem>>, vector<1x8x8xbf16>
    %10 = vector.shape_cast %9 : vector<1x8x8xbf16> to vector<8x8xbf16>
    %11 = vector.extract_strided_slice %3 {offsets = [0, 90], sizes = [8, 294], strides = [1, 1]} : vector<8x512xbf16> to vector<8x294xbf16>
    %cst_14 = arith.constant dense<0.000000e+00> : vector<8x294xf32>
    %12 = tpu.matmul %10, %11, %cst_14 {dimension_numbers = #tpu.dot_dimension_numbers<[1], [0], [0], [1], [0, 0, 1, 1], [], []>} : vector<8x8xbf16>, vector<8x294xbf16>, vector<8x294xf32> -> vector<8x294xf32>
    %13 = arith.addf %8, %12 : vector<8x294xf32>
    %c1 = arith.constant 1 : index
    %c0_15 = arith.constant 0 : index
    %c0_16 = arith.constant 0 : index
    %14 = vector.load %arg1[%c1, %c0_15, %c0_16] : memref<9x8x8xbf16, #tpu.memory_space<vmem>>, vector<1x8x8xbf16>
    %15 = vector.shape_cast %14 : vector<1x8x8xbf16> to vector<8x8xbf16>
    %16 = vector.extract_strided_slice %3 {offsets = [0, 91], sizes = [8, 294], strides = [1, 1]} : vector<8x512xbf16> to vector<8x294xbf16>
    %cst_17 = arith.constant dense<0.000000e+00> : vector<8x294xf32>
    %17 = tpu.matmul %15, %16, %cst_17 {dimension_numbers = #tpu.dot_dimension_numbers<[1], [0], [0], [1], [0, 0, 1, 1], [], []>} : vector<8x8xbf16>, vector<8x294xbf16>, vector<8x294xf32> -> vector<8x294xf32>
    %18 = arith.addf %13, %17 : vector<8x294xf32>
    %c2 = arith.constant 2 : index
    %c0_18 = arith.constant 0 : index
    %c0_19 = arith.constant 0 : index
    %19 = vector.load %arg1[%c2, %c0_18, %c0_19] : memref<9x8x8xbf16, #tpu.memory_space<vmem>>, vector<1x8x8xbf16>
    %20 = vector.shape_cast %19 : vector<1x8x8xbf16> to vector<8x8xbf16>
    %21 = vector.extract_strided_slice %3 {offsets = [0, 92], sizes = [8, 294], strides = [1, 1]} : vector<8x512xbf16> to vector<8x294xbf16>
    %cst_20 = arith.constant dense<0.000000e+00> : vector<8x294xf32>
    %22 = tpu.matmul %20, %21, %cst_20 {dimension_numbers = #tpu.dot_dimension_numbers<[1], [0], [0], [1], [0, 0, 1, 1], [], []>} : vector<8x8xbf16>, vector<8x294xbf16>, vector<8x294xf32> -> vector<8x294xf32>
    %23 = arith.addf %18, %22 : vector<8x294xf32>
    %c3 = arith.constant 3 : index
    %c0_21 = arith.constant 0 : index
    %c0_22 = arith.constant 0 : index
    %24 = vector.load %arg1[%c3, %c0_21, %c0_22] : memref<9x8x8xbf16, #tpu.memory_space<vmem>>, vector<1x8x8xbf16>
    %25 = vector.shape_cast %24 : vector<1x8x8xbf16> to vector<8x8xbf16>
    %26 = vector.extract_strided_slice %3 {offsets = [0, 108], sizes = [8, 294], strides = [1, 1]} : vector<8x512xbf16> to vector<8x294xbf16>
    %cst_23 = arith.constant dense<0.000000e+00> : vector<8x294xf32>
    %27 = tpu.matmul %25, %26, %cst_23 {dimension_numbers = #tpu.dot_dimension_numbers<[1], [0], [0], [1], [0, 0, 1, 1], [], []>} : vector<8x8xbf16>, vector<8x294xbf16>, vector<8x294xf32> -> vector<8x294xf32>
    %28 = arith.addf %23, %27 : vector<8x294xf32>
    %c4 = arith.constant 4 : index
    %c0_24 = arith.constant 0 : index
    %c0_25 = arith.constant 0 : index
    %29 = vector.load %arg1[%c4, %c0_24, %c0_25] : memref<9x8x8xbf16, #tpu.memory_space<vmem>>, vector<1x8x8xbf16>
    %30 = vector.shape_cast %29 : vector<1x8x8xbf16> to vector<8x8xbf16>
    %31 = vector.extract_strided_slice %3 {offsets = [0, 109], sizes = [8, 294], strides = [1, 1]} : vector<8x512xbf16> to vector<8x294xbf16>
    %cst_26 = arith.constant dense<0.000000e+00> : vector<8x294xf32>
    %32 = tpu.matmul %30, %31, %cst_26 {dimension_numbers = #tpu.dot_dimension_numbers<[1], [0], [0], [1], [0, 0, 1, 1], [], []>} : vector<8x8xbf16>, vector<8x294xbf16>, vector<8x294xf32> -> vector<8x294xf32>
    %33 = arith.addf %28, %32 : vector<8x294xf32>
    %c5 = arith.constant 5 : index
    %c0_27 = arith.constant 0 : index
    %c0_28 = arith.constant 0 : index
    %34 = vector.load %arg1[%c5, %c0_27, %c0_28] : memref<9x8x8xbf16, #tpu.memory_space<vmem>>, vector<1x8x8xbf16>
    %35 = vector.shape_cast %34 : vector<1x8x8xbf16> to vector<8x8xbf16>
    %36 = vector.extract_strided_slice %3 {offsets = [0, 110], sizes = [8, 294], strides = [1, 1]} : vector<8x512xbf16> to vector<8x294xbf16>
    %cst_29 = arith.constant dense<0.000000e+00> : vector<8x294xf32>
    %37 = tpu.matmul %35, %36, %cst_29 {dimension_numbers = #tpu.dot_dimension_numbers<[1], [0], [0], [1], [0, 0, 1, 1], [], []>} : vector<8x8xbf16>, vector<8x294xbf16>, vector<8x294xf32> -> vector<8x294xf32>
    %38 = arith.addf %33, %37 : vector<8x294xf32>
    %c6 = arith.constant 6 : index
    %c0_30 = arith.constant 0 : index
    %c0_31 = arith.constant 0 : index
    %39 = vector.load %arg1[%c6, %c0_30, %c0_31] : memref<9x8x8xbf16, #tpu.memory_space<vmem>>, vector<1x8x8xbf16>
    %40 = vector.shape_cast %39 : vector<1x8x8xbf16> to vector<8x8xbf16>
    %41 = vector.extract_strided_slice %3 {offsets = [0, 126], sizes = [8, 294], strides = [1, 1]} : vector<8x512xbf16> to vector<8x294xbf16>
    %cst_32 = arith.constant dense<0.000000e+00> : vector<8x294xf32>
    %42 = tpu.matmul %40, %41, %cst_32 {dimension_numbers = #tpu.dot_dimension_numbers<[1], [0], [0], [1], [0, 0, 1, 1], [], []>} : vector<8x8xbf16>, vector<8x294xbf16>, vector<8x294xf32> -> vector<8x294xf32>
    %43 = arith.addf %38, %42 : vector<8x294xf32>
    %c7 = arith.constant 7 : index
    %c0_33 = arith.constant 0 : index
    %c0_34 = arith.constant 0 : index
    %44 = vector.load %arg1[%c7, %c0_33, %c0_34] : memref<9x8x8xbf16, #tpu.memory_space<vmem>>, vector<1x8x8xbf16>
    %45 = vector.shape_cast %44 : vector<1x8x8xbf16> to vector<8x8xbf16>
    %46 = vector.extract_strided_slice %3 {offsets = [0, 127], sizes = [8, 294], strides = [1, 1]} : vector<8x512xbf16> to vector<8x294xbf16>
    %cst_35 = arith.constant dense<0.000000e+00> : vector<8x294xf32>
    %47 = tpu.matmul %45, %46, %cst_35 {dimension_numbers = #tpu.dot_dimension_numbers<[1], [0], [0], [1], [0, 0, 1, 1], [], []>} : vector<8x8xbf16>, vector<8x294xbf16>, vector<8x294xf32> -> vector<8x294xf32>
    %48 = arith.addf %43, %47 : vector<8x294xf32>
    %c8 = arith.constant 8 : index
    %c0_36 = arith.constant 0 : index
    %c0_37 = arith.constant 0 : index
    %49 = vector.load %arg1[%c8, %c0_36, %c0_37] : memref<9x8x8xbf16, #tpu.memory_space<vmem>>, vector<1x8x8xbf16>
    %50 = vector.shape_cast %49 : vector<1x8x8xbf16> to vector<8x8xbf16>
    %51 = vector.extract_strided_slice %3 {offsets = [0, 128], sizes = [8, 294], strides = [1, 1]} : vector<8x512xbf16> to vector<8x294xbf16>
    %cst_38 = arith.constant dense<0.000000e+00> : vector<8x294xf32>
    %52 = tpu.matmul %50, %51, %cst_38 {dimension_numbers = #tpu.dot_dimension_numbers<[1], [0], [0], [1], [0, 0, 1, 1], [], []>} : vector<8x8xbf16>, vector<8x294xbf16>, vector<8x294xf32> -> vector<8x294xf32>
    %53 = arith.addf %48, %52 : vector<8x294xf32>
    %c0_39 = arith.constant 0 : index
    %c0_40 = arith.constant 0 : index
    %54 = vector.load %arg2[%c0_39, %c0_40] : memref<8x1xf32, #tpu.memory_space<vmem>>, vector<8x1xf32>
    %55 = vector.broadcast %54 : vector<8x1xf32> to vector<8x294xf32>
    %56 = arith.addf %53, %55 : vector<8x294xf32>
    %57 = vector.extract_strided_slice %7 {offsets = [0, 109], sizes = [1, 294], strides = [1, 1]} : vector<1x512xf32> to vector<1x294xf32>
    %58 = vector.broadcast %57 : vector<1x294xf32> to vector<8x294xf32>
    %59 = arith.mulf %56, %58 : vector<8x294xf32>
    %60 = arith.truncf %59 : vector<8x294xf32> to vector<8x294xbf16>
    %cst_41 = arith.constant 0.000000e+00 : f32
    %61 = vector.broadcast %cst_41 : f32 to vector<16x256xf32>
    %c0_42 = arith.constant 0 : index
    %c0_43 = arith.constant 0 : index
    %c0_44 = arith.constant 0 : index
    %62 = vector.load %arg3[%c0_42, %c0_43, %c0_44] : memref<9x16x8xbf16, #tpu.memory_space<vmem>>, vector<1x16x8xbf16>
    %63 = vector.shape_cast %62 : vector<1x16x8xbf16> to vector<16x8xbf16>
    %64 = vector.extract_strided_slice %60 {offsets = [0, 0], sizes = [8, 256], strides = [1, 1]} : vector<8x294xbf16> to vector<8x256xbf16>
    %cst_45 = arith.constant dense<0.000000e+00> : vector<16x256xf32>
    %65 = tpu.matmul %63, %64, %cst_45 {dimension_numbers = #tpu.dot_dimension_numbers<[1], [0], [0], [1], [0, 0, 1, 1], [], []>} : vector<16x8xbf16>, vector<8x256xbf16>, vector<16x256xf32> -> vector<16x256xf32>
    %66 = arith.addf %61, %65 : vector<16x256xf32>
    %c1_46 = arith.constant 1 : index
    %c0_47 = arith.constant 0 : index
    %c0_48 = arith.constant 0 : index
    %67 = vector.load %arg3[%c1_46, %c0_47, %c0_48] : memref<9x16x8xbf16, #tpu.memory_space<vmem>>, vector<1x16x8xbf16>
    %68 = vector.shape_cast %67 : vector<1x16x8xbf16> to vector<16x8xbf16>
    %69 = vector.extract_strided_slice %60 {offsets = [0, 1], sizes = [8, 256], strides = [1, 1]} : vector<8x294xbf16> to vector<8x256xbf16>
    %cst_49 = arith.constant dense<0.000000e+00> : vector<16x256xf32>
    %70 = tpu.matmul %68, %69, %cst_49 {dimension_numbers = #tpu.dot_dimension_numbers<[1], [0], [0], [1], [0, 0, 1, 1], [], []>} : vector<16x8xbf16>, vector<8x256xbf16>, vector<16x256xf32> -> vector<16x256xf32>
    %71 = arith.addf %66, %70 : vector<16x256xf32>
    %c2_50 = arith.constant 2 : index
    %c0_51 = arith.constant 0 : index
    %c0_52 = arith.constant 0 : index
    %72 = vector.load %arg3[%c2_50, %c0_51, %c0_52] : memref<9x16x8xbf16, #tpu.memory_space<vmem>>, vector<1x16x8xbf16>
    %73 = vector.shape_cast %72 : vector<1x16x8xbf16> to vector<16x8xbf16>
    %74 = vector.extract_strided_slice %60 {offsets = [0, 2], sizes = [8, 256], strides = [1, 1]} : vector<8x294xbf16> to vector<8x256xbf16>
    %cst_53 = arith.constant dense<0.000000e+00> : vector<16x256xf32>
    %75 = tpu.matmul %73, %74, %cst_53 {dimension_numbers = #tpu.dot_dimension_numbers<[1], [0], [0], [1], [0, 0, 1, 1], [], []>} : vector<16x8xbf16>, vector<8x256xbf16>, vector<16x256xf32> -> vector<16x256xf32>
    %76 = arith.addf %71, %75 : vector<16x256xf32>
    %c3_54 = arith.constant 3 : index
    %c0_55 = arith.constant 0 : index
    %c0_56 = arith.constant 0 : index
    %77 = vector.load %arg3[%c3_54, %c0_55, %c0_56] : memref<9x16x8xbf16, #tpu.memory_space<vmem>>, vector<1x16x8xbf16>
    %78 = vector.shape_cast %77 : vector<1x16x8xbf16> to vector<16x8xbf16>
    %79 = vector.extract_strided_slice %60 {offsets = [0, 18], sizes = [8, 256], strides = [1, 1]} : vector<8x294xbf16> to vector<8x256xbf16>
    %cst_57 = arith.constant dense<0.000000e+00> : vector<16x256xf32>
    %80 = tpu.matmul %78, %79, %cst_57 {dimension_numbers = #tpu.dot_dimension_numbers<[1], [0], [0], [1], [0, 0, 1, 1], [], []>} : vector<16x8xbf16>, vector<8x256xbf16>, vector<16x256xf32> -> vector<16x256xf32>
    %81 = arith.addf %76, %80 : vector<16x256xf32>
    %c4_58 = arith.constant 4 : index
    %c0_59 = arith.constant 0 : index
    %c0_60 = arith.constant 0 : index
    %82 = vector.load %arg3[%c4_58, %c0_59, %c0_60] : memref<9x16x8xbf16, #tpu.memory_space<vmem>>, vector<1x16x8xbf16>
    %83 = vector.shape_cast %82 : vector<1x16x8xbf16> to vector<16x8xbf16>
    %84 = vector.extract_strided_slice %60 {offsets = [0, 19], sizes = [8, 256], strides = [1, 1]} : vector<8x294xbf16> to vector<8x256xbf16>
    %cst_61 = arith.constant dense<0.000000e+00> : vector<16x256xf32>
    %85 = tpu.matmul %83, %84, %cst_61 {dimension_numbers = #tpu.dot_dimension_numbers<[1], [0], [0], [1], [0, 0, 1, 1], [], []>} : vector<16x8xbf16>, vector<8x256xbf16>, vector<16x256xf32> -> vector<16x256xf32>
    %86 = arith.addf %81, %85 : vector<16x256xf32>
    %c5_62 = arith.constant 5 : index
    %c0_63 = arith.constant 0 : index
    %c0_64 = arith.constant 0 : index
    %87 = vector.load %arg3[%c5_62, %c0_63, %c0_64] : memref<9x16x8xbf16, #tpu.memory_space<vmem>>, vector<1x16x8xbf16>
    %88 = vector.shape_cast %87 : vector<1x16x8xbf16> to vector<16x8xbf16>
    %89 = vector.extract_strided_slice %60 {offsets = [0, 20], sizes = [8, 256], strides = [1, 1]} : vector<8x294xbf16> to vector<8x256xbf16>
    %cst_65 = arith.constant dense<0.000000e+00> : vector<16x256xf32>
    %90 = tpu.matmul %88, %89, %cst_65 {dimension_numbers = #tpu.dot_dimension_numbers<[1], [0], [0], [1], [0, 0, 1, 1], [], []>} : vector<16x8xbf16>, vector<8x256xbf16>, vector<16x256xf32> -> vector<16x256xf32>
    %91 = arith.addf %86, %90 : vector<16x256xf32>
    %c6_66 = arith.constant 6 : index
    %c0_67 = arith.constant 0 : index
    %c0_68 = arith.constant 0 : index
    %92 = vector.load %arg3[%c6_66, %c0_67, %c0_68] : memref<9x16x8xbf16, #tpu.memory_space<vmem>>, vector<1x16x8xbf16>
    %93 = vector.shape_cast %92 : vector<1x16x8xbf16> to vector<16x8xbf16>
    %94 = vector.extract_strided_slice %60 {offsets = [0, 36], sizes = [8, 256], strides = [1, 1]} : vector<8x294xbf16> to vector<8x256xbf16>
    %cst_69 = arith.constant dense<0.000000e+00> : vector<16x256xf32>
    %95 = tpu.matmul %93, %94, %cst_69 {dimension_numbers = #tpu.dot_dimension_numbers<[1], [0], [0], [1], [0, 0, 1, 1], [], []>} : vector<16x8xbf16>, vector<8x256xbf16>, vector<16x256xf32> -> vector<16x256xf32>
    %96 = arith.addf %91, %95 : vector<16x256xf32>
    %c7_70 = arith.constant 7 : index
    %c0_71 = arith.constant 0 : index
    %c0_72 = arith.constant 0 : index
    %97 = vector.load %arg3[%c7_70, %c0_71, %c0_72] : memref<9x16x8xbf16, #tpu.memory_space<vmem>>, vector<1x16x8xbf16>
    %98 = vector.shape_cast %97 : vector<1x16x8xbf16> to vector<16x8xbf16>
    %99 = vector.extract_strided_slice %60 {offsets = [0, 37], sizes = [8, 256], strides = [1, 1]} : vector<8x294xbf16> to vector<8x256xbf16>
    %cst_73 = arith.constant dense<0.000000e+00> : vector<16x256xf32>
    %100 = tpu.matmul %98, %99, %cst_73 {dimension_numbers = #tpu.dot_dimension_numbers<[1], [0], [0], [1], [0, 0, 1, 1], [], []>} : vector<16x8xbf16>, vector<8x256xbf16>, vector<16x256xf32> -> vector<16x256xf32>
    %101 = arith.addf %96, %100 : vector<16x256xf32>
    %c8_74 = arith.constant 8 : index
    %c0_75 = arith.constant 0 : index
    %c0_76 = arith.constant 0 : index
    %102 = vector.load %arg3[%c8_74, %c0_75, %c0_76] : memref<9x16x8xbf16, #tpu.memory_space<vmem>>, vector<1x16x8xbf16>
    %103 = vector.shape_cast %102 : vector<1x16x8xbf16> to vector<16x8xbf16>
    %104 = vector.extract_strided_slice %60 {offsets = [0, 38], sizes = [8, 256], strides = [1, 1]} : vector<8x294xbf16> to vector<8x256xbf16>
    %cst_77 = arith.constant dense<0.000000e+00> : vector<16x256xf32>
    %105 = tpu.matmul %103, %104, %cst_77 {dimension_numbers = #tpu.dot_dimension_numbers<[1], [0], [0], [1], [0, 0, 1, 1], [], []>} : vector<16x8xbf16>, vector<8x256xbf16>, vector<16x256xf32> -> vector<16x256xf32>
    %106 = arith.addf %101, %105 : vector<16x256xf32>
    %c0_78 = arith.constant 0 : index
    %c0_79 = arith.constant 0 : index
    %107 = vector.load %arg4[%c0_78, %c0_79] : memref<16x1xf32, #tpu.memory_space<vmem>>, vector<16x1xf32>
    %108 = vector.broadcast %107 : vector<16x1xf32> to vector<16x256xf32>
    %109 = arith.addf %106, %108 : vector<16x256xf32>
    %110 = vector.extract_strided_slice %109 {offsets = [0, 0], sizes = [8, 256], strides = [1, 1]} : vector<16x256xf32> to vector<8x256xf32>
    %111 = vector.extract_strided_slice %109 {offsets = [8, 0], sizes = [8, 256], strides = [1, 1]} : vector<16x256xf32> to vector<8x256xf32>
    %c0_80 = arith.constant 0 : index
    %c0_81 = arith.constant 0 : index
    %112 = vector.load %arg13[%c0_80, %c0_81] : memref<8x256xf32, #tpu.memory_space<vmem>>, vector<8x256xf32>
    %c0_82 = arith.constant 0 : index
    %c0_83 = arith.constant 0 : index
    %113 = vector.load %arg5[%c0_82, %c0_83] : memref<8x1xf32, #tpu.memory_space<vmem>>, vector<8x1xf32>
    %114 = vector.broadcast %113 : vector<8x1xf32> to vector<8x256xf32>
    %115 = arith.subf %112, %114 : vector<8x256xf32>
    %c0_84 = arith.constant 0 : index
    %c0_85 = arith.constant 0 : index
    %116 = vector.load %arg6[%c0_84, %c0_85] : memref<8x1xf32, #tpu.memory_space<vmem>>, vector<8x1xf32>
    %117 = vector.broadcast %116 : vector<8x1xf32> to vector<8x256xf32>
    %118 = arith.mulf %115, %117 : vector<8x256xf32>
    %119 = arith.mulf %118, %110 : vector<8x256xf32>
    %120 = arith.addf %119, %111 : vector<8x256xf32>
    %cst_86 = arith.constant 0.000000e+00 : f32
    %121 = vector.broadcast %cst_86 : f32 to vector<8x256xf32>
    %122 = arith.maximumf %120, %121 : vector<8x256xf32>
    %c0_87 = arith.constant 0 : index
    %c0_88 = arith.constant 0 : index
    %123 = vector.load %arg14[%c0_87, %c0_88] : memref<8x256xf32, #tpu.memory_space<vmem>>, vector<8x256xf32>
    %124 = arith.addf %122, %123 : vector<8x256xf32>
    %c0_89 = arith.constant 0 : index
    %c0_90 = arith.constant 0 : index
    %125 = vector.load %arg15[%c0_89, %c0_90] : memref<8x256xf32, #tpu.memory_space<vmem>>, vector<8x256xf32>
    tpu.vector_store %arg15[%c0_89, %c0_90], %124 {strides = array<i32>} : memref<8x256xf32, #tpu.memory_space<vmem>>, vector<8x256xf32>,
    return
  }
  func.func @transform_0(%arg0: i32) -> (i32, i32, i32) {
    %c0_i32 = arith.constant 0 : i32
    %c0_i32_0 = arith.constant 0 : i32
    %c0_i32_1 = arith.constant 0 : i32
    %c0_i32_2 = arith.constant 0 : i32
    return %c0_i32, %c0_i32_0, %c0_i32_1 : i32, i32, i32
  }
  func.func @transform_1(%arg0: i32) -> (i32, i32) {
    %c0_i32 = arith.constant 0 : i32
    %c0_i32_0 = arith.constant 0 : i32
    %c0_i32_1 = arith.constant 0 : i32
    return %c0_i32, %c0_i32_0 : i32, i32
  }
  func.func @transform_2(%arg0: i32) -> (i32, i32, i32) {
    %c0_i32 = arith.constant 0 : i32
    %c0_i32_0 = arith.constant 0 : i32
    %c0_i32_1 = arith.constant 0 : i32
    %c0_i32_2 = arith.constant 0 : i32
    return %c0_i32, %c0_i32_0, %c0_i32_1 : i32, i32, i32
  }
  func.func @transform_3(%arg0: i32) -> (i32, i32) {
    %c0_i32 = arith.constant 0 : i32
    %c0_i32_0 = arith.constant 0 : i32
    %c0_i32_1 = arith.constant 0 : i32
    return %c0_i32, %c0_i32_0 : i32, i32
  }
  func.func @transform_4(%arg0: i32) -> (i32, i32) {
    %c0_i32 = arith.constant 0 : i32
    %c0_i32_0 = arith.constant 0 : i32
    %c0_i32_1 = arith.constant 0 : i32
    return %c0_i32, %c0_i32_0 : i32, i32
  }
  func.func @transform_5(%arg0: i32) -> (i32, i32) {
    %c0_i32 = arith.constant 0 : i32
    %c0_i32_0 = arith.constant 0 : i32
    %c0_i32_1 = arith.constant 0 : i32
    return %c0_i32, %c0_i32_0 : i32, i32
  }
  func.func @transform_6(%arg0: i32) -> (i32, i32) {
    %c2_i32 = arith.constant 2 : i32
    %0 = arith.muli %arg0, %c2_i32 : i32
    %c1_i32 = arith.constant 1 : i32
    %1 = arith.subi %0, %c1_i32 : i32
    %c0_i32 = arith.constant 0 : i32
    %2 = arith.maxsi %1, %c0_i32 : i32
    %c0_i32_0 = arith.constant 0 : i32
    %c0_i32_1 = arith.constant 0 : i32
    return %c0_i32_0, %2 : i32, i32
  }
  func.func @transform_7(%arg0: i32) -> (i32, i32) {
    %c0_i32 = arith.constant 0 : i32
    %c0_i32_0 = arith.constant 0 : i32
    return %c0_i32, %arg0 : i32, i32
  }
  func.func @transform_8(%arg0: i32) -> (i32, i32) {
    %c1_i32 = arith.constant 1 : i32
    %0 = arith.addi %arg0, %c1_i32 : i32
    %c2_i32 = arith.constant 2 : i32
    %1 = arith.muli %0, %c2_i32 : i32
    %c5_i32 = arith.constant 5 : i32
    %2 = arith.minsi %1, %c5_i32 : i32
    %c0_i32 = arith.constant 0 : i32
    %c0_i32_0 = arith.constant 0 : i32
    return %c0_i32, %2 : i32, i32
  }
  func.func @transform_9(%arg0: i32) -> (i32, i32) {
    %c2_i32 = arith.constant 2 : i32
    %0 = arith.muli %arg0, %c2_i32 : i32
    %c1_i32 = arith.constant 1 : i32
    %1 = arith.subi %0, %c1_i32 : i32
    %c0_i32 = arith.constant 0 : i32
    %2 = arith.maxsi %1, %c0_i32 : i32
    %c0_i32_0 = arith.constant 0 : i32
    %c0_i32_1 = arith.constant 0 : i32
    return %c0_i32_0, %2 : i32, i32
  }
  func.func @transform_10(%arg0: i32) -> (i32, i32) {
    %c0_i32 = arith.constant 0 : i32
    %c0_i32_0 = arith.constant 0 : i32
    return %c0_i32, %arg0 : i32, i32
  }
  func.func @transform_11(%arg0: i32) -> (i32, i32) {
    %c1_i32 = arith.constant 1 : i32
    %0 = arith.addi %arg0, %c1_i32 : i32
    %c2_i32 = arith.constant 2 : i32
    %1 = arith.muli %0, %c2_i32 : i32
    %c5_i32 = arith.constant 5 : i32
    %2 = arith.minsi %1, %c5_i32 : i32
    %c0_i32 = arith.constant 0 : i32
    %c0_i32_0 = arith.constant 0 : i32
    return %c0_i32, %2 : i32, i32
  }
  func.func @transform_12(%arg0: i32) -> (i32, i32) {
    %c0_i32 = arith.constant 0 : i32
    %c0_i32_0 = arith.constant 0 : i32
    return %c0_i32, %arg0 : i32, i32
  }
  func.func @transform_13(%arg0: i32) -> (i32, i32) {
    %c0_i32 = arith.constant 0 : i32
    %c0_i32_0 = arith.constant 0 : i32
    return %c0_i32, %arg0 : i32, i32
  }
  func.func @transform_14(%arg0: i32) -> (i32, i32) {
    %c0_i32 = arith.constant 0 : i32
    %c0_i32_0 = arith.constant 0 : i32
    return %c0_i32, %arg0 : i32, i32
  }
}

module attributes {stable_mosaic.version = 11 : i64} {
  func.func @kernel(%arg0: i32, %arg1: memref<9x8x8xbf16, #tpu.memory_space<vmem>>, %arg2: memref<8x1xf32, #tpu.memory_space<vmem>>, %arg3: memref<9x16x8xbf16, #tpu.memory_space<vmem>>, %arg4: memref<16x1xf32, #tpu.memory_space<vmem>>, %arg5: memref<8x1xf32, #tpu.memory_space<vmem>>, %arg6: memref<8x1xf32, #tpu.memory_space<vmem>>, %arg7: memref<1x128xf32, #tpu.memory_space<vmem>>, %arg8: memref<1x256xf32, #tpu.memory_space<vmem>>, %arg9: memref<1x128xf32, #tpu.memory_space<vmem>>, %arg10: memref<8x128xbf16, #tpu.memory_space<vmem>>, %arg11: memref<8x256xbf16, #tpu.memory_space<vmem>>, %arg12: memref<8x128xbf16, #tpu.memory_space<vmem>>, %arg13: memref<8x256xf32, #tpu.memory_space<vmem>>, %arg14: memref<8x256xf32, #tpu.memory_space<vmem>>, %arg15: memref<8x128xf32, #tpu.memory_space<vmem>>, %arg16: memref<8x128xf32, #tpu.memory_space<vmem>>) attributes {dimension_semantics = [#tpu.dimension_semantics<parallel>], iteration_bounds = array<i64: 3>, scalar_prefetch = 0 : i64, scratch_operands = 0 : i64, tpu.core_type = #tpu.core_type<tc>, window_params = [{pipeline_mode = #tpu.pipeline_mode<synchronous>, transform_indices = @transform_0, window_bounds = array<i64: 9, 8, 8>}, {pipeline_mode = #tpu.pipeline_mode<synchronous>, transform_indices = @transform_1, window_bounds = array<i64: 8, 1>}, {pipeline_mode = #tpu.pipeline_mode<synchronous>, transform_indices = @transform_2, window_bounds = array<i64: 9, 16, 8>}, {pipeline_mode = #tpu.pipeline_mode<synchronous>, transform_indices = @transform_3, window_bounds = array<i64: 16, 1>}, {pipeline_mode = #tpu.pipeline_mode<synchronous>, transform_indices = @transform_4, window_bounds = array<i64: 8, 1>}, {pipeline_mode = #tpu.pipeline_mode<synchronous>, transform_indices = @transform_5, window_bounds = array<i64: 8, 1>}, {transform_indices = @transform_6, window_bounds = array<i64: 1, 128>}, {transform_indices = @transform_7, window_bounds = array<i64: 1, 256>}, {transform_indices = @transform_8, window_bounds = array<i64: 1, 128>}, {transform_indices = @transform_9, window_bounds = array<i64: 8, 128>}, {transform_indices = @transform_10, window_bounds = array<i64: 8, 256>}, {transform_indices = @transform_11, window_bounds = array<i64: 8, 128>}, {transform_indices = @transform_12, window_bounds = array<i64: 8, 256>}, {transform_indices = @transform_13, window_bounds = array<i64: 8, 256>}, {transform_indices = @transform_14, window_bounds = array<i64: 8, 128>}, {transform_indices = @transform_15, window_bounds = array<i64: 8, 128>}]} {
    %c0 = arith.constant 0 : index
    %c0_0 = arith.constant 0 : index
    %0 = vector.load %arg10[%c0, %c0_0] : memref<8x128xbf16, #tpu.memory_space<vmem>>, vector<8x128xbf16>
    %c0_1 = arith.constant 0 : index
    %c0_2 = arith.constant 0 : index
    %1 = vector.load %arg11[%c0_1, %c0_2] : memref<8x256xbf16, #tpu.memory_space<vmem>>, vector<8x256xbf16>
    %c0_3 = arith.constant 0 : index
    %c0_4 = arith.constant 0 : index
    %2 = vector.load %arg12[%c0_3, %c0_4] : memref<8x128xbf16, #tpu.memory_space<vmem>>, vector<8x128xbf16>
    %3 = tpu.concatenate %0, %1, %2 in 1 : vector<8x128xbf16>, vector<8x256xbf16>, vector<8x128xbf16> -> vector<8x512xbf16>
    %c0_5 = arith.constant 0 : index
    %c0_6 = arith.constant 0 : index
    %4 = vector.load %arg7[%c0_5, %c0_6] : memref<1x128xf32, #tpu.memory_space<vmem>>, vector<1x128xf32>
    %c0_7 = arith.constant 0 : index
    %c0_8 = arith.constant 0 : index
    %5 = vector.load %arg8[%c0_7, %c0_8] : memref<1x256xf32, #tpu.memory_space<vmem>>, vector<1x256xf32>
    %c0_9 = arith.constant 0 : index
    %c0_10 = arith.constant 0 : index
    %6 = vector.load %arg9[%c0_9, %c0_10] : memref<1x128xf32, #tpu.memory_space<vmem>>, vector<1x128xf32>
    %7 = tpu.concatenate %4, %5, %6 in 1 : vector<1x128xf32>, vector<1x256xf32>, vector<1x128xf32> -> vector<1x512xf32>
    %cst = arith.constant 0.000000e+00 : f32
    %8 = vector.broadcast %cst : f32 to vector<8x294xf32>
    %c0_11 = arith.constant 0 : index
    %c0_12 = arith.constant 0 : index
    %c0_13 = arith.constant 0 : index
    %9 = vector.load %arg1[%c0_11, %c0_12, %c0_13] : memref<9x8x8xbf16, #tpu.memory_space<vmem>>, vector<1x8x8xbf16>
    %10 = vector.shape_cast %9 : vector<1x8x8xbf16> to vector<8x8xbf16>
    %11 = vector.extract_strided_slice %3 {offsets = [0, 90], sizes = [8, 294], strides = [1, 1]} : vector<8x512xbf16> to vector<8x294xbf16>
    %cst_14 = arith.constant dense<0.000000e+00> : vector<8x294xf32>
    %12 = tpu.matmul %10, %11, %cst_14 {dimension_numbers = #tpu.dot_dimension_numbers<[1], [0], [0], [1], [0, 0, 1, 1], [], []>} : vector<8x8xbf16>, vector<8x294xbf16>, vector<8x294xf32> -> vector<8x294xf32>
    %13 = arith.addf %8, %12 : vector<8x294xf32>
    %c1 = arith.constant 1 : index
    %c0_15 = arith.constant 0 : index
    %c0_16 = arith.constant 0 : index
    %14 = vector.load %arg1[%c1, %c0_15, %c0_16] : memref<9x8x8xbf16, #tpu.memory_space<vmem>>, vector<1x8x8xbf16>
    %15 = vector.shape_cast %14 : vector<1x8x8xbf16> to vector<8x8xbf16>
    %16 = vector.extract_strided_slice %3 {offsets = [0, 91], sizes = [8, 294], strides = [1, 1]} : vector<8x512xbf16> to vector<8x294xbf16>
    %cst_17 = arith.constant dense<0.000000e+00> : vector<8x294xf32>
    %17 = tpu.matmul %15, %16, %cst_17 {dimension_numbers = #tpu.dot_dimension_numbers<[1], [0], [0], [1], [0, 0, 1, 1], [], []>} : vector<8x8xbf16>, vector<8x294xbf16>, vector<8x294xf32> -> vector<8x294xf32>
    %18 = arith.addf %13, %17 : vector<8x294xf32>
    %c2 = arith.constant 2 : index
    %c0_18 = arith.constant 0 : index
    %c0_19 = arith.constant 0 : index
    %19 = vector.load %arg1[%c2, %c0_18, %c0_19] : memref<9x8x8xbf16, #tpu.memory_space<vmem>>, vector<1x8x8xbf16>
    %20 = vector.shape_cast %19 : vector<1x8x8xbf16> to vector<8x8xbf16>
    %21 = vector.extract_strided_slice %3 {offsets = [0, 92], sizes = [8, 294], strides = [1, 1]} : vector<8x512xbf16> to vector<8x294xbf16>
    %cst_20 = arith.constant dense<0.000000e+00> : vector<8x294xf32>
    %22 = tpu.matmul %20, %21, %cst_20 {dimension_numbers = #tpu.dot_dimension_numbers<[1], [0], [0], [1], [0, 0, 1, 1], [], []>} : vector<8x8xbf16>, vector<8x294xbf16>, vector<8x294xf32> -> vector<8x294xf32>
    %23 = arith.addf %18, %22 : vector<8x294xf32>
    %c3 = arith.constant 3 : index
    %c0_21 = arith.constant 0 : index
    %c0_22 = arith.constant 0 : index
    %24 = vector.load %arg1[%c3, %c0_21, %c0_22] : memref<9x8x8xbf16, #tpu.memory_space<vmem>>, vector<1x8x8xbf16>
    %25 = vector.shape_cast %24 : vector<1x8x8xbf16> to vector<8x8xbf16>
    %26 = vector.extract_strided_slice %3 {offsets = [0, 108], sizes = [8, 294], strides = [1, 1]} : vector<8x512xbf16> to vector<8x294xbf16>
    %cst_23 = arith.constant dense<0.000000e+00> : vector<8x294xf32>
    %27 = tpu.matmul %25, %26, %cst_23 {dimension_numbers = #tpu.dot_dimension_numbers<[1], [0], [0], [1], [0, 0, 1, 1], [], []>} : vector<8x8xbf16>, vector<8x294xbf16>, vector<8x294xf32> -> vector<8x294xf32>
    %28 = arith.addf %23, %27 : vector<8x294xf32>
    %c4 = arith.constant 4 : index
    %c0_24 = arith.constant 0 : index
    %c0_25 = arith.constant 0 : index
    %29 = vector.load %arg1[%c4, %c0_24, %c0_25] : memref<9x8x8xbf16, #tpu.memory_space<vmem>>, vector<1x8x8xbf16>
    %30 = vector.shape_cast %29 : vector<1x8x8xbf16> to vector<8x8xbf16>
    %31 = vector.extract_strided_slice %3 {offsets = [0, 109], sizes = [8, 294], strides = [1, 1]} : vector<8x512xbf16> to vector<8x294xbf16>
    %cst_26 = arith.constant dense<0.000000e+00> : vector<8x294xf32>
    %32 = tpu.matmul %30, %31, %cst_26 {dimension_numbers = #tpu.dot_dimension_numbers<[1], [0], [0], [1], [0, 0, 1, 1], [], []>} : vector<8x8xbf16>, vector<8x294xbf16>, vector<8x294xf32> -> vector<8x294xf32>
    %33 = arith.addf %28, %32 : vector<8x294xf32>
    %c5 = arith.constant 5 : index
    %c0_27 = arith.constant 0 : index
    %c0_28 = arith.constant 0 : index
    %34 = vector.load %arg1[%c5, %c0_27, %c0_28] : memref<9x8x8xbf16, #tpu.memory_space<vmem>>, vector<1x8x8xbf16>
    %35 = vector.shape_cast %34 : vector<1x8x8xbf16> to vector<8x8xbf16>
    %36 = vector.extract_strided_slice %3 {offsets = [0, 110], sizes = [8, 294], strides = [1, 1]} : vector<8x512xbf16> to vector<8x294xbf16>
    %cst_29 = arith.constant dense<0.000000e+00> : vector<8x294xf32>
    %37 = tpu.matmul %35, %36, %cst_29 {dimension_numbers = #tpu.dot_dimension_numbers<[1], [0], [0], [1], [0, 0, 1, 1], [], []>} : vector<8x8xbf16>, vector<8x294xbf16>, vector<8x294xf32> -> vector<8x294xf32>
    %38 = arith.addf %33, %37 : vector<8x294xf32>
    %c6 = arith.constant 6 : index
    %c0_30 = arith.constant 0 : index
    %c0_31 = arith.constant 0 : index
    %39 = vector.load %arg1[%c6, %c0_30, %c0_31] : memref<9x8x8xbf16, #tpu.memory_space<vmem>>, vector<1x8x8xbf16>
    %40 = vector.shape_cast %39 : vector<1x8x8xbf16> to vector<8x8xbf16>
    %41 = vector.extract_strided_slice %3 {offsets = [0, 126], sizes = [8, 294], strides = [1, 1]} : vector<8x512xbf16> to vector<8x294xbf16>
    %cst_32 = arith.constant dense<0.000000e+00> : vector<8x294xf32>
    %42 = tpu.matmul %40, %41, %cst_32 {dimension_numbers = #tpu.dot_dimension_numbers<[1], [0], [0], [1], [0, 0, 1, 1], [], []>} : vector<8x8xbf16>, vector<8x294xbf16>, vector<8x294xf32> -> vector<8x294xf32>
    %43 = arith.addf %38, %42 : vector<8x294xf32>
    %c7 = arith.constant 7 : index
    %c0_33 = arith.constant 0 : index
    %c0_34 = arith.constant 0 : index
    %44 = vector.load %arg1[%c7, %c0_33, %c0_34] : memref<9x8x8xbf16, #tpu.memory_space<vmem>>, vector<1x8x8xbf16>
    %45 = vector.shape_cast %44 : vector<1x8x8xbf16> to vector<8x8xbf16>
    %46 = vector.extract_strided_slice %3 {offsets = [0, 127], sizes = [8, 294], strides = [1, 1]} : vector<8x512xbf16> to vector<8x294xbf16>
    %cst_35 = arith.constant dense<0.000000e+00> : vector<8x294xf32>
    %47 = tpu.matmul %45, %46, %cst_35 {dimension_numbers = #tpu.dot_dimension_numbers<[1], [0], [0], [1], [0, 0, 1, 1], [], []>} : vector<8x8xbf16>, vector<8x294xbf16>, vector<8x294xf32> -> vector<8x294xf32>
    %48 = arith.addf %43, %47 : vector<8x294xf32>
    %c8 = arith.constant 8 : index
    %c0_36 = arith.constant 0 : index
    %c0_37 = arith.constant 0 : index
    %49 = vector.load %arg1[%c8, %c0_36, %c0_37] : memref<9x8x8xbf16, #tpu.memory_space<vmem>>, vector<1x8x8xbf16>
    %50 = vector.shape_cast %49 : vector<1x8x8xbf16> to vector<8x8xbf16>
    %51 = vector.extract_strided_slice %3 {offsets = [0, 128], sizes = [8, 294], strides = [1, 1]} : vector<8x512xbf16> to vector<8x294xbf16>
    %cst_38 = arith.constant dense<0.000000e+00> : vector<8x294xf32>
    %52 = tpu.matmul %50, %51, %cst_38 {dimension_numbers = #tpu.dot_dimension_numbers<[1], [0], [0], [1], [0, 0, 1, 1], [], []>} : vector<8x8xbf16>, vector<8x294xbf16>, vector<8x294xf32> -> vector<8x294xf32>
    %53 = arith.addf %48, %52 : vector<8x294xf32>
    %c0_39 = arith.constant 0 : index
    %c0_40 = arith.constant 0 : index
    %54 = vector.load %arg2[%c0_39, %c0_40] : memref<8x1xf32, #tpu.memory_space<vmem>>, vector<8x1xf32>
    %55 = vector.broadcast %54 : vector<8x1xf32> to vector<8x294xf32>
    %56 = arith.addf %53, %55 : vector<8x294xf32>
    %57 = vector.extract_strided_slice %7 {offsets = [0, 109], sizes = [1, 294], strides = [1, 1]} : vector<1x512xf32> to vector<1x294xf32>
    %58 = vector.broadcast %57 : vector<1x294xf32> to vector<8x294xf32>
    %59 = arith.mulf %56, %58 : vector<8x294xf32>
    %60 = arith.truncf %59 : vector<8x294xf32> to vector<8x294xbf16>
    %cst_41 = arith.constant 0.000000e+00 : f32
    %61 = vector.broadcast %cst_41 : f32 to vector<16x256xf32>
    %c0_42 = arith.constant 0 : index
    %c0_43 = arith.constant 0 : index
    %c0_44 = arith.constant 0 : index
    %62 = vector.load %arg3[%c0_42, %c0_43, %c0_44] : memref<9x16x8xbf16, #tpu.memory_space<vmem>>, vector<1x16x8xbf16>
    %63 = vector.shape_cast %62 : vector<1x16x8xbf16> to vector<16x8xbf16>
    %64 = vector.extract_strided_slice %60 {offsets = [0, 0], sizes = [8, 256], strides = [1, 1]} : vector<8x294xbf16> to vector<8x256xbf16>
    %cst_45 = arith.constant dense<0.000000e+00> : vector<16x256xf32>
    %65 = tpu.matmul %63, %64, %cst_45 {dimension_numbers = #tpu.dot_dimension_numbers<[1], [0], [0], [1], [0, 0, 1, 1], [], []>} : vector<16x8xbf16>, vector<8x256xbf16>, vector<16x256xf32> -> vector<16x256xf32>
    %66 = arith.addf %61, %65 : vector<16x256xf32>
    %c1_46 = arith.constant 1 : index
    %c0_47 = arith.constant 0 : index
    %c0_48 = arith.constant 0 : index
    %67 = vector.load %arg3[%c1_46, %c0_47, %c0_48] : memref<9x16x8xbf16, #tpu.memory_space<vmem>>, vector<1x16x8xbf16>
    %68 = vector.shape_cast %67 : vector<1x16x8xbf16> to vector<16x8xbf16>
    %69 = vector.extract_strided_slice %60 {offsets = [0, 1], sizes = [8, 256], strides = [1, 1]} : vector<8x294xbf16> to vector<8x256xbf16>
    %cst_49 = arith.constant dense<0.000000e+00> : vector<16x256xf32>
    %70 = tpu.matmul %68, %69, %cst_49 {dimension_numbers = #tpu.dot_dimension_numbers<[1], [0], [0], [1], [0, 0, 1, 1], [], []>} : vector<16x8xbf16>, vector<8x256xbf16>, vector<16x256xf32> -> vector<16x256xf32>
    %71 = arith.addf %66, %70 : vector<16x256xf32>
    %c2_50 = arith.constant 2 : index
    %c0_51 = arith.constant 0 : index
    %c0_52 = arith.constant 0 : index
    %72 = vector.load %arg3[%c2_50, %c0_51, %c0_52] : memref<9x16x8xbf16, #tpu.memory_space<vmem>>, vector<1x16x8xbf16>
    %73 = vector.shape_cast %72 : vector<1x16x8xbf16> to vector<16x8xbf16>
    %74 = vector.extract_strided_slice %60 {offsets = [0, 2], sizes = [8, 256], strides = [1, 1]} : vector<8x294xbf16> to vector<8x256xbf16>
    %cst_53 = arith.constant dense<0.000000e+00> : vector<16x256xf32>
    %75 = tpu.matmul %73, %74, %cst_53 {dimension_numbers = #tpu.dot_dimension_numbers<[1], [0], [0], [1], [0, 0, 1, 1], [], []>} : vector<16x8xbf16>, vector<8x256xbf16>, vector<16x256xf32> -> vector<16x256xf32>
    %76 = arith.addf %71, %75 : vector<16x256xf32>
    %c3_54 = arith.constant 3 : index
    %c0_55 = arith.constant 0 : index
    %c0_56 = arith.constant 0 : index
    %77 = vector.load %arg3[%c3_54, %c0_55, %c0_56] : memref<9x16x8xbf16, #tpu.memory_space<vmem>>, vector<1x16x8xbf16>
    %78 = vector.shape_cast %77 : vector<1x16x8xbf16> to vector<16x8xbf16>
    %79 = vector.extract_strided_slice %60 {offsets = [0, 18], sizes = [8, 256], strides = [1, 1]} : vector<8x294xbf16> to vector<8x256xbf16>
    %cst_57 = arith.constant dense<0.000000e+00> : vector<16x256xf32>
    %80 = tpu.matmul %78, %79, %cst_57 {dimension_numbers = #tpu.dot_dimension_numbers<[1], [0], [0], [1], [0, 0, 1, 1], [], []>} : vector<16x8xbf16>, vector<8x256xbf16>, vector<16x256xf32> -> vector<16x256xf32>
    %81 = arith.addf %76, %80 : vector<16x256xf32>
    %c4_58 = arith.constant 4 : index
    %c0_59 = arith.constant 0 : index
    %c0_60 = arith.constant 0 : index
    %82 = vector.load %arg3[%c4_58, %c0_59, %c0_60] : memref<9x16x8xbf16, #tpu.memory_space<vmem>>, vector<1x16x8xbf16>
    %83 = vector.shape_cast %82 : vector<1x16x8xbf16> to vector<16x8xbf16>
    %84 = vector.extract_strided_slice %60 {offsets = [0, 19], sizes = [8, 256], strides = [1, 1]} : vector<8x294xbf16> to vector<8x256xbf16>
    %cst_61 = arith.constant dense<0.000000e+00> : vector<16x256xf32>
    %85 = tpu.matmul %83, %84, %cst_61 {dimension_numbers = #tpu.dot_dimension_numbers<[1], [0], [0], [1], [0, 0, 1, 1], [], []>} : vector<16x8xbf16>, vector<8x256xbf16>, vector<16x256xf32> -> vector<16x256xf32>
    %86 = arith.addf %81, %85 : vector<16x256xf32>
    %c5_62 = arith.constant 5 : index
    %c0_63 = arith.constant 0 : index
    %c0_64 = arith.constant 0 : index
    %87 = vector.load %arg3[%c5_62, %c0_63, %c0_64] : memref<9x16x8xbf16, #tpu.memory_space<vmem>>, vector<1x16x8xbf16>
    %88 = vector.shape_cast %87 : vector<1x16x8xbf16> to vector<16x8xbf16>
    %89 = vector.extract_strided_slice %60 {offsets = [0, 20], sizes = [8, 256], strides = [1, 1]} : vector<8x294xbf16> to vector<8x256xbf16>
    %cst_65 = arith.constant dense<0.000000e+00> : vector<16x256xf32>
    %90 = tpu.matmul %88, %89, %cst_65 {dimension_numbers = #tpu.dot_dimension_numbers<[1], [0], [0], [1], [0, 0, 1, 1], [], []>} : vector<16x8xbf16>, vector<8x256xbf16>, vector<16x256xf32> -> vector<16x256xf32>
    %91 = arith.addf %86, %90 : vector<16x256xf32>
    %c6_66 = arith.constant 6 : index
    %c0_67 = arith.constant 0 : index
    %c0_68 = arith.constant 0 : index
    %92 = vector.load %arg3[%c6_66, %c0_67, %c0_68] : memref<9x16x8xbf16, #tpu.memory_space<vmem>>, vector<1x16x8xbf16>
    %93 = vector.shape_cast %92 : vector<1x16x8xbf16> to vector<16x8xbf16>
    %94 = vector.extract_strided_slice %60 {offsets = [0, 36], sizes = [8, 256], strides = [1, 1]} : vector<8x294xbf16> to vector<8x256xbf16>
    %cst_69 = arith.constant dense<0.000000e+00> : vector<16x256xf32>
    %95 = tpu.matmul %93, %94, %cst_69 {dimension_numbers = #tpu.dot_dimension_numbers<[1], [0], [0], [1], [0, 0, 1, 1], [], []>} : vector<16x8xbf16>, vector<8x256xbf16>, vector<16x256xf32> -> vector<16x256xf32>
    %96 = arith.addf %91, %95 : vector<16x256xf32>
    %c7_70 = arith.constant 7 : index
    %c0_71 = arith.constant 0 : index
    %c0_72 = arith.constant 0 : index
    %97 = vector.load %arg3[%c7_70, %c0_71, %c0_72] : memref<9x16x8xbf16, #tpu.memory_space<vmem>>, vector<1x16x8xbf16>
    %98 = vector.shape_cast %97 : vector<1x16x8xbf16> to vector<16x8xbf16>
    %99 = vector.extract_strided_slice %60 {offsets = [0, 37], sizes = [8, 256], strides = [1, 1]} : vector<8x294xbf16> to vector<8x256xbf16>
    %cst_73 = arith.constant dense<0.000000e+00> : vector<16x256xf32>
    %100 = tpu.matmul %98, %99, %cst_73 {dimension_numbers = #tpu.dot_dimension_numbers<[1], [0], [0], [1], [0, 0, 1, 1], [], []>} : vector<16x8xbf16>, vector<8x256xbf16>, vector<16x256xf32> -> vector<16x256xf32>
    %101 = arith.addf %96, %100 : vector<16x256xf32>
    %c8_74 = arith.constant 8 : index
    %c0_75 = arith.constant 0 : index
    %c0_76 = arith.constant 0 : index
    %102 = vector.load %arg3[%c8_74, %c0_75, %c0_76] : memref<9x16x8xbf16, #tpu.memory_space<vmem>>, vector<1x16x8xbf16>
    %103 = vector.shape_cast %102 : vector<1x16x8xbf16> to vector<16x8xbf16>
    %104 = vector.extract_strided_slice %60 {offsets = [0, 38], sizes = [8, 256], strides = [1, 1]} : vector<8x294xbf16> to vector<8x256xbf16>
    %cst_77 = arith.constant dense<0.000000e+00> : vector<16x256xf32>
    %105 = tpu.matmul %103, %104, %cst_77 {dimension_numbers = #tpu.dot_dimension_numbers<[1], [0], [0], [1], [0, 0, 1, 1], [], []>} : vector<16x8xbf16>, vector<8x256xbf16>, vector<16x256xf32> -> vector<16x256xf32>
    %106 = arith.addf %101, %105 : vector<16x256xf32>
    %c0_78 = arith.constant 0 : index
    %c0_79 = arith.constant 0 : index
    %107 = vector.load %arg4[%c0_78, %c0_79] : memref<16x1xf32, #tpu.memory_space<vmem>>, vector<16x1xf32>
    %108 = vector.broadcast %107 : vector<16x1xf32> to vector<16x256xf32>
    %109 = arith.addf %106, %108 : vector<16x256xf32>
    %110 = vector.extract_strided_slice %109 {offsets = [0, 0], sizes = [8, 256], strides = [1, 1]} : vector<16x256xf32> to vector<8x256xf32>
    %111 = vector.extract_strided_slice %109 {offsets = [8, 0], sizes = [8, 256], strides = [1, 1]} : vector<16x256xf32> to vector<8x256xf32>
    %c0_80 = arith.constant 0 : index
    %c0_81 = arith.constant 0 : index
    %112 = vector.load %arg13[%c0_80, %c0_81] : memref<8x256xf32, #tpu.memory_space<vmem>>, vector<8x256xf32>
    %c0_82 = arith.constant 0 : index
    %c0_83 = arith.constant 0 : index
    %113 = vector.load %arg5[%c0_82, %c0_83] : memref<8x1xf32, #tpu.memory_space<vmem>>, vector<8x1xf32>
    %114 = vector.broadcast %113 : vector<8x1xf32> to vector<8x256xf32>
    %115 = arith.subf %112, %114 : vector<8x256xf32>
    %c0_84 = arith.constant 0 : index
    %c0_85 = arith.constant 0 : index
    %116 = vector.load %arg6[%c0_84, %c0_85] : memref<8x1xf32, #tpu.memory_space<vmem>>, vector<8x1xf32>
    %117 = vector.broadcast %116 : vector<8x1xf32> to vector<8x256xf32>
    %118 = arith.mulf %115, %117 : vector<8x256xf32>
    %119 = arith.mulf %118, %110 : vector<8x256xf32>
    %120 = arith.addf %119, %111 : vector<8x256xf32>
    %cst_86 = arith.constant 0.000000e+00 : f32
    %121 = vector.broadcast %cst_86 : f32 to vector<8x256xf32>
    %122 = arith.maximumf %120, %121 : vector<8x256xf32>
    %c0_87 = arith.constant 0 : index
    %c0_88 = arith.constant 0 : index
    %123 = vector.load %arg14[%c0_87, %c0_88] : memref<8x256xf32, #tpu.memory_space<vmem>>, vector<8x256xf32>
    tpu.vector_store %arg14[%c0_87, %c0_88], %122 {strides = array<i32>} : memref<8x256xf32, #tpu.memory_space<vmem>>, vector<8x256xf32>,
    %124 = vector.extract_strided_slice %7 {offsets = [0, 128], sizes = [1, 256], strides = [1, 1]} : vector<1x512xf32> to vector<1x256xf32>
    %cst_89 = arith.constant 0.000000e+00 : f32
    %125 = vector.broadcast %cst_89 : f32 to vector<1x256xf32>
    %126 = arith.cmpf ogt, %124, %125 : vector<1x256xf32>
    %cst_90 = arith.constant 0.000000e+00 : f32
    %127 = vector.shape_cast %126 : vector<1x256xi1> to vector<1x256xi1>
    %128 = vector.broadcast %127 : vector<1x256xi1> to vector<8x256xi1>
    %129 = vector.broadcast %cst_90 : f32 to vector<8x256xf32>
    %130 = arith.select %128, %122, %129 : vector<8x256xi1>, vector<8x256xf32>
    %cst_91 = arith.constant dense<0.000000e+00> : vector<8xf32>
    %131 = vector.multi_reduction <add>, %130, %cst_91 [1] : vector<8x256xf32> to vector<8xf32>
    %132 = vector.shape_cast %131 : vector<8xf32> to vector<8x1xf32>
    %133 = arith.mulf %130, %130 : vector<8x256xf32>
    %cst_92 = arith.constant dense<0.000000e+00> : vector<8xf32>
    %134 = vector.multi_reduction <add>, %133, %cst_92 [1] : vector<8x256xf32> to vector<8xf32>
    %135 = vector.shape_cast %134 : vector<8xf32> to vector<8x1xf32>
    %136 = tpu.iota {dimensions = array<i32: 1>} : vector<8x128xi32>
    %c0_i32 = arith.constant 0 : i32
    %137 = vector.broadcast %c0_i32 : i32 to vector<8x128xi32>
    %138 = arith.cmpi eq, %136, %137 : vector<8x128xi32>
    %cst_93 = arith.constant 0.000000e+00 : f32
    %139 = vector.shape_cast %132 : vector<8x1xf32> to vector<8x1xf32>
    %140 = vector.broadcast %139 : vector<8x1xf32> to vector<8x128xf32>
    %141 = vector.broadcast %cst_93 : f32 to vector<8x128xf32>
    %142 = arith.select %138, %140, %141 : vector<8x128xi1>, vector<8x128xf32>
    %c0_94 = arith.constant 0 : index
    %c0_95 = arith.constant 0 : index
    %143 = vector.load %arg15[%c0_94, %c0_95] : memref<8x128xf32, #tpu.memory_space<vmem>>, vector<8x128xf32>
    tpu.vector_store %arg15[%c0_94, %c0_95], %142 {strides = array<i32>} : memref<8x128xf32, #tpu.memory_space<vmem>>, vector<8x128xf32>,
    %c0_i32_96 = arith.constant 0 : i32
    %144 = vector.broadcast %c0_i32_96 : i32 to vector<8x128xi32>
    %145 = arith.cmpi eq, %136, %144 : vector<8x128xi32>
    %cst_97 = arith.constant 0.000000e+00 : f32
    %146 = vector.shape_cast %135 : vector<8x1xf32> to vector<8x1xf32>
    %147 = vector.broadcast %146 : vector<8x1xf32> to vector<8x128xf32>
    %148 = vector.broadcast %cst_97 : f32 to vector<8x128xf32>
    %149 = arith.select %145, %147, %148 : vector<8x128xi1>, vector<8x128xf32>
    %c0_98 = arith.constant 0 : index
    %c0_99 = arith.constant 0 : index
    %150 = vector.load %arg16[%c0_98, %c0_99] : memref<8x128xf32, #tpu.memory_space<vmem>>, vector<8x128xf32>
    tpu.vector_store %arg16[%c0_98, %c0_99], %149 {strides = array<i32>} : memref<8x128xf32, #tpu.memory_space<vmem>>, vector<8x128xf32>,
    return
  }
  func.func @transform_0(%arg0: i32) -> (i32, i32, i32) {
    %c0_i32 = arith.constant 0 : i32
    %c0_i32_0 = arith.constant 0 : i32
    %c0_i32_1 = arith.constant 0 : i32
    %c0_i32_2 = arith.constant 0 : i32
    return %c0_i32, %c0_i32_0, %c0_i32_1 : i32, i32, i32
  }
  func.func @transform_1(%arg0: i32) -> (i32, i32) {
    %c0_i32 = arith.constant 0 : i32
    %c0_i32_0 = arith.constant 0 : i32
    %c0_i32_1 = arith.constant 0 : i32
    return %c0_i32, %c0_i32_0 : i32, i32
  }
  func.func @transform_2(%arg0: i32) -> (i32, i32, i32) {
    %c0_i32 = arith.constant 0 : i32
    %c0_i32_0 = arith.constant 0 : i32
    %c0_i32_1 = arith.constant 0 : i32
    %c0_i32_2 = arith.constant 0 : i32
    return %c0_i32, %c0_i32_0, %c0_i32_1 : i32, i32, i32
  }
  func.func @transform_3(%arg0: i32) -> (i32, i32) {
    %c0_i32 = arith.constant 0 : i32
    %c0_i32_0 = arith.constant 0 : i32
    %c0_i32_1 = arith.constant 0 : i32
    return %c0_i32, %c0_i32_0 : i32, i32
  }
  func.func @transform_4(%arg0: i32) -> (i32, i32) {
    %c0_i32 = arith.constant 0 : i32
    %c0_i32_0 = arith.constant 0 : i32
    %c0_i32_1 = arith.constant 0 : i32
    return %c0_i32, %c0_i32_0 : i32, i32
  }
  func.func @transform_5(%arg0: i32) -> (i32, i32) {
    %c0_i32 = arith.constant 0 : i32
    %c0_i32_0 = arith.constant 0 : i32
    %c0_i32_1 = arith.constant 0 : i32
    return %c0_i32, %c0_i32_0 : i32, i32
  }
  func.func @transform_6(%arg0: i32) -> (i32, i32) {
    %c2_i32 = arith.constant 2 : i32
    %0 = arith.muli %arg0, %c2_i32 : i32
    %c1_i32 = arith.constant 1 : i32
    %1 = arith.subi %0, %c1_i32 : i32
    %c0_i32 = arith.constant 0 : i32
    %2 = arith.maxsi %1, %c0_i32 : i32
    %c0_i32_0 = arith.constant 0 : i32
    %c0_i32_1 = arith.constant 0 : i32
    return %c0_i32_0, %2 : i32, i32
  }
  func.func @transform_7(%arg0: i32) -> (i32, i32) {
    %c0_i32 = arith.constant 0 : i32
    %c0_i32_0 = arith.constant 0 : i32
    return %c0_i32, %arg0 : i32, i32
  }
  func.func @transform_8(%arg0: i32) -> (i32, i32) {
    %c1_i32 = arith.constant 1 : i32
    %0 = arith.addi %arg0, %c1_i32 : i32
    %c2_i32 = arith.constant 2 : i32
    %1 = arith.muli %0, %c2_i32 : i32
    %c5_i32 = arith.constant 5 : i32
    %2 = arith.minsi %1, %c5_i32 : i32
    %c0_i32 = arith.constant 0 : i32
    %c0_i32_0 = arith.constant 0 : i32
    return %c0_i32, %2 : i32, i32
  }
  func.func @transform_9(%arg0: i32) -> (i32, i32) {
    %c2_i32 = arith.constant 2 : i32
    %0 = arith.muli %arg0, %c2_i32 : i32
    %c1_i32 = arith.constant 1 : i32
    %1 = arith.subi %0, %c1_i32 : i32
    %c0_i32 = arith.constant 0 : i32
    %2 = arith.maxsi %1, %c0_i32 : i32
    %c0_i32_0 = arith.constant 0 : i32
    %c0_i32_1 = arith.constant 0 : i32
    return %c0_i32_0, %2 : i32, i32
  }
  func.func @transform_10(%arg0: i32) -> (i32, i32) {
    %c0_i32 = arith.constant 0 : i32
    %c0_i32_0 = arith.constant 0 : i32
    return %c0_i32, %arg0 : i32, i32
  }
  func.func @transform_11(%arg0: i32) -> (i32, i32) {
    %c1_i32 = arith.constant 1 : i32
    %0 = arith.addi %arg0, %c1_i32 : i32
    %c2_i32 = arith.constant 2 : i32
    %1 = arith.muli %0, %c2_i32 : i32
    %c5_i32 = arith.constant 5 : i32
    %2 = arith.minsi %1, %c5_i32 : i32
    %c0_i32 = arith.constant 0 : i32
    %c0_i32_0 = arith.constant 0 : i32
    return %c0_i32, %2 : i32, i32
  }
  func.func @transform_12(%arg0: i32) -> (i32, i32) {
    %c0_i32 = arith.constant 0 : i32
    %c0_i32_0 = arith.constant 0 : i32
    return %c0_i32, %arg0 : i32, i32
  }
  func.func @transform_13(%arg0: i32) -> (i32, i32) {
    %c0_i32 = arith.constant 0 : i32
    %c0_i32_0 = arith.constant 0 : i32
    return %c0_i32, %arg0 : i32, i32
  }
  func.func @transform_14(%arg0: i32) -> (i32, i32) {
    %c0_i32 = arith.constant 0 : i32
    %c0_i32_0 = arith.constant 0 : i32
    return %c0_i32, %arg0 : i32, i32
  }
  func.func @transform_15(%arg0: i32) -> (i32, i32) {
    %c0_i32 = arith.constant 0 : i32
    %c0_i32_0 = arith.constant 0 : i32
    return %c0_i32, %arg0 : i32, i32
  }
}

</mosaic_0001>

<llo_original>
// kernel: tile.5
$region0: #{tile.5}
  %s0 = inlined_call_operand.vmem [shape: f32[18,18], index: 0, kind: input, shape index: {}]
  %s1 = inlined_call_operand.vmem [shape: f32[324], index: 1, kind: output, shape index: {}]
  $region1: #{tile.5} parent=0
    #allocation0 [shape = 'u8[4096]{0}', space=vmem, size = 0x1000, scoped, tag = 'scoped mem for output reshape']
    %v2 = vld [vmem:[%s0] sm:$0x1]
    %vm3 = vcmask 146432
    %4 = vst.msk [vmem:[#allocation0] sm:$0x1] %vm3, %v2
    %s5 = scalar_lea.vmem %s0, 7
    %v6 = vld [vmem:[%s5] sm:$0x1]
    %s7 = scalar_lea.vmem %s0, 7
    %v8 = vld [vmem:[%s7] sm:$0x1]
    %vm9 = vcmask 15360
    %v10 = vsel %vm9, %v8, %v6
    %11 = vrot.lane.b32.xlu0 %v10, 126
    %v12 = vpop.permute.xlu0 %11
    %vm13 = vcmask 130048
    %s14 = scalar_lea.vmem [#allocation0], 1
    %15 = vst.msk [vmem:[%s14] sm:$0x1] %vm13, %v12
    %vm16 = vcmask 1048560
    %17 = vst.msk [vmem:[#allocation0] sm:$0x1] %vm16, %v12
    %s18 = scalar_lea.vmem %s0, 14
    %v19 = vld [vmem:[%s18] sm:$0x1]
    %s20 = scalar_lea.vmem %s0, 14
    %v21 = vld [vmem:[%s20] sm:$0x1]
    %vm22 = vcmask 31744
    %v23 = vsel %vm22, %v21, %v19
    %24 = vrot.lane.b32.xlu0 %v23, 124
    %v25 = vpop.permute.xlu0 %24
    %vm26 = vcmask 113664
    %s27 = scalar_lea.vmem [#allocation0], 2
    %28 = vst.msk [vmem:[%s27] sm:$0x1] %vm26, %v25
    %vm29 = vcmask 1048544
    %s30 = scalar_lea.vmem [#allocation0], 1
    %31 = vst.msk [vmem:[%s30] sm:$0x1] %vm29, %v25
    %s32 = scalar_lea.vmem %s0, 6
    %v33 = vld [vmem:[%s32] sm:$0x1]
    %34 = vrot.lane.b32.xlu0 %v33, 108
    %v35 = vpop.permute.xlu0 %34
    %vm36 = vcmask 1032032
    %37 = vst.msk [vmem:[#allocation0] sm:$0x1] %vm36, %v35
    %s38 = scalar_lea.vmem %s0, 13
    %v39 = vld [vmem:[%s38] sm:$0x1]
    %40 = vrot.lane.b32.xlu0 %v39, 106
    %v41 = vpop.permute.xlu0 %40
    %vm42 = vcmask 1015632
    %s43 = scalar_lea.vmem [#allocation0], 1
    %44 = vst.msk [vmem:[%s43] sm:$0x1] %vm42, %v41
    %s45 = scalar_lea.vmem %s0, 5
    %v46 = vld [vmem:[%s45] sm:$0x1]
    %47 = vrot.lane.b32.xlu0 %v46, 90
    %v48 = vpop.permute.xlu0 %47
    %vm49 = vcmask 884432
    %50 = vst.msk [vmem:[#allocation0] sm:$0x1] %vm49, %v48
    %s51 = scalar_lea.vmem %s0, 12
    %v52 = vld [vmem:[%s51] sm:$0x1]
    %53 = vrot.lane.b32.xlu0 %v52, 88
    %v54 = vpop.permute.xlu0 %53
    %vm55 = vcmask 868032
    %s56 = scalar_lea.vmem [#allocation0], 1
    %57 = vst.msk [vmem:[%s56] sm:$0x1] %vm55, %v54
    %s58 = scalar_lea.vmem %s0, 4
    %v59 = vld [vmem:[%s58] sm:$0x1]
    %60 = vrot.lane.b32.xlu0 %v59, 72
    %v61 = vpop.permute.xlu0 %60
    %vm62 = vcmask 736832
    %63 = vst.msk [vmem:[#allocation0] sm:$0x1] %vm62, %v61
    %s64 = scalar_lea.vmem %s0, 11
    %v65 = vld [vmem:[%s64] sm:$0x1]
    %66 = vrot.lane.b32.xlu0 %v65, 70
    %v67 = vpop.permute.xlu0 %66
    %vm68 = vcmask 720432
    %s69 = scalar_lea.vmem [#allocation0], 1
    %70 = vst.msk [vmem:[%s69] sm:$0x1] %vm68, %v67
    %s71 = scalar_lea.vmem %s0, 3
    %v72 = vld [vmem:[%s71] sm:$0x1]
    %73 = vrot.lane.b32.xlu0 %v72, 54
    %v74 = vpop.permute.xlu0 %73
    %vm75 = vcmask 589232
    %76 = vst.msk [vmem:[#allocation0] sm:$0x1] %vm75, %v74
    %s77 = scalar_lea.vmem %s0, 10
    %v78 = vld [vmem:[%s77] sm:$0x1]
    %79 = vrot.lane.b32.xlu0 %v78, 52
    %v80 = vpop.permute.xlu0 %79
    %vm81 = vcmask 572832
    %s82 = scalar_lea.vmem [#allocation0], 1
    %83 = vst.msk [vmem:[%s82] sm:$0x1] %vm81, %v80
    %s84 = scalar_lea.vmem %s0, 17
    %v85 = vld [vmem:[%s84] sm:$0x1]
    %86 = vrot.lane.b32.xlu0 %v85, 50
    %v87 = vpop.permute.xlu0 %86
    %vm88 = vcmask 556432
    %s89 = scalar_lea.vmem [#allocation0], 2
    %90 = vst.msk [vmem:[%s89] sm:$0x1] %vm88, %v87
    %s91 = scalar_lea.vmem %s0, 2
    %v92 = vld [vmem:[%s91] sm:$0x1]
    %93 = vrot.lane.b32.xlu0 %v92, 36
    %v94 = vpop.permute.xlu0 %93
    %vm95 = vcmask 441632
    %96 = vst.msk [vmem:[#allocation0] sm:$0x1] %vm95, %v94
    %s97 = scalar_lea.vmem %s0, 9
    %v98 = vld [vmem:[%s97] sm:$0x1]
    %99 = vrot.lane.b32.xlu0 %v98, 34
    %v100 = vpop.permute.xlu0 %99
    %vm101 = vcmask 425232
    %s102 = scalar_lea.vmem [#allocation0], 1
    %103 = vst.msk [vmem:[%s102] sm:$0x1] %vm101, %v100
    %s104 = scalar_lea.vmem %s0, 16
    %v105 = vld [vmem:[%s104] sm:$0x1]
    %106 = vrot.lane.b32.xlu0 %v105, 32
    %v107 = vpop.permute.xlu0 %106
    %vm108 = vcmask 408832
    %s109 = scalar_lea.vmem [#allocation0], 2
    %110 = vst.msk [vmem:[%s109] sm:$0x1] %vm108, %v107
    %s111 = scalar_lea.vmem %s0, 1
    %v112 = vld [vmem:[%s111] sm:$0x1]
    %113 = vrot.lane.b32.xlu0 %v112, 18
    %v114 = vpop.permute.xlu0 %113
    %vm115 = vcmask 294032
    %116 = vst.msk [vmem:[#allocation0] sm:$0x1] %vm115, %v114
    %s117 = scalar_lea.vmem %s0, 8
    %v118 = vld [vmem:[%s117] sm:$0x1]
    %119 = vrot.lane.b32.xlu0 %v118, 16
    %v120 = vpop.permute.xlu0 %119
    %vm121 = vcmask 277632
    %s122 = scalar_lea.vmem [#allocation0], 1
    %123 = vst.msk [vmem:[%s122] sm:$0x1] %vm121, %v120
    %s124 = scalar_lea.vmem %s0, 15
    %v125 = vld [vmem:[%s124] sm:$0x1]
    %126 = vrot.lane.b32.xlu0 %v125, 14
    %v127 = vpop.permute.xlu0 %126
    %vm128 = vcmask 261232
    %s129 = scalar_lea.vmem [#allocation0], 2
    %130 = vst.msk [vmem:[%s129] sm:$0x1] %vm128, %v127
    %s132 = sshllo.u32 0, 4
    %v134 = vld [vmem:[#allocation0] sm:%s132]
    %s135 = sshllo.u32 0, 4
    %136 = vst [vmem:[%s1] sm:%s135] %v134

// kernel: tile.6
$region0: #{tile.6}
  #allocation0 [shape = 's32[1]{0}', space=sflag, size = 0x4, scoped, tag = 'scoped memory for tile.6']
  %s0 = inlined_call_operand.vmem [shape: f32[324], index: 0, kind: input, shape index: {}]
  %s1 = inlined_call_operand.vmem [shape: f32[2,324], index: 1, kind: output, shape index: {}]
  // Predicated region
  $region2: #{tile.6} parent=0 // pred_check
    _
  $region3: #{tile.6} parent=0 // pred_check_branch
    %3 = sbr.rel (0) target = $region5
  $region4: #{tile.6} parent=0 // pred_region
    _
  $region5: #{tile.6} parent=0 // pred_fallthru
    _
  %v4 = vld [vmem:[%s0] ss:$0 sm:$0xff]
  %5 = vst [vmem:[%s1] sm:$0x3] %v4
  %s6 = scalar_lea.vmem %s0, 1
  %v7 = vld [vmem:[%s6] ss:$0 sm:$0xff]
  %s8 = scalar_lea.vmem %s1, 2
  %9 = vst [vmem:[%s8] sm:$0x3] %v7
  %s10 = scalar_lea.vmem %s0, 2
  %v11 = vld [vmem:[%s10] ss:$0 sm:$0xff]
  %s12 = scalar_lea.vmem %s1, 4
  %13 = vst [vmem:[%s12] sm:$0x3] %v11

// kernel: tile.7
$region0: #{tile.7}
  %s0 = inlined_call_operand.vmem [shape: f32[2,324], index: 0, kind: input, shape index: {}]
  %s1 = inlined_call_operand.vmem [shape: f32[648], index: 1, kind: output, shape index: {}]
  $region1: #{tile.7} parent=0
    #allocation0 [shape = 'u8[12288]{0}', space=vmem, size = 0x3000, scoped, tag = 'scoped mem for input reshape']
    %s3 = sshllo.u32 0, 2
    %s4 = smul.addr 2, 2
    %s5 = scalar_lea.vmem %s0, %s4
    %v6 = vld [vmem:[%s5] sm:%s3]
    %s7 = scalar_lea.vmem [#allocation0], 16
    %8 = vst [vmem:[%s7] sm:%s3] %v6
    %s9 = scalar_lea.vmem %s0, 2
    %v10 = vld [vmem:[%s9] sm:%s3]
    %s11 = scalar_lea.vmem [#allocation0], 8
    %12 = vst [vmem:[%s11] sm:%s3] %v10
    %v13 = vld [vmem:[%s0] sm:%s3]
    %14 = vst [vmem:[#allocation0] sm:%s3] %v13
    %s15 = scalar_lea.vmem [#allocation0], 16
    %v16 = vld [vmem:[%s15] sm:$0x1]
    %vm17 = vcmask 556032
    %s18 = scalar_lea.vmem %s1, 2
    %19 = vst.msk [vmem:[%s18] sm:$0x1] %vm17, %v16
    %s20 = smov 3
    %v21 = vld [vmem:[#allocation0] ss:$8 sm:%s20]
    %22 = vst [vmem:[%s1] sm:$0x3] %v21
    %s23 = scalar_lea.vmem [#allocation0], 17
    %v24 = vld [vmem:[%s23] sm:$0x1]
    %s25 = scalar_lea.vmem [#allocation0], 1
    %v26 = vld [vmem:[%s25] ss:$8 sm:$0x7]
    %vm27 = vcmask 490496
    %v28 = vsel %vm27, %v26, %v24
    %29 = vrot.lane.b32.xlu0 %v28, 68
    %v30 = vpop.permute.xlu0 %29
    %vm31 = vcmask 64512
    %s32 = scalar_lea.vmem %s1, 5
    %33 = vst.msk [vmem:[%s32] sm:$0x1] %vm31, %v30
    %vm34 = vcmask 1048096
    %s35 = scalar_lea.vmem %s1, 2
    %36 = vst.msk [vmem:[%s35] sm:$0x7] %vm34, %v30
    %s37 = scalar_lea.vmem [#allocation0], 1
    %s38 = smov 3
    %v39 = vld [vmem:[%s37] ss:$8 sm:%s38]
    %40 = vrot.lane.b32.xlu0 %v39, 68
    %v41 = vpop.permute.xlu0 %40
    %vm42 = vcmask 556032
    %s43 = scalar_lea.vmem %s1, 3
    %44 = vst.msk [vmem:[%s43] sm:$0x3] %vm42, %v41

// kernel: spade_block_forward.3
$region0: #{spade_block_forward.3}
  #allocation0 [shape = 'u32[]', space=smem, size = 0x4, offset = 0x4, fixed_abs, tag = 'smem constant byte address 0x4 - core index']
  #allocation1 [shape = 'u32[144,128]{1,0:T(1,128)}', space=vmem, size = 0x12000, scoped, tag = 'internal scratch']
  %s0 = inlined_call_operand.vmem [shape: f32[8,768], index: 0, kind: input, shape index: {}]
  %s1 = inlined_call_operand.vmem [shape: f32[8,384], index: 1, kind: output, shape index: {0}]
  %s2 = inlined_call_operand.vmem [shape: f32[8,384], index: 2, kind: output, shape index: {1}]
  %3 = xla_tuple %s1, %s2
  %s4 = sld [smem:[#allocation0]]
  $region45: #{spade_block_forward.3} parent=0
    _
  %s6 = ssub.s32 1, %s4
  %s7 = scalar_select 0, %s6, %s4
  loop: start=0, step=1, limit=5
  $region2: #{spade_block_forward.3} parent=0 // loop_pre_header
    _
  $region3: #{spade_block_forward.3} parent=0 // loop_header
    %s9 = sphi 0, %s13
    %p10 = scmp.ge.s32.totalorder %s9, 5
    %s19 = sphi 0, %s21
    %s22 = sphi 0, %s19
    %s23 = sphi 0, %s22
    %s39 = sphi 0, %s23
    %s45 = sphi 0, %s47
    %s48 = sphi 0, %s45
    %s49 = sphi 0, %s48
    %s65 = sphi 0, %s49
    %s71 = sphi 0, %s73
    %s74 = sphi 0, %s71
    %s75 = sphi 0, %s74
    %s91 = sphi 0, %s75
  $region4: #{spade_block_forward.3} parent=0 // loop_header_branch
    %12 = sbr.rel (%p10) target = $region8
  $region5: #{spade_block_forward.3} parent=0 // loop_body
    %s14 = ssub.s32 %s9, 1
    %s15 = ssub.s32 %s9, 2
    %s16 = sadd.s32 %s9, 1
    %s17 = ssub.s32 %s9, %s16
    %p18 = scmp.eq.s32.totalorder %s17, 0
    %s20 = sadd.s32 %s19, 1
    %s21 = scalar_select %p18, %s19, %s20
    %p24 = pneg %p18
    %p25 = scmp.eq.s32.totalorder %s9, 2
    %p26 = por %p24, %p25
    %p27 = scmp.ne.s32.totalorder %s19, %s22
    %p28 = scmp.eq.s32.totalorder %s9, 0
    %p29 = por %p27, %p28
    %p30 = scmp.ne.s32.totalorder %s19, %s22
    %p31 = scmp.eq.s32.totalorder %s14, 2
    %p32 = por %p30, %p31
    %p33 = scmp.ne.s32.totalorder %s22, %s23
    %p34 = scmp.eq.s32.totalorder %s14, 0
    %p35 = por %p33, %p34
    %p36 = scmp.ne.s32.totalorder %s22, %s23
    %p37 = scmp.eq.s32.totalorder %s15, 2
    %p38 = por %p36, %p37
    %p40 = scmp.ne.s32.totalorder %s23, %s39
    %p41 = scmp.eq.s32.totalorder %s15, 0
    %p42 = por %p40, %p41
    %s43 = ssub.s32 %s9, %s16
    %p44 = scmp.eq.s32.totalorder %s43, 0
    %s46 = sadd.s32 %s45, 1
    %s47 = scalar_select %p44, %s45, %s46
    %p50 = pneg %p44
    %p51 = scmp.eq.s32.totalorder %s9, 2
    %p52 = por %p50, %p51
    %p53 = scmp.ne.s32.totalorder %s45, %s48
    %p54 = scmp.eq.s32.totalorder %s9, 0
    %p55 = por %p53, %p54
    %p56 = scmp.ne.s32.totalorder %s45, %s48
    %p57 = scmp.eq.s32.totalorder %s14, 2
    %p58 = por %p56, %p57
    %p59 = scmp.ne.s32.totalorder %s48, %s49
    %p60 = scmp.eq.s32.totalorder %s14, 0
    %p61 = por %p59, %p60
    %p62 = scmp.ne.s32.totalorder %s48, %s49
    %p63 = scmp.eq.s32.totalorder %s15, 2
    %p64 = por %p62, %p63
    %p66 = scmp.ne.s32.totalorder %s49, %s65
    %p67 = scmp.eq.s32.totalorder %s15, 0
    %p68 = por %p66, %p67
    %s69 = ssub.s32 %s9, %s16
    %p70 = scmp.eq.s32.totalorder %s69, 0
    %s72 = sadd.s32 %s71, 1
    %s73 = scalar_select %p70, %s71, %s72
    %p76 = pneg %p70
    %p77 = scmp.eq.s32.totalorder %s9, 2
    %p78 = por %p76, %p77
    %p79 = scmp.ne.s32.totalorder %s71, %s74
    %p80 = scmp.eq.s32.totalorder %s9, 0
    %p81 = por %p79, %p80
    %p82 = scmp.ne.s32.totalorder %s71, %s74
    %p83 = scmp.eq.s32.totalorder %s14, 2
    %p84 = por %p82, %p83
    %p85 = scmp.ne.s32.totalorder %s74, %s75
    %p86 = scmp.eq.s32.totalorder %s14, 0
    %p87 = por %p85, %p86
    %p88 = scmp.ne.s32.totalorder %s74, %s75
    %p89 = scmp.eq.s32.totalorder %s15, 2
    %p90 = por %p88, %p89
    %p92 = scmp.ne.s32.totalorder %s75, %s91
    %p93 = scmp.eq.s32.totalorder %s15, 0
    %p94 = por %p92, %p93
    %p95 = scmp.le.s32.totalorder 1, %s9
    %p96 = scmp.lt.s32.totalorder %s9, 4
    %p97 = pnand %p95, %p96
    %p98 = pneg %p97
    // Predicated region
    $region9: #{spade_block_forward.3} parent=5 // pred_check
      _
    $region10: #{spade_block_forward.3} parent=5 // pred_check_branch
      %100 = sbr.rel (%p97) target = $region12
    $region11: #{spade_block_forward.3} parent=5 // pred_region
      %s101 = ssub.s32 %s9, 1
    $region12: #{spade_block_forward.3} parent=5 // pred_fallthru
      _
    %p102 = scmp.lt.s32.totalorder %s9, 3
    // Predicated region
    $region13: #{spade_block_forward.3} parent=5 // pred_check
      %p103 = pneg %p102
    $region14: #{spade_block_forward.3} parent=5 // pred_check_branch
      %105 = sbr.rel (%p103) target = $region16
    $region15: #{spade_block_forward.3} parent=5 // pred_region
      // Predicated region
      $region17: #{spade_block_forward.3} parent=15 // pred_check
        %p106 = pneg %p29
      $region18: #{spade_block_forward.3} parent=15 // pred_check_branch
        %108 = sbr.rel (%p106) target = $region20
      $region19: #{spade_block_forward.3} parent=15 // pred_region
        %s109 = smul.u32 2, %s9
        %p110 = scmp.lt.s32.totalorder %s109, 5
        %s111 = scalar_select %p110, %s109, 5
        %s112 = smul.addr %s111, 8
        %s113 = scalar_lea.vmem %s0, %s112
        %s114 = smul.u32 2, %s9
      $region20: #{spade_block_forward.3} parent=15 // pred_fallthru
        _
    $region16: #{spade_block_forward.3} parent=5 // pred_fallthru
      _
    %p115 = scmp.le.s32.totalorder 1, %s9
    %p116 = scmp.lt.s32.totalorder %s9, 4
    %p117 = pnand %p115, %p116
    %p118 = pneg %p117
    // Predicated region
    $region21: #{spade_block_forward.3} parent=5 // pred_check
      _
    $region22: #{spade_block_forward.3} parent=5 // pred_check_branch
      %120 = sbr.rel (%p117) target = $region24
    $region23: #{spade_block_forward.3} parent=5 // pred_region
      %s121 = ssub.s32 %s9, 1
      %s122 = smul.u32 2, %s14
      %p123 = scmp.lt.s32.totalorder %s122, 5
      %s124 = scalar_select %p123, %s122, 5
      %s125 = smul.addr %s124, 8
      %s126 = scalar_lea.vmem %s0, %s125
      %p127 = pneg %p35
      %p128 = pneg %p32
      %p129 = pneg %p61
      %p130 = pneg %p58
      %p131 = scmp.lt.s32.totalorder %s14, 2
      %s132 = scalar_select %p131, %s14, 2
      %s133 = smul.addr %s132, 8
      %s134 = scalar_lea.vmem %s1, %s133
      %p135 = pneg %p87
      %p136 = pneg %p84
      %p137 = scmp.lt.s32.totalorder %s14, 2
      %s138 = scalar_select %p137, %s14, 2
      %s139 = smul.addr %s138, 8
      %s140 = scalar_lea.vmem %s2, %s139
      %s141 = smul.u32 2, %s14
      %p142 = scmp.lt.s32.totalorder %s141, 5
      %s143 = scalar_select %p142, %s141, 5
      %s144 = smul.addr %s143, 8
      %s145 = scalar_lea.vmem %s0, %s144
      %s146 = smul.u32 2, %s14
      %p147 = scmp.lt.s32.totalorder %s14, 2
      %s148 = scalar_select %p147, %s14, 2
      %s149 = smul.addr %s148, 8
      %s150 = scalar_lea.vmem %s1, %s149
      %p151 = scmp.lt.s32.totalorder %s14, 2
      %s152 = scalar_select %p151, %s14, 2
      %s153 = smul.addr %s152, 8
      %s154 = scalar_lea.vmem %s2, %s153
      %v155 = vld [vmem:[%s145] sm:$0xff]
      %v156 = vld [vmem:[%s145 + $0x8] sm:$0xff]
      %v157 = vadd.f32 %v155, %v156
      %158 = vadd.xlane.f32.xlu0 %v157
      %v159 = vpop.xlane.xlu0 %158
      %v160 = vmul.f32 %v155, %v155
      %v161 = vmul.f32 %v156, %v156
      %v162 = vadd.f32 %v160, %v161
      %163 = vadd.xlane.f32.xlu0 %v162
      %v164 = vpop.xlane.xlu0 %163
      %v165 = vlaneseq
      %v166 = vand.u32 %v165, 127
      %vm167 = vcmp.eq.s32.totalorder %v166, 0
      %v168 = vsel %vm167, %v159, 0.0
      %169 = vst [vmem:[%s150] sm:$0xff] %v168
      %v170 = vsel %vm167, %v164, 0.0
      %171 = vst [vmem:[%s154] sm:$0xff] %v170
      %p172 = scmp.lt.s32.totalorder %s14, 2
      %s173 = scalar_select %p172, %s14, 2
      %s174 = smul.addr %s173, 8
      %s175 = scalar_lea.vmem %s1, %s174
      %p176 = scmp.lt.s32.totalorder %s14, 2
      %s177 = scalar_select %p176, %s14, 2
      %s178 = smul.addr %s177, 8
      %s179 = scalar_lea.vmem %s2, %s178
      // Predicated region
      $region25: #{spade_block_forward.3} parent=23 // pred_check
        %p180 = pneg %p58
      $region26: #{spade_block_forward.3} parent=23 // pred_check_branch
        %182 = sbr.rel (%p180) target = $region28
      $region27: #{spade_block_forward.3} parent=23 // pred_region
        _
      $region28: #{spade_block_forward.3} parent=23 // pred_fallthru
        _
      // Predicated region
      $region29: #{spade_block_forward.3} parent=23 // pred_check
        %p183 = pneg %p84
      $region30: #{spade_block_forward.3} parent=23 // pred_check_branch
        %185 = sbr.rel (%p183) target = $region32
      $region31: #{spade_block_forward.3} parent=23 // pred_region
        _
      $region32: #{spade_block_forward.3} parent=23 // pred_fallthru
        _
    $region24: #{spade_block_forward.3} parent=5 // pred_fallthru
      _
    %p186 = scmp.le.s32.totalorder 2, %s9
    // Predicated region
    $region33: #{spade_block_forward.3} parent=5 // pred_check
      %p187 = pneg %p186
    $region34: #{spade_block_forward.3} parent=5 // pred_check_branch
      %189 = sbr.rel (%p187) target = $region36
    $region35: #{spade_block_forward.3} parent=5 // pred_region
      %s190 = ssub.s32 %s9, 2
      // Predicated region
      $region37: #{spade_block_forward.3} parent=35 // pred_check
        %p191 = pneg %p64
      $region38: #{spade_block_forward.3} parent=35 // pred_check_branch
        %193 = sbr.rel (%p191) target = $region40
      $region39: #{spade_block_forward.3} parent=35 // pred_region
        %p194 = scmp.lt.s32.totalorder %s15, 2
        %s195 = scalar_select %p194, %s15, 2
        %s196 = smul.addr %s195, 8
        %s197 = scalar_lea.vmem %s1, %s196
      $region40: #{spade_block_forward.3} parent=35 // pred_fallthru
        _
      // Predicated region
      $region41: #{spade_block_forward.3} parent=35 // pred_check
        %p198 = pneg %p90
      $region42: #{spade_block_forward.3} parent=35 // pred_check_branch
        %200 = sbr.rel (%p198) target = $region44
      $region43: #{spade_block_forward.3} parent=35 // pred_region
        %p201 = scmp.lt.s32.totalorder %s15, 2
        %s202 = scalar_select %p201, %s15, 2
        %s203 = smul.addr %s202, 8
        %s204 = scalar_lea.vmem %s2, %s203
      $region44: #{spade_block_forward.3} parent=35 // pred_fallthru
        _
    $region36: #{spade_block_forward.3} parent=5 // pred_fallthru
      _
  $region6: #{spade_block_forward.3} parent=0 // loop_footer
    %s13 = sadd.s32 1, %s9
  $region7: #{spade_block_forward.3} parent=0 // loop_footer_branch
    %8 = sbr.rel target = $region3
  $region8: #{spade_block_forward.3} parent=0 // loop_exit
    _

// kernel: spade_block_forward.4
$region0: #{spade_block_forward.4}
  #allocation0 [shape = 'u32[]', space=smem, size = 0x4, offset = 0x4, fixed_abs, tag = 'smem constant byte address 0x4 - core index']
  #allocation1 [shape = 'u32[144,128]{1,0:T(1,128)}', space=vmem, size = 0x12000, scoped, tag = 'internal scratch']
  %s0 = inlined_call_operand.vmem [shape: bf16[9,8,8], index: 0, kind: input, shape index: {}]
  %s1 = inlined_call_operand.vmem [shape: f32[8,1], index: 1, kind: input, shape index: {}]
  %s2 = inlined_call_operand.vmem [shape: bf16[9,16,8], index: 2, kind: input, shape index: {}]
  %s3 = inlined_call_operand.vmem [shape: f32[16,1], index: 3, kind: input, shape index: {}]
  %s4 = inlined_call_operand.vmem [shape: f32[8,1], index: 4, kind: input, shape index: {}]
  %s5 = inlined_call_operand.vmem [shape: f32[8,1], index: 5, kind: input, shape index: {}]
  %s6 = inlined_call_operand.vmem [shape: f32[1,768], index: 6, kind: input, shape index: {}, may-alias: {6,7,8}]
  %s7 = inlined_call_operand.vmem [shape: f32[1,768], index: 7, kind: input, shape index: {}, may-alias: {6,7,8}]
  %s8 = inlined_call_operand.vmem [shape: f32[1,768], index: 8, kind: input, shape index: {}, may-alias: {6,7,8}]
  %s9 = inlined_call_operand.vmem [shape: bf16[8,768], index: 9, kind: input, shape index: {}, may-alias: {9,10,11}]
  %s10 = inlined_call_operand.vmem [shape: bf16[8,768], index: 10, kind: input, shape index: {}, may-alias: {9,10,11}]
  %s11 = inlined_call_operand.vmem [shape: bf16[8,768], index: 11, kind: input, shape index: {}, may-alias: {9,10,11}]
  %s12 = inlined_call_operand.vmem [shape: f32[8,768], index: 12, kind: input, shape index: {}]
  %s13 = inlined_call_operand.vmem [shape: f32[8,768], index: 13, kind: output, shape index: {0}]
  %s14 = inlined_call_operand.vmem [shape: f32[8,384], index: 14, kind: output, shape index: {1}]
  %s15 = inlined_call_operand.vmem [shape: f32[8,384], index: 15, kind: output, shape index: {2}]
  %16 = xla_tuple %s13, %s14, %s15
  %s17 = sld [smem:[#allocation0]]
  $region101: #{spade_block_forward.4} parent=0
    _
  %s19 = ssub.s32 1, %s17
  %s20 = scalar_select 0, %s19, %s17
  loop: start=0, step=1, limit=5
  $region2: #{spade_block_forward.4} parent=0 // loop_pre_header
    _
  $region3: #{spade_block_forward.4} parent=0 // loop_header
    %s22 = sphi 0, %s26
    %p23 = scmp.ge.s32.totalorder %s22, 5
    %s30 = sphi 0, %s30
    %s32 = sphi 0, %s30
    %s33 = sphi 0, %s32
    %s47 = sphi 0, %s33
    %s51 = sphi 0, %s51
    %s53 = sphi 0, %s51
    %s54 = sphi 0, %s53
    %s68 = sphi 0, %s54
    %s72 = sphi 0, %s72
    %s74 = sphi 0, %s72
    %s75 = sphi 0, %s74
    %s89 = sphi 0, %s75
    %s93 = sphi 0, %s93
    %s95 = sphi 0, %s93
    %s96 = sphi 0, %s95
    %s110 = sphi 0, %s96
    %s114 = sphi 0, %s114
    %s116 = sphi 0, %s114
    %s117 = sphi 0, %s116
    %s131 = sphi 0, %s117
    %s135 = sphi 0, %s135
    %s137 = sphi 0, %s135
    %s138 = sphi 0, %s137
    %s152 = sphi 0, %s138
    %s166 = sphi 0, %s168
    %s169 = sphi 0, %s166
    %s170 = sphi 0, %s169
    %s186 = sphi 0, %s170
    %s192 = sphi 0, %s194
    %s195 = sphi 0, %s192
    %s196 = sphi 0, %s195
    %s212 = sphi 0, %s196
    %s226 = sphi 0, %s228
    %s229 = sphi 0, %s226
    %s230 = sphi 0, %s229
    %s246 = sphi 0, %s230
    %s260 = sphi 0, %s262
    %s263 = sphi 0, %s260
    %s264 = sphi 0, %s263
    %s280 = sphi 0, %s264
    %s286 = sphi 0, %s288
    %s289 = sphi 0, %s286
    %s290 = sphi 0, %s289
    %s306 = sphi 0, %s290
    %s320 = sphi 0, %s322
    %s323 = sphi 0, %s320
    %s324 = sphi 0, %s323
    %s340 = sphi 0, %s324
    %s346 = sphi 0, %s348
    %s349 = sphi 0, %s346
    %s350 = sphi 0, %s349
    %s366 = sphi 0, %s350
    %s372 = sphi 0, %s374
    %s375 = sphi 0, %s372
    %s376 = sphi 0, %s375
    %s392 = sphi 0, %s376
    %s398 = sphi 0, %s400
    %s401 = sphi 0, %s398
    %s402 = sphi 0, %s401
    %s418 = sphi 0, %s402
    %s424 = sphi 0, %s426
    %s427 = sphi 0, %s424
    %s428 = sphi 0, %s427
    %s444 = sphi 0, %s428
  $region4: #{spade_block_forward.4} parent=0 // loop_header_branch
    %25 = sbr.rel (%p23) target = $region8
  $region5: #{spade_block_forward.4} parent=0 // loop_body
    %s27 = ssub.s32 %s22, 1
    %s28 = ssub.s32 %s22, 2
    %s29 = sadd.s32 %s22, 1
    %s31 = sadd.s32 %s30, 1
    %p34 = scmp.eq.s32.totalorder %s22, 2
    %p35 = scmp.ne.s32.totalorder %s30, %s32
    %p36 = scmp.eq.s32.totalorder %s22, 0
    %p37 = por %p35, %p36
    %p38 = scmp.ne.s32.totalorder %s30, %s32
    %p39 = scmp.eq.s32.totalorder %s27, 2
    %p40 = por %p38, %p39
    %p41 = scmp.ne.s32.totalorder %s32, %s33
    %p42 = scmp.eq.s32.totalorder %s27, 0
    %p43 = por %p41, %p42
    %p44 = scmp.ne.s32.totalorder %s32, %s33
    %p45 = scmp.eq.s32.totalorder %s28, 2
    %p46 = por %p44, %p45
    %p48 = scmp.ne.s32.totalorder %s33, %s47
    %p49 = scmp.eq.s32.totalorder %s28, 0
    %p50 = por %p48, %p49
    %s52 = sadd.s32 %s51, 1
    %p55 = scmp.eq.s32.totalorder %s22, 2
    %p56 = scmp.ne.s32.totalorder %s51, %s53
    %p57 = scmp.eq.s32.totalorder %s22, 0
    %p58 = por %p56, %p57
    %p59 = scmp.ne.s32.totalorder %s51, %s53
    %p60 = scmp.eq.s32.totalorder %s27, 2
    %p61 = por %p59, %p60
    %p62 = scmp.ne.s32.totalorder %s53, %s54
    %p63 = scmp.eq.s32.totalorder %s27, 0
    %p64 = por %p62, %p63
    %p65 = scmp.ne.s32.totalorder %s53, %s54
    %p66 = scmp.eq.s32.totalorder %s28, 2
    %p67 = por %p65, %p66
    %p69 = scmp.ne.s32.totalorder %s54, %s68
    %p70 = scmp.eq.s32.totalorder %s28, 0
    %p71 = por %p69, %p70
    %s73 = sadd.s32 %s72, 1
    %p76 = scmp.eq.s32.totalorder %s22, 2
    %p77 = scmp.ne.s32.totalorder %s72, %s74
    %p78 = scmp.eq.s32.totalorder %s22, 0
    %p79 = por %p77, %p78
    %p80 = scmp.ne.s32.totalorder %s72, %s74
    %p81 = scmp.eq.s32.totalorder %s27, 2
    %p82 = por %p80, %p81
    %p83 = scmp.ne.s32.totalorder %s74, %s75
    %p84 = scmp.eq.s32.totalorder %s27, 0
    %p85 = por %p83, %p84
    %p86 = scmp.ne.s32.totalorder %s74, %s75
    %p87 = scmp.eq.s32.totalorder %s28, 2
    %p88 = por %p86, %p87
    %p90 = scmp.ne.s32.totalorder %s75, %s89
    %p91 = scmp.eq.s32.totalorder %s28, 0
    %p92 = por %p90, %p91
    %s94 = sadd.s32 %s93, 1
    %p97 = scmp.eq.s32.totalorder %s22, 2
    %p98 = scmp.ne.s32.totalorder %s93, %s95
    %p99 = scmp.eq.s32.totalorder %s22, 0
    %p100 = por %p98, %p99
    %p101 = scmp.ne.s32.totalorder %s93, %s95
    %p102 = scmp.eq.s32.totalorder %s27, 2
    %p103 = por %p101, %p102
    %p104 = scmp.ne.s32.totalorder %s95, %s96
    %p105 = scmp.eq.s32.totalorder %s27, 0
    %p106 = por %p104, %p105
    %p107 = scmp.ne.s32.totalorder %s95, %s96
    %p108 = scmp.eq.s32.totalorder %s28, 2
    %p109 = por %p107, %p108
    %p111 = scmp.ne.s32.totalorder %s96, %s110
    %p112 = scmp.eq.s32.totalorder %s28, 0
    %p113 = por %p111, %p112
    %s115 = sadd.s32 %s114, 1
    %p118 = scmp.eq.s32.totalorder %s22, 2
    %p119 = scmp.ne.s32.totalorder %s114, %s116
    %p120 = scmp.eq.s32.totalorder %s22, 0
    %p121 = por %p119, %p120
    %p122 = scmp.ne.s32.totalorder %s114, %s116
    %p123 = scmp.eq.s32.totalorder %s27, 2
    %p124 = por %p122, %p123
    %p125 = scmp.ne.s32.totalorder %s116, %s117
    %p126 = scmp.eq.s32.totalorder %s27, 0
    %p127 = por %p125, %p126
    %p128 = scmp.ne.s32.totalorder %s116, %s117
    %p129 = scmp.eq.s32.totalorder %s28, 2
    %p130 = por %p128, %p129
    %p132 = scmp.ne.s32.totalorder %s117, %s131
    %p133 = scmp.eq.s32.totalorder %s28, 0
    %p134 = por %p132, %p133
    %s136 = sadd.s32 %s135, 1
    %p139 = scmp.eq.s32.totalorder %s22, 2
    %p140 = scmp.ne.s32.totalorder %s135, %s137
    %p141 = scmp.eq.s32.totalorder %s22, 0
    %p142 = por %p140, %p141
    %p143 = scmp.ne.s32.totalorder %s135, %s137
    %p144 = scmp.eq.s32.totalorder %s27, 2
    %p145 = por %p143, %p144
    %p146 = scmp.ne.s32.totalorder %s137, %s138
    %p147 = scmp.eq.s32.totalorder %s27, 0
    %p148 = por %p146, %p147
    %p149 = scmp.ne.s32.totalorder %s137, %s138
    %p150 = scmp.eq.s32.totalorder %s28, 2
    %p151 = por %p149, %p150
    %p153 = scmp.ne.s32.totalorder %s138, %s152
    %p154 = scmp.eq.s32.totalorder %s28, 0
    %p155 = por %p153, %p154
    %s156 = smul.u32 %s22, 2
    %s157 = ssub.s32 %s156, 1
    %p158 = scmp.gt.s32.totalorder %s157, 0
    %s159 = scalar_select %p158, %s157, 0
    %s160 = smul.u32 %s29, 2
    %s161 = ssub.s32 %s160, 1
    %p162 = scmp.gt.s32.totalorder %s161, 0
    %s163 = scalar_select %p162, %s161, 0
    %s164 = ssub.s32 %s159, %s163
    %p165 = scmp.eq.s32.totalorder %s164, 0
    %s167 = sadd.s32 %s166, 1
    %s168 = scalar_select %p165, %s166, %s167
    %p171 = pneg %p165
    %p172 = scmp.eq.s32.totalorder %s22, 2
    %p173 = por %p171, %p172
    %p174 = scmp.ne.s32.totalorder %s166, %s169
    %p175 = scmp.eq.s32.totalorder %s22, 0
    %p176 = por %p174, %p175
    %p177 = scmp.ne.s32.totalorder %s166, %s169
    %p178 = scmp.eq.s32.totalorder %s27, 2
    %p179 = por %p177, %p178
    %p180 = scmp.ne.s32.totalorder %s169, %s170
    %p181 = scmp.eq.s32.totalorder %s27, 0
    %p182 = por %p180, %p181
    %p183 = scmp.ne.s32.totalorder %s169, %s170
    %p184 = scmp.eq.s32.totalorder %s28, 2
    %p185 = por %p183, %p184
    %p187 = scmp.ne.s32.totalorder %s170, %s186
    %p188 = scmp.eq.s32.totalorder %s28, 0
    %p189 = por %p187, %p188
    %s190 = ssub.s32 %s22, %s29
    %p191 = scmp.eq.s32.totalorder %s190, 0
    %s193 = sadd.s32 %s192, 1
    %s194 = scalar_select %p191, %s192, %s193
    %p197 = pneg %p191
    %p198 = scmp.eq.s32.totalorder %s22, 2
    %p199 = por %p197, %p198
    %p200 = scmp.ne.s32.totalorder %s192, %s195
    %p201 = scmp.eq.s32.totalorder %s22, 0
    %p202 = por %p200, %p201
    %p203 = scmp.ne.s32.totalorder %s192, %s195
    %p204 = scmp.eq.s32.totalorder %s27, 2
    %p205 = por %p203, %p204
    %p206 = scmp.ne.s32.totalorder %s195, %s196
    %p207 = scmp.eq.s32.totalorder %s27, 0
    %p208 = por %p206, %p207
    %p209 = scmp.ne.s32.totalorder %s195, %s196
    %p210 = scmp.eq.s32.totalorder %s28, 2
    %p211 = por %p209, %p210
    %p213 = scmp.ne.s32.totalorder %s196, %s212
    %p214 = scmp.eq.s32.totalorder %s28, 0
    %p215 = por %p213, %p214
    %s216 = sadd.s32 %s22, 1
    %s217 = smul.u32 %s216, 2
    %p218 = scmp.lt.s32.totalorder %s217, 5
    %s219 = scalar_select %p218, %s217, 5
    %s220 = sadd.s32 %s29, 1
    %s221 = smul.u32 %s220, 2
    %p222 = scmp.lt.s32.totalorder %s221, 5
    %s223 = scalar_select %p222, %s221, 5
    %s224 = ssub.s32 %s219, %s223
    %p225 = scmp.eq.s32.totalorder %s224, 0
    %s227 = sadd.s32 %s226, 1
    %s228 = scalar_select %p225, %s226, %s227
    %p231 = pneg %p225
    %p232 = scmp.eq.s32.totalorder %s22, 2
    %p233 = por %p231, %p232
    %p234 = scmp.ne.s32.totalorder %s226, %s229
    %p235 = scmp.eq.s32.totalorder %s22, 0
    %p236 = por %p234, %p235
    %p237 = scmp.ne.s32.totalorder %s226, %s229
    %p238 = scmp.eq.s32.totalorder %s27, 2
    %p239 = por %p237, %p238
    %p240 = scmp.ne.s32.totalorder %s229, %s230
    %p241 = scmp.eq.s32.totalorder %s27, 0
    %p242 = por %p240, %p241
    %p243 = scmp.ne.s32.totalorder %s229, %s230
    %p244 = scmp.eq.s32.totalorder %s28, 2
    %p245 = por %p243, %p244
    %p247 = scmp.ne.s32.totalorder %s230, %s246
    %p248 = scmp.eq.s32.totalorder %s28, 0
    %p249 = por %p247, %p248
    %s250 = smul.u32 %s22, 2
    %s251 = ssub.s32 %s250, 1
    %p252 = scmp.gt.s32.totalorder %s251, 0
    %s253 = scalar_select %p252, %s251, 0
    %s254 = smul.u32 %s29, 2
    %s255 = ssub.s32 %s254, 1
    %p256 = scmp.gt.s32.totalorder %s255, 0
    %s257 = scalar_select %p256, %s255, 0
    %s258 = ssub.s32 %s253, %s257
    %p259 = scmp.eq.s32.totalorder %s258, 0
    %s261 = sadd.s32 %s260, 1
    %s262 = scalar_select %p259, %s260, %s261
    %p265 = pneg %p259
    %p266 = scmp.eq.s32.totalorder %s22, 2
    %p267 = por %p265, %p266
    %p268 = scmp.ne.s32.totalorder %s260, %s263
    %p269 = scmp.eq.s32.totalorder %s22, 0
    %p270 = por %p268, %p269
    %p271 = scmp.ne.s32.totalorder %s260, %s263
    %p272 = scmp.eq.s32.totalorder %s27, 2
    %p273 = por %p271, %p272
    %p274 = scmp.ne.s32.totalorder %s263, %s264
    %p275 = scmp.eq.s32.totalorder %s27, 0
    %p276 = por %p274, %p275
    %p277 = scmp.ne.s32.totalorder %s263, %s264
    %p278 = scmp.eq.s32.totalorder %s28, 2
    %p279 = por %p277, %p278
    %p281 = scmp.ne.s32.totalorder %s264, %s280
    %p282 = scmp.eq.s32.totalorder %s28, 0
    %p283 = por %p281, %p282
    %s284 = ssub.s32 %s22, %s29
    %p285 = scmp.eq.s32.totalorder %s284, 0
    %s287 = sadd.s32 %s286, 1
    %s288 = scalar_select %p285, %s286, %s287
    %p291 = pneg %p285
    %p292 = scmp.eq.s32.totalorder %s22, 2
    %p293 = por %p291, %p292
    %p294 = scmp.ne.s32.totalorder %s286, %s289
    %p295 = scmp.eq.s32.totalorder %s22, 0
    %p296 = por %p294, %p295
    %p297 = scmp.ne.s32.totalorder %s286, %s289
    %p298 = scmp.eq.s32.totalorder %s27, 2
    %p299 = por %p297, %p298
    %p300 = scmp.ne.s32.totalorder %s289, %s290
    %p301 = scmp.eq.s32.totalorder %s27, 0
    %p302 = por %p300, %p301
    %p303 = scmp.ne.s32.totalorder %s289, %s290
    %p304 = scmp.eq.s32.totalorder %s28, 2
    %p305 = por %p303, %p304
    %p307 = scmp.ne.s32.totalorder %s290, %s306
    %p308 = scmp.eq.s32.totalorder %s28, 0
    %p309 = por %p307, %p308
    %s310 = sadd.s32 %s22, 1
    %s311 = smul.u32 %s310, 2
    %p312 = scmp.lt.s32.totalorder %s311, 5
    %s313 = scalar_select %p312, %s311, 5
    %s314 = sadd.s32 %s29, 1
    %s315 = smul.u32 %s314, 2
    %p316 = scmp.lt.s32.totalorder %s315, 5
    %s317 = scalar_select %p316, %s315, 5
    %s318 = ssub.s32 %s313, %s317
    %p319 = scmp.eq.s32.totalorder %s318, 0
    %s321 = sadd.s32 %s320, 1
    %s322 = scalar_select %p319, %s320, %s321
    %p325 = pneg %p319
    %p326 = scmp.eq.s32.totalorder %s22, 2
    %p327 = por %p325, %p326
    %p328 = scmp.ne.s32.totalorder %s320, %s323
    %p329 = scmp.eq.s32.totalorder %s22, 0
    %p330 = por %p328, %p329
    %p331 = scmp.ne.s32.totalorder %s320, %s323
    %p332 = scmp.eq.s32.totalorder %s27, 2
    %p333 = por %p331, %p332
    %p334 = scmp.ne.s32.totalorder %s323, %s324
    %p335 = scmp.eq.s32.totalorder %s27, 0
    %p336 = por %p334, %p335
    %p337 = scmp.ne.s32.totalorder %s323, %s324
    %p338 = scmp.eq.s32.totalorder %s28, 2
    %p339 = por %p337, %p338
    %p341 = scmp.ne.s32.totalorder %s324, %s340
    %p342 = scmp.eq.s32.totalorder %s28, 0
    %p343 = por %p341, %p342
    %s344 = ssub.s32 %s22, %s29
    %p345 = scmp.eq.s32.totalorder %s344, 0
    %s347 = sadd.s32 %s346, 1
    %s348 = scalar_select %p345, %s346, %s347
    %p351 = pneg %p345
    %p352 = scmp.eq.s32.totalorder %s22, 2
    %p353 = por %p351, %p352
    %p354 = scmp.ne.s32.totalorder %s346, %s349
    %p355 = scmp.eq.s32.totalorder %s22, 0
    %p356 = por %p354, %p355
    %p357 = scmp.ne.s32.totalorder %s346, %s349
    %p358 = scmp.eq.s32.totalorder %s27, 2
    %p359 = por %p357, %p358
    %p360 = scmp.ne.s32.totalorder %s349, %s350
    %p361 = scmp.eq.s32.totalorder %s27, 0
    %p362 = por %p360, %p361
    %p363 = scmp.ne.s32.totalorder %s349, %s350
    %p364 = scmp.eq.s32.totalorder %s28, 2
    %p365 = por %p363, %p364
    %p367 = scmp.ne.s32.totalorder %s350, %s366
    %p368 = scmp.eq.s32.totalorder %s28, 0
    %p369 = por %p367, %p368
    %s370 = ssub.s32 %s22, %s29
    %p371 = scmp.eq.s32.totalorder %s370, 0
    %s373 = sadd.s32 %s372, 1
    %s374 = scalar_select %p371, %s372, %s373
    %p377 = pneg %p371
    %p378 = scmp.eq.s32.totalorder %s22, 2
    %p379 = por %p377, %p378
    %p380 = scmp.ne.s32.totalorder %s372, %s375
    %p381 = scmp.eq.s32.totalorder %s22, 0
    %p382 = por %p380, %p381
    %p383 = scmp.ne.s32.totalorder %s372, %s375
    %p384 = scmp.eq.s32.totalorder %s27, 2
    %p385 = por %p383, %p384
    %p386 = scmp.ne.s32.totalorder %s375, %s376
    %p387 = scmp.eq.s32.totalorder %s27, 0
    %p388 = por %p386, %p387
    %p389 = scmp.ne.s32.totalorder %s375, %s376
    %p390 = scmp.eq.s32.totalorder %s28, 2
    %p391 = por %p389, %p390
    %p393 = scmp.ne.s32.totalorder %s376, %s392
    %p394 = scmp.eq.s32.totalorder %s28, 0
    %p395 = por %p393, %p394
    %s396 = ssub.s32 %s22, %s29
    %p397 = scmp.eq.s32.totalorder %s396, 0
    %s399 = sadd.s32 %s398, 1
    %s400 = scalar_select %p397, %s398, %s399
    %p403 = pneg %p397
    %p404 = scmp.eq.s32.totalorder %s22, 2
    %p405 = por %p403, %p404
    %p406 = scmp.ne.s32.totalorder %s398, %s401
    %p407 = scmp.eq.s32.totalorder %s22, 0
    %p408 = por %p406, %p407
    %p409 = scmp.ne.s32.totalorder %s398, %s401
    %p410 = scmp.eq.s32.totalorder %s27, 2
    %p411 = por %p409, %p410
    %p412 = scmp.ne.s32.totalorder %s401, %s402
    %p413 = scmp.eq.s32.totalorder %s27, 0
    %p414 = por %p412, %p413
    %p415 = scmp.ne.s32.totalorder %s401, %s402
    %p416 = scmp.eq.s32.totalorder %s28, 2
    %p417 = por %p415, %p416
    %p419 = scmp.ne.s32.totalorder %s402, %s418
    %p420 = scmp.eq.s32.totalorder %s28, 0
    %p421 = por %p419, %p420
    %s422 = ssub.s32 %s22, %s29
    %p423 = scmp.eq.s32.totalorder %s422, 0
    %s425 = sadd.s32 %s424, 1
    %s426 = scalar_select %p423, %s424, %s425
    %p429 = pneg %p423
    %p430 = scmp.eq.s32.totalorder %s22, 2
    %p431 = por %p429, %p430
    %p432 = scmp.ne.s32.totalorder %s424, %s427
    %p433 = scmp.eq.s32.totalorder %s22, 0
    %p434 = por %p432, %p433
    %p435 = scmp.ne.s32.totalorder %s424, %s427
    %p436 = scmp.eq.s32.totalorder %s27, 2
    %p437 = por %p435, %p436
    %p438 = scmp.ne.s32.totalorder %s427, %s428
    %p439 = scmp.eq.s32.totalorder %s27, 0
    %p440 = por %p438, %p439
    %p441 = scmp.ne.s32.totalorder %s427, %s428
    %p442 = scmp.eq.s32.totalorder %s28, 2
    %p443 = por %p441, %p442
    %p445 = scmp.ne.s32.totalorder %s428, %s444
    %p446 = scmp.eq.s32.totalorder %s28, 0
    %p447 = por %p445, %p446
    %p448 = scmp.le.s32.totalorder 1, %s22
    %p449 = scmp.lt.s32.totalorder %s22, 4
    %p450 = pnand %p448, %p449
    %p451 = pneg %p450
    // Predicated region
    $region9: #{spade_block_forward.4} parent=5 // pred_check
      _
    $region10: #{spade_block_forward.4} parent=5 // pred_check_branch
      %453 = sbr.rel (%p450) target = $region12
    $region11: #{spade_block_forward.4} parent=5 // pred_region
      %s454 = ssub.s32 %s22, 1
      // Predicated region
      $region13: #{spade_block_forward.4} parent=11 // pred_check
        %p455 = pneg %p43
      $region14: #{spade_block_forward.4} parent=11 // pred_check_branch
        %457 = sbr.rel (%p455) target = $region16
      $region15: #{spade_block_forward.4} parent=11 // pred_region
        _
      $region16: #{spade_block_forward.4} parent=11 // pred_fallthru
        _
      // Predicated region
      $region17: #{spade_block_forward.4} parent=11 // pred_check
        %p458 = pneg %p64
      $region18: #{spade_block_forward.4} parent=11 // pred_check_branch
        %460 = sbr.rel (%p458) target = $region20
      $region19: #{spade_block_forward.4} parent=11 // pred_region
        _
      $region20: #{spade_block_forward.4} parent=11 // pred_fallthru
        _
      // Predicated region
      $region21: #{spade_block_forward.4} parent=11 // pred_check
        %p461 = pneg %p85
      $region22: #{spade_block_forward.4} parent=11 // pred_check_branch
        %463 = sbr.rel (%p461) target = $region24
      $region23: #{spade_block_forward.4} parent=11 // pred_region
        _
      $region24: #{spade_block_forward.4} parent=11 // pred_fallthru
        _
      // Predicated region
      $region25: #{spade_block_forward.4} parent=11 // pred_check
        %p464 = pneg %p106
      $region26: #{spade_block_forward.4} parent=11 // pred_check_branch
        %466 = sbr.rel (%p464) target = $region28
      $region27: #{spade_block_forward.4} parent=11 // pred_region
        _
      $region28: #{spade_block_forward.4} parent=11 // pred_fallthru
        _
      // Predicated region
      $region29: #{spade_block_forward.4} parent=11 // pred_check
        %p467 = pneg %p127
      $region30: #{spade_block_forward.4} parent=11 // pred_check_branch
        %469 = sbr.rel (%p467) target = $region32
      $region31: #{spade_block_forward.4} parent=11 // pred_region
        _
      $region32: #{spade_block_forward.4} parent=11 // pred_fallthru
        _
      // Predicated region
      $region33: #{spade_block_forward.4} parent=11 // pred_check
        %p470 = pneg %p148
      $region34: #{spade_block_forward.4} parent=11 // pred_check_branch
        %472 = sbr.rel (%p470) target = $region36
      $region35: #{spade_block_forward.4} parent=11 // pred_region
        _
      $region36: #{spade_block_forward.4} parent=11 // pred_fallthru
        _
    $region12: #{spade_block_forward.4} parent=5 // pred_fallthru
      _
    %p473 = scmp.lt.s32.totalorder %s22, 3
    // Predicated region
    $region37: #{spade_block_forward.4} parent=5 // pred_check
      %p474 = pneg %p473
    $region38: #{spade_block_forward.4} parent=5 // pred_check_branch
      %476 = sbr.rel (%p474) target = $region40
    $region39: #{spade_block_forward.4} parent=5 // pred_region
      // Predicated region
      $region41: #{spade_block_forward.4} parent=39 // pred_check
        %p477 = pneg %p176
      $region42: #{spade_block_forward.4} parent=39 // pred_check_branch
        %479 = sbr.rel (%p477) target = $region44
      $region43: #{spade_block_forward.4} parent=39 // pred_region
        %s480 = smul.u32 %s22, 2
        %s481 = ssub.s32 %s480, 1
        %p482 = scmp.gt.s32.totalorder %s481, 0
        %s483 = scalar_select %p482, %s481, 0
        %p484 = scmp.lt.s32.totalorder %s483, 5
        %s485 = scalar_select %p484, %s483, 5
        %s486 = scalar_lea.vmem %s6, %s485
        %s487 = smul.u32 %s22, 2
        %s488 = ssub.s32 %s487, 1
        %p489 = scmp.gt.s32.totalorder %s488, 0
        %s490 = scalar_select %p489, %s488, 0
      $region44: #{spade_block_forward.4} parent=39 // pred_fallthru
        _
      // Predicated region
      $region45: #{spade_block_forward.4} parent=39 // pred_check
        %p491 = pneg %p202
      $region46: #{spade_block_forward.4} parent=39 // pred_check_branch
        %493 = sbr.rel (%p491) target = $region48
      $region47: #{spade_block_forward.4} parent=39 // pred_region
        %s494 = smul.u32 2, %s22
        %p495 = scmp.lt.s32.totalorder %s494, 5
        %s496 = scalar_select %p495, %s494, 5
        %s497 = scalar_lea.vmem %s7, %s496
        %s498 = smul.u32 2, %s22
      $region48: #{spade_block_forward.4} parent=39 // pred_fallthru
        _
      // Predicated region
      $region49: #{spade_block_forward.4} parent=39 // pred_check
        %p499 = pneg %p236
      $region50: #{spade_block_forward.4} parent=39 // pred_check_branch
        %501 = sbr.rel (%p499) target = $region52
      $region51: #{spade_block_forward.4} parent=39 // pred_region
        %s502 = sadd.s32 %s22, 1
        %s503 = smul.u32 %s502, 2
        %p504 = scmp.lt.s32.totalorder %s503, 5
        %s505 = scalar_select %p504, %s503, 5
        %p506 = scmp.lt.s32.totalorder %s505, 5
        %s507 = scalar_select %p506, %s505, 5
        %s508 = scalar_lea.vmem %s8, %s507
        %s509 = sadd.s32 %s22, 1
        %s510 = smul.u32 %s509, 2
        %p511 = scmp.lt.s32.totalorder %s510, 5
        %s512 = scalar_select %p511, %s510, 5
      $region52: #{spade_block_forward.4} parent=39 // pred_fallthru
        _
      // Predicated region
      $region53: #{spade_block_forward.4} parent=39 // pred_check
        %p513 = pneg %p270
      $region54: #{spade_block_forward.4} parent=39 // pred_check_branch
        %515 = sbr.rel (%p513) target = $region56
      $region55: #{spade_block_forward.4} parent=39 // pred_region
        %s516 = smul.u32 %s22, 2
        %s517 = ssub.s32 %s516, 1
        %p518 = scmp.gt.s32.totalorder %s517, 0
        %s519 = scalar_select %p518, %s517, 0
        %p520 = scmp.lt.s32.totalorder %s519, 5
        %s521 = scalar_select %p520, %s519, 5
        %s522 = smul.addr %s521, 4
        %s523 = scalar_lea.vmem %s9, %s522
        %s524 = smul.u32 %s22, 2
        %s525 = ssub.s32 %s524, 1
        %p526 = scmp.gt.s32.totalorder %s525, 0
        %s527 = scalar_select %p526, %s525, 0
      $region56: #{spade_block_forward.4} parent=39 // pred_fallthru
        _
      // Predicated region
      $region57: #{spade_block_forward.4} parent=39 // pred_check
        %p528 = pneg %p296
      $region58: #{spade_block_forward.4} parent=39 // pred_check_branch
        %530 = sbr.rel (%p528) target = $region60
      $region59: #{spade_block_forward.4} parent=39 // pred_region
        %s531 = smul.u32 2, %s22
        %p532 = scmp.lt.s32.totalorder %s531, 5
        %s533 = scalar_select %p532, %s531, 5
        %s534 = smul.addr %s533, 4
        %s535 = scalar_lea.vmem %s10, %s534
        %s536 = smul.u32 2, %s22
      $region60: #{spade_block_forward.4} parent=39 // pred_fallthru
        _
      // Predicated region
      $region61: #{spade_block_forward.4} parent=39 // pred_check
        %p537 = pneg %p330
      $region62: #{spade_block_forward.4} parent=39 // pred_check_branch
        %539 = sbr.rel (%p537) target = $region64
      $region63: #{spade_block_forward.4} parent=39 // pred_region
        %s540 = sadd.s32 %s22, 1
        %s541 = smul.u32 %s540, 2
        %p542 = scmp.lt.s32.totalorder %s541, 5
        %s543 = scalar_select %p542, %s541, 5
        %p544 = scmp.lt.s32.totalorder %s543, 5
        %s545 = scalar_select %p544, %s543, 5
        %s546 = smul.addr %s545, 4
        %s547 = scalar_lea.vmem %s11, %s546
        %s548 = sadd.s32 %s22, 1
        %s549 = smul.u32 %s548, 2
        %p550 = scmp.lt.s32.totalorder %s549, 5
        %s551 = scalar_select %p550, %s549, 5
      $region64: #{spade_block_forward.4} parent=39 // pred_fallthru
        _
      // Predicated region
      $region65: #{spade_block_forward.4} parent=39 // pred_check
        %p552 = pneg %p356
      $region66: #{spade_block_forward.4} parent=39 // pred_check_branch
        %554 = sbr.rel (%p552) target = $region68
      $region67: #{spade_block_forward.4} parent=39 // pred_region
        %s555 = smul.u32 2, %s22
        %p556 = scmp.lt.s32.totalorder %s555, 5
        %s557 = scalar_select %p556, %s555, 5
        %s558 = smul.addr %s557, 8
        %s559 = scalar_lea.vmem %s12, %s558
        %s560 = smul.u32 2, %s22
      $region68: #{spade_block_forward.4} parent=39 // pred_fallthru
        _
    $region40: #{spade_block_forward.4} parent=5 // pred_fallthru
      _
    %p561 = scmp.le.s32.totalorder 1, %s22
    %p562 = scmp.lt.s32.totalorder %s22, 4
    %p563 = pnand %p561, %p562
    %p564 = pneg %p563
    // Predicated region
    $region69: #{spade_block_forward.4} parent=5 // pred_check
      _
    $region70: #{spade_block_forward.4} parent=5 // pred_check_branch
      %566 = sbr.rel (%p563) target = $region72
    $region71: #{spade_block_forward.4} parent=5 // pred_region
      %s567 = ssub.s32 %s22, 1
      %p568 = pneg %p43
      %p569 = pneg %p40
      %p570 = pneg %p64
      %p571 = pneg %p61
      %p572 = pneg %p85
      %p573 = pneg %p82
      %p574 = pneg %p106
      %p575 = pneg %p103
      %p576 = pneg %p127
      %p577 = pneg %p124
      %p578 = pneg %p148
      %p579 = pneg %p145
      %s580 = smul.u32 %s27, 2
      %s581 = ssub.s32 %s580, 1
      %p582 = scmp.gt.s32.totalorder %s581, 0
      %s583 = scalar_select %p582, %s581, 0
      %p584 = scmp.lt.s32.totalorder %s583, 5
      %s585 = scalar_select %p584, %s583, 5
      %s586 = scalar_lea.vmem %s6, %s585
      %p587 = pneg %p182
      %p588 = pneg %p179
      %s589 = smul.u32 2, %s27
      %p590 = scmp.lt.s32.totalorder %s589, 5
      %s591 = scalar_select %p590, %s589, 5
      %s592 = scalar_lea.vmem %s7, %s591
      %p593 = pneg %p208
      %p594 = pneg %p205
      %s595 = sadd.s32 %s27, 1
      %s596 = smul.u32 %s595, 2
      %p597 = scmp.lt.s32.totalorder %s596, 5
      %s598 = scalar_select %p597, %s596, 5
      %p599 = scmp.lt.s32.totalorder %s598, 5
      %s600 = scalar_select %p599, %s598, 5
      %s601 = scalar_lea.vmem %s8, %s600
      %p602 = pneg %p242
      %p603 = pneg %p239
      %s604 = smul.u32 %s27, 2
      %s605 = ssub.s32 %s604, 1
      %p606 = scmp.gt.s32.totalorder %s605, 0
      %s607 = scalar_select %p606, %s605, 0
      %p608 = scmp.lt.s32.totalorder %s607, 5
      %s609 = scalar_select %p608, %s607, 5
      %s610 = smul.addr %s609, 4
      %s611 = scalar_lea.vmem %s9, %s610
      %p612 = pneg %p276
      %p613 = pneg %p273
      %s614 = smul.u32 2, %s27
      %p615 = scmp.lt.s32.totalorder %s614, 5
      %s616 = scalar_select %p615, %s614, 5
      %s617 = smul.addr %s616, 4
      %s618 = scalar_lea.vmem %s10, %s617
      %p619 = pneg %p302
      %p620 = pneg %p299
      %s621 = sadd.s32 %s27, 1
      %s622 = smul.u32 %s621, 2
      %p623 = scmp.lt.s32.totalorder %s622, 5
      %s624 = scalar_select %p623, %s622, 5
      %p625 = scmp.lt.s32.totalorder %s624, 5
      %s626 = scalar_select %p625, %s624, 5
      %s627 = smul.addr %s626, 4
      %s628 = scalar_lea.vmem %s11, %s627
      %p629 = pneg %p336
      %p630 = pneg %p333
      %s631 = smul.u32 2, %s27
      %p632 = scmp.lt.s32.totalorder %s631, 5
      %s633 = scalar_select %p632, %s631, 5
      %s634 = smul.addr %s633, 8
      %s635 = scalar_lea.vmem %s12, %s634
      %p636 = pneg %p362
      %p637 = pneg %p359
      %p638 = pneg %p388
      %p639 = pneg %p385
      %s640 = smul.u32 2, %s27
      %p641 = scmp.lt.s32.totalorder %s640, 5
      %s642 = scalar_select %p641, %s640, 5
      %s643 = smul.addr %s642, 8
      %s644 = scalar_lea.vmem %s13, %s643
      %p645 = pneg %p414
      %p646 = pneg %p411
      %p647 = scmp.lt.s32.totalorder %s27, 2
      %s648 = scalar_select %p647, %s27, 2
      %s649 = smul.addr %s648, 8
      %s650 = scalar_lea.vmem %s14, %s649
      %p651 = pneg %p440
      %p652 = pneg %p437
      %p653 = scmp.lt.s32.totalorder %s27, 2
      %s654 = scalar_select %p653, %s27, 2
      %s655 = smul.addr %s654, 8
      %s656 = scalar_lea.vmem %s15, %s655
      %s657 = smul.u32 %s27, 2
      %s658 = ssub.s32 %s657, 1
      %p659 = scmp.gt.s32.totalorder %s658, 0
      %s660 = scalar_select %p659, %s658, 0
      %p661 = scmp.lt.s32.totalorder %s660, 5
      %s662 = scalar_select %p661, %s660, 5
      %s663 = scalar_lea.vmem %s6, %s662
      %s664 = smul.u32 %s27, 2
      %s665 = ssub.s32 %s664, 1
      %p666 = scmp.gt.s32.totalorder %s665, 0
      %s667 = scalar_select %p666, %s665, 0
      %s668 = smul.u32 2, %s27
      %p669 = scmp.lt.s32.totalorder %s668, 5
      %s670 = scalar_select %p669, %s668, 5
      %s671 = scalar_lea.vmem %s7, %s670
      %s672 = smul.u32 2, %s27
      %s673 = sadd.s32 %s27, 1
      %s674 = smul.u32 %s673, 2
      %p675 = scmp.lt.s32.totalorder %s674, 5
      %s676 = scalar_select %p675, %s674, 5
      %p677 = scmp.lt.s32.totalorder %s676, 5
      %s678 = scalar_select %p677, %s676, 5
      %s679 = scalar_lea.vmem %s8, %s678
      %s680 = sadd.s32 %s27, 1
      %s681 = smul.u32 %s680, 2
      %p682 = scmp.lt.s32.totalorder %s681, 5
      %s683 = scalar_select %p682, %s681, 5
      %s684 = smul.u32 %s27, 2
      %s685 = ssub.s32 %s684, 1
      %p686 = scmp.gt.s32.totalorder %s685, 0
      %s687 = scalar_select %p686, %s685, 0
      %p688 = scmp.lt.s32.totalorder %s687, 5
      %s689 = scalar_select %p688, %s687, 5
      %s690 = smul.addr %s689, 4
      %s691 = scalar_lea.vmem %s9, %s690
      %s692 = smul.u32 %s27, 2
      %s693 = ssub.s32 %s692, 1
      %p694 = scmp.gt.s32.totalorder %s693, 0
      %s695 = scalar_select %p694, %s693, 0
      %s696 = smul.u32 2, %s27
      %p697 = scmp.lt.s32.totalorder %s696, 5
      %s698 = scalar_select %p697, %s696, 5
      %s699 = smul.addr %s698, 4
      %s700 = scalar_lea.vmem %s10, %s699
      %s701 = smul.u32 2, %s27
      %s702 = sadd.s32 %s27, 1
      %s703 = smul.u32 %s702, 2
      %p704 = scmp.lt.s32.totalorder %s703, 5
      %s705 = scalar_select %p704, %s703, 5
      %p706 = scmp.lt.s32.totalorder %s705, 5
      %s707 = scalar_select %p706, %s705, 5
      %s708 = smul.addr %s707, 4
      %s709 = scalar_lea.vmem %s11, %s708
      %s710 = sadd.s32 %s27, 1
      %s711 = smul.u32 %s710, 2
      %p712 = scmp.lt.s32.totalorder %s711, 5
      %s713 = scalar_select %p712, %s711, 5
      %s714 = smul.u32 2, %s27
      %p715 = scmp.lt.s32.totalorder %s714, 5
      %s716 = scalar_select %p715, %s714, 5
      %s717 = smul.addr %s716, 8
      %s718 = scalar_lea.vmem %s12, %s717
      %s719 = smul.u32 2, %s27
      %s720 = smul.u32 2, %s27
      %p721 = scmp.lt.s32.totalorder %s720, 5
      %s722 = scalar_select %p721, %s720, 5
      %s723 = smul.addr %s722, 8
      %s724 = scalar_lea.vmem %s13, %s723
      %s725 = smul.u32 2, %s27
      %p726 = scmp.lt.s32.totalorder %s27, 2
      %s727 = scalar_select %p726, %s27, 2
      %s728 = smul.addr %s727, 8
      %s729 = scalar_lea.vmem %s14, %s728
      %p730 = scmp.lt.s32.totalorder %s27, 2
      %s731 = scalar_select %p730, %s27, 2
      %s732 = smul.addr %s731, 8
      %s733 = scalar_lea.vmem %s15, %s732
      %v735 = vld [vmem:[%s691] sm:$0xf]
      %v736 = vld [vmem:[%s700] sm:$0xff]
      %v737 = vld [vmem:[%s709] sm:$0xf]
      %v739 = vunpack.c.l.b16 %v736
      %v740 = vunpack.c.h.b16 %v736
      %v741 = vpack.c.b16 %v739, %v739
      %v742 = vpack.c.b16 %v740, %v740
      %v743 = vld [vmem:[%s663] sm:$0x1]
      %v744 = vld [vmem:[%s671] sm:$0x3]
      %v745 = vld [vmem:[%s679] sm:$0x1]
      %v747 = vlaneseq
      %v748 = vshrl.u32 %v747, 7
      %v749 = vsub.s32 0, %v748
      %v750 = vrot.slane %v744, %v749
      %v751 = vlaneseq
      %v752 = vshrl.u32 %v751, 7
      %v753 = vsub.s32 1, %v752
      %v754 = vrot.slane %v744, %v753
      %v757 = vld [vmem:[%s0] sm:$0xf]
      %s758 = scalar_lea.vmem %s0, 4
      %v759 = vld [vmem:[%s758] sm:$0xf]
      %762 = vrot.lane.b32.xlu0 %v735, 37
      %v763 = vpop.permute.xlu0 %762
      %764 = vrot.lane.b32.xlu0 %v741, 37
      %v765 = vpop.permute.xlu0 %764
      %766 = vrot.lane.b32.xlu0 %v742, 37
      %v767 = vpop.permute.xlu0 %766
      %768 = vrot.lane.b32.xlu0 %v737, 37
      %v769 = vpop.permute.xlu0 %768
      %vm770 = vcmask 302080
      %v771 = vsel %vm770, %v763, %v765
      %v772 = vsel %vm770, %v765, %v767
      %v773 = vsel %vm770, %v767, %v769
      %vm774 = vcmask 64512
      %v776 = vsel %vm774, %v759, 0
      %vm778 = vcmask 1043456
      %v780 = vsel %vm778, %v771, 0
      %v783 = vsel %vm778, %v772, 0
      %v786 = vsel %vm778, %v773, 0
      %788 = vmatprep.subr.bf16.mxu0 %v783
      %789 = vmatpush1.bf16.msra.mxu0 %v780
      %790 = vmatprep.subr.bf16.mxu0 0
      %791 = vmatpush1.bf16.msra.mxu0 0
      %792 = vmatprep.subr.bf16.mxu0 0
      %793 = vmatpush1.bf16.msra.mxu0 0
      %794 = vmatprep.subr.bf16.mxu0 0
      %795 = vmatpush1.bf16.msra.mxu0 0
      %796 = vmatprep.subr.bf16.mxu0 0
      %797 = vmatpush1.bf16.msra.mxu0 0
      %798 = vmatprep.subr.bf16.mxu0 0
      %799 = vmatpush1.bf16.msra.mxu0 0
      %800 = vmatprep.subr.bf16.mxu0 0
      %801 = vmatpush1.bf16.msra.mxu0 0
      %802 = vmatprep.subr.bf16.mxu0 0
      %803 = vmatpush1.bf16.msra.mxu0 0
      %804 = vmatprep.subr.bf16.mxu0 0
      %805 = vmatpush1.bf16.msra.mxu0 0
      %806 = vmatprep.subr.bf16.mxu0 0
      %807 = vmatpush1.bf16.msra.mxu0 0
      %808 = vmatprep.subr.bf16.mxu0 0
      %809 = vmatpush1.bf16.msra.mxu0 0
      %810 = vmatprep.subr.bf16.mxu0 0
      %811 = vmatpush1.bf16.msra.mxu0 0
      %812 = vmatprep.subr.bf16.mxu0 0
      %813 = vmatpush1.bf16.msra.mxu0 0
      %814 = vmatprep.subr.bf16.mxu0 0
      %815 = vmatpush1.bf16.msra.mxu0 0
      %816 = vmatprep.subr.bf16.mxu0 0
      %817 = vmatpush1.bf16.msra.mxu0 0
      %818 = vmatprep.subr.bf16.mxu0 0
      %819 = vmatpush1.bf16.msra.mxu0 0
      %820 = vmatprep.mubr.bf16.mxu0 0
      %821 = vmatmul.mubr.bf16.gmra.mrb[0].mxu0 %v776
      %v822 = vpop.f32.mrb[0].mxu0
      %v823 = vadd.f32 0.0, %v822
      %v824 = vpop.f32.mrb[0].mxu0
      %v825 = vadd.f32 0.0, %v824
      %v826 = vpop.f32.mrb[0].mxu0
      %v827 = vpop.f32.mrb[0].mxu0
      %828 = vdwg.mxu0
      %829 = vmatprep.subr.bf16.mxu0 0
      %830 = vmatpush1.bf16.msra.mxu0 %v786
      %831 = vmatprep.subr.bf16.mxu0 0
      %832 = vmatpush1.bf16.msra.mxu0 0
      %833 = vmatprep.subr.bf16.mxu0 0
      %834 = vmatpush1.bf16.msra.mxu0 0
      %835 = vmatprep.subr.bf16.mxu0 0
      %836 = vmatpush1.bf16.msra.mxu0 0
      %837 = vmatprep.subr.bf16.mxu0 0
      %838 = vmatpush1.bf16.msra.mxu0 0
      %839 = vmatprep.subr.bf16.mxu0 0
      %840 = vmatpush1.bf16.msra.mxu0 0
      %841 = vmatprep.subr.bf16.mxu0 0
      %842 = vmatpush1.bf16.msra.mxu0 0
      %843 = vmatprep.subr.bf16.mxu0 0
      %844 = vmatpush1.bf16.msra.mxu0 0
      %845 = vmatprep.subr.bf16.mxu0 0
      %846 = vmatpush1.bf16.msra.mxu0 0
      %847 = vmatprep.subr.bf16.mxu0 0
      %848 = vmatpush1.bf16.msra.mxu0 0
      %849 = vmatprep.subr.bf16.mxu0 0
      %850 = vmatpush1.bf16.msra.mxu0 0
      %851 = vmatprep.subr.bf16.mxu0 0
      %852 = vmatpush1.bf16.msra.mxu0 0
      %853 = vmatprep.subr.bf16.mxu0 0
      %854 = vmatpush1.bf16.msra.mxu0 0
      %855 = vmatprep.subr.bf16.mxu0 0
      %856 = vmatpush1.bf16.msra.mxu0 0
      %857 = vmatprep.subr.bf16.mxu0 0
      %858 = vmatpush1.bf16.msra.mxu0 0
      %859 = vmatprep.subr.bf16.mxu0 0
      %860 = vmatpush1.bf16.msra.mxu0 0
      %861 = vmatprep.mubr.bf16.mxu0 0
      %862 = vmatmul.mubr.bf16.gmra.mrb[0].mxu0 %v776
      %v863 = vpop.f32.mrb[0].mxu0
      %v864 = vadd.f32 0.0, %v863
      %v865 = vpop.f32.mrb[0].mxu0
      %v866 = vpop.f32.mrb[0].mxu0
      %v867 = vpop.f32.mrb[0].mxu0
      %868 = vdwg.mxu0
      %869 = vrot.lane.b32.xlu0 %v735, 38
      %v870 = vpop.permute.xlu0 %869
      %871 = vrot.lane.b32.xlu0 %v741, 38
      %v872 = vpop.permute.xlu0 %871
      %873 = vrot.lane.b32.xlu0 %v742, 38
      %v874 = vpop.permute.xlu0 %873
      %vm875 = vcmask 310272
      %v876 = vsel %vm875, %v870, %v872
      %v877 = vsel %vm875, %v872, %v874
      %v879 = vsel %vm774, %v757, 0
      %v882 = vsel %vm778, %v876, 0
      %v885 = vsel %vm778, %v877, 0
      %v888 = vsel %vm778, %v874, 0
      %890 = vmatprep.subr.bf16.mxu0 %v885
      %891 = vmatpush1.bf16.msra.mxu0 %v882
      %892 = vmatprep.subr.bf16.mxu0 0
      %893 = vmatpush1.bf16.msra.mxu0 0
      %894 = vmatprep.subr.bf16.mxu0 0
      %895 = vmatpush1.bf16.msra.mxu0 0
      %896 = vmatprep.subr.bf16.mxu0 0
      %897 = vmatpush1.bf16.msra.mxu0 0
      %898 = vmatprep.subr.bf16.mxu0 0
      %899 = vmatpush1.bf16.msra.mxu0 0
      %900 = vmatprep.subr.bf16.mxu0 0
      %901 = vmatpush1.bf16.msra.mxu0 0
      %902 = vmatprep.subr.bf16.mxu0 0
      %903 = vmatpush1.bf16.msra.mxu0 0
      %904 = vmatprep.subr.bf16.mxu0 0
      %905 = vmatpush1.bf16.msra.mxu0 0
      %906 = vmatprep.subr.bf16.mxu0 0
      %907 = vmatpush1.bf16.msra.mxu0 0
      %908 = vmatprep.subr.bf16.mxu0 0
      %909 = vmatpush1.bf16.msra.mxu0 0
      %910 = vmatprep.subr.bf16.mxu0 0
      %911 = vmatpush1.bf16.msra.mxu0 0
      %912 = vmatprep.subr.bf16.mxu0 0
      %913 = vmatpush1.bf16.msra.mxu0 0
      %914 = vmatprep.subr.bf16.mxu0 0
      %915 = vmatpush1.bf16.msra.mxu0 0
      %916 = vmatprep.subr.bf16.mxu0 0
      %917 = vmatpush1.bf16.msra.mxu0 0
      %918 = vmatprep.subr.bf16.mxu0 0
      %919 = vmatpush1.bf16.msra.mxu0 0
      %920 = vmatprep.subr.bf16.mxu0 0
      %921 = vmatpush1.bf16.msra.mxu0 0
      %922 = vmatprep.mubr.bf16.mxu0 0
      %923 = vmatmul.mubr.bf16.gmra.mrb[0].mxu0 %v879
      %v924 = vpop.f32.mrb[0].mxu0
      %v925 = vadd.f32 %v823, %v924
      %v926 = vpop.f32.mrb[0].mxu0
      %v927 = vadd.f32 %v825, %v926
      %v928 = vpop.f32.mrb[0].mxu0
      %v929 = vpop.f32.mrb[0].mxu0
      %930 = vdwg.mxu0
      %931 = vmatprep.subr.bf16.mxu0 0
      %932 = vmatpush1.bf16.msra.mxu0 %v888
      %933 = vmatprep.subr.bf16.mxu0 0
      %934 = vmatpush1.bf16.msra.mxu0 0
      %935 = vmatprep.subr.bf16.mxu0 0
      %936 = vmatpush1.bf16.msra.mxu0 0
      %937 = vmatprep.subr.bf16.mxu0 0
      %938 = vmatpush1.bf16.msra.mxu0 0
      %939 = vmatprep.subr.bf16.mxu0 0
      %940 = vmatpush1.bf16.msra.mxu0 0
      %941 = vmatprep.subr.bf16.mxu0 0
      %942 = vmatpush1.bf16.msra.mxu0 0
      %943 = vmatprep.subr.bf16.mxu0 0
      %944 = vmatpush1.bf16.msra.mxu0 0
      %945 = vmatprep.subr.bf16.mxu0 0
      %946 = vmatpush1.bf16.msra.mxu0 0
      %947 = vmatprep.subr.bf16.mxu0 0
      %948 = vmatpush1.bf16.msra.mxu0 0
      %949 = vmatprep.subr.bf16.mxu0 0
      %950 = vmatpush1.bf16.msra.mxu0 0
      %951 = vmatprep.subr.bf16.mxu0 0
      %952 = vmatpush1.bf16.msra.mxu0 0
      %953 = vmatprep.subr.bf16.mxu0 0
      %954 = vmatpush1.bf16.msra.mxu0 0
      %955 = vmatprep.subr.bf16.mxu0 0
      %956 = vmatpush1.bf16.msra.mxu0 0
      %957 = vmatprep.subr.bf16.mxu0 0
      %958 = vmatpush1.bf16.msra.mxu0 0
      %959 = vmatprep.subr.bf16.mxu0 0
      %960 = vmatpush1.bf16.msra.mxu0 0
      %961 = vmatprep.subr.bf16.mxu0 0
      %962 = vmatpush1.bf16.msra.mxu0 0
      %963 = vmatprep.mubr.bf16.mxu0 0
      %964 = vmatmul.mubr.bf16.gmra.mrb[0].mxu0 %v879
      %v965 = vpop.f32.mrb[0].mxu0
      %v966 = vadd.f32 %v864, %v965
      %v967 = vpop.f32.mrb[0].mxu0
      %v968 = vpop.f32.mrb[0].mxu0
      %v969 = vpop.f32.mrb[0].mxu0
      %970 = vdwg.mxu0
      %s971 = scalar_lea.vmem %s0, 8
      %v972 = vld [vmem:[%s971] sm:$0xf]
      %973 = vrot.lane.b32.xlu0 %v735, 36
      %v974 = vpop.permute.xlu0 %973
      %975 = vrot.lane.b32.xlu0 %v741, 36
      %v976 = vpop.permute.xlu0 %975
      %977 = vrot.lane.b32.xlu0 %v742, 36
      %v978 = vpop.permute.xlu0 %977
      %979 = vrot.lane.b32.xlu0 %v737, 36
      %v980 = vpop.permute.xlu0 %979
      %vm981 = vcmask 293888
      %v982 = vsel %vm981, %v974, %v976
      %v983 = vsel %vm981, %v976, %v978
      %v984 = vsel %vm981, %v978, %v980
      %v986 = vsel %vm774, %v972, 0
      %v989 = vsel %vm778, %v982, 0
      %v992 = vsel %vm778, %v983, 0
      %v995 = vsel %vm778, %v984, 0
      %997 = vmatprep.subr.bf16.mxu0 %v992
      %998 = vmatpush1.bf16.msra.mxu0 %v989
      %999 = vmatprep.subr.bf16.mxu0 0
      %1000 = vmatpush1.bf16.msra.mxu0 0
      %1001 = vmatprep.subr.bf16.mxu0 0
      %1002 = vmatpush1.bf16.msra.mxu0 0
      %1003 = vmatprep.subr.bf16.mxu0 0
      %1004 = vmatpush1.bf16.msra.mxu0 0
      %1005 = vmatprep.subr.bf16.mxu0 0
      %1006 = vmatpush1.bf16.msra.mxu0 0
      %1007 = vmatprep.subr.bf16.mxu0 0
      %1008 = vmatpush1.bf16.msra.mxu0 0
      %1009 = vmatprep.subr.bf16.mxu0 0
      %1010 = vmatpush1.bf16.msra.mxu0 0
      %1011 = vmatprep.subr.bf16.mxu0 0
      %1012 = vmatpush1.bf16.msra.mxu0 0
      %1013 = vmatprep.subr.bf16.mxu0 0
      %1014 = vmatpush1.bf16.msra.mxu0 0
      %1015 = vmatprep.subr.bf16.mxu0 0
      %1016 = vmatpush1.bf16.msra.mxu0 0
      %1017 = vmatprep.subr.bf16.mxu0 0
      %1018 = vmatpush1.bf16.msra.mxu0 0
      %1019 = vmatprep.subr.bf16.mxu0 0
      %1020 = vmatpush1.bf16.msra.mxu0 0
      %1021 = vmatprep.subr.bf16.mxu0 0
      %1022 = vmatpush1.bf16.msra.mxu0 0
      %1023 = vmatprep.subr.bf16.mxu0 0
      %1024 = vmatpush1.bf16.msra.mxu0 0
      %1025 = vmatprep.subr.bf16.mxu0 0
      %1026 = vmatpush1.bf16.msra.mxu0 0
      %1027 = vmatprep.subr.bf16.mxu0 0
      %1028 = vmatpush1.bf16.msra.mxu0 0
      %1029 = vmatprep.mubr.bf16.mxu0 0
      %1030 = vmatmul.mubr.bf16.gmra.mrb[0].mxu0 %v986
      %v1031 = vpop.f32.mrb[0].mxu0
      %v1032 = vadd.f32 0.0, %v1031
      %v1033 = vpop.f32.mrb[0].mxu0
      %v1034 = vadd.f32 0.0, %v1033
      %v1035 = vpop.f32.mrb[0].mxu0
      %v1036 = vpop.f32.mrb[0].mxu0
      %1037 = vdwg.mxu0
      %1038 = vmatprep.subr.bf16.mxu0 0
      %1039 = vmatpush1.bf16.msra.mxu0 %v995
      %1040 = vmatprep.subr.bf16.mxu0 0
      %1041 = vmatpush1.bf16.msra.mxu0 0
      %1042 = vmatprep.subr.bf16.mxu0 0
      %1043 = vmatpush1.bf16.msra.mxu0 0
      %1044 = vmatprep.subr.bf16.mxu0 0
      %1045 = vmatpush1.bf16.msra.mxu0 0
      %1046 = vmatprep.subr.bf16.mxu0 0
      %1047 = vmatpush1.bf16.msra.mxu0 0
      %1048 = vmatprep.subr.bf16.mxu0 0
      %1049 = vmatpush1.bf16.msra.mxu0 0
      %1050 = vmatprep.subr.bf16.mxu0 0
      %1051 = vmatpush1.bf16.msra.mxu0 0
      %1052 = vmatprep.subr.bf16.mxu0 0
      %1053 = vmatpush1.bf16.msra.mxu0 0
      %1054 = vmatprep.subr.bf16.mxu0 0
      %1055 = vmatpush1.bf16.msra.mxu0 0
      %1056 = vmatprep.subr.bf16.mxu0 0
      %1057 = vmatpush1.bf16.msra.mxu0 0
      %1058 = vmatprep.subr.bf16.mxu0 0
      %1059 = vmatpush1.bf16.msra.mxu0 0
      %1060 = vmatprep.subr.bf16.mxu0 0
      %1061 = vmatpush1.bf16.msra.mxu0 0
      %1062 = vmatprep.subr.bf16.mxu0 0
      %1063 = vmatpush1.bf16.msra.mxu0 0
      %1064 = vmatprep.subr.bf16.mxu0 0
      %1065 = vmatpush1.bf16.msra.mxu0 0
      %1066 = vmatprep.subr.bf16.mxu0 0
      %1067 = vmatpush1.bf16.msra.mxu0 0
      %1068 = vmatprep.subr.bf16.mxu0 0
      %1069 = vmatpush1.bf16.msra.mxu0 0
      %1070 = vmatprep.mubr.bf16.mxu0 0
      %1071 = vmatmul.mubr.bf16.gmra.mrb[0].mxu0 %v986
      %v1072 = vpop.f32.mrb[0].mxu0
      %v1073 = vadd.f32 0.0, %v1072
      %v1074 = vpop.f32.mrb[0].mxu0
      %v1075 = vpop.f32.mrb[0].mxu0
      %v1076 = vpop.f32.mrb[0].mxu0
      %1077 = vdwg.mxu0
      %v1078 = vadd.f32 %v925, %v1032
      %v1079 = vadd.f32 %v927, %v1034
      %v1080 = vadd.f32 %v966, %v1073
      %s1081 = scalar_lea.vmem %s0, 12
      %v1082 = vld [vmem:[%s1081] sm:$0xf]
      %1083 = vrot.lane.b32.xlu0 %v735, 20
      %v1084 = vpop.permute.xlu0 %1083
      %1085 = vrot.lane.b32.xlu0 %v741, 20
      %v1086 = vpop.permute.xlu0 %1085
      %1087 = vrot.lane.b32.xlu0 %v742, 20
      %v1088 = vpop.permute.xlu0 %1087
      %1089 = vrot.lane.b32.xlu0 %v737, 20
      %v1090 = vpop.permute.xlu0 %1089
      %vm1091 = vcmask 162816
      %v1092 = vsel %vm1091, %v1084, %v1086
      %v1093 = vsel %vm1091, %v1086, %v1088
      %v1094 = vsel %vm1091, %v1088, %v1090
      %v1096 = vsel %vm774, %v1082, 0
      %v1099 = vsel %vm778, %v1092, 0
      %v1102 = vsel %vm778, %v1093, 0
      %v1105 = vsel %vm778, %v1094, 0
      %1107 = vmatprep.subr.bf16.mxu0 %v1102
      %1108 = vmatpush1.bf16.msra.mxu0 %v1099
      %1109 = vmatprep.subr.bf16.mxu0 0
      %1110 = vmatpush1.bf16.msra.mxu0 0
      %1111 = vmatprep.subr.bf16.mxu0 0
      %1112 = vmatpush1.bf16.msra.mxu0 0
      %1113 = vmatprep.subr.bf16.mxu0 0
      %1114 = vmatpush1.bf16.msra.mxu0 0
      %1115 = vmatprep.subr.bf16.mxu0 0
      %1116 = vmatpush1.bf16.msra.mxu0 0
      %1117 = vmatprep.subr.bf16.mxu0 0
      %1118 = vmatpush1.bf16.msra.mxu0 0
      %1119 = vmatprep.subr.bf16.mxu0 0
      %1120 = vmatpush1.bf16.msra.mxu0 0
      %1121 = vmatprep.subr.bf16.mxu0 0
      %1122 = vmatpush1.bf16.msra.mxu0 0
      %1123 = vmatprep.subr.bf16.mxu0 0
      %1124 = vmatpush1.bf16.msra.mxu0 0
      %1125 = vmatprep.subr.bf16.mxu0 0
      %1126 = vmatpush1.bf16.msra.mxu0 0
      %1127 = vmatprep.subr.bf16.mxu0 0
      %1128 = vmatpush1.bf16.msra.mxu0 0
      %1129 = vmatprep.subr.bf16.mxu0 0
      %1130 = vmatpush1.bf16.msra.mxu0 0
      %1131 = vmatprep.subr.bf16.mxu0 0
      %1132 = vmatpush1.bf16.msra.mxu0 0
      %1133 = vmatprep.subr.bf16.mxu0 0
      %1134 = vmatpush1.bf16.msra.mxu0 0
      %1135 = vmatprep.subr.bf16.mxu0 0
      %1136 = vmatpush1.bf16.msra.mxu0 0
      %1137 = vmatprep.subr.bf16.mxu0 0
      %1138 = vmatpush1.bf16.msra.mxu0 0
      %1139 = vmatprep.mubr.bf16.mxu0 0
      %1140 = vmatmul.mubr.bf16.gmra.mrb[0].mxu0 %v1096
      %v1141 = vpop.f32.mrb[0].mxu0
      %v1142 = vadd.f32 0.0, %v1141
      %v1143 = vpop.f32.mrb[0].mxu0
      %v1144 = vadd.f32 0.0, %v1143
      %v1145 = vpop.f32.mrb[0].mxu0
      %v1146 = vpop.f32.mrb[0].mxu0
      %1147 = vdwg.mxu0
      %1148 = vmatprep.subr.bf16.mxu0 0
      %1149 = vmatpush1.bf16.msra.mxu0 %v1105
      %1150 = vmatprep.subr.bf16.mxu0 0
      %1151 = vmatpush1.bf16.msra.mxu0 0
      %1152 = vmatprep.subr.bf16.mxu0 0
      %1153 = vmatpush1.bf16.msra.mxu0 0
      %1154 = vmatprep.subr.bf16.mxu0 0
      %1155 = vmatpush1.bf16.msra.mxu0 0
      %1156 = vmatprep.subr.bf16.mxu0 0
      %1157 = vmatpush1.bf16.msra.mxu0 0
      %1158 = vmatprep.subr.bf16.mxu0 0
      %1159 = vmatpush1.bf16.msra.mxu0 0
      %1160 = vmatprep.subr.bf16.mxu0 0
      %1161 = vmatpush1.bf16.msra.mxu0 0
      %1162 = vmatprep.subr.bf16.mxu0 0
      %1163 = vmatpush1.bf16.msra.mxu0 0
      %1164 = vmatprep.subr.bf16.mxu0 0
      %1165 = vmatpush1.bf16.msra.mxu0 0
      %1166 = vmatprep.subr.bf16.mxu0 0
      %1167 = vmatpush1.bf16.msra.mxu0 0
      %1168 = vmatprep.subr.bf16.mxu0 0
      %1169 = vmatpush1.bf16.msra.mxu0 0
      %1170 = vmatprep.subr.bf16.mxu0 0
      %1171 = vmatpush1.bf16.msra.mxu0 0
      %1172 = vmatprep.subr.bf16.mxu0 0
      %1173 = vmatpush1.bf16.msra.mxu0 0
      %1174 = vmatprep.subr.bf16.mxu0 0
      %1175 = vmatpush1.bf16.msra.mxu0 0
      %1176 = vmatprep.subr.bf16.mxu0 0
      %1177 = vmatpush1.bf16.msra.mxu0 0
      %1178 = vmatprep.subr.bf16.mxu0 0
      %1179 = vmatpush1.bf16.msra.mxu0 0
      %1180 = vmatprep.mubr.bf16.mxu0 0
      %1181 = vmatmul.mubr.bf16.gmra.mrb[0].mxu0 %v1096
      %v1182 = vpop.f32.mrb[0].mxu0
      %v1183 = vadd.f32 0.0, %v1182
      %v1184 = vpop.f32.mrb[0].mxu0
      %v1185 = vpop.f32.mrb[0].mxu0
      %v1186 = vpop.f32.mrb[0].mxu0
      %1187 = vdwg.mxu0
      %v1188 = vadd.f32 %v1078, %v1142
      %v1189 = vadd.f32 %v1079, %v1144
      %v1190 = vadd.f32 %v1080, %v1183
      %s1191 = scalar_lea.vmem %s0, 16
      %v1192 = vld [vmem:[%s1191] sm:$0xf]
      %1193 = vrot.lane.b32.xlu0 %v735, 19
      %v1194 = vpop.permute.xlu0 %1193
      %1195 = vrot.lane.b32.xlu0 %v741, 19
      %v1196 = vpop.permute.xlu0 %1195
      %1197 = vrot.lane.b32.xlu0 %v742, 19
      %v1198 = vpop.permute.xlu0 %1197
      %1199 = vrot.lane.b32.xlu0 %v737, 19
      %v1200 = vpop.permute.xlu0 %1199
      %vm1201 = vcmask 154624
      %v1202 = vsel %vm1201, %v1194, %v1196
      %v1203 = vsel %vm1201, %v1196, %v1198
      %v1204 = vsel %vm1201, %v1198, %v1200
      %v1206 = vsel %vm774, %v1192, 0
      %v1209 = vsel %vm778, %v1202, 0
      %v1212 = vsel %vm778, %v1203, 0
      %v1215 = vsel %vm778, %v1204, 0
      %1217 = vmatprep.subr.bf16.mxu0 %v1212
      %1218 = vmatpush1.bf16.msra.mxu0 %v1209
      %1219 = vmatprep.subr.bf16.mxu0 0
      %1220 = vmatpush1.bf16.msra.mxu0 0
      %1221 = vmatprep.subr.bf16.mxu0 0
      %1222 = vmatpush1.bf16.msra.mxu0 0
      %1223 = vmatprep.subr.bf16.mxu0 0
      %1224 = vmatpush1.bf16.msra.mxu0 0
      %1225 = vmatprep.subr.bf16.mxu0 0
      %1226 = vmatpush1.bf16.msra.mxu0 0
      %1227 = vmatprep.subr.bf16.mxu0 0
      %1228 = vmatpush1.bf16.msra.mxu0 0
      %1229 = vmatprep.subr.bf16.mxu0 0
      %1230 = vmatpush1.bf16.msra.mxu0 0
      %1231 = vmatprep.subr.bf16.mxu0 0
      %1232 = vmatpush1.bf16.msra.mxu0 0
      %1233 = vmatprep.subr.bf16.mxu0 0
      %1234 = vmatpush1.bf16.msra.mxu0 0
      %1235 = vmatprep.subr.bf16.mxu0 0
      %1236 = vmatpush1.bf16.msra.mxu0 0
      %1237 = vmatprep.subr.bf16.mxu0 0
      %1238 = vmatpush1.bf16.msra.mxu0 0
      %1239 = vmatprep.subr.bf16.mxu0 0
      %1240 = vmatpush1.bf16.msra.mxu0 0
      %1241 = vmatprep.subr.bf16.mxu0 0
      %1242 = vmatpush1.bf16.msra.mxu0 0
      %1243 = vmatprep.subr.bf16.mxu0 0
      %1244 = vmatpush1.bf16.msra.mxu0 0
      %1245 = vmatprep.subr.bf16.mxu0 0
      %1246 = vmatpush1.bf16.msra.mxu0 0
      %1247 = vmatprep.subr.bf16.mxu0 0
      %1248 = vmatpush1.bf16.msra.mxu0 0
      %1249 = vmatprep.mubr.bf16.mxu0 0
      %1250 = vmatmul.mubr.bf16.gmra.mrb[0].mxu0 %v1206
      %v1251 = vpop.f32.mrb[0].mxu0
      %v1252 = vadd.f32 0.0, %v1251
      %v1253 = vpop.f32.mrb[0].mxu0
      %v1254 = vadd.f32 0.0, %v1253
      %v1255 = vpop.f32.mrb[0].mxu0
      %v1256 = vpop.f32.mrb[0].mxu0
      %1257 = vdwg.mxu0
      %1258 = vmatprep.subr.bf16.mxu0 0
      %1259 = vmatpush1.bf16.msra.mxu0 %v1215
      %1260 = vmatprep.subr.bf16.mxu0 0
      %1261 = vmatpush1.bf16.msra.mxu0 0
      %1262 = vmatprep.subr.bf16.mxu0 0
      %1263 = vmatpush1.bf16.msra.mxu0 0
      %1264 = vmatprep.subr.bf16.mxu0 0
      %1265 = vmatpush1.bf16.msra.mxu0 0
      %1266 = vmatprep.subr.bf16.mxu0 0
      %1267 = vmatpush1.bf16.msra.mxu0 0
      %1268 = vmatprep.subr.bf16.mxu0 0
      %1269 = vmatpush1.bf16.msra.mxu0 0
      %1270 = vmatprep.subr.bf16.mxu0 0
      %1271 = vmatpush1.bf16.msra.mxu0 0
      %1272 = vmatprep.subr.bf16.mxu0 0
      %1273 = vmatpush1.bf16.msra.mxu0 0
      %1274 = vmatprep.subr.bf16.mxu0 0
      %1275 = vmatpush1.bf16.msra.mxu0 0
      %1276 = vmatprep.subr.bf16.mxu0 0
      %1277 = vmatpush1.bf16.msra.mxu0 0
      %1278 = vmatprep.subr.bf16.mxu0 0
      %1279 = vmatpush1.bf16.msra.mxu0 0
      %1280 = vmatprep.subr.bf16.mxu0 0
      %1281 = vmatpush1.bf16.msra.mxu0 0
      %1282 = vmatprep.subr.bf16.mxu0 0
      %1283 = vmatpush1.bf16.msra.mxu0 0
      %1284 = vmatprep.subr.bf16.mxu0 0
      %1285 = vmatpush1.bf16.msra.mxu0 0
      %1286 = vmatprep.subr.bf16.mxu0 0
      %1287 = vmatpush1.bf16.msra.mxu0 0
      %1288 = vmatprep.subr.bf16.mxu0 0
      %1289 = vmatpush1.bf16.msra.mxu0 0
      %1290 = vmatprep.mubr.bf16.mxu0 0
      %1291 = vmatmul.mubr.bf16.gmra.mrb[0].mxu0 %v1206
      %v1292 = vpop.f32.mrb[0].mxu0
      %v1293 = vadd.f32 0.0, %v1292
      %v1294 = vpop.f32.mrb[0].mxu0
      %v1295 = vpop.f32.mrb[0].mxu0
      %v1296 = vpop.f32.mrb[0].mxu0
      %1297 = vdwg.mxu0
      %v1298 = vadd.f32 %v1188, %v1252
      %v1299 = vadd.f32 %v1189, %v1254
      %v1300 = vadd.f32 %v1190, %v1293
      %s1301 = scalar_lea.vmem %s0, 20
      %v1302 = vld [vmem:[%s1301] sm:$0xf]
      %1303 = vrot.lane.b32.xlu0 %v735, 18
      %v1304 = vpop.permute.xlu0 %1303
      %1305 = vrot.lane.b32.xlu0 %v741, 18
      %v1306 = vpop.permute.xlu0 %1305
      %1307 = vrot.lane.b32.xlu0 %v742, 18
      %v1308 = vpop.permute.xlu0 %1307
      %1309 = vrot.lane.b32.xlu0 %v737, 18
      %v1310 = vpop.permute.xlu0 %1309
      %vm1311 = vcmask 146432
      %v1312 = vsel %vm1311, %v1304, %v1306
      %v1313 = vsel %vm1311, %v1306, %v1308
      %v1314 = vsel %vm1311, %v1308, %v1310
      %v1316 = vsel %vm774, %v1302, 0
      %v1319 = vsel %vm778, %v1312, 0
      %v1322 = vsel %vm778, %v1313, 0
      %v1325 = vsel %vm778, %v1314, 0
      %1327 = vmatprep.subr.bf16.mxu0 %v1322
      %1328 = vmatpush1.bf16.msra.mxu0 %v1319
      %1329 = vmatprep.subr.bf16.mxu0 0
      %1330 = vmatpush1.bf16.msra.mxu0 0
      %1331 = vmatprep.subr.bf16.mxu0 0
      %1332 = vmatpush1.bf16.msra.mxu0 0
      %1333 = vmatprep.subr.bf16.mxu0 0
      %1334 = vmatpush1.bf16.msra.mxu0 0
      %1335 = vmatprep.subr.bf16.mxu0 0
      %1336 = vmatpush1.bf16.msra.mxu0 0
      %1337 = vmatprep.subr.bf16.mxu0 0
      %1338 = vmatpush1.bf16.msra.mxu0 0
      %1339 = vmatprep.subr.bf16.mxu0 0
      %1340 = vmatpush1.bf16.msra.mxu0 0
      %1341 = vmatprep.subr.bf16.mxu0 0
      %1342 = vmatpush1.bf16.msra.mxu0 0
      %1343 = vmatprep.subr.bf16.mxu0 0
      %1344 = vmatpush1.bf16.msra.mxu0 0
      %1345 = vmatprep.subr.bf16.mxu0 0
      %1346 = vmatpush1.bf16.msra.mxu0 0
      %1347 = vmatprep.subr.bf16.mxu0 0
      %1348 = vmatpush1.bf16.msra.mxu0 0
      %1349 = vmatprep.subr.bf16.mxu0 0
      %1350 = vmatpush1.bf16.msra.mxu0 0
      %1351 = vmatprep.subr.bf16.mxu0 0
      %1352 = vmatpush1.bf16.msra.mxu0 0
      %1353 = vmatprep.subr.bf16.mxu0 0
      %1354 = vmatpush1.bf16.msra.mxu0 0
      %1355 = vmatprep.subr.bf16.mxu0 0
      %1356 = vmatpush1.bf16.msra.mxu0 0
      %1357 = vmatprep.subr.bf16.mxu0 0
      %1358 = vmatpush1.bf16.msra.mxu0 0
      %1359 = vmatprep.mubr.bf16.mxu0 0
      %1360 = vmatmul.mubr.bf16.gmra.mrb[0].mxu0 %v1316
      %v1361 = vpop.f32.mrb[0].mxu0
      %v1362 = vadd.f32 0.0, %v1361
      %v1363 = vpop.f32.mrb[0].mxu0
      %v1364 = vadd.f32 0.0, %v1363
      %v1365 = vpop.f32.mrb[0].mxu0
      %v1366 = vpop.f32.mrb[0].mxu0
      %1367 = vdwg.mxu0
      %1368 = vmatprep.subr.bf16.mxu0 0
      %1369 = vmatpush1.bf16.msra.mxu0 %v1325
      %1370 = vmatprep.subr.bf16.mxu0 0
      %1371 = vmatpush1.bf16.msra.mxu0 0
      %1372 = vmatprep.subr.bf16.mxu0 0
      %1373 = vmatpush1.bf16.msra.mxu0 0
      %1374 = vmatprep.subr.bf16.mxu0 0
      %1375 = vmatpush1.bf16.msra.mxu0 0
      %1376 = vmatprep.subr.bf16.mxu0 0
      %1377 = vmatpush1.bf16.msra.mxu0 0
      %1378 = vmatprep.subr.bf16.mxu0 0
      %1379 = vmatpush1.bf16.msra.mxu0 0
      %1380 = vmatprep.subr.bf16.mxu0 0
      %1381 = vmatpush1.bf16.msra.mxu0 0
      %1382 = vmatprep.subr.bf16.mxu0 0
      %1383 = vmatpush1.bf16.msra.mxu0 0
      %1384 = vmatprep.subr.bf16.mxu0 0
      %1385 = vmatpush1.bf16.msra.mxu0 0
      %1386 = vmatprep.subr.bf16.mxu0 0
      %1387 = vmatpush1.bf16.msra.mxu0 0
      %1388 = vmatprep.subr.bf16.mxu0 0
      %1389 = vmatpush1.bf16.msra.mxu0 0
      %1390 = vmatprep.subr.bf16.mxu0 0
      %1391 = vmatpush1.bf16.msra.mxu0 0
      %1392 = vmatprep.subr.bf16.mxu0 0
      %1393 = vmatpush1.bf16.msra.mxu0 0
      %1394 = vmatprep.subr.bf16.mxu0 0
      %1395 = vmatpush1.bf16.msra.mxu0 0
      %1396 = vmatprep.subr.bf16.mxu0 0
      %1397 = vmatpush1.bf16.msra.mxu0 0
      %1398 = vmatprep.subr.bf16.mxu0 0
      %1399 = vmatpush1.bf16.msra.mxu0 0
      %1400 = vmatprep.mubr.bf16.mxu0 0
      %1401 = vmatmul.mubr.bf16.gmra.mrb[0].mxu0 %v1316
      %v1402 = vpop.f32.mrb[0].mxu0
      %v1403 = vadd.f32 0.0, %v1402
      %v1404 = vpop.f32.mrb[0].mxu0
      %v1405 = vpop.f32.mrb[0].mxu0
      %v1406 = vpop.f32.mrb[0].mxu0
      %1407 = vdwg.mxu0
      %v1408 = vadd.f32 %v1298, %v1362
      %v1409 = vadd.f32 %v1299, %v1364
      %v1410 = vadd.f32 %v1300, %v1403
      %s1411 = scalar_lea.vmem %s0, 24
      %v1412 = vld [vmem:[%s1411] sm:$0xf]
      %1413 = vrot.lane.b32.xlu0 %v735, 2
      %v1414 = vpop.permute.xlu0 %1413
      %1415 = vrot.lane.b32.xlu0 %v741, 2
      %v1416 = vpop.permute.xlu0 %1415
      %1417 = vrot.lane.b32.xlu0 %v742, 2
      %v1418 = vpop.permute.xlu0 %1417
      %1419 = vrot.lane.b32.xlu0 %v737, 2
      %v1420 = vpop.permute.xlu0 %1419
      %vm1421 = vcmask 15360
      %v1422 = vsel %vm1421, %v1414, %v1416
      %v1423 = vsel %vm1421, %v1416, %v1418
      %v1424 = vsel %vm1421, %v1418, %v1420
      %v1426 = vsel %vm774, %v1412, 0
      %v1429 = vsel %vm778, %v1422, 0
      %v1432 = vsel %vm778, %v1423, 0
      %v1435 = vsel %vm778, %v1424, 0
      %1437 = vmatprep.subr.bf16.mxu0 %v1432
      %1438 = vmatpush1.bf16.msra.mxu0 %v1429
      %1439 = vmatprep.subr.bf16.mxu0 0
      %1440 = vmatpush1.bf16.msra.mxu0 0
      %1441 = vmatprep.subr.bf16.mxu0 0
      %1442 = vmatpush1.bf16.msra.mxu0 0
      %1443 = vmatprep.subr.bf16.mxu0 0
      %1444 = vmatpush1.bf16.msra.mxu0 0
      %1445 = vmatprep.subr.bf16.mxu0 0
      %1446 = vmatpush1.bf16.msra.mxu0 0
      %1447 = vmatprep.subr.bf16.mxu0 0
      %1448 = vmatpush1.bf16.msra.mxu0 0
      %1449 = vmatprep.subr.bf16.mxu0 0
      %1450 = vmatpush1.bf16.msra.mxu0 0
      %1451 = vmatprep.subr.bf16.mxu0 0
      %1452 = vmatpush1.bf16.msra.mxu0 0
      %1453 = vmatprep.subr.bf16.mxu0 0
      %1454 = vmatpush1.bf16.msra.mxu0 0
      %1455 = vmatprep.subr.bf16.mxu0 0
      %1456 = vmatpush1.bf16.msra.mxu0 0
      %1457 = vmatprep.subr.bf16.mxu0 0
      %1458 = vmatpush1.bf16.msra.mxu0 0
      %1459 = vmatprep.subr.bf16.mxu0 0
      %1460 = vmatpush1.bf16.msra.mxu0 0
      %1461 = vmatprep.subr.bf16.mxu0 0
      %1462 = vmatpush1.bf16.msra.mxu0 0
      %1463 = vmatprep.subr.bf16.mxu0 0
      %1464 = vmatpush1.bf16.msra.mxu0 0
      %1465 = vmatprep.subr.bf16.mxu0 0
      %1466 = vmatpush1.bf16.msra.mxu0 0
      %1467 = vmatprep.subr.bf16.mxu0 0
      %1468 = vmatpush1.bf16.msra.mxu0 0
      %1469 = vmatprep.mubr.bf16.mxu0 0
      %1470 = vmatmul.mubr.bf16.gmra.mrb[0].mxu0 %v1426
      %v1471 = vpop.f32.mrb[0].mxu0
      %v1472 = vadd.f32 0.0, %v1471
      %v1473 = vpop.f32.mrb[0].mxu0
      %v1474 = vadd.f32 0.0, %v1473
      %v1475 = vpop.f32.mrb[0].mxu0
      %v1476 = vpop.f32.mrb[0].mxu0
      %1477 = vdwg.mxu0
      %1478 = vmatprep.subr.bf16.mxu0 0
      %1479 = vmatpush1.bf16.msra.mxu0 %v1435
      %1480 = vmatprep.subr.bf16.mxu0 0
      %1481 = vmatpush1.bf16.msra.mxu0 0
      %1482 = vmatprep.subr.bf16.mxu0 0
      %1483 = vmatpush1.bf16.msra.mxu0 0
      %1484 = vmatprep.subr.bf16.mxu0 0
      %1485 = vmatpush1.bf16.msra.mxu0 0
      %1486 = vmatprep.subr.bf16.mxu0 0
      %1487 = vmatpush1.bf16.msra.mxu0 0
      %1488 = vmatprep.subr.bf16.mxu0 0
      %1489 = vmatpush1.bf16.msra.mxu0 0
      %1490 = vmatprep.subr.bf16.mxu0 0
      %1491 = vmatpush1.bf16.msra.mxu0 0
      %1492 = vmatprep.subr.bf16.mxu0 0
      %1493 = vmatpush1.bf16.msra.mxu0 0
      %1494 = vmatprep.subr.bf16.mxu0 0
      %1495 = vmatpush1.bf16.msra.mxu0 0
      %1496 = vmatprep.subr.bf16.mxu0 0
      %1497 = vmatpush1.bf16.msra.mxu0 0
      %1498 = vmatprep.subr.bf16.mxu0 0
      %1499 = vmatpush1.bf16.msra.mxu0 0
      %1500 = vmatprep.subr.bf16.mxu0 0
      %1501 = vmatpush1.bf16.msra.mxu0 0
      %1502 = vmatprep.subr.bf16.mxu0 0
      %1503 = vmatpush1.bf16.msra.mxu0 0
      %1504 = vmatprep.subr.bf16.mxu0 0
      %1505 = vmatpush1.bf16.msra.mxu0 0
      %1506 = vmatprep.subr.bf16.mxu0 0
      %1507 = vmatpush1.bf16.msra.mxu0 0
      %1508 = vmatprep.subr.bf16.mxu0 0
      %1509 = vmatpush1.bf16.msra.mxu0 0
      %1510 = vmatprep.mubr.bf16.mxu0 0
      %1511 = vmatmul.mubr.bf16.gmra.mrb[0].mxu0 %v1426
      %v1512 = vpop.f32.mrb[0].mxu0
      %v1513 = vadd.f32 0.0, %v1512
      %v1514 = vpop.f32.mrb[0].mxu0
      %v1515 = vpop.f32.mrb[0].mxu0
      %v1516 = vpop.f32.mrb[0].mxu0
      %1517 = vdwg.mxu0
      %v1518 = vadd.f32 %v1408, %v1472
      %v1519 = vadd.f32 %v1409, %v1474
      %v1520 = vadd.f32 %v1410, %v1513
      %s1521 = scalar_lea.vmem %s0, 28
      %v1522 = vld [vmem:[%s1521] sm:$0xf]
      %1523 = vrot.lane.b32.xlu0 %v735, 1
      %v1524 = vpop.permute.xlu0 %1523
      %1525 = vrot.lane.b32.xlu0 %v741, 1
      %v1526 = vpop.permute.xlu0 %1525
      %1527 = vrot.lane.b32.xlu0 %v742, 1
      %v1528 = vpop.permute.xlu0 %1527
      %1529 = vrot.lane.b32.xlu0 %v737, 1
      %v1530 = vpop.permute.xlu0 %1529
      %vm1531 = vcmask 7168
      %v1532 = vsel %vm1531, %v1524, %v1526
      %v1533 = vsel %vm1531, %v1526, %v1528
      %v1534 = vsel %vm1531, %v1528, %v1530
      %v1536 = vsel %vm774, %v1522, 0
      %v1539 = vsel %vm778, %v1532, 0
      %v1542 = vsel %vm778, %v1533, 0
      %v1545 = vsel %vm778, %v1534, 0
      %1547 = vmatprep.subr.bf16.mxu0 %v1542
      %1548 = vmatpush1.bf16.msra.mxu0 %v1539
      %1549 = vmatprep.subr.bf16.mxu0 0
      %1550 = vmatpush1.bf16.msra.mxu0 0
      %1551 = vmatprep.subr.bf16.mxu0 0
      %1552 = vmatpush1.bf16.msra.mxu0 0
      %1553 = vmatprep.subr.bf16.mxu0 0
      %1554 = vmatpush1.bf16.msra.mxu0 0
      %1555 = vmatprep.subr.bf16.mxu0 0
      %1556 = vmatpush1.bf16.msra.mxu0 0
      %1557 = vmatprep.subr.bf16.mxu0 0
      %1558 = vmatpush1.bf16.msra.mxu0 0
      %1559 = vmatprep.subr.bf16.mxu0 0
      %1560 = vmatpush1.bf16.msra.mxu0 0
      %1561 = vmatprep.subr.bf16.mxu0 0
      %1562 = vmatpush1.bf16.msra.mxu0 0
      %1563 = vmatprep.subr.bf16.mxu0 0
      %1564 = vmatpush1.bf16.msra.mxu0 0
      %1565 = vmatprep.subr.bf16.mxu0 0
      %1566 = vmatpush1.bf16.msra.mxu0 0
      %1567 = vmatprep.subr.bf16.mxu0 0
      %1568 = vmatpush1.bf16.msra.mxu0 0
      %1569 = vmatprep.subr.bf16.mxu0 0
      %1570 = vmatpush1.bf16.msra.mxu0 0
      %1571 = vmatprep.subr.bf16.mxu0 0
      %1572 = vmatpush1.bf16.msra.mxu0 0
      %1573 = vmatprep.subr.bf16.mxu0 0
      %1574 = vmatpush1.bf16.msra.mxu0 0
      %1575 = vmatprep.subr.bf16.mxu0 0
      %1576 = vmatpush1.bf16.msra.mxu0 0
      %1577 = vmatprep.subr.bf16.mxu0 0
      %1578 = vmatpush1.bf16.msra.mxu0 0
      %1579 = vmatprep.mubr.bf16.mxu0 0
      %1580 = vmatmul.mubr.bf16.gmra.mrb[0].mxu0 %v1536
      %v1581 = vpop.f32.mrb[0].mxu0
      %v1582 = vadd.f32 0.0, %v1581
      %v1583 = vpop.f32.mrb[0].mxu0
      %v1584 = vadd.f32 0.0, %v1583
      %v1585 = vpop.f32.mrb[0].mxu0
      %v1586 = vpop.f32.mrb[0].mxu0
      %1587 = vdwg.mxu0
      %1588 = vmatprep.subr.bf16.mxu0 0
      %1589 = vmatpush1.bf16.msra.mxu0 %v1545
      %1590 = vmatprep.subr.bf16.mxu0 0
      %1591 = vmatpush1.bf16.msra.mxu0 0
      %1592 = vmatprep.subr.bf16.mxu0 0
      %1593 = vmatpush1.bf16.msra.mxu0 0
      %1594 = vmatprep.subr.bf16.mxu0 0
      %1595 = vmatpush1.bf16.msra.mxu0 0
      %1596 = vmatprep.subr.bf16.mxu0 0
      %1597 = vmatpush1.bf16.msra.mxu0 0
      %1598 = vmatprep.subr.bf16.mxu0 0
      %1599 = vmatpush1.bf16.msra.mxu0 0
      %1600 = vmatprep.subr.bf16.mxu0 0
      %1601 = vmatpush1.bf16.msra.mxu0 0
      %1602 = vmatprep.subr.bf16.mxu0 0
      %1603 = vmatpush1.bf16.msra.mxu0 0
      %1604 = vmatprep.subr.bf16.mxu0 0
      %1605 = vmatpush1.bf16.msra.mxu0 0
      %1606 = vmatprep.subr.bf16.mxu0 0
      %1607 = vmatpush1.bf16.msra.mxu0 0
      %1608 = vmatprep.subr.bf16.mxu0 0
      %1609 = vmatpush1.bf16.msra.mxu0 0
      %1610 = vmatprep.subr.bf16.mxu0 0
      %1611 = vmatpush1.bf16.msra.mxu0 0
      %1612 = vmatprep.subr.bf16.mxu0 0
      %1613 = vmatpush1.bf16.msra.mxu0 0
      %1614 = vmatprep.subr.bf16.mxu0 0
      %1615 = vmatpush1.bf16.msra.mxu0 0
      %1616 = vmatprep.subr.bf16.mxu0 0
      %1617 = vmatpush1.bf16.msra.mxu0 0
      %1618 = vmatprep.subr.bf16.mxu0 0
      %1619 = vmatpush1.bf16.msra.mxu0 0
      %1620 = vmatprep.mubr.bf16.mxu0 0
      %1621 = vmatmul.mubr.bf16.gmra.mrb[0].mxu0 %v1536
      %v1622 = vpop.f32.mrb[0].mxu0
      %v1623 = vadd.f32 0.0, %v1622
      %v1624 = vpop.f32.mrb[0].mxu0
      %v1625 = vpop.f32.mrb[0].mxu0
      %v1626 = vpop.f32.mrb[0].mxu0
      %1627 = vdwg.mxu0
      %v1628 = vadd.f32 %v1518, %v1582
      %v1629 = vadd.f32 %v1519, %v1584
      %v1630 = vadd.f32 %v1520, %v1623
      %s1631 = scalar_lea.vmem %s0, 32
      %v1632 = vld [vmem:[%s1631] sm:$0xf]
      %v1634 = vsel %vm774, %v1632, 0
      %v1637 = vsel %vm778, %v741, 0
      %v1640 = vsel %vm778, %v742, 0
      %v1643 = vsel %vm778, %v737, 0
      %1645 = vmatprep.subr.bf16.mxu0 %v1640
      %1646 = vmatpush1.bf16.msra.mxu0 %v1637
      %1647 = vmatprep.subr.bf16.mxu0 0
      %1648 = vmatpush1.bf16.msra.mxu0 0
      %1649 = vmatprep.subr.bf16.mxu0 0
      %1650 = vmatpush1.bf16.msra.mxu0 0
      %1651 = vmatprep.subr.bf16.mxu0 0
      %1652 = vmatpush1.bf16.msra.mxu0 0
      %1653 = vmatprep.subr.bf16.mxu0 0
      %1654 = vmatpush1.bf16.msra.mxu0 0
      %1655 = vmatprep.subr.bf16.mxu0 0
      %1656 = vmatpush1.bf16.msra.mxu0 0
      %1657 = vmatprep.subr.bf16.mxu0 0
      %1658 = vmatpush1.bf16.msra.mxu0 0
      %1659 = vmatprep.subr.bf16.mxu0 0
      %1660 = vmatpush1.bf16.msra.mxu0 0
      %1661 = vmatprep.subr.bf16.mxu0 0
      %1662 = vmatpush1.bf16.msra.mxu0 0
      %1663 = vmatprep.subr.bf16.mxu0 0
      %1664 = vmatpush1.bf16.msra.mxu0 0
      %1665 = vmatprep.subr.bf16.mxu0 0
      %1666 = vmatpush1.bf16.msra.mxu0 0
      %1667 = vmatprep.subr.bf16.mxu0 0
      %1668 = vmatpush1.bf16.msra.mxu0 0
      %1669 = vmatprep.subr.bf16.mxu0 0
      %1670 = vmatpush1.bf16.msra.mxu0 0
      %1671 = vmatprep.subr.bf16.mxu0 0
      %1672 = vmatpush1.bf16.msra.mxu0 0
      %1673 = vmatprep.subr.bf16.mxu0 0
      %1674 = vmatpush1.bf16.msra.mxu0 0
      %1675 = vmatprep.subr.bf16.mxu0 0
      %1676 = vmatpush1.bf16.msra.mxu0 0
      %1677 = vmatprep.mubr.bf16.mxu0 0
      %1678 = vmatmul.mubr.bf16.gmra.mrb[0].mxu0 %v1634
      %v1679 = vpop.f32.mrb[0].mxu0
      %v1680 = vadd.f32 0.0, %v1679
      %v1681 = vpop.f32.mrb[0].mxu0
      %v1682 = vadd.f32 0.0, %v1681
      %v1683 = vpop.f32.mrb[0].mxu0
      %v1684 = vpop.f32.mrb[0].mxu0
      %1685 = vdwg.mxu0
      %1686 = vmatprep.subr.bf16.mxu0 0
      %1687 = vmatpush1.bf16.msra.mxu0 %v1643
      %1688 = vmatprep.subr.bf16.mxu0 0
      %1689 = vmatpush1.bf16.msra.mxu0 0
      %1690 = vmatprep.subr.bf16.mxu0 0
      %1691 = vmatpush1.bf16.msra.mxu0 0
      %1692 = vmatprep.subr.bf16.mxu0 0
      %1693 = vmatpush1.bf16.msra.mxu0 0
      %1694 = vmatprep.subr.bf16.mxu0 0
      %1695 = vmatpush1.bf16.msra.mxu0 0
      %1696 = vmatprep.subr.bf16.mxu0 0
      %1697 = vmatpush1.bf16.msra.mxu0 0
      %1698 = vmatprep.subr.bf16.mxu0 0
      %1699 = vmatpush1.bf16.msra.mxu0 0
      %1700 = vmatprep.subr.bf16.mxu0 0
      %1701 = vmatpush1.bf16.msra.mxu0 0
      %1702 = vmatprep.subr.bf16.mxu0 0
      %1703 = vmatpush1.bf16.msra.mxu0 0
      %1704 = vmatprep.subr.bf16.mxu0 0
      %1705 = vmatpush1.bf16.msra.mxu0 0
      %1706 = vmatprep.subr.bf16.mxu0 0
      %1707 = vmatpush1.bf16.msra.mxu0 0
      %1708 = vmatprep.subr.bf16.mxu0 0
      %1709 = vmatpush1.bf16.msra.mxu0 0
      %1710 = vmatprep.subr.bf16.mxu0 0
      %1711 = vmatpush1.bf16.msra.mxu0 0
      %1712 = vmatprep.subr.bf16.mxu0 0
      %1713 = vmatpush1.bf16.msra.mxu0 0
      %1714 = vmatprep.subr.bf16.mxu0 0
      %1715 = vmatpush1.bf16.msra.mxu0 0
      %1716 = vmatprep.subr.bf16.mxu0 0
      %1717 = vmatpush1.bf16.msra.mxu0 0
      %1718 = vmatprep.mubr.bf16.mxu0 0
      %1719 = vmatmul.mubr.bf16.gmra.mrb[0].mxu0 %v1634
      %v1720 = vpop.f32.mrb[0].mxu0
      %v1721 = vadd.f32 0.0, %v1720
      %v1722 = vpop.f32.mrb[0].mxu0
      %v1723 = vpop.f32.mrb[0].mxu0
      %v1724 = vpop.f32.mrb[0].mxu0
      %1725 = vdwg.mxu0
      %v1726 = vadd.f32 %v1628, %v1680
      %v1727 = vadd.f32 %v1629, %v1682
      %v1728 = vadd.f32 %v1630, %v1721
      %v1729 = vld [vmem:[%s1] sm:$0xff]
      %1731 = vset.pattern.permute.xlu0 0
      %1732 = vperm.xlu0 %1731, %v1729
      %v1733 = vpop.permute.xlu0 %1732
      %v1735 = vadd.f32 %v1726, %v1733
      %v1736 = vadd.f32 %v1727, %v1733
      %v1737 = vadd.f32 %v1728, %v1733
      %v1738 = vlaneseq
      %v1739 = vshrl.u32 %v1738, 7
      %v1740 = vsub.s32 0, %v1739
      %v1741 = vrot.slane %v743, %v1740
      %v1742 = vlaneseq
      %v1743 = vshrl.u32 %v1742, 7
      %v1744 = vsub.s32 0, %v1743
      %v1745 = vrot.slane %v750, %v1744
      %v1746 = vlaneseq
      %v1747 = vshrl.u32 %v1746, 7
      %v1748 = vsub.s32 0, %v1747
      %v1749 = vrot.slane %v754, %v1748
      %v1750 = vlaneseq
      %v1751 = vshrl.u32 %v1750, 7
      %v1752 = vsub.s32 0, %v1751
      %v1753 = vrot.slane %v745, %v1752
      %1758 = vrot.lane.b32.xlu0 %v1741, 19
      %v1759 = vpop.permute.xlu0 %1758
      %1760 = vrot.lane.b32.xlu0 %v1745, 19
      %v1761 = vpop.permute.xlu0 %1760
      %1762 = vrot.lane.b32.xlu0 %v1749, 19
      %v1763 = vpop.permute.xlu0 %1762
      %1764 = vrot.lane.b32.xlu0 %v1753, 19
      %v1765 = vpop.permute.xlu0 %1764
      %vm1766 = vcmask 154624
      %v1767 = vsel %vm1766, %v1759, %v1761
      %v1768 = vsel %vm1766, %v1761, %v1763
      %v1769 = vsel %vm1766, %v1763, %v1765
      %v1773 = vmul.f32 %v1735, %v1767
      %v1774 = vmul.f32 %v1736, %v1768
      %v1775 = vmul.f32 %v1737, %v1769
      %v1776 = vpack.c.bf16 %v1773, %v1773
      %v1777 = vpack.c.bf16 %v1774, %v1774
      %v1778 = vpack.c.bf16 %v1775, %v1775
      %v1779 = vld [vmem:[%s2] sm:$0xf]
      %v1780 = vld [vmem:[%s2 + $0x4] sm:$0xf]
      %s1781 = scalar_lea.vmem %s2, 8
      %v1782 = vld [vmem:[%s1781] sm:$0xf]
      %v1783 = vld [vmem:[%s1781 + $0x4] sm:$0xf]
      %v1786 = vunpack.c.l.b16 %v1782
      %v1787 = vunpack.c.l.b16 %v1783
      %v1788 = vpack.c.b16 %v1787, %v1786
      %1792 = vrot.lane.b32.xlu0 %v1776, 127
      %v1793 = vpop.permute.xlu0 %1792
      %1794 = vrot.lane.b32.xlu0 %v1777, 127
      %v1795 = vpop.permute.xlu0 %1794
      %1796 = vrot.lane.b32.xlu0 %v1778, 127
      %v1797 = vpop.permute.xlu0 %1796
      %vm1798 = vcmask 1039360
      %v1799 = vsel %vm1798, %v1793, %v1795
      %v1800 = vsel %vm1798, %v1795, %v1797
      %v1802 = vsel %vm774, %v1788, 0
      %v1805 = vsel %vm778, %v1799, 0
      %v1808 = vsel %vm778, %v1800, 0
      %1810 = vmatprep.subr.bf16.mxu0 %v1808
      %1811 = vmatpush1.bf16.msra.mxu0 %v1805
      %1812 = vmatprep.subr.bf16.mxu0 0
      %1813 = vmatpush1.bf16.msra.mxu0 0
      %1814 = vmatprep.subr.bf16.mxu0 0
      %1815 = vmatpush1.bf16.msra.mxu0 0
      %1816 = vmatprep.subr.bf16.mxu0 0
      %1817 = vmatpush1.bf16.msra.mxu0 0
      %1818 = vmatprep.subr.bf16.mxu0 0
      %1819 = vmatpush1.bf16.msra.mxu0 0
      %1820 = vmatprep.subr.bf16.mxu0 0
      %1821 = vmatpush1.bf16.msra.mxu0 0
      %1822 = vmatprep.subr.bf16.mxu0 0
      %1823 = vmatpush1.bf16.msra.mxu0 0
      %1824 = vmatprep.subr.bf16.mxu0 0
      %1825 = vmatpush1.bf16.msra.mxu0 0
      %1826 = vmatprep.subr.bf16.mxu0 0
      %1827 = vmatpush1.bf16.msra.mxu0 0
      %1828 = vmatprep.subr.bf16.mxu0 0
      %1829 = vmatpush1.bf16.msra.mxu0 0
      %1830 = vmatprep.subr.bf16.mxu0 0
      %1831 = vmatpush1.bf16.msra.mxu0 0
      %1832 = vmatprep.subr.bf16.mxu0 0
      %1833 = vmatpush1.bf16.msra.mxu0 0
      %1834 = vmatprep.subr.bf16.mxu0 0
      %1835 = vmatpush1.bf16.msra.mxu0 0
      %1836 = vmatprep.subr.bf16.mxu0 0
      %1837 = vmatpush1.bf16.msra.mxu0 0
      %1838 = vmatprep.subr.bf16.mxu0 0
      %1839 = vmatpush1.bf16.msra.mxu0 0
      %1840 = vmatprep.subr.bf16.mxu0 0
      %1841 = vmatpush1.bf16.msra.mxu0 0
      %1842 = vmatprep.mubr.bf16.mxu0 0
      %1843 = vmatmul.mubr.bf16.gmra.mrb[0].mxu0 %v1802
      %v1844 = vpop.f32.mrb[0].mxu0
      %v1845 = vadd.f32 0.0, %v1844
      %v1846 = vpop.f32.mrb[0].mxu0
      %v1847 = vadd.f32 0.0, %v1846
      %v1848 = vpop.f32.mrb[0].mxu0
      %v1849 = vadd.f32 0.0, %v1848
      %v1850 = vpop.f32.mrb[0].mxu0
      %v1851 = vadd.f32 0.0, %v1850
      %1852 = vdwg.mxu0
      %v1855 = vunpack.c.l.b16 %v1779
      %v1856 = vunpack.c.l.b16 %v1780
      %v1857 = vpack.c.b16 %v1856, %v1855
      %v1859 = vsel %vm774, %v1857, 0
      %v1862 = vsel %vm778, %v1776, 0
      %v1865 = vsel %vm778, %v1777, 0
      %1867 = vmatprep.subr.bf16.mxu0 %v1865
      %1868 = vmatpush1.bf16.msra.mxu0 %v1862
      %1869 = vmatprep.subr.bf16.mxu0 0
      %1870 = vmatpush1.bf16.msra.mxu0 0
      %1871 = vmatprep.subr.bf16.mxu0 0
      %1872 = vmatpush1.bf16.msra.mxu0 0
      %1873 = vmatprep.subr.bf16.mxu0 0
      %1874 = vmatpush1.bf16.msra.mxu0 0
      %1875 = vmatprep.subr.bf16.mxu0 0
      %1876 = vmatpush1.bf16.msra.mxu0 0
      %1877 = vmatprep.subr.bf16.mxu0 0
      %1878 = vmatpush1.bf16.msra.mxu0 0
      %1879 = vmatprep.subr.bf16.mxu0 0
      %1880 = vmatpush1.bf16.msra.mxu0 0
      %1881 = vmatprep.subr.bf16.mxu0 0
      %1882 = vmatpush1.bf16.msra.mxu0 0
      %1883 = vmatprep.subr.bf16.mxu0 0
      %1884 = vmatpush1.bf16.msra.mxu0 0
      %1885 = vmatprep.subr.bf16.mxu0 0
      %1886 = vmatpush1.bf16.msra.mxu0 0
      %1887 = vmatprep.subr.bf16.mxu0 0
      %1888 = vmatpush1.bf16.msra.mxu0 0
      %1889 = vmatprep.subr.bf16.mxu0 0
      %1890 = vmatpush1.bf16.msra.mxu0 0
      %1891 = vmatprep.subr.bf16.mxu0 0
      %1892 = vmatpush1.bf16.msra.mxu0 0
      %1893 = vmatprep.subr.bf16.mxu0 0
      %1894 = vmatpush1.bf16.msra.mxu0 0
      %1895 = vmatprep.subr.bf16.mxu0 0
      %1896 = vmatpush1.bf16.msra.mxu0 0
      %1897 = vmatprep.subr.bf16.mxu0 0
      %1898 = vmatpush1.bf16.msra.mxu0 0
      %1899 = vmatprep.mubr.bf16.mxu0 0
      %1900 = vmatmul.mubr.bf16.gmra.mrb[0].mxu0 %v1859
      %v1901 = vpop.f32.mrb[0].mxu0
      %v1902 = vadd.f32 %v1845, %v1901
      %v1903 = vpop.f32.mrb[0].mxu0
      %v1904 = vadd.f32 %v1847, %v1903
      %v1905 = vpop.f32.mrb[0].mxu0
      %v1906 = vadd.f32 %v1849, %v1905
      %v1907 = vpop.f32.mrb[0].mxu0
      %v1908 = vadd.f32 %v1851, %v1907
      %1909 = vdwg.mxu0
      %s1910 = scalar_lea.vmem %s2, 16
      %v1911 = vld [vmem:[%s1910] sm:$0xf]
      %v1912 = vld [vmem:[%s1910 + $0x4] sm:$0xf]
      %v1915 = vunpack.c.l.b16 %v1911
      %v1916 = vunpack.c.l.b16 %v1912
      %v1917 = vpack.c.b16 %v1916, %v1915
      %1918 = vrot.lane.b32.xlu0 %v1776, 126
      %v1919 = vpop.permute.xlu0 %1918
      %1920 = vrot.lane.b32.xlu0 %v1777, 126
      %v1921 = vpop.permute.xlu0 %1920
      %1922 = vrot.lane.b32.xlu0 %v1778, 126
      %v1923 = vpop.permute.xlu0 %1922
      %vm1924 = vcmask 1031168
      %v1925 = vsel %vm1924, %v1919, %v1921
      %v1926 = vsel %vm1924, %v1921, %v1923
      %v1928 = vsel %vm774, %v1917, 0
      %v1931 = vsel %vm778, %v1925, 0
      %v1934 = vsel %vm778, %v1926, 0
      %1936 = vmatprep.subr.bf16.mxu0 %v1934
      %1937 = vmatpush1.bf16.msra.mxu0 %v1931
      %1938 = vmatprep.subr.bf16.mxu0 0
      %1939 = vmatpush1.bf16.msra.mxu0 0
      %1940 = vmatprep.subr.bf16.mxu0 0
      %1941 = vmatpush1.bf16.msra.mxu0 0
      %1942 = vmatprep.subr.bf16.mxu0 0
      %1943 = vmatpush1.bf16.msra.mxu0 0
      %1944 = vmatprep.subr.bf16.mxu0 0
      %1945 = vmatpush1.bf16.msra.mxu0 0
      %1946 = vmatprep.subr.bf16.mxu0 0
      %1947 = vmatpush1.bf16.msra.mxu0 0
      %1948 = vmatprep.subr.bf16.mxu0 0
      %1949 = vmatpush1.bf16.msra.mxu0 0
      %1950 = vmatprep.subr.bf16.mxu0 0
      %1951 = vmatpush1.bf16.msra.mxu0 0
      %1952 = vmatprep.subr.bf16.mxu0 0
      %1953 = vmatpush1.bf16.msra.mxu0 0
      %1954 = vmatprep.subr.bf16.mxu0 0
      %1955 = vmatpush1.bf16.msra.mxu0 0
      %1956 = vmatprep.subr.bf16.mxu0 0
      %1957 = vmatpush1.bf16.msra.mxu0 0
      %1958 = vmatprep.subr.bf16.mxu0 0
      %1959 = vmatpush1.bf16.msra.mxu0 0
      %1960 = vmatprep.subr.bf16.mxu0 0
      %1961 = vmatpush1.bf16.msra.mxu0 0
      %1962 = vmatprep.subr.bf16.mxu0 0
      %1963 = vmatpush1.bf16.msra.mxu0 0
      %1964 = vmatprep.subr.bf16.mxu0 0
      %1965 = vmatpush1.bf16.msra.mxu0 0
      %1966 = vmatprep.subr.bf16.mxu0 0
      %1967 = vmatpush1.bf16.msra.mxu0 0
      %1968 = vmatprep.mubr.bf16.mxu0 0
      %1969 = vmatmul.mubr.bf16.gmra.mrb[0].mxu0 %v1928
      %v1970 = vpop.f32.mrb[0].mxu0
      %v1971 = vadd.f32 0.0, %v1970
      %v1972 = vpop.f32.mrb[0].mxu0
      %v1973 = vadd.f32 0.0, %v1972
      %v1974 = vpop.f32.mrb[0].mxu0
      %v1975 = vadd.f32 0.0, %v1974
      %v1976 = vpop.f32.mrb[0].mxu0
      %v1977 = vadd.f32 0.0, %v1976
      %1978 = vdwg.mxu0
      %v1979 = vadd.f32 %v1902, %v1971
      %v1980 = vadd.f32 %v1904, %v1973
      %v1981 = vadd.f32 %v1906, %v1975
      %v1982 = vadd.f32 %v1908, %v1977
      %s1983 = scalar_lea.vmem %s2, 24
      %v1984 = vld [vmem:[%s1983] sm:$0xf]
      %v1985 = vld [vmem:[%s1983 + $0x4] sm:$0xf]
      %v1988 = vunpack.c.l.b16 %v1984
      %v1989 = vunpack.c.l.b16 %v1985
      %v1990 = vpack.c.b16 %v1989, %v1988
      %1991 = vrot.lane.b32.xlu0 %v1776, 110
      %v1992 = vpop.permute.xlu0 %1991
      %1993 = vrot.lane.b32.xlu0 %v1777, 110
      %v1994 = vpop.permute.xlu0 %1993
      %1995 = vrot.lane.b32.xlu0 %v1778, 110
      %v1996 = vpop.permute.xlu0 %1995
      %vm1997 = vcmask 900096
      %v1998 = vsel %vm1997, %v1992, %v1994
      %v1999 = vsel %vm1997, %v1994, %v1996
      %v2001 = vsel %vm774, %v1990, 0
      %v2004 = vsel %vm778, %v1998, 0
      %v2007 = vsel %vm778, %v1999, 0
      %2009 = vmatprep.subr.bf16.mxu0 %v2007
      %2010 = vmatpush1.bf16.msra.mxu0 %v2004
      %2011 = vmatprep.subr.bf16.mxu0 0
      %2012 = vmatpush1.bf16.msra.mxu0 0
      %2013 = vmatprep.subr.bf16.mxu0 0
      %2014 = vmatpush1.bf16.msra.mxu0 0
      %2015 = vmatprep.subr.bf16.mxu0 0
      %2016 = vmatpush1.bf16.msra.mxu0 0
      %2017 = vmatprep.subr.bf16.mxu0 0
      %2018 = vmatpush1.bf16.msra.mxu0 0
      %2019 = vmatprep.subr.bf16.mxu0 0
      %2020 = vmatpush1.bf16.msra.mxu0 0
      %2021 = vmatprep.subr.bf16.mxu0 0
      %2022 = vmatpush1.bf16.msra.mxu0 0
      %2023 = vmatprep.subr.bf16.mxu0 0
      %2024 = vmatpush1.bf16.msra.mxu0 0
      %2025 = vmatprep.subr.bf16.mxu0 0
      %2026 = vmatpush1.bf16.msra.mxu0 0
      %2027 = vmatprep.subr.bf16.mxu0 0
      %2028 = vmatpush1.bf16.msra.mxu0 0
      %2029 = vmatprep.subr.bf16.mxu0 0
      %2030 = vmatpush1.bf16.msra.mxu0 0
      %2031 = vmatprep.subr.bf16.mxu0 0
      %2032 = vmatpush1.bf16.msra.mxu0 0
      %2033 = vmatprep.subr.bf16.mxu0 0
      %2034 = vmatpush1.bf16.msra.mxu0 0
      %2035 = vmatprep.subr.bf16.mxu0 0
      %2036 = vmatpush1.bf16.msra.mxu0 0
      %2037 = vmatprep.subr.bf16.mxu0 0
      %2038 = vmatpush1.bf16.msra.mxu0 0
      %2039 = vmatprep.subr.bf16.mxu0 0
      %2040 = vmatpush1.bf16.msra.mxu0 0
      %2041 = vmatprep.mubr.bf16.mxu0 0
      %2042 = vmatmul.mubr.bf16.gmra.mrb[0].mxu0 %v2001
      %v2043 = vpop.f32.mrb[0].mxu0
      %v2044 = vadd.f32 0.0, %v2043
      %v2045 = vpop.f32.mrb[0].mxu0
      %v2046 = vadd.f32 0.0, %v2045
      %v2047 = vpop.f32.mrb[0].mxu0
      %v2048 = vadd.f32 0.0, %v2047
      %v2049 = vpop.f32.mrb[0].mxu0
      %v2050 = vadd.f32 0.0, %v2049
      %2051 = vdwg.mxu0
      %v2052 = vadd.f32 %v1979, %v2044
      %v2053 = vadd.f32 %v1980, %v2046
      %v2054 = vadd.f32 %v1981, %v2048
      %v2055 = vadd.f32 %v1982, %v2050
      %s2056 = scalar_lea.vmem %s2, 32
      %v2057 = vld [vmem:[%s2056] sm:$0xf]
      %v2058 = vld [vmem:[%s2056 + $0x4] sm:$0xf]
      %v2061 = vunpack.c.l.b16 %v2057
      %v2062 = vunpack.c.l.b16 %v2058
      %v2063 = vpack.c.b16 %v2062, %v2061
      %2064 = vrot.lane.b32.xlu0 %v1776, 109
      %v2065 = vpop.permute.xlu0 %2064
      %2066 = vrot.lane.b32.xlu0 %v1777, 109
      %v2067 = vpop.permute.xlu0 %2066
      %2068 = vrot.lane.b32.xlu0 %v1778, 109
      %v2069 = vpop.permute.xlu0 %2068
      %vm2070 = vcmask 891904
      %v2071 = vsel %vm2070, %v2065, %v2067
      %v2072 = vsel %vm2070, %v2067, %v2069
      %v2074 = vsel %vm774, %v2063, 0
      %v2077 = vsel %vm778, %v2071, 0
      %v2080 = vsel %vm778, %v2072, 0
      %2082 = vmatprep.subr.bf16.mxu0 %v2080
      %2083 = vmatpush1.bf16.msra.mxu0 %v2077
      %2084 = vmatprep.subr.bf16.mxu0 0
      %2085 = vmatpush1.bf16.msra.mxu0 0
      %2086 = vmatprep.subr.bf16.mxu0 0
      %2087 = vmatpush1.bf16.msra.mxu0 0
      %2088 = vmatprep.subr.bf16.mxu0 0
      %2089 = vmatpush1.bf16.msra.mxu0 0
      %2090 = vmatprep.subr.bf16.mxu0 0
      %2091 = vmatpush1.bf16.msra.mxu0 0
      %2092 = vmatprep.subr.bf16.mxu0 0
      %2093 = vmatpush1.bf16.msra.mxu0 0
      %2094 = vmatprep.subr.bf16.mxu0 0
      %2095 = vmatpush1.bf16.msra.mxu0 0
      %2096 = vmatprep.subr.bf16.mxu0 0
      %2097 = vmatpush1.bf16.msra.mxu0 0
      %2098 = vmatprep.subr.bf16.mxu0 0
      %2099 = vmatpush1.bf16.msra.mxu0 0
      %2100 = vmatprep.subr.bf16.mxu0 0
      %2101 = vmatpush1.bf16.msra.mxu0 0
      %2102 = vmatprep.subr.bf16.mxu0 0
      %2103 = vmatpush1.bf16.msra.mxu0 0
      %2104 = vmatprep.subr.bf16.mxu0 0
      %2105 = vmatpush1.bf16.msra.mxu0 0
      %2106 = vmatprep.subr.bf16.mxu0 0
      %2107 = vmatpush1.bf16.msra.mxu0 0
      %2108 = vmatprep.subr.bf16.mxu0 0
      %2109 = vmatpush1.bf16.msra.mxu0 0
      %2110 = vmatprep.subr.bf16.mxu0 0
      %2111 = vmatpush1.bf16.msra.mxu0 0
      %2112 = vmatprep.subr.bf16.mxu0 0
      %2113 = vmatpush1.bf16.msra.mxu0 0
      %2114 = vmatprep.mubr.bf16.mxu0 0
      %2115 = vmatmul.mubr.bf16.gmra.mrb[0].mxu0 %v2074
      %v2116 = vpop.f32.mrb[0].mxu0
      %v2117 = vadd.f32 0.0, %v2116
      %v2118 = vpop.f32.mrb[0].mxu0
      %v2119 = vadd.f32 0.0, %v2118
      %v2120 = vpop.f32.mrb[0].mxu0
      %v2121 = vadd.f32 0.0, %v2120
      %v2122 = vpop.f32.mrb[0].mxu0
      %v2123 = vadd.f32 0.0, %v2122
      %2124 = vdwg.mxu0
      %v2125 = vadd.f32 %v2052, %v2117
      %v2126 = vadd.f32 %v2053, %v2119
      %v2127 = vadd.f32 %v2054, %v2121
      %v2128 = vadd.f32 %v2055, %v2123
      %s2129 = scalar_lea.vmem %s2, 40
      %v2130 = vld [vmem:[%s2129] sm:$0xf]
      %v2131 = vld [vmem:[%s2129 + $0x4] sm:$0xf]
      %v2134 = vunpack.c.l.b16 %v2130
      %v2135 = vunpack.c.l.b16 %v2131
      %v2136 = vpack.c.b16 %v2135, %v2134
      %2137 = vrot.lane.b32.xlu0 %v1776, 108
      %v2138 = vpop.permute.xlu0 %2137
      %2139 = vrot.lane.b32.xlu0 %v1777, 108
      %v2140 = vpop.permute.xlu0 %2139
      %2141 = vrot.lane.b32.xlu0 %v1778, 108
      %v2142 = vpop.permute.xlu0 %2141
      %vm2143 = vcmask 883712
      %v2144 = vsel %vm2143, %v2138, %v2140
      %v2145 = vsel %vm2143, %v2140, %v2142
      %v2147 = vsel %vm774, %v2136, 0
      %v2150 = vsel %vm778, %v2144, 0
      %v2153 = vsel %vm778, %v2145, 0
      %2155 = vmatprep.subr.bf16.mxu0 %v2153
      %2156 = vmatpush1.bf16.msra.mxu0 %v2150
      %2157 = vmatprep.subr.bf16.mxu0 0
      %2158 = vmatpush1.bf16.msra.mxu0 0
      %2159 = vmatprep.subr.bf16.mxu0 0
      %2160 = vmatpush1.bf16.msra.mxu0 0
      %2161 = vmatprep.subr.bf16.mxu0 0
      %2162 = vmatpush1.bf16.msra.mxu0 0
      %2163 = vmatprep.subr.bf16.mxu0 0
      %2164 = vmatpush1.bf16.msra.mxu0 0
      %2165 = vmatprep.subr.bf16.mxu0 0
      %2166 = vmatpush1.bf16.msra.mxu0 0
      %2167 = vmatprep.subr.bf16.mxu0 0
      %2168 = vmatpush1.bf16.msra.mxu0 0
      %2169 = vmatprep.subr.bf16.mxu0 0
      %2170 = vmatpush1.bf16.msra.mxu0 0
      %2171 = vmatprep.subr.bf16.mxu0 0
      %2172 = vmatpush1.bf16.msra.mxu0 0
      %2173 = vmatprep.subr.bf16.mxu0 0
      %2174 = vmatpush1.bf16.msra.mxu0 0
      %2175 = vmatprep.subr.bf16.mxu0 0
      %2176 = vmatpush1.bf16.msra.mxu0 0
      %2177 = vmatprep.subr.bf16.mxu0 0
      %2178 = vmatpush1.bf16.msra.mxu0 0
      %2179 = vmatprep.subr.bf16.mxu0 0
      %2180 = vmatpush1.bf16.msra.mxu0 0
      %2181 = vmatprep.subr.bf16.mxu0 0
      %2182 = vmatpush1.bf16.msra.mxu0 0
      %2183 = vmatprep.subr.bf16.mxu0 0
      %2184 = vmatpush1.bf16.msra.mxu0 0
      %2185 = vmatprep.subr.bf16.mxu0 0
      %2186 = vmatpush1.bf16.msra.mxu0 0
      %2187 = vmatprep.mubr.bf16.mxu0 0
      %2188 = vmatmul.mubr.bf16.gmra.mrb[0].mxu0 %v2147
      %v2189 = vpop.f32.mrb[0].mxu0
      %v2190 = vadd.f32 0.0, %v2189
      %v2191 = vpop.f32.mrb[0].mxu0
      %v2192 = vadd.f32 0.0, %v2191
      %v2193 = vpop.f32.mrb[0].mxu0
      %v2194 = vadd.f32 0.0, %v2193
      %v2195 = vpop.f32.mrb[0].mxu0
      %v2196 = vadd.f32 0.0, %v2195
      %2197 = vdwg.mxu0
      %v2198 = vadd.f32 %v2125, %v2190
      %v2199 = vadd.f32 %v2126, %v2192
      %v2200 = vadd.f32 %v2127, %v2194
      %v2201 = vadd.f32 %v2128, %v2196
      %s2202 = scalar_lea.vmem %s2, 48
      %v2203 = vld [vmem:[%s2202] sm:$0xf]
      %v2204 = vld [vmem:[%s2202 + $0x4] sm:$0xf]
      %v2207 = vunpack.c.l.b16 %v2203
      %v2208 = vunpack.c.l.b16 %v2204
      %v2209 = vpack.c.b16 %v2208, %v2207
      %2210 = vrot.lane.b32.xlu0 %v1776, 92
      %v2211 = vpop.permute.xlu0 %2210
      %2212 = vrot.lane.b32.xlu0 %v1777, 92
      %v2213 = vpop.permute.xlu0 %2212
      %2214 = vrot.lane.b32.xlu0 %v1778, 92
      %v2215 = vpop.permute.xlu0 %2214
      %vm2216 = vcmask 752640
      %v2217 = vsel %vm2216, %v2211, %v2213
      %v2218 = vsel %vm2216, %v2213, %v2215
      %v2220 = vsel %vm774, %v2209, 0
      %v2223 = vsel %vm778, %v2217, 0
      %v2226 = vsel %vm778, %v2218, 0
      %2228 = vmatprep.subr.bf16.mxu0 %v2226
      %2229 = vmatpush1.bf16.msra.mxu0 %v2223
      %2230 = vmatprep.subr.bf16.mxu0 0
      %2231 = vmatpush1.bf16.msra.mxu0 0
      %2232 = vmatprep.subr.bf16.mxu0 0
      %2233 = vmatpush1.bf16.msra.mxu0 0
      %2234 = vmatprep.subr.bf16.mxu0 0
      %2235 = vmatpush1.bf16.msra.mxu0 0
      %2236 = vmatprep.subr.bf16.mxu0 0
      %2237 = vmatpush1.bf16.msra.mxu0 0
      %2238 = vmatprep.subr.bf16.mxu0 0
      %2239 = vmatpush1.bf16.msra.mxu0 0
      %2240 = vmatprep.subr.bf16.mxu0 0
      %2241 = vmatpush1.bf16.msra.mxu0 0
      %2242 = vmatprep.subr.bf16.mxu0 0
      %2243 = vmatpush1.bf16.msra.mxu0 0
      %2244 = vmatprep.subr.bf16.mxu0 0
      %2245 = vmatpush1.bf16.msra.mxu0 0
      %2246 = vmatprep.subr.bf16.mxu0 0
      %2247 = vmatpush1.bf16.msra.mxu0 0
      %2248 = vmatprep.subr.bf16.mxu0 0
      %2249 = vmatpush1.bf16.msra.mxu0 0
      %2250 = vmatprep.subr.bf16.mxu0 0
      %2251 = vmatpush1.bf16.msra.mxu0 0
      %2252 = vmatprep.subr.bf16.mxu0 0
      %2253 = vmatpush1.bf16.msra.mxu0 0
      %2254 = vmatprep.subr.bf16.mxu0 0
      %2255 = vmatpush1.bf16.msra.mxu0 0
      %2256 = vmatprep.subr.bf16.mxu0 0
      %2257 = vmatpush1.bf16.msra.mxu0 0
      %2258 = vmatprep.subr.bf16.mxu0 0
      %2259 = vmatpush1.bf16.msra.mxu0 0
      %2260 = vmatprep.mubr.bf16.mxu0 0
      %2261 = vmatmul.mubr.bf16.gmra.mrb[0].mxu0 %v2220
      %v2262 = vpop.f32.mrb[0].mxu0
      %v2263 = vadd.f32 0.0, %v2262
      %v2264 = vpop.f32.mrb[0].mxu0
      %v2265 = vadd.f32 0.0, %v2264
      %v2266 = vpop.f32.mrb[0].mxu0
      %v2267 = vadd.f32 0.0, %v2266
      %v2268 = vpop.f32.mrb[0].mxu0
      %v2269 = vadd.f32 0.0, %v2268
      %2270 = vdwg.mxu0
      %v2271 = vadd.f32 %v2198, %v2263
      %v2272 = vadd.f32 %v2199, %v2265
      %v2273 = vadd.f32 %v2200, %v2267
      %v2274 = vadd.f32 %v2201, %v2269
      %s2275 = scalar_lea.vmem %s2, 56
      %v2276 = vld [vmem:[%s2275] sm:$0xf]
      %v2277 = vld [vmem:[%s2275 + $0x4] sm:$0xf]
      %v2280 = vunpack.c.l.b16 %v2276
      %v2281 = vunpack.c.l.b16 %v2277
      %v2282 = vpack.c.b16 %v2281, %v2280
      %2283 = vrot.lane.b32.xlu0 %v1776, 91
      %v2284 = vpop.permute.xlu0 %2283
      %2285 = vrot.lane.b32.xlu0 %v1777, 91
      %v2286 = vpop.permute.xlu0 %2285
      %2287 = vrot.lane.b32.xlu0 %v1778, 91
      %v2288 = vpop.permute.xlu0 %2287
      %vm2289 = vcmask 744448
      %v2290 = vsel %vm2289, %v2284, %v2286
      %v2291 = vsel %vm2289, %v2286, %v2288
      %v2293 = vsel %vm774, %v2282, 0
      %v2296 = vsel %vm778, %v2290, 0
      %v2299 = vsel %vm778, %v2291, 0
      %2301 = vmatprep.subr.bf16.mxu0 %v2299
      %2302 = vmatpush1.bf16.msra.mxu0 %v2296
      %2303 = vmatprep.subr.bf16.mxu0 0
      %2304 = vmatpush1.bf16.msra.mxu0 0
      %2305 = vmatprep.subr.bf16.mxu0 0
      %2306 = vmatpush1.bf16.msra.mxu0 0
      %2307 = vmatprep.subr.bf16.mxu0 0
      %2308 = vmatpush1.bf16.msra.mxu0 0
      %2309 = vmatprep.subr.bf16.mxu0 0
      %2310 = vmatpush1.bf16.msra.mxu0 0
      %2311 = vmatprep.subr.bf16.mxu0 0
      %2312 = vmatpush1.bf16.msra.mxu0 0
      %2313 = vmatprep.subr.bf16.mxu0 0
      %2314 = vmatpush1.bf16.msra.mxu0 0
      %2315 = vmatprep.subr.bf16.mxu0 0
      %2316 = vmatpush1.bf16.msra.mxu0 0
      %2317 = vmatprep.subr.bf16.mxu0 0
      %2318 = vmatpush1.bf16.msra.mxu0 0
      %2319 = vmatprep.subr.bf16.mxu0 0
      %2320 = vmatpush1.bf16.msra.mxu0 0
      %2321 = vmatprep.subr.bf16.mxu0 0
      %2322 = vmatpush1.bf16.msra.mxu0 0
      %2323 = vmatprep.subr.bf16.mxu0 0
      %2324 = vmatpush1.bf16.msra.mxu0 0
      %2325 = vmatprep.subr.bf16.mxu0 0
      %2326 = vmatpush1.bf16.msra.mxu0 0
      %2327 = vmatprep.subr.bf16.mxu0 0
      %2328 = vmatpush1.bf16.msra.mxu0 0
      %2329 = vmatprep.subr.bf16.mxu0 0
      %2330 = vmatpush1.bf16.msra.mxu0 0
      %2331 = vmatprep.subr.bf16.mxu0 0
      %2332 = vmatpush1.bf16.msra.mxu0 0
      %2333 = vmatprep.mubr.bf16.mxu0 0
      %2334 = vmatmul.mubr.bf16.gmra.mrb[0].mxu0 %v2293
      %v2335 = vpop.f32.mrb[0].mxu0
      %v2336 = vadd.f32 0.0, %v2335
      %v2337 = vpop.f32.mrb[0].mxu0
      %v2338 = vadd.f32 0.0, %v2337
      %v2339 = vpop.f32.mrb[0].mxu0
      %v2340 = vadd.f32 0.0, %v2339
      %v2341 = vpop.f32.mrb[0].mxu0
      %v2342 = vadd.f32 0.0, %v2341
      %2343 = vdwg.mxu0
      %v2344 = vadd.f32 %v2271, %v2336
      %v2345 = vadd.f32 %v2272, %v2338
      %v2346 = vadd.f32 %v2273, %v2340
      %v2347 = vadd.f32 %v2274, %v2342
      %s2348 = scalar_lea.vmem %s2, 64
      %v2349 = vld [vmem:[%s2348] sm:$0xf]
      %v2350 = vld [vmem:[%s2348 + $0x4] sm:$0xf]
      %v2353 = vunpack.c.l.b16 %v2349
      %v2354 = vunpack.c.l.b16 %v2350
      %v2355 = vpack.c.b16 %v2354, %v2353
      %2356 = vrot.lane.b32.xlu0 %v1776, 90
      %v2357 = vpop.permute.xlu0 %2356
      %2358 = vrot.lane.b32.xlu0 %v1777, 90
      %v2359 = vpop.permute.xlu0 %2358
      %2360 = vrot.lane.b32.xlu0 %v1778, 90
      %v2361 = vpop.permute.xlu0 %2360
      %vm2362 = vcmask 736256
      %v2363 = vsel %vm2362, %v2357, %v2359
      %v2364 = vsel %vm2362, %v2359, %v2361
      %v2366 = vsel %vm774, %v2355, 0
      %v2369 = vsel %vm778, %v2363, 0
      %v2372 = vsel %vm778, %v2364, 0
      %2374 = vmatprep.subr.bf16.mxu0 %v2372
      %2375 = vmatpush1.bf16.msra.mxu0 %v2369
      %2376 = vmatprep.subr.bf16.mxu0 0
      %2377 = vmatpush1.bf16.msra.mxu0 0
      %2378 = vmatprep.subr.bf16.mxu0 0
      %2379 = vmatpush1.bf16.msra.mxu0 0
      %2380 = vmatprep.subr.bf16.mxu0 0
      %2381 = vmatpush1.bf16.msra.mxu0 0
      %2382 = vmatprep.subr.bf16.mxu0 0
      %2383 = vmatpush1.bf16.msra.mxu0 0
      %2384 = vmatprep.subr.bf16.mxu0 0
      %2385 = vmatpush1.bf16.msra.mxu0 0
      %2386 = vmatprep.subr.bf16.mxu0 0
      %2387 = vmatpush1.bf16.msra.mxu0 0
      %2388 = vmatprep.subr.bf16.mxu0 0
      %2389 = vmatpush1.bf16.msra.mxu0 0
      %2390 = vmatprep.subr.bf16.mxu0 0
      %2391 = vmatpush1.bf16.msra.mxu0 0
      %2392 = vmatprep.subr.bf16.mxu0 0
      %2393 = vmatpush1.bf16.msra.mxu0 0
      %2394 = vmatprep.subr.bf16.mxu0 0
      %2395 = vmatpush1.bf16.msra.mxu0 0
      %2396 = vmatprep.subr.bf16.mxu0 0
      %2397 = vmatpush1.bf16.msra.mxu0 0
      %2398 = vmatprep.subr.bf16.mxu0 0
      %2399 = vmatpush1.bf16.msra.mxu0 0
      %2400 = vmatprep.subr.bf16.mxu0 0
      %2401 = vmatpush1.bf16.msra.mxu0 0
      %2402 = vmatprep.subr.bf16.mxu0 0
      %2403 = vmatpush1.bf16.msra.mxu0 0
      %2404 = vmatprep.subr.bf16.mxu0 0
      %2405 = vmatpush1.bf16.msra.mxu0 0
      %2406 = vmatprep.mubr.bf16.mxu0 0
      %2407 = vmatmul.mubr.bf16.gmra.mrb[0].mxu0 %v2366
      %v2408 = vpop.f32.mrb[0].mxu0
      %v2409 = vadd.f32 0.0, %v2408
      %v2410 = vpop.f32.mrb[0].mxu0
      %v2411 = vadd.f32 0.0, %v2410
      %v2412 = vpop.f32.mrb[0].mxu0
      %v2413 = vadd.f32 0.0, %v2412
      %v2414 = vpop.f32.mrb[0].mxu0
      %v2415 = vadd.f32 0.0, %v2414
      %2416 = vdwg.mxu0
      %v2417 = vadd.f32 %v2344, %v2409
      %v2418 = vadd.f32 %v2345, %v2411
      %v2419 = vadd.f32 %v2346, %v2413
      %v2420 = vadd.f32 %v2347, %v2415
      %v2421 = vld [vmem:[%s3] sm:$0xff]
      %v2422 = vld [vmem:[%s3 + $0x8] sm:$0xff]
      %2424 = vset.pattern.permute.xlu0 0
      %2425 = vperm.xlu0 %2424, %v2421
      %v2426 = vpop.permute.xlu0 %2425
      %2429 = vset.pattern.permute.xlu0 0
      %2430 = vperm.xlu0 %2429, %v2422
      %v2431 = vpop.permute.xlu0 %2430
      %v2433 = vadd.f32 %v2417, %v2426
      %v2434 = vadd.f32 %v2418, %v2426
      %v2435 = vadd.f32 %v2419, %v2431
      %v2436 = vadd.f32 %v2420, %v2431
      %v2437 = vld [vmem:[%s718] sm:$0xff]
      %v2438 = vld [vmem:[%s718 + $0x8] sm:$0xff]
      %v2439 = vld [vmem:[%s4] sm:$0xff]
      %2441 = vset.pattern.permute.xlu0 0
      %2442 = vperm.xlu0 %2441, %v2439
      %v2443 = vpop.permute.xlu0 %2442
      %v2445 = vsub.f32 %v2437, %v2443
      %v2446 = vsub.f32 %v2438, %v2443
      %v2447 = vld [vmem:[%s5] sm:$0xff]
      %2449 = vset.pattern.permute.xlu0 0
      %2450 = vperm.xlu0 %2449, %v2447
      %v2451 = vpop.permute.xlu0 %2450
      %v2453 = vmul.f32 %v2445, %v2451
      %v2454 = vmul.f32 %v2446, %v2451
      %v2455 = vmul.f32 %v2453, %v2433
      %v2456 = vmul.f32 %v2454, %v2434
      %v2457 = vadd.f32 %v2455, %v2435
      %v2458 = vadd.f32 %v2456, %v2436
      %v2459 = vmax.f32 %v2457, 0.0
      %v2460 = vmax.f32 %v2458, 0.0
      %2461 = vst [vmem:[%s724] sm:$0xff] %v2459
      %2462 = vst [vmem:[%s724 + $0x8] sm:$0xff] %v2460
      %vm2463 = vcmp.gt.f32.partialorder %v750, 0.0
      %vm2464 = vcmp.gt.f32.partialorder %v754, 0.0
      %v2465 = vsel %vm2463, 1, 0
      %v2466 = vsel %vm2464, 1, 0
      %v2467 = vlaneseq
      %v2468 = vshrl.u32 %v2467, 7
      %v2469 = vsub.s32 0, %v2468
      %v2470 = vrot.slane %v2465, %v2469
      %v2471 = vlaneseq
      %v2472 = vshrl.u32 %v2471, 7
      %v2473 = vsub.s32 0, %v2472
      %v2474 = vrot.slane %v2466, %v2473
      %vm2475 = vcmp.eq.s32.totalorder %v2470, 1
      %vm2476 = vcmp.eq.s32.totalorder %v2474, 1
      %v2477 = vsel %vm2475, %v2459, 0.0
      %v2478 = vsel %vm2476, %v2460, 0.0
      %v2479 = vadd.f32 %v2477, %v2478
      %2480 = vadd.xlane.f32.xlu0 %v2479
      %v2481 = vpop.xlane.xlu0 %2480
      %v2482 = vmul.f32 %v2477, %v2477
      %v2483 = vmul.f32 %v2478, %v2478
      %v2484 = vadd.f32 %v2482, %v2483
      %2485 = vadd.xlane.f32.xlu0 %v2484
      %v2486 = vpop.xlane.xlu0 %2485
      %v2487 = vlaneseq
      %v2488 = vand.u32 %v2487, 127
      %vm2489 = vcmp.eq.s32.totalorder %v2488, 0
      %v2490 = vsel %vm2489, %v2481, 0.0
      %2491 = vst [vmem:[%s729] sm:$0xff] %v2490
      %v2492 = vsel %vm2489, %v2486, 0.0
      %2493 = vst [vmem:[%s733] sm:$0xff] %v2492
      %s2494 = smul.u32 2, %s27
      %p2495 = scmp.lt.s32.totalorder %s2494, 5
      %s2496 = scalar_select %p2495, %s2494, 5
      %s2497 = smul.addr %s2496, 8
      %s2498 = scalar_lea.vmem %s13, %s2497
      %p2499 = scmp.lt.s32.totalorder %s27, 2
      %s2500 = scalar_select %p2499, %s27, 2
      %s2501 = smul.addr %s2500, 8
      %s2502 = scalar_lea.vmem %s14, %s2501
      %p2503 = scmp.lt.s32.totalorder %s27, 2
      %s2504 = scalar_select %p2503, %s27, 2
      %s2505 = smul.addr %s2504, 8
      %s2506 = scalar_lea.vmem %s15, %s2505
      // Predicated region
      $region73: #{spade_block_forward.4} parent=71 // pred_check
        %p2507 = pneg %p385
      $region74: #{spade_block_forward.4} parent=71 // pred_check_branch
        %2509 = sbr.rel (%p2507) target = $region76
      $region75: #{spade_block_forward.4} parent=71 // pred_region
        %s2510 = smul.u32 2, %s27
      $region76: #{spade_block_forward.4} parent=71 // pred_fallthru
        _
      // Predicated region
      $region77: #{spade_block_forward.4} parent=71 // pred_check
        %p2511 = pneg %p411
      $region78: #{spade_block_forward.4} parent=71 // pred_check_branch
        %2513 = sbr.rel (%p2511) target = $region80
      $region79: #{spade_block_forward.4} parent=71 // pred_region
        _
      $region80: #{spade_block_forward.4} parent=71 // pred_fallthru
        _
      // Predicated region
      $region81: #{spade_block_forward.4} parent=71 // pred_check
        %p2514 = pneg %p437
      $region82: #{spade_block_forward.4} parent=71 // pred_check_branch
        %2516 = sbr.rel (%p2514) target = $region84
      $region83: #{spade_block_forward.4} parent=71 // pred_region
        _
      $region84: #{spade_block_forward.4} parent=71 // pred_fallthru
        _
    $region72: #{spade_block_forward.4} parent=5 // pred_fallthru
      _
    %p2517 = scmp.le.s32.totalorder 2, %s22
    // Predicated region
    $region85: #{spade_block_forward.4} parent=5 // pred_check
      %p2518 = pneg %p2517
    $region86: #{spade_block_forward.4} parent=5 // pred_check_branch
      %2520 = sbr.rel (%p2518) target = $region88
    $region87: #{spade_block_forward.4} parent=5 // pred_region
      %s2521 = ssub.s32 %s22, 2
      // Predicated region
      $region89: #{spade_block_forward.4} parent=87 // pred_check
        %p2522 = pneg %p391
      $region90: #{spade_block_forward.4} parent=87 // pred_check_branch
        %2524 = sbr.rel (%p2522) target = $region92
      $region91: #{spade_block_forward.4} parent=87 // pred_region
        %s2525 = smul.u32 2, %s28
        %p2526 = scmp.lt.s32.totalorder %s2525, 5
        %s2527 = scalar_select %p2526, %s2525, 5
        %s2528 = smul.addr %s2527, 8
        %s2529 = scalar_lea.vmem %s13, %s2528
      $region92: #{spade_block_forward.4} parent=87 // pred_fallthru
        _
      // Predicated region
      $region93: #{spade_block_forward.4} parent=87 // pred_check
        %p2530 = pneg %p417
      $region94: #{spade_block_forward.4} parent=87 // pred_check_branch
        %2532 = sbr.rel (%p2530) target = $region96
      $region95: #{spade_block_forward.4} parent=87 // pred_region
        %p2533 = scmp.lt.s32.totalorder %s28, 2
        %s2534 = scalar_select %p2533, %s28, 2
        %s2535 = smul.addr %s2534, 8
        %s2536 = scalar_lea.vmem %s14, %s2535
      $region96: #{spade_block_forward.4} parent=87 // pred_fallthru
        _
      // Predicated region
      $region97: #{spade_block_forward.4} parent=87 // pred_check
        %p2537 = pneg %p443
      $region98: #{spade_block_forward.4} parent=87 // pred_check_branch
        %2539 = sbr.rel (%p2537) target = $region100
      $region99: #{spade_block_forward.4} parent=87 // pred_region
        %p2540 = scmp.lt.s32.totalorder %s28, 2
        %s2541 = scalar_select %p2540, %s28, 2
        %s2542 = smul.addr %s2541, 8
        %s2543 = scalar_lea.vmem %s15, %s2542
      $region100: #{spade_block_forward.4} parent=87 // pred_fallthru
        _
    $region88: #{spade_block_forward.4} parent=5 // pred_fallthru
      _
  $region6: #{spade_block_forward.4} parent=0 // loop_footer
    %s26 = sadd.s32 1, %s22
  $region7: #{spade_block_forward.4} parent=0 // loop_footer_branch
    %21 = sbr.rel target = $region3
  $region8: #{spade_block_forward.4} parent=0 // loop_exit
    _

// kernel: spade_block_forward.5
$region0: #{spade_block_forward.5}
  #allocation0 [shape = 'u32[]', space=smem, size = 0x4, offset = 0x4, fixed_abs, tag = 'smem constant byte address 0x4 - core index']
  #allocation1 [shape = 'u32[144,128]{1,0:T(1,128)}', space=vmem, size = 0x12000, scoped, tag = 'internal scratch']
  %s0 = inlined_call_operand.vmem [shape: bf16[9,8,8], index: 0, kind: input, shape index: {}]
  %s1 = inlined_call_operand.vmem [shape: f32[8,1], index: 1, kind: input, shape index: {}]
  %s2 = inlined_call_operand.vmem [shape: bf16[9,16,8], index: 2, kind: input, shape index: {}]
  %s3 = inlined_call_operand.vmem [shape: f32[16,1], index: 3, kind: input, shape index: {}]
  %s4 = inlined_call_operand.vmem [shape: f32[8,1], index: 4, kind: input, shape index: {}]
  %s5 = inlined_call_operand.vmem [shape: f32[8,1], index: 5, kind: input, shape index: {}]
  %s6 = inlined_call_operand.vmem [shape: f32[1,768], index: 6, kind: input, shape index: {}, may-alias: {6,7,8}]
  %s7 = inlined_call_operand.vmem [shape: f32[1,768], index: 7, kind: input, shape index: {}, may-alias: {6,7,8}]
  %s8 = inlined_call_operand.vmem [shape: f32[1,768], index: 8, kind: input, shape index: {}, may-alias: {6,7,8}]
  %s9 = inlined_call_operand.vmem [shape: bf16[8,768], index: 9, kind: input, shape index: {}, may-alias: {9,10,11}]
  %s10 = inlined_call_operand.vmem [shape: bf16[8,768], index: 10, kind: input, shape index: {}, may-alias: {9,10,11}]
  %s11 = inlined_call_operand.vmem [shape: bf16[8,768], index: 11, kind: input, shape index: {}, may-alias: {9,10,11}]
  %s12 = inlined_call_operand.vmem [shape: f32[8,768], index: 12, kind: input, shape index: {}]
  %s13 = inlined_call_operand.vmem [shape: f32[8,768], index: 13, kind: input, shape index: {}]
  %s14 = inlined_call_operand.vmem [shape: f32[8,768], index: 14, kind: output, shape index: {}]
  %s15 = sld [smem:[#allocation0]]
  $region89: #{spade_block_forward.5} parent=0
    _
  %s17 = ssub.s32 1, %s15
  %s18 = scalar_select 0, %s17, %s15
  loop: start=0, step=1, limit=5
  $region2: #{spade_block_forward.5} parent=0 // loop_pre_header
    _
  $region3: #{spade_block_forward.5} parent=0 // loop_header
    %s20 = sphi 0, %s24
    %p21 = scmp.ge.s32.totalorder %s20, 5
    %s28 = sphi 0, %s28
    %s30 = sphi 0, %s28
    %s31 = sphi 0, %s30
    %s45 = sphi 0, %s31
    %s49 = sphi 0, %s49
    %s51 = sphi 0, %s49
    %s52 = sphi 0, %s51
    %s66 = sphi 0, %s52
    %s70 = sphi 0, %s70
    %s72 = sphi 0, %s70
    %s73 = sphi 0, %s72
    %s87 = sphi 0, %s73
    %s91 = sphi 0, %s91
    %s93 = sphi 0, %s91
    %s94 = sphi 0, %s93
    %s108 = sphi 0, %s94
    %s112 = sphi 0, %s112
    %s114 = sphi 0, %s112
    %s115 = sphi 0, %s114
    %s129 = sphi 0, %s115
    %s133 = sphi 0, %s133
    %s135 = sphi 0, %s133
    %s136 = sphi 0, %s135
    %s150 = sphi 0, %s136
    %s164 = sphi 0, %s166
    %s167 = sphi 0, %s164
    %s168 = sphi 0, %s167
    %s184 = sphi 0, %s168
    %s190 = sphi 0, %s192
    %s193 = sphi 0, %s190
    %s194 = sphi 0, %s193
    %s210 = sphi 0, %s194
    %s224 = sphi 0, %s226
    %s227 = sphi 0, %s224
    %s228 = sphi 0, %s227
    %s244 = sphi 0, %s228
    %s258 = sphi 0, %s260
    %s261 = sphi 0, %s258
    %s262 = sphi 0, %s261
    %s278 = sphi 0, %s262
    %s284 = sphi 0, %s286
    %s287 = sphi 0, %s284
    %s288 = sphi 0, %s287
    %s304 = sphi 0, %s288
    %s318 = sphi 0, %s320
    %s321 = sphi 0, %s318
    %s322 = sphi 0, %s321
    %s338 = sphi 0, %s322
    %s344 = sphi 0, %s346
    %s347 = sphi 0, %s344
    %s348 = sphi 0, %s347
    %s364 = sphi 0, %s348
    %s370 = sphi 0, %s372
    %s373 = sphi 0, %s370
    %s374 = sphi 0, %s373
    %s390 = sphi 0, %s374
    %s396 = sphi 0, %s398
    %s399 = sphi 0, %s396
    %s400 = sphi 0, %s399
    %s416 = sphi 0, %s400
  $region4: #{spade_block_forward.5} parent=0 // loop_header_branch
    %23 = sbr.rel (%p21) target = $region8
  $region5: #{spade_block_forward.5} parent=0 // loop_body
    %s25 = ssub.s32 %s20, 1
    %s26 = ssub.s32 %s20, 2
    %s27 = sadd.s32 %s20, 1
    %s29 = sadd.s32 %s28, 1
    %p32 = scmp.eq.s32.totalorder %s20, 2
    %p33 = scmp.ne.s32.totalorder %s28, %s30
    %p34 = scmp.eq.s32.totalorder %s20, 0
    %p35 = por %p33, %p34
    %p36 = scmp.ne.s32.totalorder %s28, %s30
    %p37 = scmp.eq.s32.totalorder %s25, 2
    %p38 = por %p36, %p37
    %p39 = scmp.ne.s32.totalorder %s30, %s31
    %p40 = scmp.eq.s32.totalorder %s25, 0
    %p41 = por %p39, %p40
    %p42 = scmp.ne.s32.totalorder %s30, %s31
    %p43 = scmp.eq.s32.totalorder %s26, 2
    %p44 = por %p42, %p43
    %p46 = scmp.ne.s32.totalorder %s31, %s45
    %p47 = scmp.eq.s32.totalorder %s26, 0
    %p48 = por %p46, %p47
    %s50 = sadd.s32 %s49, 1
    %p53 = scmp.eq.s32.totalorder %s20, 2
    %p54 = scmp.ne.s32.totalorder %s49, %s51
    %p55 = scmp.eq.s32.totalorder %s20, 0
    %p56 = por %p54, %p55
    %p57 = scmp.ne.s32.totalorder %s49, %s51
    %p58 = scmp.eq.s32.totalorder %s25, 2
    %p59 = por %p57, %p58
    %p60 = scmp.ne.s32.totalorder %s51, %s52
    %p61 = scmp.eq.s32.totalorder %s25, 0
    %p62 = por %p60, %p61
    %p63 = scmp.ne.s32.totalorder %s51, %s52
    %p64 = scmp.eq.s32.totalorder %s26, 2
    %p65 = por %p63, %p64
    %p67 = scmp.ne.s32.totalorder %s52, %s66
    %p68 = scmp.eq.s32.totalorder %s26, 0
    %p69 = por %p67, %p68
    %s71 = sadd.s32 %s70, 1
    %p74 = scmp.eq.s32.totalorder %s20, 2
    %p75 = scmp.ne.s32.totalorder %s70, %s72
    %p76 = scmp.eq.s32.totalorder %s20, 0
    %p77 = por %p75, %p76
    %p78 = scmp.ne.s32.totalorder %s70, %s72
    %p79 = scmp.eq.s32.totalorder %s25, 2
    %p80 = por %p78, %p79
    %p81 = scmp.ne.s32.totalorder %s72, %s73
    %p82 = scmp.eq.s32.totalorder %s25, 0
    %p83 = por %p81, %p82
    %p84 = scmp.ne.s32.totalorder %s72, %s73
    %p85 = scmp.eq.s32.totalorder %s26, 2
    %p86 = por %p84, %p85
    %p88 = scmp.ne.s32.totalorder %s73, %s87
    %p89 = scmp.eq.s32.totalorder %s26, 0
    %p90 = por %p88, %p89
    %s92 = sadd.s32 %s91, 1
    %p95 = scmp.eq.s32.totalorder %s20, 2
    %p96 = scmp.ne.s32.totalorder %s91, %s93
    %p97 = scmp.eq.s32.totalorder %s20, 0
    %p98 = por %p96, %p97
    %p99 = scmp.ne.s32.totalorder %s91, %s93
    %p100 = scmp.eq.s32.totalorder %s25, 2
    %p101 = por %p99, %p100
    %p102 = scmp.ne.s32.totalorder %s93, %s94
    %p103 = scmp.eq.s32.totalorder %s25, 0
    %p104 = por %p102, %p103
    %p105 = scmp.ne.s32.totalorder %s93, %s94
    %p106 = scmp.eq.s32.totalorder %s26, 2
    %p107 = por %p105, %p106
    %p109 = scmp.ne.s32.totalorder %s94, %s108
    %p110 = scmp.eq.s32.totalorder %s26, 0
    %p111 = por %p109, %p110
    %s113 = sadd.s32 %s112, 1
    %p116 = scmp.eq.s32.totalorder %s20, 2
    %p117 = scmp.ne.s32.totalorder %s112, %s114
    %p118 = scmp.eq.s32.totalorder %s20, 0
    %p119 = por %p117, %p118
    %p120 = scmp.ne.s32.totalorder %s112, %s114
    %p121 = scmp.eq.s32.totalorder %s25, 2
    %p122 = por %p120, %p121
    %p123 = scmp.ne.s32.totalorder %s114, %s115
    %p124 = scmp.eq.s32.totalorder %s25, 0
    %p125 = por %p123, %p124
    %p126 = scmp.ne.s32.totalorder %s114, %s115
    %p127 = scmp.eq.s32.totalorder %s26, 2
    %p128 = por %p126, %p127
    %p130 = scmp.ne.s32.totalorder %s115, %s129
    %p131 = scmp.eq.s32.totalorder %s26, 0
    %p132 = por %p130, %p131
    %s134 = sadd.s32 %s133, 1
    %p137 = scmp.eq.s32.totalorder %s20, 2
    %p138 = scmp.ne.s32.totalorder %s133, %s135
    %p139 = scmp.eq.s32.totalorder %s20, 0
    %p140 = por %p138, %p139
    %p141 = scmp.ne.s32.totalorder %s133, %s135
    %p142 = scmp.eq.s32.totalorder %s25, 2
    %p143 = por %p141, %p142
    %p144 = scmp.ne.s32.totalorder %s135, %s136
    %p145 = scmp.eq.s32.totalorder %s25, 0
    %p146 = por %p144, %p145
    %p147 = scmp.ne.s32.totalorder %s135, %s136
    %p148 = scmp.eq.s32.totalorder %s26, 2
    %p149 = por %p147, %p148
    %p151 = scmp.ne.s32.totalorder %s136, %s150
    %p152 = scmp.eq.s32.totalorder %s26, 0
    %p153 = por %p151, %p152
    %s154 = smul.u32 %s20, 2
    %s155 = ssub.s32 %s154, 1
    %p156 = scmp.gt.s32.totalorder %s155, 0
    %s157 = scalar_select %p156, %s155, 0
    %s158 = smul.u32 %s27, 2
    %s159 = ssub.s32 %s158, 1
    %p160 = scmp.gt.s32.totalorder %s159, 0
    %s161 = scalar_select %p160, %s159, 0
    %s162 = ssub.s32 %s157, %s161
    %p163 = scmp.eq.s32.totalorder %s162, 0
    %s165 = sadd.s32 %s164, 1
    %s166 = scalar_select %p163, %s164, %s165
    %p169 = pneg %p163
    %p170 = scmp.eq.s32.totalorder %s20, 2
    %p171 = por %p169, %p170
    %p172 = scmp.ne.s32.totalorder %s164, %s167
    %p173 = scmp.eq.s32.totalorder %s20, 0
    %p174 = por %p172, %p173
    %p175 = scmp.ne.s32.totalorder %s164, %s167
    %p176 = scmp.eq.s32.totalorder %s25, 2
    %p177 = por %p175, %p176
    %p178 = scmp.ne.s32.totalorder %s167, %s168
    %p179 = scmp.eq.s32.totalorder %s25, 0
    %p180 = por %p178, %p179
    %p181 = scmp.ne.s32.totalorder %s167, %s168
    %p182 = scmp.eq.s32.totalorder %s26, 2
    %p183 = por %p181, %p182
    %p185 = scmp.ne.s32.totalorder %s168, %s184
    %p186 = scmp.eq.s32.totalorder %s26, 0
    %p187 = por %p185, %p186
    %s188 = ssub.s32 %s20, %s27
    %p189 = scmp.eq.s32.totalorder %s188, 0
    %s191 = sadd.s32 %s190, 1
    %s192 = scalar_select %p189, %s190, %s191
    %p195 = pneg %p189
    %p196 = scmp.eq.s32.totalorder %s20, 2
    %p197 = por %p195, %p196
    %p198 = scmp.ne.s32.totalorder %s190, %s193
    %p199 = scmp.eq.s32.totalorder %s20, 0
    %p200 = por %p198, %p199
    %p201 = scmp.ne.s32.totalorder %s190, %s193
    %p202 = scmp.eq.s32.totalorder %s25, 2
    %p203 = por %p201, %p202
    %p204 = scmp.ne.s32.totalorder %s193, %s194
    %p205 = scmp.eq.s32.totalorder %s25, 0
    %p206 = por %p204, %p205
    %p207 = scmp.ne.s32.totalorder %s193, %s194
    %p208 = scmp.eq.s32.totalorder %s26, 2
    %p209 = por %p207, %p208
    %p211 = scmp.ne.s32.totalorder %s194, %s210
    %p212 = scmp.eq.s32.totalorder %s26, 0
    %p213 = por %p211, %p212
    %s214 = sadd.s32 %s20, 1
    %s215 = smul.u32 %s214, 2
    %p216 = scmp.lt.s32.totalorder %s215, 5
    %s217 = scalar_select %p216, %s215, 5
    %s218 = sadd.s32 %s27, 1
    %s219 = smul.u32 %s218, 2
    %p220 = scmp.lt.s32.totalorder %s219, 5
    %s221 = scalar_select %p220, %s219, 5
    %s222 = ssub.s32 %s217, %s221
    %p223 = scmp.eq.s32.totalorder %s222, 0
    %s225 = sadd.s32 %s224, 1
    %s226 = scalar_select %p223, %s224, %s225
    %p229 = pneg %p223
    %p230 = scmp.eq.s32.totalorder %s20, 2
    %p231 = por %p229, %p230
    %p232 = scmp.ne.s32.totalorder %s224, %s227
    %p233 = scmp.eq.s32.totalorder %s20, 0
    %p234 = por %p232, %p233
    %p235 = scmp.ne.s32.totalorder %s224, %s227
    %p236 = scmp.eq.s32.totalorder %s25, 2
    %p237 = por %p235, %p236
    %p238 = scmp.ne.s32.totalorder %s227, %s228
    %p239 = scmp.eq.s32.totalorder %s25, 0
    %p240 = por %p238, %p239
    %p241 = scmp.ne.s32.totalorder %s227, %s228
    %p242 = scmp.eq.s32.totalorder %s26, 2
    %p243 = por %p241, %p242
    %p245 = scmp.ne.s32.totalorder %s228, %s244
    %p246 = scmp.eq.s32.totalorder %s26, 0
    %p247 = por %p245, %p246
    %s248 = smul.u32 %s20, 2
    %s249 = ssub.s32 %s248, 1
    %p250 = scmp.gt.s32.totalorder %s249, 0
    %s251 = scalar_select %p250, %s249, 0
    %s252 = smul.u32 %s27, 2
    %s253 = ssub.s32 %s252, 1
    %p254 = scmp.gt.s32.totalorder %s253, 0
    %s255 = scalar_select %p254, %s253, 0
    %s256 = ssub.s32 %s251, %s255
    %p257 = scmp.eq.s32.totalorder %s256, 0
    %s259 = sadd.s32 %s258, 1
    %s260 = scalar_select %p257, %s258, %s259
    %p263 = pneg %p257
    %p264 = scmp.eq.s32.totalorder %s20, 2
    %p265 = por %p263, %p264
    %p266 = scmp.ne.s32.totalorder %s258, %s261
    %p267 = scmp.eq.s32.totalorder %s20, 0
    %p268 = por %p266, %p267
    %p269 = scmp.ne.s32.totalorder %s258, %s261
    %p270 = scmp.eq.s32.totalorder %s25, 2
    %p271 = por %p269, %p270
    %p272 = scmp.ne.s32.totalorder %s261, %s262
    %p273 = scmp.eq.s32.totalorder %s25, 0
    %p274 = por %p272, %p273
    %p275 = scmp.ne.s32.totalorder %s261, %s262
    %p276 = scmp.eq.s32.totalorder %s26, 2
    %p277 = por %p275, %p276
    %p279 = scmp.ne.s32.totalorder %s262, %s278
    %p280 = scmp.eq.s32.totalorder %s26, 0
    %p281 = por %p279, %p280
    %s282 = ssub.s32 %s20, %s27
    %p283 = scmp.eq.s32.totalorder %s282, 0
    %s285 = sadd.s32 %s284, 1
    %s286 = scalar_select %p283, %s284, %s285
    %p289 = pneg %p283
    %p290 = scmp.eq.s32.totalorder %s20, 2
    %p291 = por %p289, %p290
    %p292 = scmp.ne.s32.totalorder %s284, %s287
    %p293 = scmp.eq.s32.totalorder %s20, 0
    %p294 = por %p292, %p293
    %p295 = scmp.ne.s32.totalorder %s284, %s287
    %p296 = scmp.eq.s32.totalorder %s25, 2
    %p297 = por %p295, %p296
    %p298 = scmp.ne.s32.totalorder %s287, %s288
    %p299 = scmp.eq.s32.totalorder %s25, 0
    %p300 = por %p298, %p299
    %p301 = scmp.ne.s32.totalorder %s287, %s288
    %p302 = scmp.eq.s32.totalorder %s26, 2
    %p303 = por %p301, %p302
    %p305 = scmp.ne.s32.totalorder %s288, %s304
    %p306 = scmp.eq.s32.totalorder %s26, 0
    %p307 = por %p305, %p306
    %s308 = sadd.s32 %s20, 1
    %s309 = smul.u32 %s308, 2
    %p310 = scmp.lt.s32.totalorder %s309, 5
    %s311 = scalar_select %p310, %s309, 5
    %s312 = sadd.s32 %s27, 1
    %s313 = smul.u32 %s312, 2
    %p314 = scmp.lt.s32.totalorder %s313, 5
    %s315 = scalar_select %p314, %s313, 5
    %s316 = ssub.s32 %s311, %s315
    %p317 = scmp.eq.s32.totalorder %s316, 0
    %s319 = sadd.s32 %s318, 1
    %s320 = scalar_select %p317, %s318, %s319
    %p323 = pneg %p317
    %p324 = scmp.eq.s32.totalorder %s20, 2
    %p325 = por %p323, %p324
    %p326 = scmp.ne.s32.totalorder %s318, %s321
    %p327 = scmp.eq.s32.totalorder %s20, 0
    %p328 = por %p326, %p327
    %p329 = scmp.ne.s32.totalorder %s318, %s321
    %p330 = scmp.eq.s32.totalorder %s25, 2
    %p331 = por %p329, %p330
    %p332 = scmp.ne.s32.totalorder %s321, %s322
    %p333 = scmp.eq.s32.totalorder %s25, 0
    %p334 = por %p332, %p333
    %p335 = scmp.ne.s32.totalorder %s321, %s322
    %p336 = scmp.eq.s32.totalorder %s26, 2
    %p337 = por %p335, %p336
    %p339 = scmp.ne.s32.totalorder %s322, %s338
    %p340 = scmp.eq.s32.totalorder %s26, 0
    %p341 = por %p339, %p340
    %s342 = ssub.s32 %s20, %s27
    %p343 = scmp.eq.s32.totalorder %s342, 0
    %s345 = sadd.s32 %s344, 1
    %s346 = scalar_select %p343, %s344, %s345
    %p349 = pneg %p343
    %p350 = scmp.eq.s32.totalorder %s20, 2
    %p351 = por %p349, %p350
    %p352 = scmp.ne.s32.totalorder %s344, %s347
    %p353 = scmp.eq.s32.totalorder %s20, 0
    %p354 = por %p352, %p353
    %p355 = scmp.ne.s32.totalorder %s344, %s347
    %p356 = scmp.eq.s32.totalorder %s25, 2
    %p357 = por %p355, %p356
    %p358 = scmp.ne.s32.totalorder %s347, %s348
    %p359 = scmp.eq.s32.totalorder %s25, 0
    %p360 = por %p358, %p359
    %p361 = scmp.ne.s32.totalorder %s347, %s348
    %p362 = scmp.eq.s32.totalorder %s26, 2
    %p363 = por %p361, %p362
    %p365 = scmp.ne.s32.totalorder %s348, %s364
    %p366 = scmp.eq.s32.totalorder %s26, 0
    %p367 = por %p365, %p366
    %s368 = ssub.s32 %s20, %s27
    %p369 = scmp.eq.s32.totalorder %s368, 0
    %s371 = sadd.s32 %s370, 1
    %s372 = scalar_select %p369, %s370, %s371
    %p375 = pneg %p369
    %p376 = scmp.eq.s32.totalorder %s20, 2
    %p377 = por %p375, %p376
    %p378 = scmp.ne.s32.totalorder %s370, %s373
    %p379 = scmp.eq.s32.totalorder %s20, 0
    %p380 = por %p378, %p379
    %p381 = scmp.ne.s32.totalorder %s370, %s373
    %p382 = scmp.eq.s32.totalorder %s25, 2
    %p383 = por %p381, %p382
    %p384 = scmp.ne.s32.totalorder %s373, %s374
    %p385 = scmp.eq.s32.totalorder %s25, 0
    %p386 = por %p384, %p385
    %p387 = scmp.ne.s32.totalorder %s373, %s374
    %p388 = scmp.eq.s32.totalorder %s26, 2
    %p389 = por %p387, %p388
    %p391 = scmp.ne.s32.totalorder %s374, %s390
    %p392 = scmp.eq.s32.totalorder %s26, 0
    %p393 = por %p391, %p392
    %s394 = ssub.s32 %s20, %s27
    %p395 = scmp.eq.s32.totalorder %s394, 0
    %s397 = sadd.s32 %s396, 1
    %s398 = scalar_select %p395, %s396, %s397
    %p401 = pneg %p395
    %p402 = scmp.eq.s32.totalorder %s20, 2
    %p403 = por %p401, %p402
    %p404 = scmp.ne.s32.totalorder %s396, %s399
    %p405 = scmp.eq.s32.totalorder %s20, 0
    %p406 = por %p404, %p405
    %p407 = scmp.ne.s32.totalorder %s396, %s399
    %p408 = scmp.eq.s32.totalorder %s25, 2
    %p409 = por %p407, %p408
    %p410 = scmp.ne.s32.totalorder %s399, %s400
    %p411 = scmp.eq.s32.totalorder %s25, 0
    %p412 = por %p410, %p411
    %p413 = scmp.ne.s32.totalorder %s399, %s400
    %p414 = scmp.eq.s32.totalorder %s26, 2
    %p415 = por %p413, %p414
    %p417 = scmp.ne.s32.totalorder %s400, %s416
    %p418 = scmp.eq.s32.totalorder %s26, 0
    %p419 = por %p417, %p418
    %p420 = scmp.le.s32.totalorder 1, %s20
    %p421 = scmp.lt.s32.totalorder %s20, 4
    %p422 = pnand %p420, %p421
    %p423 = pneg %p422
    // Predicated region
    $region9: #{spade_block_forward.5} parent=5 // pred_check
      _
    $region10: #{spade_block_forward.5} parent=5 // pred_check_branch
      %425 = sbr.rel (%p422) target = $region12
    $region11: #{spade_block_forward.5} parent=5 // pred_region
      %s426 = ssub.s32 %s20, 1
      // Predicated region
      $region13: #{spade_block_forward.5} parent=11 // pred_check
        %p427 = pneg %p41
      $region14: #{spade_block_forward.5} parent=11 // pred_check_branch
        %429 = sbr.rel (%p427) target = $region16
      $region15: #{spade_block_forward.5} parent=11 // pred_region
        _
      $region16: #{spade_block_forward.5} parent=11 // pred_fallthru
        _
      // Predicated region
      $region17: #{spade_block_forward.5} parent=11 // pred_check
        %p430 = pneg %p62
      $region18: #{spade_block_forward.5} parent=11 // pred_check_branch
        %432 = sbr.rel (%p430) target = $region20
      $region19: #{spade_block_forward.5} parent=11 // pred_region
        _
      $region20: #{spade_block_forward.5} parent=11 // pred_fallthru
        _
      // Predicated region
      $region21: #{spade_block_forward.5} parent=11 // pred_check
        %p433 = pneg %p83
      $region22: #{spade_block_forward.5} parent=11 // pred_check_branch
        %435 = sbr.rel (%p433) target = $region24
      $region23: #{spade_block_forward.5} parent=11 // pred_region
        _
      $region24: #{spade_block_forward.5} parent=11 // pred_fallthru
        _
      // Predicated region
      $region25: #{spade_block_forward.5} parent=11 // pred_check
        %p436 = pneg %p104
      $region26: #{spade_block_forward.5} parent=11 // pred_check_branch
        %438 = sbr.rel (%p436) target = $region28
      $region27: #{spade_block_forward.5} parent=11 // pred_region
        _
      $region28: #{spade_block_forward.5} parent=11 // pred_fallthru
        _
      // Predicated region
      $region29: #{spade_block_forward.5} parent=11 // pred_check
        %p439 = pneg %p125
      $region30: #{spade_block_forward.5} parent=11 // pred_check_branch
        %441 = sbr.rel (%p439) target = $region32
      $region31: #{spade_block_forward.5} parent=11 // pred_region
        _
      $region32: #{spade_block_forward.5} parent=11 // pred_fallthru
        _
      // Predicated region
      $region33: #{spade_block_forward.5} parent=11 // pred_check
        %p442 = pneg %p146
      $region34: #{spade_block_forward.5} parent=11 // pred_check_branch
        %444 = sbr.rel (%p442) target = $region36
      $region35: #{spade_block_forward.5} parent=11 // pred_region
        _
      $region36: #{spade_block_forward.5} parent=11 // pred_fallthru
        _
    $region12: #{spade_block_forward.5} parent=5 // pred_fallthru
      _
    %p445 = scmp.lt.s32.totalorder %s20, 3
    // Predicated region
    $region37: #{spade_block_forward.5} parent=5 // pred_check
      %p446 = pneg %p445
    $region38: #{spade_block_forward.5} parent=5 // pred_check_branch
      %448 = sbr.rel (%p446) target = $region40
    $region39: #{spade_block_forward.5} parent=5 // pred_region
      // Predicated region
      $region41: #{spade_block_forward.5} parent=39 // pred_check
        %p449 = pneg %p174
      $region42: #{spade_block_forward.5} parent=39 // pred_check_branch
        %451 = sbr.rel (%p449) target = $region44
      $region43: #{spade_block_forward.5} parent=39 // pred_region
        %s452 = smul.u32 %s20, 2
        %s453 = ssub.s32 %s452, 1
        %p454 = scmp.gt.s32.totalorder %s453, 0
        %s455 = scalar_select %p454, %s453, 0
        %p456 = scmp.lt.s32.totalorder %s455, 5
        %s457 = scalar_select %p456, %s455, 5
        %s458 = scalar_lea.vmem %s6, %s457
        %s459 = smul.u32 %s20, 2
        %s460 = ssub.s32 %s459, 1
        %p461 = scmp.gt.s32.totalorder %s460, 0
        %s462 = scalar_select %p461, %s460, 0
      $region44: #{spade_block_forward.5} parent=39 // pred_fallthru
        _
      // Predicated region
      $region45: #{spade_block_forward.5} parent=39 // pred_check
        %p463 = pneg %p200
      $region46: #{spade_block_forward.5} parent=39 // pred_check_branch
        %465 = sbr.rel (%p463) target = $region48
      $region47: #{spade_block_forward.5} parent=39 // pred_region
        %s466 = smul.u32 2, %s20
        %p467 = scmp.lt.s32.totalorder %s466, 5
        %s468 = scalar_select %p467, %s466, 5
        %s469 = scalar_lea.vmem %s7, %s468
        %s470 = smul.u32 2, %s20
      $region48: #{spade_block_forward.5} parent=39 // pred_fallthru
        _
      // Predicated region
      $region49: #{spade_block_forward.5} parent=39 // pred_check
        %p471 = pneg %p234
      $region50: #{spade_block_forward.5} parent=39 // pred_check_branch
        %473 = sbr.rel (%p471) target = $region52
      $region51: #{spade_block_forward.5} parent=39 // pred_region
        %s474 = sadd.s32 %s20, 1
        %s475 = smul.u32 %s474, 2
        %p476 = scmp.lt.s32.totalorder %s475, 5
        %s477 = scalar_select %p476, %s475, 5
        %p478 = scmp.lt.s32.totalorder %s477, 5
        %s479 = scalar_select %p478, %s477, 5
        %s480 = scalar_lea.vmem %s8, %s479
        %s481 = sadd.s32 %s20, 1
        %s482 = smul.u32 %s481, 2
        %p483 = scmp.lt.s32.totalorder %s482, 5
        %s484 = scalar_select %p483, %s482, 5
      $region52: #{spade_block_forward.5} parent=39 // pred_fallthru
        _
      // Predicated region
      $region53: #{spade_block_forward.5} parent=39 // pred_check
        %p485 = pneg %p268
      $region54: #{spade_block_forward.5} parent=39 // pred_check_branch
        %487 = sbr.rel (%p485) target = $region56
      $region55: #{spade_block_forward.5} parent=39 // pred_region
        %s488 = smul.u32 %s20, 2
        %s489 = ssub.s32 %s488, 1
        %p490 = scmp.gt.s32.totalorder %s489, 0
        %s491 = scalar_select %p490, %s489, 0
        %p492 = scmp.lt.s32.totalorder %s491, 5
        %s493 = scalar_select %p492, %s491, 5
        %s494 = smul.addr %s493, 4
        %s495 = scalar_lea.vmem %s9, %s494
        %s496 = smul.u32 %s20, 2
        %s497 = ssub.s32 %s496, 1
        %p498 = scmp.gt.s32.totalorder %s497, 0
        %s499 = scalar_select %p498, %s497, 0
      $region56: #{spade_block_forward.5} parent=39 // pred_fallthru
        _
      // Predicated region
      $region57: #{spade_block_forward.5} parent=39 // pred_check
        %p500 = pneg %p294
      $region58: #{spade_block_forward.5} parent=39 // pred_check_branch
        %502 = sbr.rel (%p500) target = $region60
      $region59: #{spade_block_forward.5} parent=39 // pred_region
        %s503 = smul.u32 2, %s20
        %p504 = scmp.lt.s32.totalorder %s503, 5
        %s505 = scalar_select %p504, %s503, 5
        %s506 = smul.addr %s505, 4
        %s507 = scalar_lea.vmem %s10, %s506
        %s508 = smul.u32 2, %s20
      $region60: #{spade_block_forward.5} parent=39 // pred_fallthru
        _
      // Predicated region
      $region61: #{spade_block_forward.5} parent=39 // pred_check
        %p509 = pneg %p328
      $region62: #{spade_block_forward.5} parent=39 // pred_check_branch
        %511 = sbr.rel (%p509) target = $region64
      $region63: #{spade_block_forward.5} parent=39 // pred_region
        %s512 = sadd.s32 %s20, 1
        %s513 = smul.u32 %s512, 2
        %p514 = scmp.lt.s32.totalorder %s513, 5
        %s515 = scalar_select %p514, %s513, 5
        %p516 = scmp.lt.s32.totalorder %s515, 5
        %s517 = scalar_select %p516, %s515, 5
        %s518 = smul.addr %s517, 4
        %s519 = scalar_lea.vmem %s11, %s518
        %s520 = sadd.s32 %s20, 1
        %s521 = smul.u32 %s520, 2
        %p522 = scmp.lt.s32.totalorder %s521, 5
        %s523 = scalar_select %p522, %s521, 5
      $region64: #{spade_block_forward.5} parent=39 // pred_fallthru
        _
      // Predicated region
      $region65: #{spade_block_forward.5} parent=39 // pred_check
        %p524 = pneg %p354
      $region66: #{spade_block_forward.5} parent=39 // pred_check_branch
        %526 = sbr.rel (%p524) target = $region68
      $region67: #{spade_block_forward.5} parent=39 // pred_region
        %s527 = smul.u32 2, %s20
        %p528 = scmp.lt.s32.totalorder %s527, 5
        %s529 = scalar_select %p528, %s527, 5
        %s530 = smul.addr %s529, 8
        %s531 = scalar_lea.vmem %s12, %s530
        %s532 = smul.u32 2, %s20
      $region68: #{spade_block_forward.5} parent=39 // pred_fallthru
        _
      // Predicated region
      $region69: #{spade_block_forward.5} parent=39 // pred_check
        %p533 = pneg %p380
      $region70: #{spade_block_forward.5} parent=39 // pred_check_branch
        %535 = sbr.rel (%p533) target = $region72
      $region71: #{spade_block_forward.5} parent=39 // pred_region
        %s536 = smul.u32 2, %s20
        %p537 = scmp.lt.s32.totalorder %s536, 5
        %s538 = scalar_select %p537, %s536, 5
        %s539 = smul.addr %s538, 8
        %s540 = scalar_lea.vmem %s13, %s539
        %s541 = smul.u32 2, %s20
      $region72: #{spade_block_forward.5} parent=39 // pred_fallthru
        _
    $region40: #{spade_block_forward.5} parent=5 // pred_fallthru
      _
    %p542 = scmp.le.s32.totalorder 1, %s20
    %p543 = scmp.lt.s32.totalorder %s20, 4
    %p544 = pnand %p542, %p543
    %p545 = pneg %p544
    // Predicated region
    $region73: #{spade_block_forward.5} parent=5 // pred_check
      _
    $region74: #{spade_block_forward.5} parent=5 // pred_check_branch
      %547 = sbr.rel (%p544) target = $region76
    $region75: #{spade_block_forward.5} parent=5 // pred_region
      %s548 = ssub.s32 %s20, 1
      %p549 = pneg %p41
      %p550 = pneg %p38
      %p551 = pneg %p62
      %p552 = pneg %p59
      %p553 = pneg %p83
      %p554 = pneg %p80
      %p555 = pneg %p104
      %p556 = pneg %p101
      %p557 = pneg %p125
      %p558 = pneg %p122
      %p559 = pneg %p146
      %p560 = pneg %p143
      %s561 = smul.u32 %s25, 2
      %s562 = ssub.s32 %s561, 1
      %p563 = scmp.gt.s32.totalorder %s562, 0
      %s564 = scalar_select %p563, %s562, 0
      %p565 = scmp.lt.s32.totalorder %s564, 5
      %s566 = scalar_select %p565, %s564, 5
      %s567 = scalar_lea.vmem %s6, %s566
      %p568 = pneg %p180
      %p569 = pneg %p177
      %s570 = smul.u32 2, %s25
      %p571 = scmp.lt.s32.totalorder %s570, 5
      %s572 = scalar_select %p571, %s570, 5
      %s573 = scalar_lea.vmem %s7, %s572
      %p574 = pneg %p206
      %p575 = pneg %p203
      %s576 = sadd.s32 %s25, 1
      %s577 = smul.u32 %s576, 2
      %p578 = scmp.lt.s32.totalorder %s577, 5
      %s579 = scalar_select %p578, %s577, 5
      %p580 = scmp.lt.s32.totalorder %s579, 5
      %s581 = scalar_select %p580, %s579, 5
      %s582 = scalar_lea.vmem %s8, %s581
      %p583 = pneg %p240
      %p584 = pneg %p237
      %s585 = smul.u32 %s25, 2
      %s586 = ssub.s32 %s585, 1
      %p587 = scmp.gt.s32.totalorder %s586, 0
      %s588 = scalar_select %p587, %s586, 0
      %p589 = scmp.lt.s32.totalorder %s588, 5
      %s590 = scalar_select %p589, %s588, 5
      %s591 = smul.addr %s590, 4
      %s592 = scalar_lea.vmem %s9, %s591
      %p593 = pneg %p274
      %p594 = pneg %p271
      %s595 = smul.u32 2, %s25
      %p596 = scmp.lt.s32.totalorder %s595, 5
      %s597 = scalar_select %p596, %s595, 5
      %s598 = smul.addr %s597, 4
      %s599 = scalar_lea.vmem %s10, %s598
      %p600 = pneg %p300
      %p601 = pneg %p297
      %s602 = sadd.s32 %s25, 1
      %s603 = smul.u32 %s602, 2
      %p604 = scmp.lt.s32.totalorder %s603, 5
      %s605 = scalar_select %p604, %s603, 5
      %p606 = scmp.lt.s32.totalorder %s605, 5
      %s607 = scalar_select %p606, %s605, 5
      %s608 = smul.addr %s607, 4
      %s609 = scalar_lea.vmem %s11, %s608
      %p610 = pneg %p334
      %p611 = pneg %p331
      %s612 = smul.u32 2, %s25
      %p613 = scmp.lt.s32.totalorder %s612, 5
      %s614 = scalar_select %p613, %s612, 5
      %s615 = smul.addr %s614, 8
      %s616 = scalar_lea.vmem %s12, %s615
      %p617 = pneg %p360
      %p618 = pneg %p357
      %s619 = smul.u32 2, %s25
      %p620 = scmp.lt.s32.totalorder %s619, 5
      %s621 = scalar_select %p620, %s619, 5
      %s622 = smul.addr %s621, 8
      %s623 = scalar_lea.vmem %s13, %s622
      %p624 = pneg %p386
      %p625 = pneg %p383
      %p626 = pneg %p412
      %p627 = pneg %p409
      %s628 = smul.u32 2, %s25
      %p629 = scmp.lt.s32.totalorder %s628, 5
      %s630 = scalar_select %p629, %s628, 5
      %s631 = smul.addr %s630, 8
      %s632 = scalar_lea.vmem %s14, %s631
      %s633 = smul.u32 %s25, 2
      %s634 = ssub.s32 %s633, 1
      %p635 = scmp.gt.s32.totalorder %s634, 0
      %s636 = scalar_select %p635, %s634, 0
      %p637 = scmp.lt.s32.totalorder %s636, 5
      %s638 = scalar_select %p637, %s636, 5
      %s639 = scalar_lea.vmem %s6, %s638
      %s640 = smul.u32 %s25, 2
      %s641 = ssub.s32 %s640, 1
      %p642 = scmp.gt.s32.totalorder %s641, 0
      %s643 = scalar_select %p642, %s641, 0
      %s644 = smul.u32 2, %s25
      %p645 = scmp.lt.s32.totalorder %s644, 5
      %s646 = scalar_select %p645, %s644, 5
      %s647 = scalar_lea.vmem %s7, %s646
      %s648 = smul.u32 2, %s25
      %s649 = sadd.s32 %s25, 1
      %s650 = smul.u32 %s649, 2
      %p651 = scmp.lt.s32.totalorder %s650, 5
      %s652 = scalar_select %p651, %s650, 5
      %p653 = scmp.lt.s32.totalorder %s652, 5
      %s654 = scalar_select %p653, %s652, 5
      %s655 = scalar_lea.vmem %s8, %s654
      %s656 = sadd.s32 %s25, 1
      %s657 = smul.u32 %s656, 2
      %p658 = scmp.lt.s32.totalorder %s657, 5
      %s659 = scalar_select %p658, %s657, 5
      %s660 = smul.u32 %s25, 2
      %s661 = ssub.s32 %s660, 1
      %p662 = scmp.gt.s32.totalorder %s661, 0
      %s663 = scalar_select %p662, %s661, 0
      %p664 = scmp.lt.s32.totalorder %s663, 5
      %s665 = scalar_select %p664, %s663, 5
      %s666 = smul.addr %s665, 4
      %s667 = scalar_lea.vmem %s9, %s666
      %s668 = smul.u32 %s25, 2
      %s669 = ssub.s32 %s668, 1
      %p670 = scmp.gt.s32.totalorder %s669, 0
      %s671 = scalar_select %p670, %s669, 0
      %s672 = smul.u32 2, %s25
      %p673 = scmp.lt.s32.totalorder %s672, 5
      %s674 = scalar_select %p673, %s672, 5
      %s675 = smul.addr %s674, 4
      %s676 = scalar_lea.vmem %s10, %s675
      %s677 = smul.u32 2, %s25
      %s678 = sadd.s32 %s25, 1
      %s679 = smul.u32 %s678, 2
      %p680 = scmp.lt.s32.totalorder %s679, 5
      %s681 = scalar_select %p680, %s679, 5
      %p682 = scmp.lt.s32.totalorder %s681, 5
      %s683 = scalar_select %p682, %s681, 5
      %s684 = smul.addr %s683, 4
      %s685 = scalar_lea.vmem %s11, %s684
      %s686 = sadd.s32 %s25, 1
      %s687 = smul.u32 %s686, 2
      %p688 = scmp.lt.s32.totalorder %s687, 5
      %s689 = scalar_select %p688, %s687, 5
      %s690 = smul.u32 2, %s25
      %p691 = scmp.lt.s32.totalorder %s690, 5
      %s692 = scalar_select %p691, %s690, 5
      %s693 = smul.addr %s692, 8
      %s694 = scalar_lea.vmem %s12, %s693
      %s695 = smul.u32 2, %s25
      %s696 = smul.u32 2, %s25
      %p697 = scmp.lt.s32.totalorder %s696, 5
      %s698 = scalar_select %p697, %s696, 5
      %s699 = smul.addr %s698, 8
      %s700 = scalar_lea.vmem %s13, %s699
      %s701 = smul.u32 2, %s25
      %s702 = smul.u32 2, %s25
      %p703 = scmp.lt.s32.totalorder %s702, 5
      %s704 = scalar_select %p703, %s702, 5
      %s705 = smul.addr %s704, 8
      %s706 = scalar_lea.vmem %s14, %s705
      %s707 = smul.u32 2, %s25
      %v709 = vld [vmem:[%s667] sm:$0xf]
      %v710 = vld [vmem:[%s676] sm:$0xff]
      %v711 = vld [vmem:[%s685] sm:$0xf]
      %v713 = vunpack.c.l.b16 %v710
      %v714 = vunpack.c.h.b16 %v710
      %v715 = vpack.c.b16 %v713, %v713
      %v716 = vpack.c.b16 %v714, %v714
      %v717 = vld [vmem:[%s639] sm:$0x1]
      %v718 = vld [vmem:[%s647] sm:$0x3]
      %v719 = vld [vmem:[%s655] sm:$0x1]
      %v721 = vlaneseq
      %v722 = vshrl.u32 %v721, 7
      %v723 = vsub.s32 0, %v722
      %v724 = vrot.slane %v718, %v723
      %v725 = vlaneseq
      %v726 = vshrl.u32 %v725, 7
      %v727 = vsub.s32 1, %v726
      %v728 = vrot.slane %v718, %v727
      %v731 = vld [vmem:[%s0] sm:$0xf]
      %s732 = scalar_lea.vmem %s0, 4
      %v733 = vld [vmem:[%s732] sm:$0xf]
      %736 = vrot.lane.b32.xlu0 %v709, 37
      %v737 = vpop.permute.xlu0 %736
      %738 = vrot.lane.b32.xlu0 %v715, 37
      %v739 = vpop.permute.xlu0 %738
      %740 = vrot.lane.b32.xlu0 %v716, 37
      %v741 = vpop.permute.xlu0 %740
      %742 = vrot.lane.b32.xlu0 %v711, 37
      %v743 = vpop.permute.xlu0 %742
      %vm744 = vcmask 302080
      %v745 = vsel %vm744, %v737, %v739
      %v746 = vsel %vm744, %v739, %v741
      %v747 = vsel %vm744, %v741, %v743
      %vm748 = vcmask 64512
      %v750 = vsel %vm748, %v733, 0
      %vm752 = vcmask 1043456
      %v754 = vsel %vm752, %v745, 0
      %v757 = vsel %vm752, %v746, 0
      %v760 = vsel %vm752, %v747, 0
      %762 = vmatprep.subr.bf16.mxu0 %v757
      %763 = vmatpush1.bf16.msra.mxu0 %v754
      %764 = vmatprep.subr.bf16.mxu0 0
      %765 = vmatpush1.bf16.msra.mxu0 0
      %766 = vmatprep.subr.bf16.mxu0 0
      %767 = vmatpush1.bf16.msra.mxu0 0
      %768 = vmatprep.subr.bf16.mxu0 0
      %769 = vmatpush1.bf16.msra.mxu0 0
      %770 = vmatprep.subr.bf16.mxu0 0
      %771 = vmatpush1.bf16.msra.mxu0 0
      %772 = vmatprep.subr.bf16.mxu0 0
      %773 = vmatpush1.bf16.msra.mxu0 0
      %774 = vmatprep.subr.bf16.mxu0 0
      %775 = vmatpush1.bf16.msra.mxu0 0
      %776 = vmatprep.subr.bf16.mxu0 0
      %777 = vmatpush1.bf16.msra.mxu0 0
      %778 = vmatprep.subr.bf16.mxu0 0
      %779 = vmatpush1.bf16.msra.mxu0 0
      %780 = vmatprep.subr.bf16.mxu0 0
      %781 = vmatpush1.bf16.msra.mxu0 0
      %782 = vmatprep.subr.bf16.mxu0 0
      %783 = vmatpush1.bf16.msra.mxu0 0
      %784 = vmatprep.subr.bf16.mxu0 0
      %785 = vmatpush1.bf16.msra.mxu0 0
      %786 = vmatprep.subr.bf16.mxu0 0
      %787 = vmatpush1.bf16.msra.mxu0 0
      %788 = vmatprep.subr.bf16.mxu0 0
      %789 = vmatpush1.bf16.msra.mxu0 0
      %790 = vmatprep.subr.bf16.mxu0 0
      %791 = vmatpush1.bf16.msra.mxu0 0
      %792 = vmatprep.subr.bf16.mxu0 0
      %793 = vmatpush1.bf16.msra.mxu0 0
      %794 = vmatprep.mubr.bf16.mxu0 0
      %795 = vmatmul.mubr.bf16.gmra.mrb[0].mxu0 %v750
      %v796 = vpop.f32.mrb[0].mxu0
      %v797 = vadd.f32 0.0, %v796
      %v798 = vpop.f32.mrb[0].mxu0
      %v799 = vadd.f32 0.0, %v798
      %v800 = vpop.f32.mrb[0].mxu0
      %v801 = vpop.f32.mrb[0].mxu0
      %802 = vdwg.mxu0
      %803 = vmatprep.subr.bf16.mxu0 0
      %804 = vmatpush1.bf16.msra.mxu0 %v760
      %805 = vmatprep.subr.bf16.mxu0 0
      %806 = vmatpush1.bf16.msra.mxu0 0
      %807 = vmatprep.subr.bf16.mxu0 0
      %808 = vmatpush1.bf16.msra.mxu0 0
      %809 = vmatprep.subr.bf16.mxu0 0
      %810 = vmatpush1.bf16.msra.mxu0 0
      %811 = vmatprep.subr.bf16.mxu0 0
      %812 = vmatpush1.bf16.msra.mxu0 0
      %813 = vmatprep.subr.bf16.mxu0 0
      %814 = vmatpush1.bf16.msra.mxu0 0
      %815 = vmatprep.subr.bf16.mxu0 0
      %816 = vmatpush1.bf16.msra.mxu0 0
      %817 = vmatprep.subr.bf16.mxu0 0
      %818 = vmatpush1.bf16.msra.mxu0 0
      %819 = vmatprep.subr.bf16.mxu0 0
      %820 = vmatpush1.bf16.msra.mxu0 0
      %821 = vmatprep.subr.bf16.mxu0 0
      %822 = vmatpush1.bf16.msra.mxu0 0
      %823 = vmatprep.subr.bf16.mxu0 0
      %824 = vmatpush1.bf16.msra.mxu0 0
      %825 = vmatprep.subr.bf16.mxu0 0
      %826 = vmatpush1.bf16.msra.mxu0 0
      %827 = vmatprep.subr.bf16.mxu0 0
      %828 = vmatpush1.bf16.msra.mxu0 0
      %829 = vmatprep.subr.bf16.mxu0 0
      %830 = vmatpush1.bf16.msra.mxu0 0
      %831 = vmatprep.subr.bf16.mxu0 0
      %832 = vmatpush1.bf16.msra.mxu0 0
      %833 = vmatprep.subr.bf16.mxu0 0
      %834 = vmatpush1.bf16.msra.mxu0 0
      %835 = vmatprep.mubr.bf16.mxu0 0
      %836 = vmatmul.mubr.bf16.gmra.mrb[0].mxu0 %v750
      %v837 = vpop.f32.mrb[0].mxu0
      %v838 = vadd.f32 0.0, %v837
      %v839 = vpop.f32.mrb[0].mxu0
      %v840 = vpop.f32.mrb[0].mxu0
      %v841 = vpop.f32.mrb[0].mxu0
      %842 = vdwg.mxu0
      %843 = vrot.lane.b32.xlu0 %v709, 38
      %v844 = vpop.permute.xlu0 %843
      %845 = vrot.lane.b32.xlu0 %v715, 38
      %v846 = vpop.permute.xlu0 %845
      %847 = vrot.lane.b32.xlu0 %v716, 38
      %v848 = vpop.permute.xlu0 %847
      %vm849 = vcmask 310272
      %v850 = vsel %vm849, %v844, %v846
      %v851 = vsel %vm849, %v846, %v848
      %v853 = vsel %vm748, %v731, 0
      %v856 = vsel %vm752, %v850, 0
      %v859 = vsel %vm752, %v851, 0
      %v862 = vsel %vm752, %v848, 0
      %864 = vmatprep.subr.bf16.mxu0 %v859
      %865 = vmatpush1.bf16.msra.mxu0 %v856
      %866 = vmatprep.subr.bf16.mxu0 0
      %867 = vmatpush1.bf16.msra.mxu0 0
      %868 = vmatprep.subr.bf16.mxu0 0
      %869 = vmatpush1.bf16.msra.mxu0 0
      %870 = vmatprep.subr.bf16.mxu0 0
      %871 = vmatpush1.bf16.msra.mxu0 0
      %872 = vmatprep.subr.bf16.mxu0 0
      %873 = vmatpush1.bf16.msra.mxu0 0
      %874 = vmatprep.subr.bf16.mxu0 0
      %875 = vmatpush1.bf16.msra.mxu0 0
      %876 = vmatprep.subr.bf16.mxu0 0
      %877 = vmatpush1.bf16.msra.mxu0 0
      %878 = vmatprep.subr.bf16.mxu0 0
      %879 = vmatpush1.bf16.msra.mxu0 0
      %880 = vmatprep.subr.bf16.mxu0 0
      %881 = vmatpush1.bf16.msra.mxu0 0
      %882 = vmatprep.subr.bf16.mxu0 0
      %883 = vmatpush1.bf16.msra.mxu0 0
      %884 = vmatprep.subr.bf16.mxu0 0
      %885 = vmatpush1.bf16.msra.mxu0 0
      %886 = vmatprep.subr.bf16.mxu0 0
      %887 = vmatpush1.bf16.msra.mxu0 0
      %888 = vmatprep.subr.bf16.mxu0 0
      %889 = vmatpush1.bf16.msra.mxu0 0
      %890 = vmatprep.subr.bf16.mxu0 0
      %891 = vmatpush1.bf16.msra.mxu0 0
      %892 = vmatprep.subr.bf16.mxu0 0
      %893 = vmatpush1.bf16.msra.mxu0 0
      %894 = vmatprep.subr.bf16.mxu0 0
      %895 = vmatpush1.bf16.msra.mxu0 0
      %896 = vmatprep.mubr.bf16.mxu0 0
      %897 = vmatmul.mubr.bf16.gmra.mrb[0].mxu0 %v853
      %v898 = vpop.f32.mrb[0].mxu0
      %v899 = vadd.f32 %v797, %v898
      %v900 = vpop.f32.mrb[0].mxu0
      %v901 = vadd.f32 %v799, %v900
      %v902 = vpop.f32.mrb[0].mxu0
      %v903 = vpop.f32.mrb[0].mxu0
      %904 = vdwg.mxu0
      %905 = vmatprep.subr.bf16.mxu0 0
      %906 = vmatpush1.bf16.msra.mxu0 %v862
      %907 = vmatprep.subr.bf16.mxu0 0
      %908 = vmatpush1.bf16.msra.mxu0 0
      %909 = vmatprep.subr.bf16.mxu0 0
      %910 = vmatpush1.bf16.msra.mxu0 0
      %911 = vmatprep.subr.bf16.mxu0 0
      %912 = vmatpush1.bf16.msra.mxu0 0
      %913 = vmatprep.subr.bf16.mxu0 0
      %914 = vmatpush1.bf16.msra.mxu0 0
      %915 = vmatprep.subr.bf16.mxu0 0
      %916 = vmatpush1.bf16.msra.mxu0 0
      %917 = vmatprep.subr.bf16.mxu0 0
      %918 = vmatpush1.bf16.msra.mxu0 0
      %919 = vmatprep.subr.bf16.mxu0 0
      %920 = vmatpush1.bf16.msra.mxu0 0
      %921 = vmatprep.subr.bf16.mxu0 0
      %922 = vmatpush1.bf16.msra.mxu0 0
      %923 = vmatprep.subr.bf16.mxu0 0
      %924 = vmatpush1.bf16.msra.mxu0 0
      %925 = vmatprep.subr.bf16.mxu0 0
      %926 = vmatpush1.bf16.msra.mxu0 0
      %927 = vmatprep.subr.bf16.mxu0 0
      %928 = vmatpush1.bf16.msra.mxu0 0
      %929 = vmatprep.subr.bf16.mxu0 0
      %930 = vmatpush1.bf16.msra.mxu0 0
      %931 = vmatprep.subr.bf16.mxu0 0
      %932 = vmatpush1.bf16.msra.mxu0 0
      %933 = vmatprep.subr.bf16.mxu0 0
      %934 = vmatpush1.bf16.msra.mxu0 0
      %935 = vmatprep.subr.bf16.mxu0 0
      %936 = vmatpush1.bf16.msra.mxu0 0
      %937 = vmatprep.mubr.bf16.mxu0 0
      %938 = vmatmul.mubr.bf16.gmra.mrb[0].mxu0 %v853
      %v939 = vpop.f32.mrb[0].mxu0
      %v940 = vadd.f32 %v838, %v939
      %v941 = vpop.f32.mrb[0].mxu0
      %v942 = vpop.f32.mrb[0].mxu0
      %v943 = vpop.f32.mrb[0].mxu0
      %944 = vdwg.mxu0
      %s945 = scalar_lea.vmem %s0, 8
      %v946 = vld [vmem:[%s945] sm:$0xf]
      %947 = vrot.lane.b32.xlu0 %v709, 36
      %v948 = vpop.permute.xlu0 %947
      %949 = vrot.lane.b32.xlu0 %v715, 36
      %v950 = vpop.permute.xlu0 %949
      %951 = vrot.lane.b32.xlu0 %v716, 36
      %v952 = vpop.permute.xlu0 %951
      %953 = vrot.lane.b32.xlu0 %v711, 36
      %v954 = vpop.permute.xlu0 %953
      %vm955 = vcmask 293888
      %v956 = vsel %vm955, %v948, %v950
      %v957 = vsel %vm955, %v950, %v952
      %v958 = vsel %vm955, %v952, %v954
      %v960 = vsel %vm748, %v946, 0
      %v963 = vsel %vm752, %v956, 0
      %v966 = vsel %vm752, %v957, 0
      %v969 = vsel %vm752, %v958, 0
      %971 = vmatprep.subr.bf16.mxu0 %v966
      %972 = vmatpush1.bf16.msra.mxu0 %v963
      %973 = vmatprep.subr.bf16.mxu0 0
      %974 = vmatpush1.bf16.msra.mxu0 0
      %975 = vmatprep.subr.bf16.mxu0 0
      %976 = vmatpush1.bf16.msra.mxu0 0
      %977 = vmatprep.subr.bf16.mxu0 0
      %978 = vmatpush1.bf16.msra.mxu0 0
      %979 = vmatprep.subr.bf16.mxu0 0
      %980 = vmatpush1.bf16.msra.mxu0 0
      %981 = vmatprep.subr.bf16.mxu0 0
      %982 = vmatpush1.bf16.msra.mxu0 0
      %983 = vmatprep.subr.bf16.mxu0 0
      %984 = vmatpush1.bf16.msra.mxu0 0
      %985 = vmatprep.subr.bf16.mxu0 0
      %986 = vmatpush1.bf16.msra.mxu0 0
      %987 = vmatprep.subr.bf16.mxu0 0
      %988 = vmatpush1.bf16.msra.mxu0 0
      %989 = vmatprep.subr.bf16.mxu0 0
      %990 = vmatpush1.bf16.msra.mxu0 0
      %991 = vmatprep.subr.bf16.mxu0 0
      %992 = vmatpush1.bf16.msra.mxu0 0
      %993 = vmatprep.subr.bf16.mxu0 0
      %994 = vmatpush1.bf16.msra.mxu0 0
      %995 = vmatprep.subr.bf16.mxu0 0
      %996 = vmatpush1.bf16.msra.mxu0 0
      %997 = vmatprep.subr.bf16.mxu0 0
      %998 = vmatpush1.bf16.msra.mxu0 0
      %999 = vmatprep.subr.bf16.mxu0 0
      %1000 = vmatpush1.bf16.msra.mxu0 0
      %1001 = vmatprep.subr.bf16.mxu0 0
      %1002 = vmatpush1.bf16.msra.mxu0 0
      %1003 = vmatprep.mubr.bf16.mxu0 0
      %1004 = vmatmul.mubr.bf16.gmra.mrb[0].mxu0 %v960
      %v1005 = vpop.f32.mrb[0].mxu0
      %v1006 = vadd.f32 0.0, %v1005
      %v1007 = vpop.f32.mrb[0].mxu0
      %v1008 = vadd.f32 0.0, %v1007
      %v1009 = vpop.f32.mrb[0].mxu0
      %v1010 = vpop.f32.mrb[0].mxu0
      %1011 = vdwg.mxu0
      %1012 = vmatprep.subr.bf16.mxu0 0
      %1013 = vmatpush1.bf16.msra.mxu0 %v969
      %1014 = vmatprep.subr.bf16.mxu0 0
      %1015 = vmatpush1.bf16.msra.mxu0 0
      %1016 = vmatprep.subr.bf16.mxu0 0
      %1017 = vmatpush1.bf16.msra.mxu0 0
      %1018 = vmatprep.subr.bf16.mxu0 0
      %1019 = vmatpush1.bf16.msra.mxu0 0
      %1020 = vmatprep.subr.bf16.mxu0 0
      %1021 = vmatpush1.bf16.msra.mxu0 0
      %1022 = vmatprep.subr.bf16.mxu0 0
      %1023 = vmatpush1.bf16.msra.mxu0 0
      %1024 = vmatprep.subr.bf16.mxu0 0
      %1025 = vmatpush1.bf16.msra.mxu0 0
      %1026 = vmatprep.subr.bf16.mxu0 0
      %1027 = vmatpush1.bf16.msra.mxu0 0
      %1028 = vmatprep.subr.bf16.mxu0 0
      %1029 = vmatpush1.bf16.msra.mxu0 0
      %1030 = vmatprep.subr.bf16.mxu0 0
      %1031 = vmatpush1.bf16.msra.mxu0 0
      %1032 = vmatprep.subr.bf16.mxu0 0
      %1033 = vmatpush1.bf16.msra.mxu0 0
      %1034 = vmatprep.subr.bf16.mxu0 0
      %1035 = vmatpush1.bf16.msra.mxu0 0
      %1036 = vmatprep.subr.bf16.mxu0 0
      %1037 = vmatpush1.bf16.msra.mxu0 0
      %1038 = vmatprep.subr.bf16.mxu0 0
      %1039 = vmatpush1.bf16.msra.mxu0 0
      %1040 = vmatprep.subr.bf16.mxu0 0
      %1041 = vmatpush1.bf16.msra.mxu0 0
      %1042 = vmatprep.subr.bf16.mxu0 0
      %1043 = vmatpush1.bf16.msra.mxu0 0
      %1044 = vmatprep.mubr.bf16.mxu0 0
      %1045 = vmatmul.mubr.bf16.gmra.mrb[0].mxu0 %v960
      %v1046 = vpop.f32.mrb[0].mxu0
      %v1047 = vadd.f32 0.0, %v1046
      %v1048 = vpop.f32.mrb[0].mxu0
      %v1049 = vpop.f32.mrb[0].mxu0
      %v1050 = vpop.f32.mrb[0].mxu0
      %1051 = vdwg.mxu0
      %v1052 = vadd.f32 %v899, %v1006
      %v1053 = vadd.f32 %v901, %v1008
      %v1054 = vadd.f32 %v940, %v1047
      %s1055 = scalar_lea.vmem %s0, 12
      %v1056 = vld [vmem:[%s1055] sm:$0xf]
      %1057 = vrot.lane.b32.xlu0 %v709, 20
      %v1058 = vpop.permute.xlu0 %1057
      %1059 = vrot.lane.b32.xlu0 %v715, 20
      %v1060 = vpop.permute.xlu0 %1059
      %1061 = vrot.lane.b32.xlu0 %v716, 20
      %v1062 = vpop.permute.xlu0 %1061
      %1063 = vrot.lane.b32.xlu0 %v711, 20
      %v1064 = vpop.permute.xlu0 %1063
      %vm1065 = vcmask 162816
      %v1066 = vsel %vm1065, %v1058, %v1060
      %v1067 = vsel %vm1065, %v1060, %v1062
      %v1068 = vsel %vm1065, %v1062, %v1064
      %v1070 = vsel %vm748, %v1056, 0
      %v1073 = vsel %vm752, %v1066, 0
      %v1076 = vsel %vm752, %v1067, 0
      %v1079 = vsel %vm752, %v1068, 0
      %1081 = vmatprep.subr.bf16.mxu0 %v1076
      %1082 = vmatpush1.bf16.msra.mxu0 %v1073
      %1083 = vmatprep.subr.bf16.mxu0 0
      %1084 = vmatpush1.bf16.msra.mxu0 0
      %1085 = vmatprep.subr.bf16.mxu0 0
      %1086 = vmatpush1.bf16.msra.mxu0 0
      %1087 = vmatprep.subr.bf16.mxu0 0
      %1088 = vmatpush1.bf16.msra.mxu0 0
      %1089 = vmatprep.subr.bf16.mxu0 0
      %1090 = vmatpush1.bf16.msra.mxu0 0
      %1091 = vmatprep.subr.bf16.mxu0 0
      %1092 = vmatpush1.bf16.msra.mxu0 0
      %1093 = vmatprep.subr.bf16.mxu0 0
      %1094 = vmatpush1.bf16.msra.mxu0 0
      %1095 = vmatprep.subr.bf16.mxu0 0
      %1096 = vmatpush1.bf16.msra.mxu0 0
      %1097 = vmatprep.subr.bf16.mxu0 0
      %1098 = vmatpush1.bf16.msra.mxu0 0
      %1099 = vmatprep.subr.bf16.mxu0 0
      %1100 = vmatpush1.bf16.msra.mxu0 0
      %1101 = vmatprep.subr.bf16.mxu0 0
      %1102 = vmatpush1.bf16.msra.mxu0 0
      %1103 = vmatprep.subr.bf16.mxu0 0
      %1104 = vmatpush1.bf16.msra.mxu0 0
      %1105 = vmatprep.subr.bf16.mxu0 0
      %1106 = vmatpush1.bf16.msra.mxu0 0
      %1107 = vmatprep.subr.bf16.mxu0 0
      %1108 = vmatpush1.bf16.msra.mxu0 0
      %1109 = vmatprep.subr.bf16.mxu0 0
      %1110 = vmatpush1.bf16.msra.mxu0 0
      %1111 = vmatprep.subr.bf16.mxu0 0
      %1112 = vmatpush1.bf16.msra.mxu0 0
      %1113 = vmatprep.mubr.bf16.mxu0 0
      %1114 = vmatmul.mubr.bf16.gmra.mrb[0].mxu0 %v1070
      %v1115 = vpop.f32.mrb[0].mxu0
      %v1116 = vadd.f32 0.0, %v1115
      %v1117 = vpop.f32.mrb[0].mxu0
      %v1118 = vadd.f32 0.0, %v1117
      %v1119 = vpop.f32.mrb[0].mxu0
      %v1120 = vpop.f32.mrb[0].mxu0
      %1121 = vdwg.mxu0
      %1122 = vmatprep.subr.bf16.mxu0 0
      %1123 = vmatpush1.bf16.msra.mxu0 %v1079
      %1124 = vmatprep.subr.bf16.mxu0 0
      %1125 = vmatpush1.bf16.msra.mxu0 0
      %1126 = vmatprep.subr.bf16.mxu0 0
      %1127 = vmatpush1.bf16.msra.mxu0 0
      %1128 = vmatprep.subr.bf16.mxu0 0
      %1129 = vmatpush1.bf16.msra.mxu0 0
      %1130 = vmatprep.subr.bf16.mxu0 0
      %1131 = vmatpush1.bf16.msra.mxu0 0
      %1132 = vmatprep.subr.bf16.mxu0 0
      %1133 = vmatpush1.bf16.msra.mxu0 0
      %1134 = vmatprep.subr.bf16.mxu0 0
      %1135 = vmatpush1.bf16.msra.mxu0 0
      %1136 = vmatprep.subr.bf16.mxu0 0
      %1137 = vmatpush1.bf16.msra.mxu0 0
      %1138 = vmatprep.subr.bf16.mxu0 0
      %1139 = vmatpush1.bf16.msra.mxu0 0
      %1140 = vmatprep.subr.bf16.mxu0 0
      %1141 = vmatpush1.bf16.msra.mxu0 0
      %1142 = vmatprep.subr.bf16.mxu0 0
      %1143 = vmatpush1.bf16.msra.mxu0 0
      %1144 = vmatprep.subr.bf16.mxu0 0
      %1145 = vmatpush1.bf16.msra.mxu0 0
      %1146 = vmatprep.subr.bf16.mxu0 0
      %1147 = vmatpush1.bf16.msra.mxu0 0
      %1148 = vmatprep.subr.bf16.mxu0 0
      %1149 = vmatpush1.bf16.msra.mxu0 0
      %1150 = vmatprep.subr.bf16.mxu0 0
      %1151 = vmatpush1.bf16.msra.mxu0 0
      %1152 = vmatprep.subr.bf16.mxu0 0
      %1153 = vmatpush1.bf16.msra.mxu0 0
      %1154 = vmatprep.mubr.bf16.mxu0 0
      %1155 = vmatmul.mubr.bf16.gmra.mrb[0].mxu0 %v1070
      %v1156 = vpop.f32.mrb[0].mxu0
      %v1157 = vadd.f32 0.0, %v1156
      %v1158 = vpop.f32.mrb[0].mxu0
      %v1159 = vpop.f32.mrb[0].mxu0
      %v1160 = vpop.f32.mrb[0].mxu0
      %1161 = vdwg.mxu0
      %v1162 = vadd.f32 %v1052, %v1116
      %v1163 = vadd.f32 %v1053, %v1118
      %v1164 = vadd.f32 %v1054, %v1157
      %s1165 = scalar_lea.vmem %s0, 16
      %v1166 = vld [vmem:[%s1165] sm:$0xf]
      %1167 = vrot.lane.b32.xlu0 %v709, 19
      %v1168 = vpop.permute.xlu0 %1167
      %1169 = vrot.lane.b32.xlu0 %v715, 19
      %v1170 = vpop.permute.xlu0 %1169
      %1171 = vrot.lane.b32.xlu0 %v716, 19
      %v1172 = vpop.permute.xlu0 %1171
      %1173 = vrot.lane.b32.xlu0 %v711, 19
      %v1174 = vpop.permute.xlu0 %1173
      %vm1175 = vcmask 154624
      %v1176 = vsel %vm1175, %v1168, %v1170
      %v1177 = vsel %vm1175, %v1170, %v1172
      %v1178 = vsel %vm1175, %v1172, %v1174
      %v1180 = vsel %vm748, %v1166, 0
      %v1183 = vsel %vm752, %v1176, 0
      %v1186 = vsel %vm752, %v1177, 0
      %v1189 = vsel %vm752, %v1178, 0
      %1191 = vmatprep.subr.bf16.mxu0 %v1186
      %1192 = vmatpush1.bf16.msra.mxu0 %v1183
      %1193 = vmatprep.subr.bf16.mxu0 0
      %1194 = vmatpush1.bf16.msra.mxu0 0
      %1195 = vmatprep.subr.bf16.mxu0 0
      %1196 = vmatpush1.bf16.msra.mxu0 0
      %1197 = vmatprep.subr.bf16.mxu0 0
      %1198 = vmatpush1.bf16.msra.mxu0 0
      %1199 = vmatprep.subr.bf16.mxu0 0
      %1200 = vmatpush1.bf16.msra.mxu0 0
      %1201 = vmatprep.subr.bf16.mxu0 0
      %1202 = vmatpush1.bf16.msra.mxu0 0
      %1203 = vmatprep.subr.bf16.mxu0 0
      %1204 = vmatpush1.bf16.msra.mxu0 0
      %1205 = vmatprep.subr.bf16.mxu0 0
      %1206 = vmatpush1.bf16.msra.mxu0 0
      %1207 = vmatprep.subr.bf16.mxu0 0
      %1208 = vmatpush1.bf16.msra.mxu0 0
      %1209 = vmatprep.subr.bf16.mxu0 0
      %1210 = vmatpush1.bf16.msra.mxu0 0
      %1211 = vmatprep.subr.bf16.mxu0 0
      %1212 = vmatpush1.bf16.msra.mxu0 0
      %1213 = vmatprep.subr.bf16.mxu0 0
      %1214 = vmatpush1.bf16.msra.mxu0 0
      %1215 = vmatprep.subr.bf16.mxu0 0
      %1216 = vmatpush1.bf16.msra.mxu0 0
      %1217 = vmatprep.subr.bf16.mxu0 0
      %1218 = vmatpush1.bf16.msra.mxu0 0
      %1219 = vmatprep.subr.bf16.mxu0 0
      %1220 = vmatpush1.bf16.msra.mxu0 0
      %1221 = vmatprep.subr.bf16.mxu0 0
      %1222 = vmatpush1.bf16.msra.mxu0 0
      %1223 = vmatprep.mubr.bf16.mxu0 0
      %1224 = vmatmul.mubr.bf16.gmra.mrb[0].mxu0 %v1180
      %v1225 = vpop.f32.mrb[0].mxu0
      %v1226 = vadd.f32 0.0, %v1225
      %v1227 = vpop.f32.mrb[0].mxu0
      %v1228 = vadd.f32 0.0, %v1227
      %v1229 = vpop.f32.mrb[0].mxu0
      %v1230 = vpop.f32.mrb[0].mxu0
      %1231 = vdwg.mxu0
      %1232 = vmatprep.subr.bf16.mxu0 0
      %1233 = vmatpush1.bf16.msra.mxu0 %v1189
      %1234 = vmatprep.subr.bf16.mxu0 0
      %1235 = vmatpush1.bf16.msra.mxu0 0
      %1236 = vmatprep.subr.bf16.mxu0 0
      %1237 = vmatpush1.bf16.msra.mxu0 0
      %1238 = vmatprep.subr.bf16.mxu0 0
      %1239 = vmatpush1.bf16.msra.mxu0 0
      %1240 = vmatprep.subr.bf16.mxu0 0
      %1241 = vmatpush1.bf16.msra.mxu0 0
      %1242 = vmatprep.subr.bf16.mxu0 0
      %1243 = vmatpush1.bf16.msra.mxu0 0
      %1244 = vmatprep.subr.bf16.mxu0 0
      %1245 = vmatpush1.bf16.msra.mxu0 0
      %1246 = vmatprep.subr.bf16.mxu0 0
      %1247 = vmatpush1.bf16.msra.mxu0 0
      %1248 = vmatprep.subr.bf16.mxu0 0
      %1249 = vmatpush1.bf16.msra.mxu0 0
      %1250 = vmatprep.subr.bf16.mxu0 0
      %1251 = vmatpush1.bf16.msra.mxu0 0
      %1252 = vmatprep.subr.bf16.mxu0 0
      %1253 = vmatpush1.bf16.msra.mxu0 0
      %1254 = vmatprep.subr.bf16.mxu0 0
      %1255 = vmatpush1.bf16.msra.mxu0 0
      %1256 = vmatprep.subr.bf16.mxu0 0
      %1257 = vmatpush1.bf16.msra.mxu0 0
      %1258 = vmatprep.subr.bf16.mxu0 0
      %1259 = vmatpush1.bf16.msra.mxu0 0
      %1260 = vmatprep.subr.bf16.mxu0 0
      %1261 = vmatpush1.bf16.msra.mxu0 0
      %1262 = vmatprep.subr.bf16.mxu0 0
      %1263 = vmatpush1.bf16.msra.mxu0 0
      %1264 = vmatprep.mubr.bf16.mxu0 0
      %1265 = vmatmul.mubr.bf16.gmra.mrb[0].mxu0 %v1180
      %v1266 = vpop.f32.mrb[0].mxu0
      %v1267 = vadd.f32 0.0, %v1266
      %v1268 = vpop.f32.mrb[0].mxu0
      %v1269 = vpop.f32.mrb[0].mxu0
      %v1270 = vpop.f32.mrb[0].mxu0
      %1271 = vdwg.mxu0
      %v1272 = vadd.f32 %v1162, %v1226
      %v1273 = vadd.f32 %v1163, %v1228
      %v1274 = vadd.f32 %v1164, %v1267
      %s1275 = scalar_lea.vmem %s0, 20
      %v1276 = vld [vmem:[%s1275] sm:$0xf]
      %1277 = vrot.lane.b32.xlu0 %v709, 18
      %v1278 = vpop.permute.xlu0 %1277
      %1279 = vrot.lane.b32.xlu0 %v715, 18
      %v1280 = vpop.permute.xlu0 %1279
      %1281 = vrot.lane.b32.xlu0 %v716, 18
      %v1282 = vpop.permute.xlu0 %1281
      %1283 = vrot.lane.b32.xlu0 %v711, 18
      %v1284 = vpop.permute.xlu0 %1283
      %vm1285 = vcmask 146432
      %v1286 = vsel %vm1285, %v1278, %v1280
      %v1287 = vsel %vm1285, %v1280, %v1282
      %v1288 = vsel %vm1285, %v1282, %v1284
      %v1290 = vsel %vm748, %v1276, 0
      %v1293 = vsel %vm752, %v1286, 0
      %v1296 = vsel %vm752, %v1287, 0
      %v1299 = vsel %vm752, %v1288, 0
      %1301 = vmatprep.subr.bf16.mxu0 %v1296
      %1302 = vmatpush1.bf16.msra.mxu0 %v1293
      %1303 = vmatprep.subr.bf16.mxu0 0
      %1304 = vmatpush1.bf16.msra.mxu0 0
      %1305 = vmatprep.subr.bf16.mxu0 0
      %1306 = vmatpush1.bf16.msra.mxu0 0
      %1307 = vmatprep.subr.bf16.mxu0 0
      %1308 = vmatpush1.bf16.msra.mxu0 0
      %1309 = vmatprep.subr.bf16.mxu0 0
      %1310 = vmatpush1.bf16.msra.mxu0 0
      %1311 = vmatprep.subr.bf16.mxu0 0
      %1312 = vmatpush1.bf16.msra.mxu0 0
      %1313 = vmatprep.subr.bf16.mxu0 0
      %1314 = vmatpush1.bf16.msra.mxu0 0
      %1315 = vmatprep.subr.bf16.mxu0 0
      %1316 = vmatpush1.bf16.msra.mxu0 0
      %1317 = vmatprep.subr.bf16.mxu0 0
      %1318 = vmatpush1.bf16.msra.mxu0 0
      %1319 = vmatprep.subr.bf16.mxu0 0
      %1320 = vmatpush1.bf16.msra.mxu0 0
      %1321 = vmatprep.subr.bf16.mxu0 0
      %1322 = vmatpush1.bf16.msra.mxu0 0
      %1323 = vmatprep.subr.bf16.mxu0 0
      %1324 = vmatpush1.bf16.msra.mxu0 0
      %1325 = vmatprep.subr.bf16.mxu0 0
      %1326 = vmatpush1.bf16.msra.mxu0 0
      %1327 = vmatprep.subr.bf16.mxu0 0
      %1328 = vmatpush1.bf16.msra.mxu0 0
      %1329 = vmatprep.subr.bf16.mxu0 0
      %1330 = vmatpush1.bf16.msra.mxu0 0
      %1331 = vmatprep.subr.bf16.mxu0 0
      %1332 = vmatpush1.bf16.msra.mxu0 0
      %1333 = vmatprep.mubr.bf16.mxu0 0
      %1334 = vmatmul.mubr.bf16.gmra.mrb[0].mxu0 %v1290
      %v1335 = vpop.f32.mrb[0].mxu0
      %v1336 = vadd.f32 0.0, %v1335
      %v1337 = vpop.f32.mrb[0].mxu0
      %v1338 = vadd.f32 0.0, %v1337
      %v1339 = vpop.f32.mrb[0].mxu0
      %v1340 = vpop.f32.mrb[0].mxu0
      %1341 = vdwg.mxu0
      %1342 = vmatprep.subr.bf16.mxu0 0
      %1343 = vmatpush1.bf16.msra.mxu0 %v1299
      %1344 = vmatprep.subr.bf16.mxu0 0
      %1345 = vmatpush1.bf16.msra.mxu0 0
      %1346 = vmatprep.subr.bf16.mxu0 0
      %1347 = vmatpush1.bf16.msra.mxu0 0
      %1348 = vmatprep.subr.bf16.mxu0 0
      %1349 = vmatpush1.bf16.msra.mxu0 0
      %1350 = vmatprep.subr.bf16.mxu0 0
      %1351 = vmatpush1.bf16.msra.mxu0 0
      %1352 = vmatprep.subr.bf16.mxu0 0
      %1353 = vmatpush1.bf16.msra.mxu0 0
      %1354 = vmatprep.subr.bf16.mxu0 0
      %1355 = vmatpush1.bf16.msra.mxu0 0
      %1356 = vmatprep.subr.bf16.mxu0 0
      %1357 = vmatpush1.bf16.msra.mxu0 0
      %1358 = vmatprep.subr.bf16.mxu0 0
      %1359 = vmatpush1.bf16.msra.mxu0 0
      %1360 = vmatprep.subr.bf16.mxu0 0
      %1361 = vmatpush1.bf16.msra.mxu0 0
      %1362 = vmatprep.subr.bf16.mxu0 0
      %1363 = vmatpush1.bf16.msra.mxu0 0
      %1364 = vmatprep.subr.bf16.mxu0 0
      %1365 = vmatpush1.bf16.msra.mxu0 0
      %1366 = vmatprep.subr.bf16.mxu0 0
      %1367 = vmatpush1.bf16.msra.mxu0 0
      %1368 = vmatprep.subr.bf16.mxu0 0
      %1369 = vmatpush1.bf16.msra.mxu0 0
      %1370 = vmatprep.subr.bf16.mxu0 0
      %1371 = vmatpush1.bf16.msra.mxu0 0
      %1372 = vmatprep.subr.bf16.mxu0 0
      %1373 = vmatpush1.bf16.msra.mxu0 0
      %1374 = vmatprep.mubr.bf16.mxu0 0
      %1375 = vmatmul.mubr.bf16.gmra.mrb[0].mxu0 %v1290
      %v1376 = vpop.f32.mrb[0].mxu0
      %v1377 = vadd.f32 0.0, %v1376
      %v1378 = vpop.f32.mrb[0].mxu0
      %v1379 = vpop.f32.mrb[0].mxu0
      %v1380 = vpop.f32.mrb[0].mxu0
      %1381 = vdwg.mxu0
      %v1382 = vadd.f32 %v1272, %v1336
      %v1383 = vadd.f32 %v1273, %v1338
      %v1384 = vadd.f32 %v1274, %v1377
      %s1385 = scalar_lea.vmem %s0, 24
      %v1386 = vld [vmem:[%s1385] sm:$0xf]
      %1387 = vrot.lane.b32.xlu0 %v709, 2
      %v1388 = vpop.permute.xlu0 %1387
      %1389 = vrot.lane.b32.xlu0 %v715, 2
      %v1390 = vpop.permute.xlu0 %1389
      %1391 = vrot.lane.b32.xlu0 %v716, 2
      %v1392 = vpop.permute.xlu0 %1391
      %1393 = vrot.lane.b32.xlu0 %v711, 2
      %v1394 = vpop.permute.xlu0 %1393
      %vm1395 = vcmask 15360
      %v1396 = vsel %vm1395, %v1388, %v1390
      %v1397 = vsel %vm1395, %v1390, %v1392
      %v1398 = vsel %vm1395, %v1392, %v1394
      %v1400 = vsel %vm748, %v1386, 0
      %v1403 = vsel %vm752, %v1396, 0
      %v1406 = vsel %vm752, %v1397, 0
      %v1409 = vsel %vm752, %v1398, 0
      %1411 = vmatprep.subr.bf16.mxu0 %v1406
      %1412 = vmatpush1.bf16.msra.mxu0 %v1403
      %1413 = vmatprep.subr.bf16.mxu0 0
      %1414 = vmatpush1.bf16.msra.mxu0 0
      %1415 = vmatprep.subr.bf16.mxu0 0
      %1416 = vmatpush1.bf16.msra.mxu0 0
      %1417 = vmatprep.subr.bf16.mxu0 0
      %1418 = vmatpush1.bf16.msra.mxu0 0
      %1419 = vmatprep.subr.bf16.mxu0 0
      %1420 = vmatpush1.bf16.msra.mxu0 0
      %1421 = vmatprep.subr.bf16.mxu0 0
      %1422 = vmatpush1.bf16.msra.mxu0 0
      %1423 = vmatprep.subr.bf16.mxu0 0
      %1424 = vmatpush1.bf16.msra.mxu0 0
      %1425 = vmatprep.subr.bf16.mxu0 0
      %1426 = vmatpush1.bf16.msra.mxu0 0
      %1427 = vmatprep.subr.bf16.mxu0 0
      %1428 = vmatpush1.bf16.msra.mxu0 0
      %1429 = vmatprep.subr.bf16.mxu0 0
      %1430 = vmatpush1.bf16.msra.mxu0 0
      %1431 = vmatprep.subr.bf16.mxu0 0
      %1432 = vmatpush1.bf16.msra.mxu0 0
      %1433 = vmatprep.subr.bf16.mxu0 0
      %1434 = vmatpush1.bf16.msra.mxu0 0
      %1435 = vmatprep.subr.bf16.mxu0 0
      %1436 = vmatpush1.bf16.msra.mxu0 0
      %1437 = vmatprep.subr.bf16.mxu0 0
      %1438 = vmatpush1.bf16.msra.mxu0 0
      %1439 = vmatprep.subr.bf16.mxu0 0
      %1440 = vmatpush1.bf16.msra.mxu0 0
      %1441 = vmatprep.subr.bf16.mxu0 0
      %1442 = vmatpush1.bf16.msra.mxu0 0
      %1443 = vmatprep.mubr.bf16.mxu0 0
      %1444 = vmatmul.mubr.bf16.gmra.mrb[0].mxu0 %v1400
      %v1445 = vpop.f32.mrb[0].mxu0
      %v1446 = vadd.f32 0.0, %v1445
      %v1447 = vpop.f32.mrb[0].mxu0
      %v1448 = vadd.f32 0.0, %v1447
      %v1449 = vpop.f32.mrb[0].mxu0
      %v1450 = vpop.f32.mrb[0].mxu0
      %1451 = vdwg.mxu0
      %1452 = vmatprep.subr.bf16.mxu0 0
      %1453 = vmatpush1.bf16.msra.mxu0 %v1409
      %1454 = vmatprep.subr.bf16.mxu0 0
      %1455 = vmatpush1.bf16.msra.mxu0 0
      %1456 = vmatprep.subr.bf16.mxu0 0
      %1457 = vmatpush1.bf16.msra.mxu0 0
      %1458 = vmatprep.subr.bf16.mxu0 0
      %1459 = vmatpush1.bf16.msra.mxu0 0
      %1460 = vmatprep.subr.bf16.mxu0 0
      %1461 = vmatpush1.bf16.msra.mxu0 0
      %1462 = vmatprep.subr.bf16.mxu0 0
      %1463 = vmatpush1.bf16.msra.mxu0 0
      %1464 = vmatprep.subr.bf16.mxu0 0
      %1465 = vmatpush1.bf16.msra.mxu0 0
      %1466 = vmatprep.subr.bf16.mxu0 0
      %1467 = vmatpush1.bf16.msra.mxu0 0
      %1468 = vmatprep.subr.bf16.mxu0 0
      %1469 = vmatpush1.bf16.msra.mxu0 0
      %1470 = vmatprep.subr.bf16.mxu0 0
      %1471 = vmatpush1.bf16.msra.mxu0 0
      %1472 = vmatprep.subr.bf16.mxu0 0
      %1473 = vmatpush1.bf16.msra.mxu0 0
      %1474 = vmatprep.subr.bf16.mxu0 0
      %1475 = vmatpush1.bf16.msra.mxu0 0
      %1476 = vmatprep.subr.bf16.mxu0 0
      %1477 = vmatpush1.bf16.msra.mxu0 0
      %1478 = vmatprep.subr.bf16.mxu0 0
      %1479 = vmatpush1.bf16.msra.mxu0 0
      %1480 = vmatprep.subr.bf16.mxu0 0
      %1481 = vmatpush1.bf16.msra.mxu0 0
      %1482 = vmatprep.subr.bf16.mxu0 0
      %1483 = vmatpush1.bf16.msra.mxu0 0
      %1484 = vmatprep.mubr.bf16.mxu0 0
      %1485 = vmatmul.mubr.bf16.gmra.mrb[0].mxu0 %v1400
      %v1486 = vpop.f32.mrb[0].mxu0
      %v1487 = vadd.f32 0.0, %v1486
      %v1488 = vpop.f32.mrb[0].mxu0
      %v1489 = vpop.f32.mrb[0].mxu0
      %v1490 = vpop.f32.mrb[0].mxu0
      %1491 = vdwg.mxu0
      %v1492 = vadd.f32 %v1382, %v1446
      %v1493 = vadd.f32 %v1383, %v1448
      %v1494 = vadd.f32 %v1384, %v1487
      %s1495 = scalar_lea.vmem %s0, 28
      %v1496 = vld [vmem:[%s1495] sm:$0xf]
      %1497 = vrot.lane.b32.xlu0 %v709, 1
      %v1498 = vpop.permute.xlu0 %1497
      %1499 = vrot.lane.b32.xlu0 %v715, 1
      %v1500 = vpop.permute.xlu0 %1499
      %1501 = vrot.lane.b32.xlu0 %v716, 1
      %v1502 = vpop.permute.xlu0 %1501
      %1503 = vrot.lane.b32.xlu0 %v711, 1
      %v1504 = vpop.permute.xlu0 %1503
      %vm1505 = vcmask 7168
      %v1506 = vsel %vm1505, %v1498, %v1500
      %v1507 = vsel %vm1505, %v1500, %v1502
      %v1508 = vsel %vm1505, %v1502, %v1504
      %v1510 = vsel %vm748, %v1496, 0
      %v1513 = vsel %vm752, %v1506, 0
      %v1516 = vsel %vm752, %v1507, 0
      %v1519 = vsel %vm752, %v1508, 0
      %1521 = vmatprep.subr.bf16.mxu0 %v1516
      %1522 = vmatpush1.bf16.msra.mxu0 %v1513
      %1523 = vmatprep.subr.bf16.mxu0 0
      %1524 = vmatpush1.bf16.msra.mxu0 0
      %1525 = vmatprep.subr.bf16.mxu0 0
      %1526 = vmatpush1.bf16.msra.mxu0 0
      %1527 = vmatprep.subr.bf16.mxu0 0
      %1528 = vmatpush1.bf16.msra.mxu0 0
      %1529 = vmatprep.subr.bf16.mxu0 0
      %1530 = vmatpush1.bf16.msra.mxu0 0
      %1531 = vmatprep.subr.bf16.mxu0 0
      %1532 = vmatpush1.bf16.msra.mxu0 0
      %1533 = vmatprep.subr.bf16.mxu0 0
      %1534 = vmatpush1.bf16.msra.mxu0 0
      %1535 = vmatprep.subr.bf16.mxu0 0
      %1536 = vmatpush1.bf16.msra.mxu0 0
      %1537 = vmatprep.subr.bf16.mxu0 0
      %1538 = vmatpush1.bf16.msra.mxu0 0
      %1539 = vmatprep.subr.bf16.mxu0 0
      %1540 = vmatpush1.bf16.msra.mxu0 0
      %1541 = vmatprep.subr.bf16.mxu0 0
      %1542 = vmatpush1.bf16.msra.mxu0 0
      %1543 = vmatprep.subr.bf16.mxu0 0
      %1544 = vmatpush1.bf16.msra.mxu0 0
      %1545 = vmatprep.subr.bf16.mxu0 0
      %1546 = vmatpush1.bf16.msra.mxu0 0
      %1547 = vmatprep.subr.bf16.mxu0 0
      %1548 = vmatpush1.bf16.msra.mxu0 0
      %1549 = vmatprep.subr.bf16.mxu0 0
      %1550 = vmatpush1.bf16.msra.mxu0 0
      %1551 = vmatprep.subr.bf16.mxu0 0
      %1552 = vmatpush1.bf16.msra.mxu0 0
      %1553 = vmatprep.mubr.bf16.mxu0 0
      %1554 = vmatmul.mubr.bf16.gmra.mrb[0].mxu0 %v1510
      %v1555 = vpop.f32.mrb[0].mxu0
      %v1556 = vadd.f32 0.0, %v1555
      %v1557 = vpop.f32.mrb[0].mxu0
      %v1558 = vadd.f32 0.0, %v1557
      %v1559 = vpop.f32.mrb[0].mxu0
      %v1560 = vpop.f32.mrb[0].mxu0
      %1561 = vdwg.mxu0
      %1562 = vmatprep.subr.bf16.mxu0 0
      %1563 = vmatpush1.bf16.msra.mxu0 %v1519
      %1564 = vmatprep.subr.bf16.mxu0 0
      %1565 = vmatpush1.bf16.msra.mxu0 0
      %1566 = vmatprep.subr.bf16.mxu0 0
      %1567 = vmatpush1.bf16.msra.mxu0 0
      %1568 = vmatprep.subr.bf16.mxu0 0
      %1569 = vmatpush1.bf16.msra.mxu0 0
      %1570 = vmatprep.subr.bf16.mxu0 0
      %1571 = vmatpush1.bf16.msra.mxu0 0
      %1572 = vmatprep.subr.bf16.mxu0 0
      %1573 = vmatpush1.bf16.msra.mxu0 0
      %1574 = vmatprep.subr.bf16.mxu0 0
      %1575 = vmatpush1.bf16.msra.mxu0 0
      %1576 = vmatprep.subr.bf16.mxu0 0
      %1577 = vmatpush1.bf16.msra.mxu0 0
      %1578 = vmatprep.subr.bf16.mxu0 0
      %1579 = vmatpush1.bf16.msra.mxu0 0
      %1580 = vmatprep.subr.bf16.mxu0 0
      %1581 = vmatpush1.bf16.msra.mxu0 0
      %1582 = vmatprep.subr.bf16.mxu0 0
      %1583 = vmatpush1.bf16.msra.mxu0 0
      %1584 = vmatprep.subr.bf16.mxu0 0
      %1585 = vmatpush1.bf16.msra.mxu0 0
      %1586 = vmatprep.subr.bf16.mxu0 0
      %1587 = vmatpush1.bf16.msra.mxu0 0
      %1588 = vmatprep.subr.bf16.mxu0 0
      %1589 = vmatpush1.bf16.msra.mxu0 0
      %1590 = vmatprep.subr.bf16.mxu0 0
      %1591 = vmatpush1.bf16.msra.mxu0 0
      %1592 = vmatprep.subr.bf16.mxu0 0
      %1593 = vmatpush1.bf16.msra.mxu0 0
      %1594 = vmatprep.mubr.bf16.mxu0 0
      %1595 = vmatmul.mubr.bf16.gmra.mrb[0].mxu0 %v1510
      %v1596 = vpop.f32.mrb[0].mxu0
      %v1597 = vadd.f32 0.0, %v1596
      %v1598 = vpop.f32.mrb[0].mxu0
      %v1599 = vpop.f32.mrb[0].mxu0
      %v1600 = vpop.f32.mrb[0].mxu0
      %1601 = vdwg.mxu0
      %v1602 = vadd.f32 %v1492, %v1556
      %v1603 = vadd.f32 %v1493, %v1558
      %v1604 = vadd.f32 %v1494, %v1597
      %s1605 = scalar_lea.vmem %s0, 32
      %v1606 = vld [vmem:[%s1605] sm:$0xf]
      %v1608 = vsel %vm748, %v1606, 0
      %v1611 = vsel %vm752, %v715, 0
      %v1614 = vsel %vm752, %v716, 0
      %v1617 = vsel %vm752, %v711, 0
      %1619 = vmatprep.subr.bf16.mxu0 %v1614
      %1620 = vmatpush1.bf16.msra.mxu0 %v1611
      %1621 = vmatprep.subr.bf16.mxu0 0
      %1622 = vmatpush1.bf16.msra.mxu0 0
      %1623 = vmatprep.subr.bf16.mxu0 0
      %1624 = vmatpush1.bf16.msra.mxu0 0
      %1625 = vmatprep.subr.bf16.mxu0 0
      %1626 = vmatpush1.bf16.msra.mxu0 0
      %1627 = vmatprep.subr.bf16.mxu0 0
      %1628 = vmatpush1.bf16.msra.mxu0 0
      %1629 = vmatprep.subr.bf16.mxu0 0
      %1630 = vmatpush1.bf16.msra.mxu0 0
      %1631 = vmatprep.subr.bf16.mxu0 0
      %1632 = vmatpush1.bf16.msra.mxu0 0
      %1633 = vmatprep.subr.bf16.mxu0 0
      %1634 = vmatpush1.bf16.msra.mxu0 0
      %1635 = vmatprep.subr.bf16.mxu0 0
      %1636 = vmatpush1.bf16.msra.mxu0 0
      %1637 = vmatprep.subr.bf16.mxu0 0
      %1638 = vmatpush1.bf16.msra.mxu0 0
      %1639 = vmatprep.subr.bf16.mxu0 0
      %1640 = vmatpush1.bf16.msra.mxu0 0
      %1641 = vmatprep.subr.bf16.mxu0 0
      %1642 = vmatpush1.bf16.msra.mxu0 0
      %1643 = vmatprep.subr.bf16.mxu0 0
      %1644 = vmatpush1.bf16.msra.mxu0 0
      %1645 = vmatprep.subr.bf16.mxu0 0
      %1646 = vmatpush1.bf16.msra.mxu0 0
      %1647 = vmatprep.subr.bf16.mxu0 0
      %1648 = vmatpush1.bf16.msra.mxu0 0
      %1649 = vmatprep.subr.bf16.mxu0 0
      %1650 = vmatpush1.bf16.msra.mxu0 0
      %1651 = vmatprep.mubr.bf16.mxu0 0
      %1652 = vmatmul.mubr.bf16.gmra.mrb[0].mxu0 %v1608
      %v1653 = vpop.f32.mrb[0].mxu0
      %v1654 = vadd.f32 0.0, %v1653
      %v1655 = vpop.f32.mrb[0].mxu0
      %v1656 = vadd.f32 0.0, %v1655
      %v1657 = vpop.f32.mrb[0].mxu0
      %v1658 = vpop.f32.mrb[0].mxu0
      %1659 = vdwg.mxu0
      %1660 = vmatprep.subr.bf16.mxu0 0
      %1661 = vmatpush1.bf16.msra.mxu0 %v1617
      %1662 = vmatprep.subr.bf16.mxu0 0
      %1663 = vmatpush1.bf16.msra.mxu0 0
      %1664 = vmatprep.subr.bf16.mxu0 0
      %1665 = vmatpush1.bf16.msra.mxu0 0
      %1666 = vmatprep.subr.bf16.mxu0 0
      %1667 = vmatpush1.bf16.msra.mxu0 0
      %1668 = vmatprep.subr.bf16.mxu0 0
      %1669 = vmatpush1.bf16.msra.mxu0 0
      %1670 = vmatprep.subr.bf16.mxu0 0
      %1671 = vmatpush1.bf16.msra.mxu0 0
      %1672 = vmatprep.subr.bf16.mxu0 0
      %1673 = vmatpush1.bf16.msra.mxu0 0
      %1674 = vmatprep.subr.bf16.mxu0 0
      %1675 = vmatpush1.bf16.msra.mxu0 0
      %1676 = vmatprep.subr.bf16.mxu0 0
      %1677 = vmatpush1.bf16.msra.mxu0 0
      %1678 = vmatprep.subr.bf16.mxu0 0
      %1679 = vmatpush1.bf16.msra.mxu0 0
      %1680 = vmatprep.subr.bf16.mxu0 0
      %1681 = vmatpush1.bf16.msra.mxu0 0
      %1682 = vmatprep.subr.bf16.mxu0 0
      %1683 = vmatpush1.bf16.msra.mxu0 0
      %1684 = vmatprep.subr.bf16.mxu0 0
      %1685 = vmatpush1.bf16.msra.mxu0 0
      %1686 = vmatprep.subr.bf16.mxu0 0
      %1687 = vmatpush1.bf16.msra.mxu0 0
      %1688 = vmatprep.subr.bf16.mxu0 0
      %1689 = vmatpush1.bf16.msra.mxu0 0
      %1690 = vmatprep.subr.bf16.mxu0 0
      %1691 = vmatpush1.bf16.msra.mxu0 0
      %1692 = vmatprep.mubr.bf16.mxu0 0
      %1693 = vmatmul.mubr.bf16.gmra.mrb[0].mxu0 %v1608
      %v1694 = vpop.f32.mrb[0].mxu0
      %v1695 = vadd.f32 0.0, %v1694
      %v1696 = vpop.f32.mrb[0].mxu0
      %v1697 = vpop.f32.mrb[0].mxu0
      %v1698 = vpop.f32.mrb[0].mxu0
      %1699 = vdwg.mxu0
      %v1700 = vadd.f32 %v1602, %v1654
      %v1701 = vadd.f32 %v1603, %v1656
      %v1702 = vadd.f32 %v1604, %v1695
      %v1703 = vld [vmem:[%s1] sm:$0xff]
      %1705 = vset.pattern.permute.xlu0 0
      %1706 = vperm.xlu0 %1705, %v1703
      %v1707 = vpop.permute.xlu0 %1706
      %v1709 = vadd.f32 %v1700, %v1707
      %v1710 = vadd.f32 %v1701, %v1707
      %v1711 = vadd.f32 %v1702, %v1707
      %v1712 = vlaneseq
      %v1713 = vshrl.u32 %v1712, 7
      %v1714 = vsub.s32 0, %v1713
      %v1715 = vrot.slane %v717, %v1714
      %v1716 = vlaneseq
      %v1717 = vshrl.u32 %v1716, 7
      %v1718 = vsub.s32 0, %v1717
      %v1719 = vrot.slane %v724, %v1718
      %v1720 = vlaneseq
      %v1721 = vshrl.u32 %v1720, 7
      %v1722 = vsub.s32 0, %v1721
      %v1723 = vrot.slane %v728, %v1722
      %v1724 = vlaneseq
      %v1725 = vshrl.u32 %v1724, 7
      %v1726 = vsub.s32 0, %v1725
      %v1727 = vrot.slane %v719, %v1726
      %1732 = vrot.lane.b32.xlu0 %v1715, 19
      %v1733 = vpop.permute.xlu0 %1732
      %1734 = vrot.lane.b32.xlu0 %v1719, 19
      %v1735 = vpop.permute.xlu0 %1734
      %1736 = vrot.lane.b32.xlu0 %v1723, 19
      %v1737 = vpop.permute.xlu0 %1736
      %1738 = vrot.lane.b32.xlu0 %v1727, 19
      %v1739 = vpop.permute.xlu0 %1738
      %vm1740 = vcmask 154624
      %v1741 = vsel %vm1740, %v1733, %v1735
      %v1742 = vsel %vm1740, %v1735, %v1737
      %v1743 = vsel %vm1740, %v1737, %v1739
      %v1747 = vmul.f32 %v1709, %v1741
      %v1748 = vmul.f32 %v1710, %v1742
      %v1749 = vmul.f32 %v1711, %v1743
      %v1750 = vpack.c.bf16 %v1747, %v1747
      %v1751 = vpack.c.bf16 %v1748, %v1748
      %v1752 = vpack.c.bf16 %v1749, %v1749
      %v1753 = vld [vmem:[%s2] sm:$0xf]
      %v1754 = vld [vmem:[%s2 + $0x4] sm:$0xf]
      %s1755 = scalar_lea.vmem %s2, 8
      %v1756 = vld [vmem:[%s1755] sm:$0xf]
      %v1757 = vld [vmem:[%s1755 + $0x4] sm:$0xf]
      %v1760 = vunpack.c.l.b16 %v1756
      %v1761 = vunpack.c.l.b16 %v1757
      %v1762 = vpack.c.b16 %v1761, %v1760
      %1766 = vrot.lane.b32.xlu0 %v1750, 127
      %v1767 = vpop.permute.xlu0 %1766
      %1768 = vrot.lane.b32.xlu0 %v1751, 127
      %v1769 = vpop.permute.xlu0 %1768
      %1770 = vrot.lane.b32.xlu0 %v1752, 127
      %v1771 = vpop.permute.xlu0 %1770
      %vm1772 = vcmask 1039360
      %v1773 = vsel %vm1772, %v1767, %v1769
      %v1774 = vsel %vm1772, %v1769, %v1771
      %v1776 = vsel %vm748, %v1762, 0
      %v1779 = vsel %vm752, %v1773, 0
      %v1782 = vsel %vm752, %v1774, 0
      %1784 = vmatprep.subr.bf16.mxu0 %v1782
      %1785 = vmatpush1.bf16.msra.mxu0 %v1779
      %1786 = vmatprep.subr.bf16.mxu0 0
      %1787 = vmatpush1.bf16.msra.mxu0 0
      %1788 = vmatprep.subr.bf16.mxu0 0
      %1789 = vmatpush1.bf16.msra.mxu0 0
      %1790 = vmatprep.subr.bf16.mxu0 0
      %1791 = vmatpush1.bf16.msra.mxu0 0
      %1792 = vmatprep.subr.bf16.mxu0 0
      %1793 = vmatpush1.bf16.msra.mxu0 0
      %1794 = vmatprep.subr.bf16.mxu0 0
      %1795 = vmatpush1.bf16.msra.mxu0 0
      %1796 = vmatprep.subr.bf16.mxu0 0
      %1797 = vmatpush1.bf16.msra.mxu0 0
      %1798 = vmatprep.subr.bf16.mxu0 0
      %1799 = vmatpush1.bf16.msra.mxu0 0
      %1800 = vmatprep.subr.bf16.mxu0 0
      %1801 = vmatpush1.bf16.msra.mxu0 0
      %1802 = vmatprep.subr.bf16.mxu0 0
      %1803 = vmatpush1.bf16.msra.mxu0 0
      %1804 = vmatprep.subr.bf16.mxu0 0
      %1805 = vmatpush1.bf16.msra.mxu0 0
      %1806 = vmatprep.subr.bf16.mxu0 0
      %1807 = vmatpush1.bf16.msra.mxu0 0
      %1808 = vmatprep.subr.bf16.mxu0 0
      %1809 = vmatpush1.bf16.msra.mxu0 0
      %1810 = vmatprep.subr.bf16.mxu0 0
      %1811 = vmatpush1.bf16.msra.mxu0 0
      %1812 = vmatprep.subr.bf16.mxu0 0
      %1813 = vmatpush1.bf16.msra.mxu0 0
      %1814 = vmatprep.subr.bf16.mxu0 0
      %1815 = vmatpush1.bf16.msra.mxu0 0
      %1816 = vmatprep.mubr.bf16.mxu0 0
      %1817 = vmatmul.mubr.bf16.gmra.mrb[0].mxu0 %v1776
      %v1818 = vpop.f32.mrb[0].mxu0
      %v1819 = vadd.f32 0.0, %v1818
      %v1820 = vpop.f32.mrb[0].mxu0
      %v1821 = vadd.f32 0.0, %v1820
      %v1822 = vpop.f32.mrb[0].mxu0
      %v1823 = vadd.f32 0.0, %v1822
      %v1824 = vpop.f32.mrb[0].mxu0
      %v1825 = vadd.f32 0.0, %v1824
      %1826 = vdwg.mxu0
      %v1829 = vunpack.c.l.b16 %v1753
      %v1830 = vunpack.c.l.b16 %v1754
      %v1831 = vpack.c.b16 %v1830, %v1829
      %v1833 = vsel %vm748, %v1831, 0
      %v1836 = vsel %vm752, %v1750, 0
      %v1839 = vsel %vm752, %v1751, 0
      %1841 = vmatprep.subr.bf16.mxu0 %v1839
      %1842 = vmatpush1.bf16.msra.mxu0 %v1836
      %1843 = vmatprep.subr.bf16.mxu0 0
      %1844 = vmatpush1.bf16.msra.mxu0 0
      %1845 = vmatprep.subr.bf16.mxu0 0
      %1846 = vmatpush1.bf16.msra.mxu0 0
      %1847 = vmatprep.subr.bf16.mxu0 0
      %1848 = vmatpush1.bf16.msra.mxu0 0
      %1849 = vmatprep.subr.bf16.mxu0 0
      %1850 = vmatpush1.bf16.msra.mxu0 0
      %1851 = vmatprep.subr.bf16.mxu0 0
      %1852 = vmatpush1.bf16.msra.mxu0 0
      %1853 = vmatprep.subr.bf16.mxu0 0
      %1854 = vmatpush1.bf16.msra.mxu0 0
      %1855 = vmatprep.subr.bf16.mxu0 0
      %1856 = vmatpush1.bf16.msra.mxu0 0
      %1857 = vmatprep.subr.bf16.mxu0 0
      %1858 = vmatpush1.bf16.msra.mxu0 0
      %1859 = vmatprep.subr.bf16.mxu0 0
      %1860 = vmatpush1.bf16.msra.mxu0 0
      %1861 = vmatprep.subr.bf16.mxu0 0
      %1862 = vmatpush1.bf16.msra.mxu0 0
      %1863 = vmatprep.subr.bf16.mxu0 0
      %1864 = vmatpush1.bf16.msra.mxu0 0
      %1865 = vmatprep.subr.bf16.mxu0 0
      %1866 = vmatpush1.bf16.msra.mxu0 0
      %1867 = vmatprep.subr.bf16.mxu0 0
      %1868 = vmatpush1.bf16.msra.mxu0 0
      %1869 = vmatprep.subr.bf16.mxu0 0
      %1870 = vmatpush1.bf16.msra.mxu0 0
      %1871 = vmatprep.subr.bf16.mxu0 0
      %1872 = vmatpush1.bf16.msra.mxu0 0
      %1873 = vmatprep.mubr.bf16.mxu0 0
      %1874 = vmatmul.mubr.bf16.gmra.mrb[0].mxu0 %v1833
      %v1875 = vpop.f32.mrb[0].mxu0
      %v1876 = vadd.f32 %v1819, %v1875
      %v1877 = vpop.f32.mrb[0].mxu0
      %v1878 = vadd.f32 %v1821, %v1877
      %v1879 = vpop.f32.mrb[0].mxu0
      %v1880 = vadd.f32 %v1823, %v1879
      %v1881 = vpop.f32.mrb[0].mxu0
      %v1882 = vadd.f32 %v1825, %v1881
      %1883 = vdwg.mxu0
      %s1884 = scalar_lea.vmem %s2, 16
      %v1885 = vld [vmem:[%s1884] sm:$0xf]
      %v1886 = vld [vmem:[%s1884 + $0x4] sm:$0xf]
      %v1889 = vunpack.c.l.b16 %v1885
      %v1890 = vunpack.c.l.b16 %v1886
      %v1891 = vpack.c.b16 %v1890, %v1889
      %1892 = vrot.lane.b32.xlu0 %v1750, 126
      %v1893 = vpop.permute.xlu0 %1892
      %1894 = vrot.lane.b32.xlu0 %v1751, 126
      %v1895 = vpop.permute.xlu0 %1894
      %1896 = vrot.lane.b32.xlu0 %v1752, 126
      %v1897 = vpop.permute.xlu0 %1896
      %vm1898 = vcmask 1031168
      %v1899 = vsel %vm1898, %v1893, %v1895
      %v1900 = vsel %vm1898, %v1895, %v1897
      %v1902 = vsel %vm748, %v1891, 0
      %v1905 = vsel %vm752, %v1899, 0
      %v1908 = vsel %vm752, %v1900, 0
      %1910 = vmatprep.subr.bf16.mxu0 %v1908
      %1911 = vmatpush1.bf16.msra.mxu0 %v1905
      %1912 = vmatprep.subr.bf16.mxu0 0
      %1913 = vmatpush1.bf16.msra.mxu0 0
      %1914 = vmatprep.subr.bf16.mxu0 0
      %1915 = vmatpush1.bf16.msra.mxu0 0
      %1916 = vmatprep.subr.bf16.mxu0 0
      %1917 = vmatpush1.bf16.msra.mxu0 0
      %1918 = vmatprep.subr.bf16.mxu0 0
      %1919 = vmatpush1.bf16.msra.mxu0 0
      %1920 = vmatprep.subr.bf16.mxu0 0
      %1921 = vmatpush1.bf16.msra.mxu0 0
      %1922 = vmatprep.subr.bf16.mxu0 0
      %1923 = vmatpush1.bf16.msra.mxu0 0
      %1924 = vmatprep.subr.bf16.mxu0 0
      %1925 = vmatpush1.bf16.msra.mxu0 0
      %1926 = vmatprep.subr.bf16.mxu0 0
      %1927 = vmatpush1.bf16.msra.mxu0 0
      %1928 = vmatprep.subr.bf16.mxu0 0
      %1929 = vmatpush1.bf16.msra.mxu0 0
      %1930 = vmatprep.subr.bf16.mxu0 0
      %1931 = vmatpush1.bf16.msra.mxu0 0
      %1932 = vmatprep.subr.bf16.mxu0 0
      %1933 = vmatpush1.bf16.msra.mxu0 0
      %1934 = vmatprep.subr.bf16.mxu0 0
      %1935 = vmatpush1.bf16.msra.mxu0 0
      %1936 = vmatprep.subr.bf16.mxu0 0
      %1937 = vmatpush1.bf16.msra.mxu0 0
      %1938 = vmatprep.subr.bf16.mxu0 0
      %1939 = vmatpush1.bf16.msra.mxu0 0
      %1940 = vmatprep.subr.bf16.mxu0 0
      %1941 = vmatpush1.bf16.msra.mxu0 0
      %1942 = vmatprep.mubr.bf16.mxu0 0
      %1943 = vmatmul.mubr.bf16.gmra.mrb[0].mxu0 %v1902
      %v1944 = vpop.f32.mrb[0].mxu0
      %v1945 = vadd.f32 0.0, %v1944
      %v1946 = vpop.f32.mrb[0].mxu0
      %v1947 = vadd.f32 0.0, %v1946
      %v1948 = vpop.f32.mrb[0].mxu0
      %v1949 = vadd.f32 0.0, %v1948
      %v1950 = vpop.f32.mrb[0].mxu0
      %v1951 = vadd.f32 0.0, %v1950
      %1952 = vdwg.mxu0
      %v1953 = vadd.f32 %v1876, %v1945
      %v1954 = vadd.f32 %v1878, %v1947
      %v1955 = vadd.f32 %v1880, %v1949
      %v1956 = vadd.f32 %v1882, %v1951
      %s1957 = scalar_lea.vmem %s2, 24
      %v1958 = vld [vmem:[%s1957] sm:$0xf]
      %v1959 = vld [vmem:[%s1957 + $0x4] sm:$0xf]
      %v1962 = vunpack.c.l.b16 %v1958
      %v1963 = vunpack.c.l.b16 %v1959
      %v1964 = vpack.c.b16 %v1963, %v1962
      %1965 = vrot.lane.b32.xlu0 %v1750, 110
      %v1966 = vpop.permute.xlu0 %1965
      %1967 = vrot.lane.b32.xlu0 %v1751, 110
      %v1968 = vpop.permute.xlu0 %1967
      %1969 = vrot.lane.b32.xlu0 %v1752, 110
      %v1970 = vpop.permute.xlu0 %1969
      %vm1971 = vcmask 900096
      %v1972 = vsel %vm1971, %v1966, %v1968
      %v1973 = vsel %vm1971, %v1968, %v1970
      %v1975 = vsel %vm748, %v1964, 0
      %v1978 = vsel %vm752, %v1972, 0
      %v1981 = vsel %vm752, %v1973, 0
      %1983 = vmatprep.subr.bf16.mxu0 %v1981
      %1984 = vmatpush1.bf16.msra.mxu0 %v1978
      %1985 = vmatprep.subr.bf16.mxu0 0
      %1986 = vmatpush1.bf16.msra.mxu0 0
      %1987 = vmatprep.subr.bf16.mxu0 0
      %1988 = vmatpush1.bf16.msra.mxu0 0
      %1989 = vmatprep.subr.bf16.mxu0 0
      %1990 = vmatpush1.bf16.msra.mxu0 0
      %1991 = vmatprep.subr.bf16.mxu0 0
      %1992 = vmatpush1.bf16.msra.mxu0 0
      %1993 = vmatprep.subr.bf16.mxu0 0
      %1994 = vmatpush1.bf16.msra.mxu0 0
      %1995 = vmatprep.subr.bf16.mxu0 0
      %1996 = vmatpush1.bf16.msra.mxu0 0
      %1997 = vmatprep.subr.bf16.mxu0 0
      %1998 = vmatpush1.bf16.msra.mxu0 0
      %1999 = vmatprep.subr.bf16.mxu0 0
      %2000 = vmatpush1.bf16.msra.mxu0 0
      %2001 = vmatprep.subr.bf16.mxu0 0
      %2002 = vmatpush1.bf16.msra.mxu0 0
      %2003 = vmatprep.subr.bf16.mxu0 0
      %2004 = vmatpush1.bf16.msra.mxu0 0
      %2005 = vmatprep.subr.bf16.mxu0 0
      %2006 = vmatpush1.bf16.msra.mxu0 0
      %2007 = vmatprep.subr.bf16.mxu0 0
      %2008 = vmatpush1.bf16.msra.mxu0 0
      %2009 = vmatprep.subr.bf16.mxu0 0
      %2010 = vmatpush1.bf16.msra.mxu0 0
      %2011 = vmatprep.subr.bf16.mxu0 0
      %2012 = vmatpush1.bf16.msra.mxu0 0
      %2013 = vmatprep.subr.bf16.mxu0 0
      %2014 = vmatpush1.bf16.msra.mxu0 0
      %2015 = vmatprep.mubr.bf16.mxu0 0
      %2016 = vmatmul.mubr.bf16.gmra.mrb[0].mxu0 %v1975
      %v2017 = vpop.f32.mrb[0].mxu0
      %v2018 = vadd.f32 0.0, %v2017
      %v2019 = vpop.f32.mrb[0].mxu0
      %v2020 = vadd.f32 0.0, %v2019
      %v2021 = vpop.f32.mrb[0].mxu0
      %v2022 = vadd.f32 0.0, %v2021
      %v2023 = vpop.f32.mrb[0].mxu0
      %v2024 = vadd.f32 0.0, %v2023
      %2025 = vdwg.mxu0
      %v2026 = vadd.f32 %v1953, %v2018
      %v2027 = vadd.f32 %v1954, %v2020
      %v2028 = vadd.f32 %v1955, %v2022
      %v2029 = vadd.f32 %v1956, %v2024
      %s2030 = scalar_lea.vmem %s2, 32
      %v2031 = vld [vmem:[%s2030] sm:$0xf]
      %v2032 = vld [vmem:[%s2030 + $0x4] sm:$0xf]
      %v2035 = vunpack.c.l.b16 %v2031
      %v2036 = vunpack.c.l.b16 %v2032
      %v2037 = vpack.c.b16 %v2036, %v2035
      %2038 = vrot.lane.b32.xlu0 %v1750, 109
      %v2039 = vpop.permute.xlu0 %2038
      %2040 = vrot.lane.b32.xlu0 %v1751, 109
      %v2041 = vpop.permute.xlu0 %2040
      %2042 = vrot.lane.b32.xlu0 %v1752, 109
      %v2043 = vpop.permute.xlu0 %2042
      %vm2044 = vcmask 891904
      %v2045 = vsel %vm2044, %v2039, %v2041
      %v2046 = vsel %vm2044, %v2041, %v2043
      %v2048 = vsel %vm748, %v2037, 0
      %v2051 = vsel %vm752, %v2045, 0
      %v2054 = vsel %vm752, %v2046, 0
      %2056 = vmatprep.subr.bf16.mxu0 %v2054
      %2057 = vmatpush1.bf16.msra.mxu0 %v2051
      %2058 = vmatprep.subr.bf16.mxu0 0
      %2059 = vmatpush1.bf16.msra.mxu0 0
      %2060 = vmatprep.subr.bf16.mxu0 0
      %2061 = vmatpush1.bf16.msra.mxu0 0
      %2062 = vmatprep.subr.bf16.mxu0 0
      %2063 = vmatpush1.bf16.msra.mxu0 0
      %2064 = vmatprep.subr.bf16.mxu0 0
      %2065 = vmatpush1.bf16.msra.mxu0 0
      %2066 = vmatprep.subr.bf16.mxu0 0
      %2067 = vmatpush1.bf16.msra.mxu0 0
      %2068 = vmatprep.subr.bf16.mxu0 0
      %2069 = vmatpush1.bf16.msra.mxu0 0
      %2070 = vmatprep.subr.bf16.mxu0 0
      %2071 = vmatpush1.bf16.msra.mxu0 0
      %2072 = vmatprep.subr.bf16.mxu0 0
      %2073 = vmatpush1.bf16.msra.mxu0 0
      %2074 = vmatprep.subr.bf16.mxu0 0
      %2075 = vmatpush1.bf16.msra.mxu0 0
      %2076 = vmatprep.subr.bf16.mxu0 0
      %2077 = vmatpush1.bf16.msra.mxu0 0
      %2078 = vmatprep.subr.bf16.mxu0 0
      %2079 = vmatpush1.bf16.msra.mxu0 0
      %2080 = vmatprep.subr.bf16.mxu0 0
      %2081 = vmatpush1.bf16.msra.mxu0 0
      %2082 = vmatprep.subr.bf16.mxu0 0
      %2083 = vmatpush1.bf16.msra.mxu0 0
      %2084 = vmatprep.subr.bf16.mxu0 0
      %2085 = vmatpush1.bf16.msra.mxu0 0
      %2086 = vmatprep.subr.bf16.mxu0 0
      %2087 = vmatpush1.bf16.msra.mxu0 0
      %2088 = vmatprep.mubr.bf16.mxu0 0
      %2089 = vmatmul.mubr.bf16.gmra.mrb[0].mxu0 %v2048
      %v2090 = vpop.f32.mrb[0].mxu0
      %v2091 = vadd.f32 0.0, %v2090
      %v2092 = vpop.f32.mrb[0].mxu0
      %v2093 = vadd.f32 0.0, %v2092
      %v2094 = vpop.f32.mrb[0].mxu0
      %v2095 = vadd.f32 0.0, %v2094
      %v2096 = vpop.f32.mrb[0].mxu0
      %v2097 = vadd.f32 0.0, %v2096
      %2098 = vdwg.mxu0
      %v2099 = vadd.f32 %v2026, %v2091
      %v2100 = vadd.f32 %v2027, %v2093
      %v2101 = vadd.f32 %v2028, %v2095
      %v2102 = vadd.f32 %v2029, %v2097
      %s2103 = scalar_lea.vmem %s2, 40
      %v2104 = vld [vmem:[%s2103] sm:$0xf]
      %v2105 = vld [vmem:[%s2103 + $0x4] sm:$0xf]
      %v2108 = vunpack.c.l.b16 %v2104
      %v2109 = vunpack.c.l.b16 %v2105
      %v2110 = vpack.c.b16 %v2109, %v2108
      %2111 = vrot.lane.b32.xlu0 %v1750, 108
      %v2112 = vpop.permute.xlu0 %2111
      %2113 = vrot.lane.b32.xlu0 %v1751, 108
      %v2114 = vpop.permute.xlu0 %2113
      %2115 = vrot.lane.b32.xlu0 %v1752, 108
      %v2116 = vpop.permute.xlu0 %2115
      %vm2117 = vcmask 883712
      %v2118 = vsel %vm2117, %v2112, %v2114
      %v2119 = vsel %vm2117, %v2114, %v2116
      %v2121 = vsel %vm748, %v2110, 0
      %v2124 = vsel %vm752, %v2118, 0
      %v2127 = vsel %vm752, %v2119, 0
      %2129 = vmatprep.subr.bf16.mxu0 %v2127
      %2130 = vmatpush1.bf16.msra.mxu0 %v2124
      %2131 = vmatprep.subr.bf16.mxu0 0
      %2132 = vmatpush1.bf16.msra.mxu0 0
      %2133 = vmatprep.subr.bf16.mxu0 0
      %2134 = vmatpush1.bf16.msra.mxu0 0
      %2135 = vmatprep.subr.bf16.mxu0 0
      %2136 = vmatpush1.bf16.msra.mxu0 0
      %2137 = vmatprep.subr.bf16.mxu0 0
      %2138 = vmatpush1.bf16.msra.mxu0 0
      %2139 = vmatprep.subr.bf16.mxu0 0
      %2140 = vmatpush1.bf16.msra.mxu0 0
      %2141 = vmatprep.subr.bf16.mxu0 0
      %2142 = vmatpush1.bf16.msra.mxu0 0
      %2143 = vmatprep.subr.bf16.mxu0 0
      %2144 = vmatpush1.bf16.msra.mxu0 0
      %2145 = vmatprep.subr.bf16.mxu0 0
      %2146 = vmatpush1.bf16.msra.mxu0 0
      %2147 = vmatprep.subr.bf16.mxu0 0
      %2148 = vmatpush1.bf16.msra.mxu0 0
      %2149 = vmatprep.subr.bf16.mxu0 0
      %2150 = vmatpush1.bf16.msra.mxu0 0
      %2151 = vmatprep.subr.bf16.mxu0 0
      %2152 = vmatpush1.bf16.msra.mxu0 0
      %2153 = vmatprep.subr.bf16.mxu0 0
      %2154 = vmatpush1.bf16.msra.mxu0 0
      %2155 = vmatprep.subr.bf16.mxu0 0
      %2156 = vmatpush1.bf16.msra.mxu0 0
      %2157 = vmatprep.subr.bf16.mxu0 0
      %2158 = vmatpush1.bf16.msra.mxu0 0
      %2159 = vmatprep.subr.bf16.mxu0 0
      %2160 = vmatpush1.bf16.msra.mxu0 0
      %2161 = vmatprep.mubr.bf16.mxu0 0
      %2162 = vmatmul.mubr.bf16.gmra.mrb[0].mxu0 %v2121
      %v2163 = vpop.f32.mrb[0].mxu0
      %v2164 = vadd.f32 0.0, %v2163
      %v2165 = vpop.f32.mrb[0].mxu0
      %v2166 = vadd.f32 0.0, %v2165
      %v2167 = vpop.f32.mrb[0].mxu0
      %v2168 = vadd.f32 0.0, %v2167
      %v2169 = vpop.f32.mrb[0].mxu0
      %v2170 = vadd.f32 0.0, %v2169
      %2171 = vdwg.mxu0
      %v2172 = vadd.f32 %v2099, %v2164
      %v2173 = vadd.f32 %v2100, %v2166
      %v2174 = vadd.f32 %v2101, %v2168
      %v2175 = vadd.f32 %v2102, %v2170
      %s2176 = scalar_lea.vmem %s2, 48
      %v2177 = vld [vmem:[%s2176] sm:$0xf]
      %v2178 = vld [vmem:[%s2176 + $0x4] sm:$0xf]
      %v2181 = vunpack.c.l.b16 %v2177
      %v2182 = vunpack.c.l.b16 %v2178
      %v2183 = vpack.c.b16 %v2182, %v2181
      %2184 = vrot.lane.b32.xlu0 %v1750, 92
      %v2185 = vpop.permute.xlu0 %2184
      %2186 = vrot.lane.b32.xlu0 %v1751, 92
      %v2187 = vpop.permute.xlu0 %2186
      %2188 = vrot.lane.b32.xlu0 %v1752, 92
      %v2189 = vpop.permute.xlu0 %2188
      %vm2190 = vcmask 752640
      %v2191 = vsel %vm2190, %v2185, %v2187
      %v2192 = vsel %vm2190, %v2187, %v2189
      %v2194 = vsel %vm748, %v2183, 0
      %v2197 = vsel %vm752, %v2191, 0
      %v2200 = vsel %vm752, %v2192, 0
      %2202 = vmatprep.subr.bf16.mxu0 %v2200
      %2203 = vmatpush1.bf16.msra.mxu0 %v2197
      %2204 = vmatprep.subr.bf16.mxu0 0
      %2205 = vmatpush1.bf16.msra.mxu0 0
      %2206 = vmatprep.subr.bf16.mxu0 0
      %2207 = vmatpush1.bf16.msra.mxu0 0
      %2208 = vmatprep.subr.bf16.mxu0 0
      %2209 = vmatpush1.bf16.msra.mxu0 0
      %2210 = vmatprep.subr.bf16.mxu0 0
      %2211 = vmatpush1.bf16.msra.mxu0 0
      %2212 = vmatprep.subr.bf16.mxu0 0
      %2213 = vmatpush1.bf16.msra.mxu0 0
      %2214 = vmatprep.subr.bf16.mxu0 0
      %2215 = vmatpush1.bf16.msra.mxu0 0
      %2216 = vmatprep.subr.bf16.mxu0 0
      %2217 = vmatpush1.bf16.msra.mxu0 0
      %2218 = vmatprep.subr.bf16.mxu0 0
      %2219 = vmatpush1.bf16.msra.mxu0 0
      %2220 = vmatprep.subr.bf16.mxu0 0
      %2221 = vmatpush1.bf16.msra.mxu0 0
      %2222 = vmatprep.subr.bf16.mxu0 0
      %2223 = vmatpush1.bf16.msra.mxu0 0
      %2224 = vmatprep.subr.bf16.mxu0 0
      %2225 = vmatpush1.bf16.msra.mxu0 0
      %2226 = vmatprep.subr.bf16.mxu0 0
      %2227 = vmatpush1.bf16.msra.mxu0 0
      %2228 = vmatprep.subr.bf16.mxu0 0
      %2229 = vmatpush1.bf16.msra.mxu0 0
      %2230 = vmatprep.subr.bf16.mxu0 0
      %2231 = vmatpush1.bf16.msra.mxu0 0
      %2232 = vmatprep.subr.bf16.mxu0 0
      %2233 = vmatpush1.bf16.msra.mxu0 0
      %2234 = vmatprep.mubr.bf16.mxu0 0
      %2235 = vmatmul.mubr.bf16.gmra.mrb[0].mxu0 %v2194
      %v2236 = vpop.f32.mrb[0].mxu0
      %v2237 = vadd.f32 0.0, %v2236
      %v2238 = vpop.f32.mrb[0].mxu0
      %v2239 = vadd.f32 0.0, %v2238
      %v2240 = vpop.f32.mrb[0].mxu0
      %v2241 = vadd.f32 0.0, %v2240
      %v2242 = vpop.f32.mrb[0].mxu0
      %v2243 = vadd.f32 0.0, %v2242
      %2244 = vdwg.mxu0
      %v2245 = vadd.f32 %v2172, %v2237
      %v2246 = vadd.f32 %v2173, %v2239
      %v2247 = vadd.f32 %v2174, %v2241
      %v2248 = vadd.f32 %v2175, %v2243
      %s2249 = scalar_lea.vmem %s2, 56
      %v2250 = vld [vmem:[%s2249] sm:$0xf]
      %v2251 = vld [vmem:[%s2249 + $0x4] sm:$0xf]
      %v2254 = vunpack.c.l.b16 %v2250
      %v2255 = vunpack.c.l.b16 %v2251
      %v2256 = vpack.c.b16 %v2255, %v2254
      %2257 = vrot.lane.b32.xlu0 %v1750, 91
      %v2258 = vpop.permute.xlu0 %2257
      %2259 = vrot.lane.b32.xlu0 %v1751, 91
      %v2260 = vpop.permute.xlu0 %2259
      %2261 = vrot.lane.b32.xlu0 %v1752, 91
      %v2262 = vpop.permute.xlu0 %2261
      %vm2263 = vcmask 744448
      %v2264 = vsel %vm2263, %v2258, %v2260
      %v2265 = vsel %vm2263, %v2260, %v2262
      %v2267 = vsel %vm748, %v2256, 0
      %v2270 = vsel %vm752, %v2264, 0
      %v2273 = vsel %vm752, %v2265, 0
      %2275 = vmatprep.subr.bf16.mxu0 %v2273
      %2276 = vmatpush1.bf16.msra.mxu0 %v2270
      %2277 = vmatprep.subr.bf16.mxu0 0
      %2278 = vmatpush1.bf16.msra.mxu0 0
      %2279 = vmatprep.subr.bf16.mxu0 0
      %2280 = vmatpush1.bf16.msra.mxu0 0
      %2281 = vmatprep.subr.bf16.mxu0 0
      %2282 = vmatpush1.bf16.msra.mxu0 0
      %2283 = vmatprep.subr.bf16.mxu0 0
      %2284 = vmatpush1.bf16.msra.mxu0 0
      %2285 = vmatprep.subr.bf16.mxu0 0
      %2286 = vmatpush1.bf16.msra.mxu0 0
      %2287 = vmatprep.subr.bf16.mxu0 0
      %2288 = vmatpush1.bf16.msra.mxu0 0
      %2289 = vmatprep.subr.bf16.mxu0 0
      %2290 = vmatpush1.bf16.msra.mxu0 0
      %2291 = vmatprep.subr.bf16.mxu0 0
      %2292 = vmatpush1.bf16.msra.mxu0 0
      %2293 = vmatprep.subr.bf16.mxu0 0
      %2294 = vmatpush1.bf16.msra.mxu0 0
      %2295 = vmatprep.subr.bf16.mxu0 0
      %2296 = vmatpush1.bf16.msra.mxu0 0
      %2297 = vmatprep.subr.bf16.mxu0 0
      %2298 = vmatpush1.bf16.msra.mxu0 0
      %2299 = vmatprep.subr.bf16.mxu0 0
      %2300 = vmatpush1.bf16.msra.mxu0 0
      %2301 = vmatprep.subr.bf16.mxu0 0
      %2302 = vmatpush1.bf16.msra.mxu0 0
      %2303 = vmatprep.subr.bf16.mxu0 0
      %2304 = vmatpush1.bf16.msra.mxu0 0
      %2305 = vmatprep.subr.bf16.mxu0 0
      %2306 = vmatpush1.bf16.msra.mxu0 0
      %2307 = vmatprep.mubr.bf16.mxu0 0
      %2308 = vmatmul.mubr.bf16.gmra.mrb[0].mxu0 %v2267
      %v2309 = vpop.f32.mrb[0].mxu0
      %v2310 = vadd.f32 0.0, %v2309
      %v2311 = vpop.f32.mrb[0].mxu0
      %v2312 = vadd.f32 0.0, %v2311
      %v2313 = vpop.f32.mrb[0].mxu0
      %v2314 = vadd.f32 0.0, %v2313
      %v2315 = vpop.f32.mrb[0].mxu0
      %v2316 = vadd.f32 0.0, %v2315
      %2317 = vdwg.mxu0
      %v2318 = vadd.f32 %v2245, %v2310
      %v2319 = vadd.f32 %v2246, %v2312
      %v2320 = vadd.f32 %v2247, %v2314
      %v2321 = vadd.f32 %v2248, %v2316
      %s2322 = scalar_lea.vmem %s2, 64
      %v2323 = vld [vmem:[%s2322] sm:$0xf]
      %v2324 = vld [vmem:[%s2322 + $0x4] sm:$0xf]
      %v2327 = vunpack.c.l.b16 %v2323
      %v2328 = vunpack.c.l.b16 %v2324
      %v2329 = vpack.c.b16 %v2328, %v2327
      %2330 = vrot.lane.b32.xlu0 %v1750, 90
      %v2331 = vpop.permute.xlu0 %2330
      %2332 = vrot.lane.b32.xlu0 %v1751, 90
      %v2333 = vpop.permute.xlu0 %2332
      %2334 = vrot.lane.b32.xlu0 %v1752, 90
      %v2335 = vpop.permute.xlu0 %2334
      %vm2336 = vcmask 736256
      %v2337 = vsel %vm2336, %v2331, %v2333
      %v2338 = vsel %vm2336, %v2333, %v2335
      %v2340 = vsel %vm748, %v2329, 0
      %v2343 = vsel %vm752, %v2337, 0
      %v2346 = vsel %vm752, %v2338, 0
      %2348 = vmatprep.subr.bf16.mxu0 %v2346
      %2349 = vmatpush1.bf16.msra.mxu0 %v2343
      %2350 = vmatprep.subr.bf16.mxu0 0
      %2351 = vmatpush1.bf16.msra.mxu0 0
      %2352 = vmatprep.subr.bf16.mxu0 0
      %2353 = vmatpush1.bf16.msra.mxu0 0
      %2354 = vmatprep.subr.bf16.mxu0 0
      %2355 = vmatpush1.bf16.msra.mxu0 0
      %2356 = vmatprep.subr.bf16.mxu0 0
      %2357 = vmatpush1.bf16.msra.mxu0 0
      %2358 = vmatprep.subr.bf16.mxu0 0
      %2359 = vmatpush1.bf16.msra.mxu0 0
      %2360 = vmatprep.subr.bf16.mxu0 0
      %2361 = vmatpush1.bf16.msra.mxu0 0
      %2362 = vmatprep.subr.bf16.mxu0 0
      %2363 = vmatpush1.bf16.msra.mxu0 0
      %2364 = vmatprep.subr.bf16.mxu0 0
      %2365 = vmatpush1.bf16.msra.mxu0 0
      %2366 = vmatprep.subr.bf16.mxu0 0
      %2367 = vmatpush1.bf16.msra.mxu0 0
      %2368 = vmatprep.subr.bf16.mxu0 0
      %2369 = vmatpush1.bf16.msra.mxu0 0
      %2370 = vmatprep.subr.bf16.mxu0 0
      %2371 = vmatpush1.bf16.msra.mxu0 0
      %2372 = vmatprep.subr.bf16.mxu0 0
      %2373 = vmatpush1.bf16.msra.mxu0 0
      %2374 = vmatprep.subr.bf16.mxu0 0
      %2375 = vmatpush1.bf16.msra.mxu0 0
      %2376 = vmatprep.subr.bf16.mxu0 0
      %2377 = vmatpush1.bf16.msra.mxu0 0
      %2378 = vmatprep.subr.bf16.mxu0 0
      %2379 = vmatpush1.bf16.msra.mxu0 0
      %2380 = vmatprep.mubr.bf16.mxu0 0
      %2381 = vmatmul.mubr.bf16.gmra.mrb[0].mxu0 %v2340
      %v2382 = vpop.f32.mrb[0].mxu0
      %v2383 = vadd.f32 0.0, %v2382
      %v2384 = vpop.f32.mrb[0].mxu0
      %v2385 = vadd.f32 0.0, %v2384
      %v2386 = vpop.f32.mrb[0].mxu0
      %v2387 = vadd.f32 0.0, %v2386
      %v2388 = vpop.f32.mrb[0].mxu0
      %v2389 = vadd.f32 0.0, %v2388
      %2390 = vdwg.mxu0
      %v2391 = vadd.f32 %v2318, %v2383
      %v2392 = vadd.f32 %v2319, %v2385
      %v2393 = vadd.f32 %v2320, %v2387
      %v2394 = vadd.f32 %v2321, %v2389
      %v2395 = vld [vmem:[%s3] sm:$0xff]
      %v2396 = vld [vmem:[%s3 + $0x8] sm:$0xff]
      %2398 = vset.pattern.permute.xlu0 0
      %2399 = vperm.xlu0 %2398, %v2395
      %v2400 = vpop.permute.xlu0 %2399
      %2403 = vset.pattern.permute.xlu0 0
      %2404 = vperm.xlu0 %2403, %v2396
      %v2405 = vpop.permute.xlu0 %2404
      %v2407 = vadd.f32 %v2391, %v2400
      %v2408 = vadd.f32 %v2392, %v2400
      %v2409 = vadd.f32 %v2393, %v2405
      %v2410 = vadd.f32 %v2394, %v2405
      %v2411 = vld [vmem:[%s694] sm:$0xff]
      %v2412 = vld [vmem:[%s694 + $0x8] sm:$0xff]
      %v2413 = vld [vmem:[%s4] sm:$0xff]
      %2415 = vset.pattern.permute.xlu0 0
      %2416 = vperm.xlu0 %2415, %v2413
      %v2417 = vpop.permute.xlu0 %2416
      %v2419 = vsub.f32 %v2411, %v2417
      %v2420 = vsub.f32 %v2412, %v2417
      %v2421 = vld [vmem:[%s5] sm:$0xff]
      %2423 = vset.pattern.permute.xlu0 0
      %2424 = vperm.xlu0 %2423, %v2421
      %v2425 = vpop.permute.xlu0 %2424
      %v2427 = vmul.f32 %v2419, %v2425
      %v2428 = vmul.f32 %v2420, %v2425
      %v2429 = vmul.f32 %v2427, %v2407
      %v2430 = vmul.f32 %v2428, %v2408
      %v2431 = vadd.f32 %v2429, %v2409
      %v2432 = vadd.f32 %v2430, %v2410
      %v2433 = vmax.f32 %v2431, 0.0
      %v2434 = vmax.f32 %v2432, 0.0
      %v2435 = vld [vmem:[%s700] sm:$0xff]
      %v2436 = vld [vmem:[%s700 + $0x8] sm:$0xff]
      %v2437 = vadd.f32 %v2433, %v2435
      %v2438 = vadd.f32 %v2434, %v2436
      %2439 = vst [vmem:[%s706] sm:$0xff] %v2437
      %2440 = vst [vmem:[%s706 + $0x8] sm:$0xff] %v2438
      %s2441 = smul.u32 2, %s25
      %p2442 = scmp.lt.s32.totalorder %s2441, 5
      %s2443 = scalar_select %p2442, %s2441, 5
      %s2444 = smul.addr %s2443, 8
      %s2445 = scalar_lea.vmem %s14, %s2444
      // Predicated region
      $region77: #{spade_block_forward.5} parent=75 // pred_check
        %p2446 = pneg %p409
      $region78: #{spade_block_forward.5} parent=75 // pred_check_branch
        %2448 = sbr.rel (%p2446) target = $region80
      $region79: #{spade_block_forward.5} parent=75 // pred_region
        %s2449 = smul.u32 2, %s25
      $region80: #{spade_block_forward.5} parent=75 // pred_fallthru
        _
    $region76: #{spade_block_forward.5} parent=5 // pred_fallthru
      _
    %p2450 = scmp.le.s32.totalorder 2, %s20
    // Predicated region
    $region81: #{spade_block_forward.5} parent=5 // pred_check
      %p2451 = pneg %p2450
    $region82: #{spade_block_forward.5} parent=5 // pred_check_branch
      %2453 = sbr.rel (%p2451) target = $region84
    $region83: #{spade_block_forward.5} parent=5 // pred_region
      %s2454 = ssub.s32 %s20, 2
      // Predicated region
      $region85: #{spade_block_forward.5} parent=83 // pred_check
        %p2455 = pneg %p415
      $region86: #{spade_block_forward.5} parent=83 // pred_check_branch
        %2457 = sbr.rel (%p2455) target = $region88
      $region87: #{spade_block_forward.5} parent=83 // pred_region
        %s2458 = smul.u32 2, %s26
        %p2459 = scmp.lt.s32.totalorder %s2458, 5
        %s2460 = scalar_select %p2459, %s2458, 5
        %s2461 = smul.addr %s2460, 8
        %s2462 = scalar_lea.vmem %s14, %s2461
      $region88: #{spade_block_forward.5} parent=83 // pred_fallthru
        _
    $region84: #{spade_block_forward.5} parent=5 // pred_fallthru
      _
  $region6: #{spade_block_forward.5} parent=0 // loop_footer
    %s24 = sadd.s32 1, %s20
  $region7: #{spade_block_forward.5} parent=0 // loop_footer_branch
    %19 = sbr.rel target = $region3
  $region8: #{spade_block_forward.5} parent=0 // loop_exit
    _

</llo_original>
